<compile_context>
chip_gen: v7x
topology: tpu7x:2x2x1
jax: 0.10.0
libtpu: 0.0.40
codegen_flags: <defaults>
</compile_context>

<pallas_src>
import functools
import math

import jax
import jax.numpy as jnp
from jax.experimental import pallas as pl
from jax.experimental.pallas import tpu as pltpu

_N_LAYER_PARAMS = 16   # flat arrays per encoder/decoder layer in the kernel arg list
_LN_EPS = 1e-5


# ----------------------------------------------------------------------------
# Shared per-batch forward math (pure jnp). Called from the Pallas kernel with
# VMEM refs and from the bf16-matched reference with plain arrays (both support
# `obj[l]` / `obj[...]` indexing), so validation compares the exact same math.
# ----------------------------------------------------------------------------

def _forward_math(src, pos, qpos, enc, dec, dn_g, dn_b, *, H, n_enc, n_dec):
    """src/pos: (n_cls, D) f32, qpos: (n_q, D) f32. Returns (hs, memory)."""
    D = src.shape[-1]
    Dh = D // H
    bf16 = jnp.bfloat16
    f32 = jnp.float32

    def dot(a, b):
        # bf16 MXU inputs, f32 accumulation.
        return jnp.dot(a.astype(bf16), b.astype(bf16), preferred_element_type=f32)

    def layer_norm(t, g, b):
        mu = jnp.mean(t, axis=-1, keepdims=True)
        d = t - mu
        var = jnp.mean(d * d, axis=-1, keepdims=True)
        return d * jax.lax.rsqrt(var + _LN_EPS) * g + b

    def mha(xq, xk, xv, wq, bq, wk, bk, wv, bv, wo, bo):
        # One lane-dense matmul per projection (all heads side-by-side along lanes).
        # 1/sqrt(Dh) is already folded into wq/bq at prep time.
        q = dot(xq, wq) + bq          # (Lq, D)
        k = dot(xk, wk) + bk          # (Lk, D)
        v = dot(xv, wv) + bv          # (Lk, D)
        outs = []
        for h in range(H):
            sl = slice(h * Dh, (h + 1) * Dh)
            qh, kh, vh = q[:, sl], k[:, sl], v[:, sl]
            s = jax.lax.dot_general(qh.astype(bf16), kh.astype(bf16),
                                    (((1,), (1,)), ((), ())),
                                    preferred_element_type=f32)      # (Lq, Lk)
            s = s - jnp.max(s, axis=-1, keepdims=True)
            e = jnp.exp(s)
            p = e / jnp.sum(e, axis=-1, keepdims=True)   # exact reciprocal (f32)
            outs.append(dot(p, vh))                      # (Lq, Dh)
        o = jnp.concatenate(outs, axis=-1)               # (Lq, D) lane concat, in vregs
        return dot(o, wo) + bo                           # single K=D output projection

    def ffn(x, w1, b1, w2, b2):
        h1 = jnp.maximum(dot(x, w1) + b1, 0.0)
        return dot(h1, w2) + b2

    # ------------------------------ encoder ------------------------------
    (e_wq, e_bq, e_wk, e_bk, e_wv, e_bv, e_wo, e_bo,
     e_n1g, e_n1b, e_w1, e_b1, e_w2, e_b2, e_n2g, e_n2b) = enc

    x = src
    for l in range(n_enc):
        qk = x + pos
        a = mha(qk, qk, x, e_wq[l], e_bq[l], e_wk[l], e_bk[l],
                e_wv[l], e_bv[l], e_wo[l], e_bo[l])
        x = layer_norm(x + a, e_n1g[l], e_n1b[l])
        y = ffn(x, e_w1[l], e_b1[l], e_w2[l], e_b2[l])
        x = layer_norm(x + y, e_n2g[l], e_n2b[l])
    memory = x

    # --------- decoder (self-attn removed: rm_self_attn_dec / rm_first_self_attn) ---------
    (d_wq, d_bq, d_wk, d_bk, d_wv, d_bv, d_wo, d_bo,
     d_n2g, d_n2b, d_w1, d_b1, d_w2, d_b2, d_n3g, d_n3b) = dec

    mem_pos = memory + pos
    tgt = None   # decoder layer 0: tgt == 0 -> skip zeros tensor + dead adds
    for l in range(n_dec):
        q_in = qpos if tgt is None else tgt + qpos
        a = mha(q_in, mem_pos, memory, d_wq[l], d_bq[l], d_wk[l], d_bk[l],
                d_wv[l], d_bv[l], d_wo[l], d_bo[l])
        pre = a if tgt is None else tgt + a
        tgt = layer_norm(pre, d_n2g[l], d_n2b[l])
        y = ffn(tgt, d_w1[l], d_b1[l], d_w2[l], d_b2[l])
        tgt = layer_norm(tgt + y, d_n3g[l], d_n3b[l])

    hs = layer_norm(tgt, dn_g[...], dn_b[...])   # final decoder norm (plain LN)
    return hs, memory


# ----------------------------------------------------------------------------
# Pallas kernel: one grid step == one batch element, whole encoder+decoder stack.
# ----------------------------------------------------------------------------

def _transformer_kernel(*refs, H, n_enc, n_dec):
    assert len(refs) == 3 + 2 * _N_LAYER_PARAMS + 2 + 2
    src_ref, pos_ref, qpos_ref = refs[0], refs[1], refs[2]
    i = 3
    enc = refs[i:i + _N_LAYER_PARAMS]; i += _N_LAYER_PARAMS
    dec = refs[i:i + _N_LAYER_PARAMS]; i += _N_LAYER_PARAMS
    dn_g, dn_b = refs[i], refs[i + 1]; i += 2
    hs_ref, mem_ref = refs[i], refs[i + 1]

    hs, mem = _forward_math(src_ref[...], pos_ref[...], qpos_ref[...],
                            enc, dec, dn_g, dn_b,
                            H=H, n_enc=n_enc, n_dec=n_dec)
    hs_ref[...] = hs.astype(hs_ref.dtype)
    mem_ref[...] = mem.astype(mem_ref.dtype)


# ----------------------------------------------------------------------------
# One-time weight re-layout (torch convention -> kernel layout), done outside
# the kernel: (K, N) matmul layout, attention scale folded into Wq/bq, matmul
# weights stored in bf16.
# ----------------------------------------------------------------------------

def _prep_attn(a, H):
    D = a["out_w"].shape[0]
    Dh = D // H
    scale = 1.0 / math.sqrt(Dh)
    bf16 = jnp.bfloat16
    Wq, Wk, Wv = a["in_w"][:D], a["in_w"][D:2 * D], a["in_w"][2 * D:]
    bq, bk, bv = a["in_b"][:D], a["in_b"][D:2 * D], a["in_b"][2 * D:]
    return [
        (Wq.T * scale).astype(bf16), (bq * scale).reshape(1, D),   # scale folded
        Wk.T.astype(bf16), bk.reshape(1, D),
        Wv.T.astype(bf16), bv.reshape(1, D),
        a["out_w"].T.astype(bf16), a["out_b"].reshape(1, D),
    ]


def _prep_layer(p, H, norm_a, norm_b):
    parts = _prep_attn(p["attn"], H)
    parts += [p[norm_a]["g"].reshape(1, -1), p[norm_a]["b"].reshape(1, -1)]
    parts += [p["lin1_w"].T.astype(jnp.bfloat16), p["lin1_b"].reshape(1, -1),
              p["lin2_w"].T.astype(jnp.bfloat16), p["lin2_b"].reshape(1, -1)]
    parts += [p[norm_b]["g"].reshape(1, -1), p[norm_b]["b"].reshape(1, -1)]
    assert len(parts) == _N_LAYER_PARAMS
    return parts


def _stack_layers(layers, H, norm_a, norm_b):
    per = [_prep_layer(p, H, norm_a, norm_b) for p in layers]
    return [jnp.stack([lp[i] for lp in per], axis=0) for i in range(_N_LAYER_PARAMS)]


def prepare_params(params, H):
    flat = _stack_layers(params["encoder"], H, "norm1", "norm2")
    flat += _stack_layers(params["decoder"], H, "norm2", "norm3")
    flat += [params["decoder_norm"]["g"].reshape(1, -1),
             params["decoder_norm"]["b"].reshape(1, -1)]
    return flat


# ----------------------------------------------------------------------------
# Pallas wrapper: single pallas_call, grid=(B,) "parallel".
# ----------------------------------------------------------------------------

def transformer_forward_pallas(params, src, query_embed, pos_embed, nhead):
    bs, d_model, n_cls = src.shape
    n_q = query_embed.shape[1]
    n_enc = len(params["encoder"])
    n_dec = len(params["decoder"])

    flat_params = prepare_params(params, nhead)   # one-time re-layout, bf16 weights

    src_tok = jnp.transpose(src, (0, 2, 1))        # (B, n_cls, D)
    pos_tok = jnp.transpose(pos_embed, (0, 2, 1))  # (B, n_cls, D)
    qpos_tok = query_embed                         # (B, n_q, D)

    def per_batch_spec(L):
        return pl.BlockSpec((None, L, d_model), lambda b: (b, 0, 0))

    def full_spec(arr):
        # Full-extent block, constant index map: weights stay VMEM-resident across
        # the batch grid (not re-streamed per step).
        return pl.BlockSpec(arr.shape, lambda b, n=len(arr.shape): (0,) * n)

    in_specs = [per_batch_spec(n_cls), per_batch_spec(n_cls), per_batch_spec(n_q)]
    in_specs += [full_spec(a) for a in flat_params]
    out_specs = (per_batch_spec(n_q), per_batch_spec(n_cls))

    kernel = functools.partial(_transformer_kernel, H=nhead, n_enc=n_enc, n_dec=n_dec)

    hs_b, mem_b = pl.pallas_call(
        kernel,
        grid=(bs,),
        in_specs=in_specs,
        out_specs=out_specs,
        out_shape=(jax.ShapeDtypeStruct((bs, n_q, d_model), jnp.float32),
                   jax.ShapeDtypeStruct((bs, n_cls, d_model), jnp.float32)),
        compiler_params=pltpu.CompilerParams(
            dimension_semantics=("parallel",),     # batch elements independent -> 2 TCs on v7x
            vmem_limit_bytes=48 * 1024 * 1024,     # explicit; raise toward 128 MiB (v5e/v6e) when scaling
        ),
    )(src_tok, pos_tok, qpos_tok, *flat_params)

    hs = hs_b[None]                                   # (1, B, n_q, D)
    mem = jnp.transpose(mem_b, (0, 2, 1))             # (B, D, n_cls)
    return hs, mem


# ----------------------------------------------------------------------------
# bf16-matched reference: identical math (shared _forward_math) on plain arrays.
# ----------------------------------------------------------------------------

def transformer_forward_prepared_ref(params, src, query_embed, pos_embed, nhead):
    bs, d_model, n_cls = src.shape
    n_enc = len(params["encoder"])
    n_dec = len(params["decoder"])
    flat = prepare_params(params, nhead)
    enc = tuple(flat[:_N_LAYER_PARAMS])
    dec = tuple(flat[_N_LAYER_PARAMS:2 * _N_LAYER_PARAMS])
    dn_g, dn_b = flat[2 * _N_LAYER_PARAMS], flat[2 * _N_LAYER_PARAMS + 1]

    src_tok = jnp.transpose(src, (0, 2, 1))
    pos_tok = jnp.transpose(pos_embed, (0, 2, 1))
    hs_list, mem_list = [], []
    for b in range(bs):
        hs_b, mem_b = _forward_math(src_tok[b], pos_tok[b], query_embed[b],
                                    enc, dec, dn_g, dn_b,
                                    H=nhead, n_enc=n_enc, n_dec=n_dec)
        hs_list.append(hs_b)
        mem_list.append(mem_b)
    hs = jnp.stack(hs_list)[None]
    mem = jnp.transpose(jnp.stack(mem_list), (0, 2, 1))
    return hs, mem


# ----------------------------------------------------------------------------
# Pure-f32 reference of the module semantics (for validation of semantics)
# ----------------------------------------------------------------------------

def _ref_mha(xq, xk, xv, a, H):
    D = xq.shape[-1]
    Dh = D // H
    Wq, Wk, Wv = a["in_w"][:D], a["in_w"][D:2 * D], a["in_w"][2 * D:]
    bq, bk, bv = a["in_b"][:D], a["in_b"][D:2 * D], a["in_b"][2 * D:]
    q = xq @ Wq.T + bq
    k = xk @ Wk.T + bk
    v = xv @ Wv.T + bv
    B, Lq, _ = q.shape
    Lk = k.shape[1]
    qh = q.reshape(B, Lq, H, Dh).transpose(0, 2, 1, 3)
    kh = k.reshape(B, Lk, H, Dh).transpose(0, 2, 1, 3)
    vh = v.reshape(B, Lk, H, Dh).transpose(0, 2, 1, 3)
    s = jnp.einsum("bhqd,bhkd->bhqk", qh, kh) / math.sqrt(Dh)
    p = jax.nn.softmax(s, axis=-1)
    o = jnp.einsum("bhqk,bhkd->bhqd", p, vh).transpose(0, 2, 1, 3).reshape(B, Lq, D)
    return o @ a["out_w"].T + a["out_b"]


def _ref_ln(t, ln):
    mu = jnp.mean(t, axis=-1, keepdims=True)
    var = jnp.mean((t - mu) ** 2, axis=-1, keepdims=True)
    return (t - mu) * jax.lax.rsqrt(var + _LN_EPS) * ln["g"] + ln["b"]


def transformer_forward_ref(params, src, query_embed, pos_embed, nhead):
    x = jnp.transpose(src, (0, 2, 1))          # (B, n_cls, D)
    pos = jnp.transpose(pos_embed, (0, 2, 1))
    qpos = query_embed                          # (B, n_q, D)
    for p in params["encoder"]:
        qk = x + pos
        x = _ref_ln(x + _ref_mha(qk, qk, x, p["attn"], nhead), p["norm1"])
        y = jax.nn.relu(x @ p["lin1_w"].T + p["lin1_b"]) @ p["lin2_w"].T + p["lin2_b"]
        x = _ref_ln(x + y, p["norm2"])
    memory = x
    tgt = jnp.zeros_like(qpos)
    for p in params["decoder"]:
        a = _ref_mha(tgt + qpos, memory + pos, memory, p["attn"], nhead)
        tgt = _ref_ln(tgt + a, p["norm2"])
        y = jax.nn.relu(tgt @ p["lin1_w"].T + p["lin1_b"]) @ p["lin2_w"].T + p["lin2_b"]
        tgt = _ref_ln(tgt + y, p["norm3"])
    out = _ref_ln(tgt, params["decoder_norm"])
    hs = out[None]                               # (1, B, n_q, D)
    mem = jnp.transpose(memory, (0, 2, 1))       # (B, D, n_cls)
    return hs, mem


# ----------------------------------------------------------------------------
# Deterministic parameter init (xavier_uniform for >1-dim params, torch layout)
# ----------------------------------------------------------------------------

def _xavier(key, shape):
    fan_out, fan_in = shape[0], shape[1]
    bound = math.sqrt(6.0 / (fan_in + fan_out))
    return jax.random.uniform(key, shape, jnp.float32, -bound, bound)


def _init_ln(d):
    return dict(g=jnp.ones((d,), jnp.float32), b=jnp.zeros((d,), jnp.float32))


def _init_mha(key, d):
    k1, k2 = jax.random.split(key)
    return dict(in_w=_xavier(k1, (3 * d, d)), in_b=jnp.zeros((3 * d,), jnp.float32),
                out_w=_xavier(k2, (d, d)), out_b=jnp.zeros((d,), jnp.float32))


def _init_enc_layer(key, d, dff):
    k0, k1, k2 = jax.random.split(key, 3)
    return dict(attn=_init_mha(k0, d),
                lin1_w=_xavier(k1, (dff, d)), lin1_b=jnp.zeros((dff,), jnp.float32),
                lin2_w=_xavier(k2, (d, dff)), lin2_b=jnp.zeros((d,), jnp.float32),
                norm1=_init_ln(d), norm2=_init_ln(d))


def _init_dec_layer(key, d, dff):
    k0, k1, k2 = jax.random.split(key, 3)
    return dict(attn=_init_mha(k0, d),
                lin1_w=_xavier(k1, (dff, d)), lin1_b=jnp.zeros((dff,), jnp.float32),
                lin2_w=_xavier(k2, (d, dff)), lin2_b=jnp.zeros((d,), jnp.float32),
                norm2=_init_ln(d), norm3=_init_ln(d))


def init_transformer(key, d_model, dff, n_enc, n_dec):
    keys = jax.random.split(key, n_enc + n_dec)
    enc = [_init_enc_layer(keys[i], d_model, dff) for i in range(n_enc)]
    dec = [_init_dec_layer(keys[n_enc + i], d_model, dff) for i in range(n_dec)]
    return dict(encoder=enc, decoder=dec, decoder_norm=_init_ln(d_model))


# ----------------------------------------------------------------------------
# Main
# ----------------------------------------------------------------------------

if __name__ == "__main__":
    d_model, nhead, dff = 32, 4, 64
    n_enc, n_dec = 2, 2
    bs, n_cls, n_q = 2, 8, 8

    root = jax.random.PRNGKey(0)
    kp, k1, k2, k3 = jax.random.split(root, 4)
    params = init_transformer(kp, d_model, dff, n_enc, n_dec)

    src = jax.random.normal(k1, (bs, d_model, n_cls), jnp.float32)
    pos_embed = jax.random.normal(k2, (bs, d_model, n_cls), jnp.float32)
    query_embed = jax.random.normal(k3, (bs, n_q, d_model), jnp.float32)

    hs, mem = transformer_forward_pallas(params, src, query_embed, pos_embed, nhead)
    hs, mem = jax.block_until_ready((hs, mem))

    assert hs.shape == (1, bs, n_q, d_model)
    assert mem.shape == (bs, d_model, n_cls)

    # 1) Tight check: kernel math == identical bf16-input / f32-accum math in XLA.
    hs_m, mem_m = transformer_forward_prepared_ref(params, src, query_embed, pos_embed, nhead)
    assert jnp.allclose(hs, hs_m, atol=2e-3, rtol=2e-3)
    assert jnp.allclose(mem, mem_m, atol=2e-3, rtol=2e-3)

    # 2) Semantics check vs the pure-f32 module reference; tolerance is bounded by
    #    the bf16 MXU inputs recommended by the perf review (softmax reciprocal is exact).
    hs_f, mem_f = transformer_forward_ref(params, src, query_embed, pos_embed, nhead)
    assert jnp.allclose(hs, hs_f, atol=5e-2, rtol=5e-2)
    assert jnp.allclose(mem, mem_f, atol=5e-2, rtol=5e-2)

    print("KERNEL_OK")
</pallas_src>

<mosaic_0001>
module attributes {stable_mosaic.version = 11 : i64} {
  func.func @_transformer_kernel(%arg0: i32, %arg1: memref<1x8x32xf32, #tpu.memory_space<vmem>>, %arg2: memref<1x8x32xf32, #tpu.memory_space<vmem>>, %arg3: memref<1x8x32xf32, #tpu.memory_space<vmem>>, %arg4: memref<2x32x32xbf16, #tpu.memory_space<vmem>>, %arg5: memref<2x1x32xf32, #tpu.memory_space<vmem>>, %arg6: memref<2x32x32xbf16, #tpu.memory_space<vmem>>, %arg7: memref<2x1x32xf32, #tpu.memory_space<vmem>>, %arg8: memref<2x32x32xbf16, #tpu.memory_space<vmem>>, %arg9: memref<2x1x32xf32, #tpu.memory_space<vmem>>, %arg10: memref<2x32x32xbf16, #tpu.memory_space<vmem>>, %arg11: memref<2x1x32xf32, #tpu.memory_space<vmem>>, %arg12: memref<2x1x32xf32, #tpu.memory_space<vmem>>, %arg13: memref<2x1x32xf32, #tpu.memory_space<vmem>>, %arg14: memref<2x32x64xbf16, #tpu.memory_space<vmem>>, %arg15: memref<2x1x64xf32, #tpu.memory_space<vmem>>, %arg16: memref<2x64x32xbf16, #tpu.memory_space<vmem>>, %arg17: memref<2x1x32xf32, #tpu.memory_space<vmem>>, %arg18: memref<2x1x32xf32, #tpu.memory_space<vmem>>, %arg19: memref<2x1x32xf32, #tpu.memory_space<vmem>>, %arg20: memref<2x32x32xbf16, #tpu.memory_space<vmem>>, %arg21: memref<2x1x32xf32, #tpu.memory_space<vmem>>, %arg22: memref<2x32x32xbf16, #tpu.memory_space<vmem>>, %arg23: memref<2x1x32xf32, #tpu.memory_space<vmem>>, %arg24: memref<2x32x32xbf16, #tpu.memory_space<vmem>>, %arg25: memref<2x1x32xf32, #tpu.memory_space<vmem>>, %arg26: memref<2x32x32xbf16, #tpu.memory_space<vmem>>, %arg27: memref<2x1x32xf32, #tpu.memory_space<vmem>>, %arg28: memref<2x1x32xf32, #tpu.memory_space<vmem>>, %arg29: memref<2x1x32xf32, #tpu.memory_space<vmem>>, %arg30: memref<2x32x64xbf16, #tpu.memory_space<vmem>>, %arg31: memref<2x1x64xf32, #tpu.memory_space<vmem>>, %arg32: memref<2x64x32xbf16, #tpu.memory_space<vmem>>, %arg33: memref<2x1x32xf32, #tpu.memory_space<vmem>>, %arg34: memref<2x1x32xf32, #tpu.memory_space<vmem>>, %arg35: memref<2x1x32xf32, #tpu.memory_space<vmem>>, %arg36: memref<1x32xf32, #tpu.memory_space<vmem>>, %arg37: memref<1x32xf32, #tpu.memory_space<vmem>>, %arg38: memref<1x8x32xf32, #tpu.memory_space<vmem>>, %arg39: memref<1x8x32xf32, #tpu.memory_space<vmem>>) attributes {dimension_semantics = [#tpu.dimension_semantics<parallel>], iteration_bounds = array<i64: 2>, scalar_prefetch = 0 : i64, scratch_operands = 0 : i64, tpu.core_type = #tpu.core_type<tc>, window_params = [{transform_indices = @transform_0, window_bounds = array<i64: 1, 8, 32>}, {transform_indices = @transform_1, window_bounds = array<i64: 1, 8, 32>}, {transform_indices = @transform_2, window_bounds = array<i64: 1, 8, 32>}, {pipeline_mode = #tpu.pipeline_mode<synchronous>, transform_indices = @transform_3, window_bounds = array<i64: 2, 32, 32>}, {pipeline_mode = #tpu.pipeline_mode<synchronous>, transform_indices = @transform_4, window_bounds = array<i64: 2, 1, 32>}, {pipeline_mode = #tpu.pipeline_mode<synchronous>, transform_indices = @transform_5, window_bounds = array<i64: 2, 32, 32>}, {pipeline_mode = #tpu.pipeline_mode<synchronous>, transform_indices = @transform_6, window_bounds = array<i64: 2, 1, 32>}, {pipeline_mode = #tpu.pipeline_mode<synchronous>, transform_indices = @transform_7, window_bounds = array<i64: 2, 32, 32>}, {pipeline_mode = #tpu.pipeline_mode<synchronous>, transform_indices = @transform_8, window_bounds = array<i64: 2, 1, 32>}, {pipeline_mode = #tpu.pipeline_mode<synchronous>, transform_indices = @transform_9, window_bounds = array<i64: 2, 32, 32>}, {pipeline_mode = #tpu.pipeline_mode<synchronous>, transform_indices = @transform_10, window_bounds = array<i64: 2, 1, 32>}, {pipeline_mode = #tpu.pipeline_mode<synchronous>, transform_indices = @transform_11, window_bounds = array<i64: 2, 1, 32>}, {pipeline_mode = #tpu.pipeline_mode<synchronous>, transform_indices = @transform_12, window_bounds = array<i64: 2, 1, 32>}, {pipeline_mode = #tpu.pipeline_mode<synchronous>, transform_indices = @transform_13, window_bounds = array<i64: 2, 32, 64>}, {pipeline_mode = #tpu.pipeline_mode<synchronous>, transform_indices = @transform_14, window_bounds = array<i64: 2, 1, 64>}, {pipeline_mode = #tpu.pipeline_mode<synchronous>, transform_indices = @transform_15, window_bounds = array<i64: 2, 64, 32>}, {pipeline_mode = #tpu.pipeline_mode<synchronous>, transform_indices = @transform_16, window_bounds = array<i64: 2, 1, 32>}, {pipeline_mode = #tpu.pipeline_mode<synchronous>, transform_indices = @transform_17, window_bounds = array<i64: 2, 1, 32>}, {pipeline_mode = #tpu.pipeline_mode<synchronous>, transform_indices = @transform_18, window_bounds = array<i64: 2, 1, 32>}, {pipeline_mode = #tpu.pipeline_mode<synchronous>, transform_indices = @transform_19, window_bounds = array<i64: 2, 32, 32>}, {pipeline_mode = #tpu.pipeline_mode<synchronous>, transform_indices = @transform_20, window_bounds = array<i64: 2, 1, 32>}, {pipeline_mode = #tpu.pipeline_mode<synchronous>, transform_indices = @transform_21, window_bounds = array<i64: 2, 32, 32>}, {pipeline_mode = #tpu.pipeline_mode<synchronous>, transform_indices = @transform_22, window_bounds = array<i64: 2, 1, 32>}, {pipeline_mode = #tpu.pipeline_mode<synchronous>, transform_indices = @transform_23, window_bounds = array<i64: 2, 32, 32>}, {pipeline_mode = #tpu.pipeline_mode<synchronous>, transform_indices = @transform_24, window_bounds = array<i64: 2, 1, 32>}, {pipeline_mode = #tpu.pipeline_mode<synchronous>, transform_indices = @transform_25, window_bounds = array<i64: 2, 32, 32>}, {pipeline_mode = #tpu.pipeline_mode<synchronous>, transform_indices = @transform_26, window_bounds = array<i64: 2, 1, 32>}, {pipeline_mode = #tpu.pipeline_mode<synchronous>, transform_indices = @transform_27, window_bounds = array<i64: 2, 1, 32>}, {pipeline_mode = #tpu.pipeline_mode<synchronous>, transform_indices = @transform_28, window_bounds = array<i64: 2, 1, 32>}, {pipeline_mode = #tpu.pipeline_mode<synchronous>, transform_indices = @transform_29, window_bounds = array<i64: 2, 32, 64>}, {pipeline_mode = #tpu.pipeline_mode<synchronous>, transform_indices = @transform_30, window_bounds = array<i64: 2, 1, 64>}, {pipeline_mode = #tpu.pipeline_mode<synchronous>, transform_indices = @transform_31, window_bounds = array<i64: 2, 64, 32>}, {pipeline_mode = #tpu.pipeline_mode<synchronous>, transform_indices = @transform_32, window_bounds = array<i64: 2, 1, 32>}, {pipeline_mode = #tpu.pipeline_mode<synchronous>, transform_indices = @transform_33, window_bounds = array<i64: 2, 1, 32>}, {pipeline_mode = #tpu.pipeline_mode<synchronous>, transform_indices = @transform_34, window_bounds = array<i64: 2, 1, 32>}, {pipeline_mode = #tpu.pipeline_mode<synchronous>, transform_indices = @transform_35, window_bounds = array<i64: 1, 32>}, {pipeline_mode = #tpu.pipeline_mode<synchronous>, transform_indices = @transform_36, window_bounds = array<i64: 1, 32>}, {transform_indices = @transform_37, window_bounds = array<i64: 1, 8, 32>}, {transform_indices = @transform_38, window_bounds = array<i64: 1, 8, 32>}]} {
    %c0 = arith.constant 0 : index
    %c0_0 = arith.constant 0 : index
    %c0_1 = arith.constant 0 : index
    %0 = vector.load %arg1[%c0, %c0_0, %c0_1] : memref<1x8x32xf32, #tpu.memory_space<vmem>>, vector<1x8x32xf32>
    %1 = vector.shape_cast %0 : vector<1x8x32xf32> to vector<8x32xf32>
    %c0_2 = arith.constant 0 : index
    %c0_3 = arith.constant 0 : index
    %c0_4 = arith.constant 0 : index
    %2 = vector.load %arg2[%c0_2, %c0_3, %c0_4] : memref<1x8x32xf32, #tpu.memory_space<vmem>>, vector<1x8x32xf32>
    %3 = vector.shape_cast %2 : vector<1x8x32xf32> to vector<8x32xf32>
    %c0_5 = arith.constant 0 : index
    %c0_6 = arith.constant 0 : index
    %c0_7 = arith.constant 0 : index
    %4 = vector.load %arg3[%c0_5, %c0_6, %c0_7] : memref<1x8x32xf32, #tpu.memory_space<vmem>>, vector<1x8x32xf32>
    %5 = vector.shape_cast %4 : vector<1x8x32xf32> to vector<8x32xf32>
    %6 = arith.addf %1, %3 : vector<8x32xf32>
    %c0_8 = arith.constant 0 : index
    %c0_9 = arith.constant 0 : index
    %c0_10 = arith.constant 0 : index
    %7 = vector.load %arg4[%c0_8, %c0_9, %c0_10] : memref<2x32x32xbf16, #tpu.memory_space<vmem>>, vector<1x32x32xbf16>
    %8 = vector.shape_cast %7 : vector<1x32x32xbf16> to vector<32x32xbf16>
    %c0_11 = arith.constant 0 : index
    %c0_12 = arith.constant 0 : index
    %c0_13 = arith.constant 0 : index
    %9 = vector.load %arg5[%c0_11, %c0_12, %c0_13] : memref<2x1x32xf32, #tpu.memory_space<vmem>>, vector<1x1x32xf32>
    %10 = vector.shape_cast %9 : vector<1x1x32xf32> to vector<1x32xf32>
    %c0_14 = arith.constant 0 : index
    %c0_15 = arith.constant 0 : index
    %c0_16 = arith.constant 0 : index
    %11 = vector.load %arg6[%c0_14, %c0_15, %c0_16] : memref<2x32x32xbf16, #tpu.memory_space<vmem>>, vector<1x32x32xbf16>
    %12 = vector.shape_cast %11 : vector<1x32x32xbf16> to vector<32x32xbf16>
    %c0_17 = arith.constant 0 : index
    %c0_18 = arith.constant 0 : index
    %c0_19 = arith.constant 0 : index
    %13 = vector.load %arg7[%c0_17, %c0_18, %c0_19] : memref<2x1x32xf32, #tpu.memory_space<vmem>>, vector<1x1x32xf32>
    %14 = vector.shape_cast %13 : vector<1x1x32xf32> to vector<1x32xf32>
    %c0_20 = arith.constant 0 : index
    %c0_21 = arith.constant 0 : index
    %c0_22 = arith.constant 0 : index
    %15 = vector.load %arg8[%c0_20, %c0_21, %c0_22] : memref<2x32x32xbf16, #tpu.memory_space<vmem>>, vector<1x32x32xbf16>
    %16 = vector.shape_cast %15 : vector<1x32x32xbf16> to vector<32x32xbf16>
    %c0_23 = arith.constant 0 : index
    %c0_24 = arith.constant 0 : index
    %c0_25 = arith.constant 0 : index
    %17 = vector.load %arg9[%c0_23, %c0_24, %c0_25] : memref<2x1x32xf32, #tpu.memory_space<vmem>>, vector<1x1x32xf32>
    %18 = vector.shape_cast %17 : vector<1x1x32xf32> to vector<1x32xf32>
    %c0_26 = arith.constant 0 : index
    %c0_27 = arith.constant 0 : index
    %c0_28 = arith.constant 0 : index
    %19 = vector.load %arg10[%c0_26, %c0_27, %c0_28] : memref<2x32x32xbf16, #tpu.memory_space<vmem>>, vector<1x32x32xbf16>
    %20 = vector.shape_cast %19 : vector<1x32x32xbf16> to vector<32x32xbf16>
    %c0_29 = arith.constant 0 : index
    %c0_30 = arith.constant 0 : index
    %c0_31 = arith.constant 0 : index
    %21 = vector.load %arg11[%c0_29, %c0_30, %c0_31] : memref<2x1x32xf32, #tpu.memory_space<vmem>>, vector<1x1x32xf32>
    %22 = vector.shape_cast %21 : vector<1x1x32xf32> to vector<1x32xf32>
    %23 = arith.truncf %6 : vector<8x32xf32> to vector<8x32xbf16>
    %cst = arith.constant dense<0.000000e+00> : vector<8x32xf32>
    %24 = tpu.matmul %23, %8, %cst {dimension_numbers = #tpu.dot_dimension_numbers<[1], [0], [0], [1], [0, 0, 1, 1], [], []>} : vector<8x32xbf16>, vector<32x32xbf16>, vector<8x32xf32> -> vector<8x32xf32>
    %25 = vector.broadcast %10 : vector<1x32xf32> to vector<8x32xf32>
    %26 = arith.addf %24, %25 : vector<8x32xf32>
    %27 = arith.truncf %6 : vector<8x32xf32> to vector<8x32xbf16>
    %cst_32 = arith.constant dense<0.000000e+00> : vector<8x32xf32>
    %28 = tpu.matmul %27, %12, %cst_32 {dimension_numbers = #tpu.dot_dimension_numbers<[1], [0], [0], [1], [0, 0, 1, 1], [], []>} : vector<8x32xbf16>, vector<32x32xbf16>, vector<8x32xf32> -> vector<8x32xf32>
    %29 = vector.broadcast %14 : vector<1x32xf32> to vector<8x32xf32>
    %30 = arith.addf %28, %29 : vector<8x32xf32>
    %31 = arith.truncf %1 : vector<8x32xf32> to vector<8x32xbf16>
    %cst_33 = arith.constant dense<0.000000e+00> : vector<8x32xf32>
    %32 = tpu.matmul %31, %16, %cst_33 {dimension_numbers = #tpu.dot_dimension_numbers<[1], [0], [0], [1], [0, 0, 1, 1], [], []>} : vector<8x32xbf16>, vector<32x32xbf16>, vector<8x32xf32> -> vector<8x32xf32>
    %33 = vector.broadcast %18 : vector<1x32xf32> to vector<8x32xf32>
    %34 = arith.addf %32, %33 : vector<8x32xf32>
    %35 = vector.extract_strided_slice %26 {offsets = [0, 0], sizes = [8, 8], strides = [1, 1]} : vector<8x32xf32> to vector<8x8xf32>
    %36 = vector.extract_strided_slice %30 {offsets = [0, 0], sizes = [8, 8], strides = [1, 1]} : vector<8x32xf32> to vector<8x8xf32>
    %37 = vector.extract_strided_slice %34 {offsets = [0, 0], sizes = [8, 8], strides = [1, 1]} : vector<8x32xf32> to vector<8x8xf32>
    %38 = arith.truncf %35 : vector<8x8xf32> to vector<8x8xbf16>
    %39 = arith.truncf %36 : vector<8x8xf32> to vector<8x8xbf16>
    %cst_34 = arith.constant dense<0.000000e+00> : vector<8x8xf32>
    %40 = tpu.matmul %38, %39, %cst_34 {dimension_numbers = #tpu.dot_dimension_numbers<[1], [1], [0], [0], [0, 0, 1, 0], [], []>} : vector<8x8xbf16>, vector<8x8xbf16>, vector<8x8xf32> -> vector<8x8xf32>
    %cst_35 = arith.constant dense<0xFF800000> : vector<8xf32>
    %41 = vector.multi_reduction <maximumf>, %40, %cst_35 [1] : vector<8x8xf32> to vector<8xf32>
    %42 = vector.shape_cast %41 : vector<8xf32> to vector<8x1xf32>
    %43 = vector.broadcast %42 : vector<8x1xf32> to vector<8x8xf32>
    %44 = arith.subf %40, %43 : vector<8x8xf32>
    %45 = math.exp %44 : vector<8x8xf32>
    %cst_36 = arith.constant dense<0.000000e+00> : vector<8xf32>
    %46 = vector.multi_reduction <add>, %45, %cst_36 [1] : vector<8x8xf32> to vector<8xf32>
    %47 = vector.shape_cast %46 : vector<8xf32> to vector<8x1xf32>
    %48 = vector.broadcast %47 : vector<8x1xf32> to vector<8x8xf32>
    %49 = arith.divf %45, %48 : vector<8x8xf32>
    %50 = arith.truncf %49 : vector<8x8xf32> to vector<8x8xbf16>
    %51 = arith.truncf %37 : vector<8x8xf32> to vector<8x8xbf16>
    %cst_37 = arith.constant dense<0.000000e+00> : vector<8x8xf32>
    %52 = tpu.matmul %50, %51, %cst_37 {dimension_numbers = #tpu.dot_dimension_numbers<[1], [0], [0], [1], [0, 0, 1, 1], [], []>} : vector<8x8xbf16>, vector<8x8xbf16>, vector<8x8xf32> -> vector<8x8xf32>
    %53 = vector.extract_strided_slice %26 {offsets = [0, 8], sizes = [8, 8], strides = [1, 1]} : vector<8x32xf32> to vector<8x8xf32>
    %54 = vector.extract_strided_slice %30 {offsets = [0, 8], sizes = [8, 8], strides = [1, 1]} : vector<8x32xf32> to vector<8x8xf32>
    %55 = vector.extract_strided_slice %34 {offsets = [0, 8], sizes = [8, 8], strides = [1, 1]} : vector<8x32xf32> to vector<8x8xf32>
    %56 = arith.truncf %53 : vector<8x8xf32> to vector<8x8xbf16>
    %57 = arith.truncf %54 : vector<8x8xf32> to vector<8x8xbf16>
    %cst_38 = arith.constant dense<0.000000e+00> : vector<8x8xf32>
    %58 = tpu.matmul %56, %57, %cst_38 {dimension_numbers = #tpu.dot_dimension_numbers<[1], [1], [0], [0], [0, 0, 1, 0], [], []>} : vector<8x8xbf16>, vector<8x8xbf16>, vector<8x8xf32> -> vector<8x8xf32>
    %cst_39 = arith.constant dense<0xFF800000> : vector<8xf32>
    %59 = vector.multi_reduction <maximumf>, %58, %cst_39 [1] : vector<8x8xf32> to vector<8xf32>
    %60 = vector.shape_cast %59 : vector<8xf32> to vector<8x1xf32>
    %61 = vector.broadcast %60 : vector<8x1xf32> to vector<8x8xf32>
    %62 = arith.subf %58, %61 : vector<8x8xf32>
    %63 = math.exp %62 : vector<8x8xf32>
    %cst_40 = arith.constant dense<0.000000e+00> : vector<8xf32>
    %64 = vector.multi_reduction <add>, %63, %cst_40 [1] : vector<8x8xf32> to vector<8xf32>
    %65 = vector.shape_cast %64 : vector<8xf32> to vector<8x1xf32>
    %66 = vector.broadcast %65 : vector<8x1xf32> to vector<8x8xf32>
    %67 = arith.divf %63, %66 : vector<8x8xf32>
    %68 = arith.truncf %67 : vector<8x8xf32> to vector<8x8xbf16>
    %69 = arith.truncf %55 : vector<8x8xf32> to vector<8x8xbf16>
    %cst_41 = arith.constant dense<0.000000e+00> : vector<8x8xf32>
    %70 = tpu.matmul %68, %69, %cst_41 {dimension_numbers = #tpu.dot_dimension_numbers<[1], [0], [0], [1], [0, 0, 1, 1], [], []>} : vector<8x8xbf16>, vector<8x8xbf16>, vector<8x8xf32> -> vector<8x8xf32>
    %71 = vector.extract_strided_slice %26 {offsets = [0, 16], sizes = [8, 8], strides = [1, 1]} : vector<8x32xf32> to vector<8x8xf32>
    %72 = vector.extract_strided_slice %30 {offsets = [0, 16], sizes = [8, 8], strides = [1, 1]} : vector<8x32xf32> to vector<8x8xf32>
    %73 = vector.extract_strided_slice %34 {offsets = [0, 16], sizes = [8, 8], strides = [1, 1]} : vector<8x32xf32> to vector<8x8xf32>
    %74 = arith.truncf %71 : vector<8x8xf32> to vector<8x8xbf16>
    %75 = arith.truncf %72 : vector<8x8xf32> to vector<8x8xbf16>
    %cst_42 = arith.constant dense<0.000000e+00> : vector<8x8xf32>
    %76 = tpu.matmul %74, %75, %cst_42 {dimension_numbers = #tpu.dot_dimension_numbers<[1], [1], [0], [0], [0, 0, 1, 0], [], []>} : vector<8x8xbf16>, vector<8x8xbf16>, vector<8x8xf32> -> vector<8x8xf32>
    %cst_43 = arith.constant dense<0xFF800000> : vector<8xf32>
    %77 = vector.multi_reduction <maximumf>, %76, %cst_43 [1] : vector<8x8xf32> to vector<8xf32>
    %78 = vector.shape_cast %77 : vector<8xf32> to vector<8x1xf32>
    %79 = vector.broadcast %78 : vector<8x1xf32> to vector<8x8xf32>
    %80 = arith.subf %76, %79 : vector<8x8xf32>
    %81 = math.exp %80 : vector<8x8xf32>
    %cst_44 = arith.constant dense<0.000000e+00> : vector<8xf32>
    %82 = vector.multi_reduction <add>, %81, %cst_44 [1] : vector<8x8xf32> to vector<8xf32>
    %83 = vector.shape_cast %82 : vector<8xf32> to vector<8x1xf32>
    %84 = vector.broadcast %83 : vector<8x1xf32> to vector<8x8xf32>
    %85 = arith.divf %81, %84 : vector<8x8xf32>
    %86 = arith.truncf %85 : vector<8x8xf32> to vector<8x8xbf16>
    %87 = arith.truncf %73 : vector<8x8xf32> to vector<8x8xbf16>
    %cst_45 = arith.constant dense<0.000000e+00> : vector<8x8xf32>
    %88 = tpu.matmul %86, %87, %cst_45 {dimension_numbers = #tpu.dot_dimension_numbers<[1], [0], [0], [1], [0, 0, 1, 1], [], []>} : vector<8x8xbf16>, vector<8x8xbf16>, vector<8x8xf32> -> vector<8x8xf32>
    %89 = vector.extract_strided_slice %26 {offsets = [0, 24], sizes = [8, 8], strides = [1, 1]} : vector<8x32xf32> to vector<8x8xf32>
    %90 = vector.extract_strided_slice %30 {offsets = [0, 24], sizes = [8, 8], strides = [1, 1]} : vector<8x32xf32> to vector<8x8xf32>
    %91 = vector.extract_strided_slice %34 {offsets = [0, 24], sizes = [8, 8], strides = [1, 1]} : vector<8x32xf32> to vector<8x8xf32>
    %92 = arith.truncf %89 : vector<8x8xf32> to vector<8x8xbf16>
    %93 = arith.truncf %90 : vector<8x8xf32> to vector<8x8xbf16>
    %cst_46 = arith.constant dense<0.000000e+00> : vector<8x8xf32>
    %94 = tpu.matmul %92, %93, %cst_46 {dimension_numbers = #tpu.dot_dimension_numbers<[1], [1], [0], [0], [0, 0, 1, 0], [], []>} : vector<8x8xbf16>, vector<8x8xbf16>, vector<8x8xf32> -> vector<8x8xf32>
    %cst_47 = arith.constant dense<0xFF800000> : vector<8xf32>
    %95 = vector.multi_reduction <maximumf>, %94, %cst_47 [1] : vector<8x8xf32> to vector<8xf32>
    %96 = vector.shape_cast %95 : vector<8xf32> to vector<8x1xf32>
    %97 = vector.broadcast %96 : vector<8x1xf32> to vector<8x8xf32>
    %98 = arith.subf %94, %97 : vector<8x8xf32>
    %99 = math.exp %98 : vector<8x8xf32>
    %cst_48 = arith.constant dense<0.000000e+00> : vector<8xf32>
    %100 = vector.multi_reduction <add>, %99, %cst_48 [1] : vector<8x8xf32> to vector<8xf32>
    %101 = vector.shape_cast %100 : vector<8xf32> to vector<8x1xf32>
    %102 = vector.broadcast %101 : vector<8x1xf32> to vector<8x8xf32>
    %103 = arith.divf %99, %102 : vector<8x8xf32>
    %104 = arith.truncf %103 : vector<8x8xf32> to vector<8x8xbf16>
    %105 = arith.truncf %91 : vector<8x8xf32> to vector<8x8xbf16>
    %cst_49 = arith.constant dense<0.000000e+00> : vector<8x8xf32>
    %106 = tpu.matmul %104, %105, %cst_49 {dimension_numbers = #tpu.dot_dimension_numbers<[1], [0], [0], [1], [0, 0, 1, 1], [], []>} : vector<8x8xbf16>, vector<8x8xbf16>, vector<8x8xf32> -> vector<8x8xf32>
    %107 = tpu.concatenate %52, %70, %88, %106 in 1 : vector<8x8xf32>, vector<8x8xf32>, vector<8x8xf32>, vector<8x8xf32> -> vector<8x32xf32>
    %108 = arith.truncf %107 : vector<8x32xf32> to vector<8x32xbf16>
    %cst_50 = arith.constant dense<0.000000e+00> : vector<8x32xf32>
    %109 = tpu.matmul %108, %20, %cst_50 {dimension_numbers = #tpu.dot_dimension_numbers<[1], [0], [0], [1], [0, 0, 1, 1], [], []>} : vector<8x32xbf16>, vector<32x32xbf16>, vector<8x32xf32> -> vector<8x32xf32>
    %110 = vector.broadcast %22 : vector<1x32xf32> to vector<8x32xf32>
    %111 = arith.addf %109, %110 : vector<8x32xf32>
    %112 = arith.addf %1, %111 : vector<8x32xf32>
    %c0_51 = arith.constant 0 : index
    %c0_52 = arith.constant 0 : index
    %c0_53 = arith.constant 0 : index
    %113 = vector.load %arg12[%c0_51, %c0_52, %c0_53] : memref<2x1x32xf32, #tpu.memory_space<vmem>>, vector<1x1x32xf32>
    %114 = vector.shape_cast %113 : vector<1x1x32xf32> to vector<1x32xf32>
    %c0_54 = arith.constant 0 : index
    %c0_55 = arith.constant 0 : index
    %c0_56 = arith.constant 0 : index
    %115 = vector.load %arg13[%c0_54, %c0_55, %c0_56] : memref<2x1x32xf32, #tpu.memory_space<vmem>>, vector<1x1x32xf32>
    %116 = vector.shape_cast %115 : vector<1x1x32xf32> to vector<1x32xf32>
    %cst_57 = arith.constant dense<0.000000e+00> : vector<8xf32>
    %117 = vector.multi_reduction <add>, %112, %cst_57 [1] : vector<8x32xf32> to vector<8xf32>
    %118 = vector.shape_cast %117 : vector<8xf32> to vector<8x1xf32>
    %cst_58 = arith.constant 3.200000e+01 : f32
    %119 = vector.broadcast %cst_58 : f32 to vector<8x1xf32>
    %120 = arith.divf %118, %119 : vector<8x1xf32>
    %121 = vector.broadcast %120 : vector<8x1xf32> to vector<8x32xf32>
    %122 = arith.subf %112, %121 : vector<8x32xf32>
    %123 = arith.mulf %122, %122 : vector<8x32xf32>
    %cst_59 = arith.constant dense<0.000000e+00> : vector<8xf32>
    %124 = vector.multi_reduction <add>, %123, %cst_59 [1] : vector<8x32xf32> to vector<8xf32>
    %125 = vector.shape_cast %124 : vector<8xf32> to vector<8x1xf32>
    %cst_60 = arith.constant 3.200000e+01 : f32
    %126 = vector.broadcast %cst_60 : f32 to vector<8x1xf32>
    %127 = arith.divf %125, %126 : vector<8x1xf32>
    %cst_61 = arith.constant 9.99999974E-6 : f32
    %128 = vector.broadcast %cst_61 : f32 to vector<8x1xf32>
    %129 = arith.addf %127, %128 : vector<8x1xf32>
    %130 = math.rsqrt %129 : vector<8x1xf32>
    %131 = vector.broadcast %130 : vector<8x1xf32> to vector<8x32xf32>
    %132 = arith.mulf %122, %131 : vector<8x32xf32>
    %133 = vector.broadcast %114 : vector<1x32xf32> to vector<8x32xf32>
    %134 = arith.mulf %132, %133 : vector<8x32xf32>
    %135 = vector.broadcast %116 : vector<1x32xf32> to vector<8x32xf32>
    %136 = arith.addf %134, %135 : vector<8x32xf32>
    %c0_62 = arith.constant 0 : index
    %c0_63 = arith.constant 0 : index
    %c0_64 = arith.constant 0 : index
    %137 = vector.load %arg14[%c0_62, %c0_63, %c0_64] : memref<2x32x64xbf16, #tpu.memory_space<vmem>>, vector<1x32x64xbf16>
    %138 = vector.shape_cast %137 : vector<1x32x64xbf16> to vector<32x64xbf16>
    %c0_65 = arith.constant 0 : index
    %c0_66 = arith.constant 0 : index
    %c0_67 = arith.constant 0 : index
    %139 = vector.load %arg15[%c0_65, %c0_66, %c0_67] : memref<2x1x64xf32, #tpu.memory_space<vmem>>, vector<1x1x64xf32>
    %140 = vector.shape_cast %139 : vector<1x1x64xf32> to vector<1x64xf32>
    %c0_68 = arith.constant 0 : index
    %c0_69 = arith.constant 0 : index
    %c0_70 = arith.constant 0 : index
    %141 = vector.load %arg16[%c0_68, %c0_69, %c0_70] : memref<2x64x32xbf16, #tpu.memory_space<vmem>>, vector<1x64x32xbf16>
    %142 = vector.shape_cast %141 : vector<1x64x32xbf16> to vector<64x32xbf16>
    %c0_71 = arith.constant 0 : index
    %c0_72 = arith.constant 0 : index
    %c0_73 = arith.constant 0 : index
    %143 = vector.load %arg17[%c0_71, %c0_72, %c0_73] : memref<2x1x32xf32, #tpu.memory_space<vmem>>, vector<1x1x32xf32>
    %144 = vector.shape_cast %143 : vector<1x1x32xf32> to vector<1x32xf32>
    %145 = arith.truncf %136 : vector<8x32xf32> to vector<8x32xbf16>
    %cst_74 = arith.constant dense<0.000000e+00> : vector<8x64xf32>
    %146 = tpu.matmul %145, %138, %cst_74 {dimension_numbers = #tpu.dot_dimension_numbers<[1], [0], [0], [1], [0, 0, 1, 1], [], []>} : vector<8x32xbf16>, vector<32x64xbf16>, vector<8x64xf32> -> vector<8x64xf32>
    %147 = vector.broadcast %140 : vector<1x64xf32> to vector<8x64xf32>
    %148 = arith.addf %146, %147 : vector<8x64xf32>
    %cst_75 = arith.constant 0.000000e+00 : f32
    %149 = vector.broadcast %cst_75 : f32 to vector<8x64xf32>
    %150 = arith.maximumf %148, %149 : vector<8x64xf32>
    %151 = arith.truncf %150 : vector<8x64xf32> to vector<8x64xbf16>
    %cst_76 = arith.constant dense<0.000000e+00> : vector<8x32xf32>
    %152 = tpu.matmul %151, %142, %cst_76 {dimension_numbers = #tpu.dot_dimension_numbers<[1], [0], [0], [1], [0, 0, 1, 1], [], []>} : vector<8x64xbf16>, vector<64x32xbf16>, vector<8x32xf32> -> vector<8x32xf32>
    %153 = vector.broadcast %144 : vector<1x32xf32> to vector<8x32xf32>
    %154 = arith.addf %152, %153 : vector<8x32xf32>
    %155 = arith.addf %136, %154 : vector<8x32xf32>
    %c0_77 = arith.constant 0 : index
    %c0_78 = arith.constant 0 : index
    %c0_79 = arith.constant 0 : index
    %156 = vector.load %arg18[%c0_77, %c0_78, %c0_79] : memref<2x1x32xf32, #tpu.memory_space<vmem>>, vector<1x1x32xf32>
    %157 = vector.shape_cast %156 : vector<1x1x32xf32> to vector<1x32xf32>
    %c0_80 = arith.constant 0 : index
    %c0_81 = arith.constant 0 : index
    %c0_82 = arith.constant 0 : index
    %158 = vector.load %arg19[%c0_80, %c0_81, %c0_82] : memref<2x1x32xf32, #tpu.memory_space<vmem>>, vector<1x1x32xf32>
    %159 = vector.shape_cast %158 : vector<1x1x32xf32> to vector<1x32xf32>
    %cst_83 = arith.constant dense<0.000000e+00> : vector<8xf32>
    %160 = vector.multi_reduction <add>, %155, %cst_83 [1] : vector<8x32xf32> to vector<8xf32>
    %161 = vector.shape_cast %160 : vector<8xf32> to vector<8x1xf32>
    %cst_84 = arith.constant 3.200000e+01 : f32
    %162 = vector.broadcast %cst_84 : f32 to vector<8x1xf32>
    %163 = arith.divf %161, %162 : vector<8x1xf32>
    %164 = vector.broadcast %163 : vector<8x1xf32> to vector<8x32xf32>
    %165 = arith.subf %155, %164 : vector<8x32xf32>
    %166 = arith.mulf %165, %165 : vector<8x32xf32>
    %cst_85 = arith.constant dense<0.000000e+00> : vector<8xf32>
    %167 = vector.multi_reduction <add>, %166, %cst_85 [1] : vector<8x32xf32> to vector<8xf32>
    %168 = vector.shape_cast %167 : vector<8xf32> to vector<8x1xf32>
    %cst_86 = arith.constant 3.200000e+01 : f32
    %169 = vector.broadcast %cst_86 : f32 to vector<8x1xf32>
    %170 = arith.divf %168, %169 : vector<8x1xf32>
    %cst_87 = arith.constant 9.99999974E-6 : f32
    %171 = vector.broadcast %cst_87 : f32 to vector<8x1xf32>
    %172 = arith.addf %170, %171 : vector<8x1xf32>
    %173 = math.rsqrt %172 : vector<8x1xf32>
    %174 = vector.broadcast %173 : vector<8x1xf32> to vector<8x32xf32>
    %175 = arith.mulf %165, %174 : vector<8x32xf32>
    %176 = vector.broadcast %157 : vector<1x32xf32> to vector<8x32xf32>
    %177 = arith.mulf %175, %176 : vector<8x32xf32>
    %178 = vector.broadcast %159 : vector<1x32xf32> to vector<8x32xf32>
    %179 = arith.addf %177, %178 : vector<8x32xf32>
    %180 = arith.addf %179, %3 : vector<8x32xf32>
    %c1 = arith.constant 1 : index
    %c0_88 = arith.constant 0 : index
    %c0_89 = arith.constant 0 : index
    %181 = vector.load %arg4[%c1, %c0_88, %c0_89] : memref<2x32x32xbf16, #tpu.memory_space<vmem>>, vector<1x32x32xbf16>
    %182 = vector.shape_cast %181 : vector<1x32x32xbf16> to vector<32x32xbf16>
    %c1_90 = arith.constant 1 : index
    %c0_91 = arith.constant 0 : index
    %c0_92 = arith.constant 0 : index
    %183 = vector.load %arg5[%c1_90, %c0_91, %c0_92] : memref<2x1x32xf32, #tpu.memory_space<vmem>>, vector<1x1x32xf32>
    %184 = vector.shape_cast %183 : vector<1x1x32xf32> to vector<1x32xf32>
    %c1_93 = arith.constant 1 : index
    %c0_94 = arith.constant 0 : index
    %c0_95 = arith.constant 0 : index
    %185 = vector.load %arg6[%c1_93, %c0_94, %c0_95] : memref<2x32x32xbf16, #tpu.memory_space<vmem>>, vector<1x32x32xbf16>
    %186 = vector.shape_cast %185 : vector<1x32x32xbf16> to vector<32x32xbf16>
    %c1_96 = arith.constant 1 : index
    %c0_97 = arith.constant 0 : index
    %c0_98 = arith.constant 0 : index
    %187 = vector.load %arg7[%c1_96, %c0_97, %c0_98] : memref<2x1x32xf32, #tpu.memory_space<vmem>>, vector<1x1x32xf32>
    %188 = vector.shape_cast %187 : vector<1x1x32xf32> to vector<1x32xf32>
    %c1_99 = arith.constant 1 : index
    %c0_100 = arith.constant 0 : index
    %c0_101 = arith.constant 0 : index
    %189 = vector.load %arg8[%c1_99, %c0_100, %c0_101] : memref<2x32x32xbf16, #tpu.memory_space<vmem>>, vector<1x32x32xbf16>
    %190 = vector.shape_cast %189 : vector<1x32x32xbf16> to vector<32x32xbf16>
    %c1_102 = arith.constant 1 : index
    %c0_103 = arith.constant 0 : index
    %c0_104 = arith.constant 0 : index
    %191 = vector.load %arg9[%c1_102, %c0_103, %c0_104] : memref<2x1x32xf32, #tpu.memory_space<vmem>>, vector<1x1x32xf32>
    %192 = vector.shape_cast %191 : vector<1x1x32xf32> to vector<1x32xf32>
    %c1_105 = arith.constant 1 : index
    %c0_106 = arith.constant 0 : index
    %c0_107 = arith.constant 0 : index
    %193 = vector.load %arg10[%c1_105, %c0_106, %c0_107] : memref<2x32x32xbf16, #tpu.memory_space<vmem>>, vector<1x32x32xbf16>
    %194 = vector.shape_cast %193 : vector<1x32x32xbf16> to vector<32x32xbf16>
    %c1_108 = arith.constant 1 : index
    %c0_109 = arith.constant 0 : index
    %c0_110 = arith.constant 0 : index
    %195 = vector.load %arg11[%c1_108, %c0_109, %c0_110] : memref<2x1x32xf32, #tpu.memory_space<vmem>>, vector<1x1x32xf32>
    %196 = vector.shape_cast %195 : vector<1x1x32xf32> to vector<1x32xf32>
    %197 = arith.truncf %180 : vector<8x32xf32> to vector<8x32xbf16>
    %cst_111 = arith.constant dense<0.000000e+00> : vector<8x32xf32>
    %198 = tpu.matmul %197, %182, %cst_111 {dimension_numbers = #tpu.dot_dimension_numbers<[1], [0], [0], [1], [0, 0, 1, 1], [], []>} : vector<8x32xbf16>, vector<32x32xbf16>, vector<8x32xf32> -> vector<8x32xf32>
    %199 = vector.broadcast %184 : vector<1x32xf32> to vector<8x32xf32>
    %200 = arith.addf %198, %199 : vector<8x32xf32>
    %201 = arith.truncf %180 : vector<8x32xf32> to vector<8x32xbf16>
    %cst_112 = arith.constant dense<0.000000e+00> : vector<8x32xf32>
    %202 = tpu.matmul %201, %186, %cst_112 {dimension_numbers = #tpu.dot_dimension_numbers<[1], [0], [0], [1], [0, 0, 1, 1], [], []>} : vector<8x32xbf16>, vector<32x32xbf16>, vector<8x32xf32> -> vector<8x32xf32>
    %203 = vector.broadcast %188 : vector<1x32xf32> to vector<8x32xf32>
    %204 = arith.addf %202, %203 : vector<8x32xf32>
    %205 = arith.truncf %179 : vector<8x32xf32> to vector<8x32xbf16>
    %cst_113 = arith.constant dense<0.000000e+00> : vector<8x32xf32>
    %206 = tpu.matmul %205, %190, %cst_113 {dimension_numbers = #tpu.dot_dimension_numbers<[1], [0], [0], [1], [0, 0, 1, 1], [], []>} : vector<8x32xbf16>, vector<32x32xbf16>, vector<8x32xf32> -> vector<8x32xf32>
    %207 = vector.broadcast %192 : vector<1x32xf32> to vector<8x32xf32>
    %208 = arith.addf %206, %207 : vector<8x32xf32>
    %209 = vector.extract_strided_slice %200 {offsets = [0, 0], sizes = [8, 8], strides = [1, 1]} : vector<8x32xf32> to vector<8x8xf32>
    %210 = vector.extract_strided_slice %204 {offsets = [0, 0], sizes = [8, 8], strides = [1, 1]} : vector<8x32xf32> to vector<8x8xf32>
    %211 = vector.extract_strided_slice %208 {offsets = [0, 0], sizes = [8, 8], strides = [1, 1]} : vector<8x32xf32> to vector<8x8xf32>
    %212 = arith.truncf %209 : vector<8x8xf32> to vector<8x8xbf16>
    %213 = arith.truncf %210 : vector<8x8xf32> to vector<8x8xbf16>
    %cst_114 = arith.constant dense<0.000000e+00> : vector<8x8xf32>
    %214 = tpu.matmul %212, %213, %cst_114 {dimension_numbers = #tpu.dot_dimension_numbers<[1], [1], [0], [0], [0, 0, 1, 0], [], []>} : vector<8x8xbf16>, vector<8x8xbf16>, vector<8x8xf32> -> vector<8x8xf32>
    %cst_115 = arith.constant dense<0xFF800000> : vector<8xf32>
    %215 = vector.multi_reduction <maximumf>, %214, %cst_115 [1] : vector<8x8xf32> to vector<8xf32>
    %216 = vector.shape_cast %215 : vector<8xf32> to vector<8x1xf32>
    %217 = vector.broadcast %216 : vector<8x1xf32> to vector<8x8xf32>
    %218 = arith.subf %214, %217 : vector<8x8xf32>
    %219 = math.exp %218 : vector<8x8xf32>
    %cst_116 = arith.constant dense<0.000000e+00> : vector<8xf32>
    %220 = vector.multi_reduction <add>, %219, %cst_116 [1] : vector<8x8xf32> to vector<8xf32>
    %221 = vector.shape_cast %220 : vector<8xf32> to vector<8x1xf32>
    %222 = vector.broadcast %221 : vector<8x1xf32> to vector<8x8xf32>
    %223 = arith.divf %219, %222 : vector<8x8xf32>
    %224 = arith.truncf %223 : vector<8x8xf32> to vector<8x8xbf16>
    %225 = arith.truncf %211 : vector<8x8xf32> to vector<8x8xbf16>
    %cst_117 = arith.constant dense<0.000000e+00> : vector<8x8xf32>
    %226 = tpu.matmul %224, %225, %cst_117 {dimension_numbers = #tpu.dot_dimension_numbers<[1], [0], [0], [1], [0, 0, 1, 1], [], []>} : vector<8x8xbf16>, vector<8x8xbf16>, vector<8x8xf32> -> vector<8x8xf32>
    %227 = vector.extract_strided_slice %200 {offsets = [0, 8], sizes = [8, 8], strides = [1, 1]} : vector<8x32xf32> to vector<8x8xf32>
    %228 = vector.extract_strided_slice %204 {offsets = [0, 8], sizes = [8, 8], strides = [1, 1]} : vector<8x32xf32> to vector<8x8xf32>
    %229 = vector.extract_strided_slice %208 {offsets = [0, 8], sizes = [8, 8], strides = [1, 1]} : vector<8x32xf32> to vector<8x8xf32>
    %230 = arith.truncf %227 : vector<8x8xf32> to vector<8x8xbf16>
    %231 = arith.truncf %228 : vector<8x8xf32> to vector<8x8xbf16>
    %cst_118 = arith.constant dense<0.000000e+00> : vector<8x8xf32>
    %232 = tpu.matmul %230, %231, %cst_118 {dimension_numbers = #tpu.dot_dimension_numbers<[1], [1], [0], [0], [0, 0, 1, 0], [], []>} : vector<8x8xbf16>, vector<8x8xbf16>, vector<8x8xf32> -> vector<8x8xf32>
    %cst_119 = arith.constant dense<0xFF800000> : vector<8xf32>
    %233 = vector.multi_reduction <maximumf>, %232, %cst_119 [1] : vector<8x8xf32> to vector<8xf32>
    %234 = vector.shape_cast %233 : vector<8xf32> to vector<8x1xf32>
    %235 = vector.broadcast %234 : vector<8x1xf32> to vector<8x8xf32>
    %236 = arith.subf %232, %235 : vector<8x8xf32>
    %237 = math.exp %236 : vector<8x8xf32>
    %cst_120 = arith.constant dense<0.000000e+00> : vector<8xf32>
    %238 = vector.multi_reduction <add>, %237, %cst_120 [1] : vector<8x8xf32> to vector<8xf32>
    %239 = vector.shape_cast %238 : vector<8xf32> to vector<8x1xf32>
    %240 = vector.broadcast %239 : vector<8x1xf32> to vector<8x8xf32>
    %241 = arith.divf %237, %240 : vector<8x8xf32>
    %242 = arith.truncf %241 : vector<8x8xf32> to vector<8x8xbf16>
    %243 = arith.truncf %229 : vector<8x8xf32> to vector<8x8xbf16>
    %cst_121 = arith.constant dense<0.000000e+00> : vector<8x8xf32>
    %244 = tpu.matmul %242, %243, %cst_121 {dimension_numbers = #tpu.dot_dimension_numbers<[1], [0], [0], [1], [0, 0, 1, 1], [], []>} : vector<8x8xbf16>, vector<8x8xbf16>, vector<8x8xf32> -> vector<8x8xf32>
    %245 = vector.extract_strided_slice %200 {offsets = [0, 16], sizes = [8, 8], strides = [1, 1]} : vector<8x32xf32> to vector<8x8xf32>
    %246 = vector.extract_strided_slice %204 {offsets = [0, 16], sizes = [8, 8], strides = [1, 1]} : vector<8x32xf32> to vector<8x8xf32>
    %247 = vector.extract_strided_slice %208 {offsets = [0, 16], sizes = [8, 8], strides = [1, 1]} : vector<8x32xf32> to vector<8x8xf32>
    %248 = arith.truncf %245 : vector<8x8xf32> to vector<8x8xbf16>
    %249 = arith.truncf %246 : vector<8x8xf32> to vector<8x8xbf16>
    %cst_122 = arith.constant dense<0.000000e+00> : vector<8x8xf32>
    %250 = tpu.matmul %248, %249, %cst_122 {dimension_numbers = #tpu.dot_dimension_numbers<[1], [1], [0], [0], [0, 0, 1, 0], [], []>} : vector<8x8xbf16>, vector<8x8xbf16>, vector<8x8xf32> -> vector<8x8xf32>
    %cst_123 = arith.constant dense<0xFF800000> : vector<8xf32>
    %251 = vector.multi_reduction <maximumf>, %250, %cst_123 [1] : vector<8x8xf32> to vector<8xf32>
    %252 = vector.shape_cast %251 : vector<8xf32> to vector<8x1xf32>
    %253 = vector.broadcast %252 : vector<8x1xf32> to vector<8x8xf32>
    %254 = arith.subf %250, %253 : vector<8x8xf32>
    %255 = math.exp %254 : vector<8x8xf32>
    %cst_124 = arith.constant dense<0.000000e+00> : vector<8xf32>
    %256 = vector.multi_reduction <add>, %255, %cst_124 [1] : vector<8x8xf32> to vector<8xf32>
    %257 = vector.shape_cast %256 : vector<8xf32> to vector<8x1xf32>
    %258 = vector.broadcast %257 : vector<8x1xf32> to vector<8x8xf32>
    %259 = arith.divf %255, %258 : vector<8x8xf32>
    %260 = arith.truncf %259 : vector<8x8xf32> to vector<8x8xbf16>
    %261 = arith.truncf %247 : vector<8x8xf32> to vector<8x8xbf16>
    %cst_125 = arith.constant dense<0.000000e+00> : vector<8x8xf32>
    %262 = tpu.matmul %260, %261, %cst_125 {dimension_numbers = #tpu.dot_dimension_numbers<[1], [0], [0], [1], [0, 0, 1, 1], [], []>} : vector<8x8xbf16>, vector<8x8xbf16>, vector<8x8xf32> -> vector<8x8xf32>
    %263 = vector.extract_strided_slice %200 {offsets = [0, 24], sizes = [8, 8], strides = [1, 1]} : vector<8x32xf32> to vector<8x8xf32>
    %264 = vector.extract_strided_slice %204 {offsets = [0, 24], sizes = [8, 8], strides = [1, 1]} : vector<8x32xf32> to vector<8x8xf32>
    %265 = vector.extract_strided_slice %208 {offsets = [0, 24], sizes = [8, 8], strides = [1, 1]} : vector<8x32xf32> to vector<8x8xf32>
    %266 = arith.truncf %263 : vector<8x8xf32> to vector<8x8xbf16>
    %267 = arith.truncf %264 : vector<8x8xf32> to vector<8x8xbf16>
    %cst_126 = arith.constant dense<0.000000e+00> : vector<8x8xf32>
    %268 = tpu.matmul %266, %267, %cst_126 {dimension_numbers = #tpu.dot_dimension_numbers<[1], [1], [0], [0], [0, 0, 1, 0], [], []>} : vector<8x8xbf16>, vector<8x8xbf16>, vector<8x8xf32> -> vector<8x8xf32>
    %cst_127 = arith.constant dense<0xFF800000> : vector<8xf32>
    %269 = vector.multi_reduction <maximumf>, %268, %cst_127 [1] : vector<8x8xf32> to vector<8xf32>
    %270 = vector.shape_cast %269 : vector<8xf32> to vector<8x1xf32>
    %271 = vector.broadcast %270 : vector<8x1xf32> to vector<8x8xf32>
    %272 = arith.subf %268, %271 : vector<8x8xf32>
    %273 = math.exp %272 : vector<8x8xf32>
    %cst_128 = arith.constant dense<0.000000e+00> : vector<8xf32>
    %274 = vector.multi_reduction <add>, %273, %cst_128 [1] : vector<8x8xf32> to vector<8xf32>
    %275 = vector.shape_cast %274 : vector<8xf32> to vector<8x1xf32>
    %276 = vector.broadcast %275 : vector<8x1xf32> to vector<8x8xf32>
    %277 = arith.divf %273, %276 : vector<8x8xf32>
    %278 = arith.truncf %277 : vector<8x8xf32> to vector<8x8xbf16>
    %279 = arith.truncf %265 : vector<8x8xf32> to vector<8x8xbf16>
    %cst_129 = arith.constant dense<0.000000e+00> : vector<8x8xf32>
    %280 = tpu.matmul %278, %279, %cst_129 {dimension_numbers = #tpu.dot_dimension_numbers<[1], [0], [0], [1], [0, 0, 1, 1], [], []>} : vector<8x8xbf16>, vector<8x8xbf16>, vector<8x8xf32> -> vector<8x8xf32>
    %281 = tpu.concatenate %226, %244, %262, %280 in 1 : vector<8x8xf32>, vector<8x8xf32>, vector<8x8xf32>, vector<8x8xf32> -> vector<8x32xf32>
    %282 = arith.truncf %281 : vector<8x32xf32> to vector<8x32xbf16>
    %cst_130 = arith.constant dense<0.000000e+00> : vector<8x32xf32>
    %283 = tpu.matmul %282, %194, %cst_130 {dimension_numbers = #tpu.dot_dimension_numbers<[1], [0], [0], [1], [0, 0, 1, 1], [], []>} : vector<8x32xbf16>, vector<32x32xbf16>, vector<8x32xf32> -> vector<8x32xf32>
    %284 = vector.broadcast %196 : vector<1x32xf32> to vector<8x32xf32>
    %285 = arith.addf %283, %284 : vector<8x32xf32>
    %286 = arith.addf %179, %285 : vector<8x32xf32>
    %c1_131 = arith.constant 1 : index
    %c0_132 = arith.constant 0 : index
    %c0_133 = arith.constant 0 : index
    %287 = vector.load %arg12[%c1_131, %c0_132, %c0_133] : memref<2x1x32xf32, #tpu.memory_space<vmem>>, vector<1x1x32xf32>
    %288 = vector.shape_cast %287 : vector<1x1x32xf32> to vector<1x32xf32>
    %c1_134 = arith.constant 1 : index
    %c0_135 = arith.constant 0 : index
    %c0_136 = arith.constant 0 : index
    %289 = vector.load %arg13[%c1_134, %c0_135, %c0_136] : memref<2x1x32xf32, #tpu.memory_space<vmem>>, vector<1x1x32xf32>
    %290 = vector.shape_cast %289 : vector<1x1x32xf32> to vector<1x32xf32>
    %cst_137 = arith.constant dense<0.000000e+00> : vector<8xf32>
    %291 = vector.multi_reduction <add>, %286, %cst_137 [1] : vector<8x32xf32> to vector<8xf32>
    %292 = vector.shape_cast %291 : vector<8xf32> to vector<8x1xf32>
    %cst_138 = arith.constant 3.200000e+01 : f32
    %293 = vector.broadcast %cst_138 : f32 to vector<8x1xf32>
    %294 = arith.divf %292, %293 : vector<8x1xf32>
    %295 = vector.broadcast %294 : vector<8x1xf32> to vector<8x32xf32>
    %296 = arith.subf %286, %295 : vector<8x32xf32>
    %297 = arith.mulf %296, %296 : vector<8x32xf32>
    %cst_139 = arith.constant dense<0.000000e+00> : vector<8xf32>
    %298 = vector.multi_reduction <add>, %297, %cst_139 [1] : vector<8x32xf32> to vector<8xf32>
    %299 = vector.shape_cast %298 : vector<8xf32> to vector<8x1xf32>
    %cst_140 = arith.constant 3.200000e+01 : f32
    %300 = vector.broadcast %cst_140 : f32 to vector<8x1xf32>
    %301 = arith.divf %299, %300 : vector<8x1xf32>
    %cst_141 = arith.constant 9.99999974E-6 : f32
    %302 = vector.broadcast %cst_141 : f32 to vector<8x1xf32>
    %303 = arith.addf %301, %302 : vector<8x1xf32>
    %304 = math.rsqrt %303 : vector<8x1xf32>
    %305 = vector.broadcast %304 : vector<8x1xf32> to vector<8x32xf32>
    %306 = arith.mulf %296, %305 : vector<8x32xf32>
    %307 = vector.broadcast %288 : vector<1x32xf32> to vector<8x32xf32>
    %308 = arith.mulf %306, %307 : vector<8x32xf32>
    %309 = vector.broadcast %290 : vector<1x32xf32> to vector<8x32xf32>
    %310 = arith.addf %308, %309 : vector<8x32xf32>
    %c1_142 = arith.constant 1 : index
    %c0_143 = arith.constant 0 : index
    %c0_144 = arith.constant 0 : index
    %311 = vector.load %arg14[%c1_142, %c0_143, %c0_144] : memref<2x32x64xbf16, #tpu.memory_space<vmem>>, vector<1x32x64xbf16>
    %312 = vector.shape_cast %311 : vector<1x32x64xbf16> to vector<32x64xbf16>
    %c1_145 = arith.constant 1 : index
    %c0_146 = arith.constant 0 : index
    %c0_147 = arith.constant 0 : index
    %313 = vector.load %arg15[%c1_145, %c0_146, %c0_147] : memref<2x1x64xf32, #tpu.memory_space<vmem>>, vector<1x1x64xf32>
    %314 = vector.shape_cast %313 : vector<1x1x64xf32> to vector<1x64xf32>
    %c1_148 = arith.constant 1 : index
    %c0_149 = arith.constant 0 : index
    %c0_150 = arith.constant 0 : index
    %315 = vector.load %arg16[%c1_148, %c0_149, %c0_150] : memref<2x64x32xbf16, #tpu.memory_space<vmem>>, vector<1x64x32xbf16>
    %316 = vector.shape_cast %315 : vector<1x64x32xbf16> to vector<64x32xbf16>
    %c1_151 = arith.constant 1 : index
    %c0_152 = arith.constant 0 : index
    %c0_153 = arith.constant 0 : index
    %317 = vector.load %arg17[%c1_151, %c0_152, %c0_153] : memref<2x1x32xf32, #tpu.memory_space<vmem>>, vector<1x1x32xf32>
    %318 = vector.shape_cast %317 : vector<1x1x32xf32> to vector<1x32xf32>
    %319 = arith.truncf %310 : vector<8x32xf32> to vector<8x32xbf16>
    %cst_154 = arith.constant dense<0.000000e+00> : vector<8x64xf32>
    %320 = tpu.matmul %319, %312, %cst_154 {dimension_numbers = #tpu.dot_dimension_numbers<[1], [0], [0], [1], [0, 0, 1, 1], [], []>} : vector<8x32xbf16>, vector<32x64xbf16>, vector<8x64xf32> -> vector<8x64xf32>
    %321 = vector.broadcast %314 : vector<1x64xf32> to vector<8x64xf32>
    %322 = arith.addf %320, %321 : vector<8x64xf32>
    %cst_155 = arith.constant 0.000000e+00 : f32
    %323 = vector.broadcast %cst_155 : f32 to vector<8x64xf32>
    %324 = arith.maximumf %322, %323 : vector<8x64xf32>
    %325 = arith.truncf %324 : vector<8x64xf32> to vector<8x64xbf16>
    %cst_156 = arith.constant dense<0.000000e+00> : vector<8x32xf32>
    %326 = tpu.matmul %325, %316, %cst_156 {dimension_numbers = #tpu.dot_dimension_numbers<[1], [0], [0], [1], [0, 0, 1, 1], [], []>} : vector<8x64xbf16>, vector<64x32xbf16>, vector<8x32xf32> -> vector<8x32xf32>
    %327 = vector.broadcast %318 : vector<1x32xf32> to vector<8x32xf32>
    %328 = arith.addf %326, %327 : vector<8x32xf32>
    %329 = arith.addf %310, %328 : vector<8x32xf32>
    %c1_157 = arith.constant 1 : index
    %c0_158 = arith.constant 0 : index
    %c0_159 = arith.constant 0 : index
    %330 = vector.load %arg18[%c1_157, %c0_158, %c0_159] : memref<2x1x32xf32, #tpu.memory_space<vmem>>, vector<1x1x32xf32>
    %331 = vector.shape_cast %330 : vector<1x1x32xf32> to vector<1x32xf32>
    %c1_160 = arith.constant 1 : index
    %c0_161 = arith.constant 0 : index
    %c0_162 = arith.constant 0 : index
    %332 = vector.load %arg19[%c1_160, %c0_161, %c0_162] : memref<2x1x32xf32, #tpu.memory_space<vmem>>, vector<1x1x32xf32>
    %333 = vector.shape_cast %332 : vector<1x1x32xf32> to vector<1x32xf32>
    %cst_163 = arith.constant dense<0.000000e+00> : vector<8xf32>
    %334 = vector.multi_reduction <add>, %329, %cst_163 [1] : vector<8x32xf32> to vector<8xf32>
    %335 = vector.shape_cast %334 : vector<8xf32> to vector<8x1xf32>
    %cst_164 = arith.constant 3.200000e+01 : f32
    %336 = vector.broadcast %cst_164 : f32 to vector<8x1xf32>
    %337 = arith.divf %335, %336 : vector<8x1xf32>
    %338 = vector.broadcast %337 : vector<8x1xf32> to vector<8x32xf32>
    %339 = arith.subf %329, %338 : vector<8x32xf32>
    %340 = arith.mulf %339, %339 : vector<8x32xf32>
    %cst_165 = arith.constant dense<0.000000e+00> : vector<8xf32>
    %341 = vector.multi_reduction <add>, %340, %cst_165 [1] : vector<8x32xf32> to vector<8xf32>
    %342 = vector.shape_cast %341 : vector<8xf32> to vector<8x1xf32>
    %cst_166 = arith.constant 3.200000e+01 : f32
    %343 = vector.broadcast %cst_166 : f32 to vector<8x1xf32>
    %344 = arith.divf %342, %343 : vector<8x1xf32>
    %cst_167 = arith.constant 9.99999974E-6 : f32
    %345 = vector.broadcast %cst_167 : f32 to vector<8x1xf32>
    %346 = arith.addf %344, %345 : vector<8x1xf32>
    %347 = math.rsqrt %346 : vector<8x1xf32>
    %348 = vector.broadcast %347 : vector<8x1xf32> to vector<8x32xf32>
    %349 = arith.mulf %339, %348 : vector<8x32xf32>
    %350 = vector.broadcast %331 : vector<1x32xf32> to vector<8x32xf32>
    %351 = arith.mulf %349, %350 : vector<8x32xf32>
    %352 = vector.broadcast %333 : vector<1x32xf32> to vector<8x32xf32>
    %353 = arith.addf %351, %352 : vector<8x32xf32>
    %354 = arith.addf %353, %3 : vector<8x32xf32>
    %c0_168 = arith.constant 0 : index
    %c0_169 = arith.constant 0 : index
    %c0_170 = arith.constant 0 : index
    %355 = vector.load %arg20[%c0_168, %c0_169, %c0_170] : memref<2x32x32xbf16, #tpu.memory_space<vmem>>, vector<1x32x32xbf16>
    %356 = vector.shape_cast %355 : vector<1x32x32xbf16> to vector<32x32xbf16>
    %c0_171 = arith.constant 0 : index
    %c0_172 = arith.constant 0 : index
    %c0_173 = arith.constant 0 : index
    %357 = vector.load %arg21[%c0_171, %c0_172, %c0_173] : memref<2x1x32xf32, #tpu.memory_space<vmem>>, vector<1x1x32xf32>
    %358 = vector.shape_cast %357 : vector<1x1x32xf32> to vector<1x32xf32>
    %c0_174 = arith.constant 0 : index
    %c0_175 = arith.constant 0 : index
    %c0_176 = arith.constant 0 : index
    %359 = vector.load %arg22[%c0_174, %c0_175, %c0_176] : memref<2x32x32xbf16, #tpu.memory_space<vmem>>, vector<1x32x32xbf16>
    %360 = vector.shape_cast %359 : vector<1x32x32xbf16> to vector<32x32xbf16>
    %c0_177 = arith.constant 0 : index
    %c0_178 = arith.constant 0 : index
    %c0_179 = arith.constant 0 : index
    %361 = vector.load %arg23[%c0_177, %c0_178, %c0_179] : memref<2x1x32xf32, #tpu.memory_space<vmem>>, vector<1x1x32xf32>
    %362 = vector.shape_cast %361 : vector<1x1x32xf32> to vector<1x32xf32>
    %c0_180 = arith.constant 0 : index
    %c0_181 = arith.constant 0 : index
    %c0_182 = arith.constant 0 : index
    %363 = vector.load %arg24[%c0_180, %c0_181, %c0_182] : memref<2x32x32xbf16, #tpu.memory_space<vmem>>, vector<1x32x32xbf16>
    %364 = vector.shape_cast %363 : vector<1x32x32xbf16> to vector<32x32xbf16>
    %c0_183 = arith.constant 0 : index
    %c0_184 = arith.constant 0 : index
    %c0_185 = arith.constant 0 : index
    %365 = vector.load %arg25[%c0_183, %c0_184, %c0_185] : memref<2x1x32xf32, #tpu.memory_space<vmem>>, vector<1x1x32xf32>
    %366 = vector.shape_cast %365 : vector<1x1x32xf32> to vector<1x32xf32>
    %c0_186 = arith.constant 0 : index
    %c0_187 = arith.constant 0 : index
    %c0_188 = arith.constant 0 : index
    %367 = vector.load %arg26[%c0_186, %c0_187, %c0_188] : memref<2x32x32xbf16, #tpu.memory_space<vmem>>, vector<1x32x32xbf16>
    %368 = vector.shape_cast %367 : vector<1x32x32xbf16> to vector<32x32xbf16>
    %c0_189 = arith.constant 0 : index
    %c0_190 = arith.constant 0 : index
    %c0_191 = arith.constant 0 : index
    %369 = vector.load %arg27[%c0_189, %c0_190, %c0_191] : memref<2x1x32xf32, #tpu.memory_space<vmem>>, vector<1x1x32xf32>
    %370 = vector.shape_cast %369 : vector<1x1x32xf32> to vector<1x32xf32>
    %371 = arith.truncf %5 : vector<8x32xf32> to vector<8x32xbf16>
    %cst_192 = arith.constant dense<0.000000e+00> : vector<8x32xf32>
    %372 = tpu.matmul %371, %356, %cst_192 {dimension_numbers = #tpu.dot_dimension_numbers<[1], [0], [0], [1], [0, 0, 1, 1], [], []>} : vector<8x32xbf16>, vector<32x32xbf16>, vector<8x32xf32> -> vector<8x32xf32>
    %373 = vector.broadcast %358 : vector<1x32xf32> to vector<8x32xf32>
    %374 = arith.addf %372, %373 : vector<8x32xf32>
    %375 = arith.truncf %354 : vector<8x32xf32> to vector<8x32xbf16>
    %cst_193 = arith.constant dense<0.000000e+00> : vector<8x32xf32>
    %376 = tpu.matmul %375, %360, %cst_193 {dimension_numbers = #tpu.dot_dimension_numbers<[1], [0], [0], [1], [0, 0, 1, 1], [], []>} : vector<8x32xbf16>, vector<32x32xbf16>, vector<8x32xf32> -> vector<8x32xf32>
    %377 = vector.broadcast %362 : vector<1x32xf32> to vector<8x32xf32>
    %378 = arith.addf %376, %377 : vector<8x32xf32>
    %379 = arith.truncf %353 : vector<8x32xf32> to vector<8x32xbf16>
    %cst_194 = arith.constant dense<0.000000e+00> : vector<8x32xf32>
    %380 = tpu.matmul %379, %364, %cst_194 {dimension_numbers = #tpu.dot_dimension_numbers<[1], [0], [0], [1], [0, 0, 1, 1], [], []>} : vector<8x32xbf16>, vector<32x32xbf16>, vector<8x32xf32> -> vector<8x32xf32>
    %381 = vector.broadcast %366 : vector<1x32xf32> to vector<8x32xf32>
    %382 = arith.addf %380, %381 : vector<8x32xf32>
    %383 = vector.extract_strided_slice %374 {offsets = [0, 0], sizes = [8, 8], strides = [1, 1]} : vector<8x32xf32> to vector<8x8xf32>
    %384 = vector.extract_strided_slice %378 {offsets = [0, 0], sizes = [8, 8], strides = [1, 1]} : vector<8x32xf32> to vector<8x8xf32>
    %385 = vector.extract_strided_slice %382 {offsets = [0, 0], sizes = [8, 8], strides = [1, 1]} : vector<8x32xf32> to vector<8x8xf32>
    %386 = arith.truncf %383 : vector<8x8xf32> to vector<8x8xbf16>
    %387 = arith.truncf %384 : vector<8x8xf32> to vector<8x8xbf16>
    %cst_195 = arith.constant dense<0.000000e+00> : vector<8x8xf32>
    %388 = tpu.matmul %386, %387, %cst_195 {dimension_numbers = #tpu.dot_dimension_numbers<[1], [1], [0], [0], [0, 0, 1, 0], [], []>} : vector<8x8xbf16>, vector<8x8xbf16>, vector<8x8xf32> -> vector<8x8xf32>
    %cst_196 = arith.constant dense<0xFF800000> : vector<8xf32>
    %389 = vector.multi_reduction <maximumf>, %388, %cst_196 [1] : vector<8x8xf32> to vector<8xf32>
    %390 = vector.shape_cast %389 : vector<8xf32> to vector<8x1xf32>
    %391 = vector.broadcast %390 : vector<8x1xf32> to vector<8x8xf32>
    %392 = arith.subf %388, %391 : vector<8x8xf32>
    %393 = math.exp %392 : vector<8x8xf32>
    %cst_197 = arith.constant dense<0.000000e+00> : vector<8xf32>
    %394 = vector.multi_reduction <add>, %393, %cst_197 [1] : vector<8x8xf32> to vector<8xf32>
    %395 = vector.shape_cast %394 : vector<8xf32> to vector<8x1xf32>
    %396 = vector.broadcast %395 : vector<8x1xf32> to vector<8x8xf32>
    %397 = arith.divf %393, %396 : vector<8x8xf32>
    %398 = arith.truncf %397 : vector<8x8xf32> to vector<8x8xbf16>
    %399 = arith.truncf %385 : vector<8x8xf32> to vector<8x8xbf16>
    %cst_198 = arith.constant dense<0.000000e+00> : vector<8x8xf32>
    %400 = tpu.matmul %398, %399, %cst_198 {dimension_numbers = #tpu.dot_dimension_numbers<[1], [0], [0], [1], [0, 0, 1, 1], [], []>} : vector<8x8xbf16>, vector<8x8xbf16>, vector<8x8xf32> -> vector<8x8xf32>
    %401 = vector.extract_strided_slice %374 {offsets = [0, 8], sizes = [8, 8], strides = [1, 1]} : vector<8x32xf32> to vector<8x8xf32>
    %402 = vector.extract_strided_slice %378 {offsets = [0, 8], sizes = [8, 8], strides = [1, 1]} : vector<8x32xf32> to vector<8x8xf32>
    %403 = vector.extract_strided_slice %382 {offsets = [0, 8], sizes = [8, 8], strides = [1, 1]} : vector<8x32xf32> to vector<8x8xf32>
    %404 = arith.truncf %401 : vector<8x8xf32> to vector<8x8xbf16>
    %405 = arith.truncf %402 : vector<8x8xf32> to vector<8x8xbf16>
    %cst_199 = arith.constant dense<0.000000e+00> : vector<8x8xf32>
    %406 = tpu.matmul %404, %405, %cst_199 {dimension_numbers = #tpu.dot_dimension_numbers<[1], [1], [0], [0], [0, 0, 1, 0], [], []>} : vector<8x8xbf16>, vector<8x8xbf16>, vector<8x8xf32> -> vector<8x8xf32>
    %cst_200 = arith.constant dense<0xFF800000> : vector<8xf32>
    %407 = vector.multi_reduction <maximumf>, %406, %cst_200 [1] : vector<8x8xf32> to vector<8xf32>
    %408 = vector.shape_cast %407 : vector<8xf32> to vector<8x1xf32>
    %409 = vector.broadcast %408 : vector<8x1xf32> to vector<8x8xf32>
    %410 = arith.subf %406, %409 : vector<8x8xf32>
    %411 = math.exp %410 : vector<8x8xf32>
    %cst_201 = arith.constant dense<0.000000e+00> : vector<8xf32>
    %412 = vector.multi_reduction <add>, %411, %cst_201 [1] : vector<8x8xf32> to vector<8xf32>
    %413 = vector.shape_cast %412 : vector<8xf32> to vector<8x1xf32>
    %414 = vector.broadcast %413 : vector<8x1xf32> to vector<8x8xf32>
    %415 = arith.divf %411, %414 : vector<8x8xf32>
    %416 = arith.truncf %415 : vector<8x8xf32> to vector<8x8xbf16>
    %417 = arith.truncf %403 : vector<8x8xf32> to vector<8x8xbf16>
    %cst_202 = arith.constant dense<0.000000e+00> : vector<8x8xf32>
    %418 = tpu.matmul %416, %417, %cst_202 {dimension_numbers = #tpu.dot_dimension_numbers<[1], [0], [0], [1], [0, 0, 1, 1], [], []>} : vector<8x8xbf16>, vector<8x8xbf16>, vector<8x8xf32> -> vector<8x8xf32>
    %419 = vector.extract_strided_slice %374 {offsets = [0, 16], sizes = [8, 8], strides = [1, 1]} : vector<8x32xf32> to vector<8x8xf32>
    %420 = vector.extract_strided_slice %378 {offsets = [0, 16], sizes = [8, 8], strides = [1, 1]} : vector<8x32xf32> to vector<8x8xf32>
    %421 = vector.extract_strided_slice %382 {offsets = [0, 16], sizes = [8, 8], strides = [1, 1]} : vector<8x32xf32> to vector<8x8xf32>
    %422 = arith.truncf %419 : vector<8x8xf32> to vector<8x8xbf16>
    %423 = arith.truncf %420 : vector<8x8xf32> to vector<8x8xbf16>
    %cst_203 = arith.constant dense<0.000000e+00> : vector<8x8xf32>
    %424 = tpu.matmul %422, %423, %cst_203 {dimension_numbers = #tpu.dot_dimension_numbers<[1], [1], [0], [0], [0, 0, 1, 0], [], []>} : vector<8x8xbf16>, vector<8x8xbf16>, vector<8x8xf32> -> vector<8x8xf32>
    %cst_204 = arith.constant dense<0xFF800000> : vector<8xf32>
    %425 = vector.multi_reduction <maximumf>, %424, %cst_204 [1] : vector<8x8xf32> to vector<8xf32>
    %426 = vector.shape_cast %425 : vector<8xf32> to vector<8x1xf32>
    %427 = vector.broadcast %426 : vector<8x1xf32> to vector<8x8xf32>
    %428 = arith.subf %424, %427 : vector<8x8xf32>
    %429 = math.exp %428 : vector<8x8xf32>
    %cst_205 = arith.constant dense<0.000000e+00> : vector<8xf32>
    %430 = vector.multi_reduction <add>, %429, %cst_205 [1] : vector<8x8xf32> to vector<8xf32>
    %431 = vector.shape_cast %430 : vector<8xf32> to vector<8x1xf32>
    %432 = vector.broadcast %431 : vector<8x1xf32> to vector<8x8xf32>
    %433 = arith.divf %429, %432 : vector<8x8xf32>
    %434 = arith.truncf %433 : vector<8x8xf32> to vector<8x8xbf16>
    %435 = arith.truncf %421 : vector<8x8xf32> to vector<8x8xbf16>
    %cst_206 = arith.constant dense<0.000000e+00> : vector<8x8xf32>
    %436 = tpu.matmul %434, %435, %cst_206 {dimension_numbers = #tpu.dot_dimension_numbers<[1], [0], [0], [1], [0, 0, 1, 1], [], []>} : vector<8x8xbf16>, vector<8x8xbf16>, vector<8x8xf32> -> vector<8x8xf32>
    %437 = vector.extract_strided_slice %374 {offsets = [0, 24], sizes = [8, 8], strides = [1, 1]} : vector<8x32xf32> to vector<8x8xf32>
    %438 = vector.extract_strided_slice %378 {offsets = [0, 24], sizes = [8, 8], strides = [1, 1]} : vector<8x32xf32> to vector<8x8xf32>
    %439 = vector.extract_strided_slice %382 {offsets = [0, 24], sizes = [8, 8], strides = [1, 1]} : vector<8x32xf32> to vector<8x8xf32>
    %440 = arith.truncf %437 : vector<8x8xf32> to vector<8x8xbf16>
    %441 = arith.truncf %438 : vector<8x8xf32> to vector<8x8xbf16>
    %cst_207 = arith.constant dense<0.000000e+00> : vector<8x8xf32>
    %442 = tpu.matmul %440, %441, %cst_207 {dimension_numbers = #tpu.dot_dimension_numbers<[1], [1], [0], [0], [0, 0, 1, 0], [], []>} : vector<8x8xbf16>, vector<8x8xbf16>, vector<8x8xf32> -> vector<8x8xf32>
    %cst_208 = arith.constant dense<0xFF800000> : vector<8xf32>
    %443 = vector.multi_reduction <maximumf>, %442, %cst_208 [1] : vector<8x8xf32> to vector<8xf32>
    %444 = vector.shape_cast %443 : vector<8xf32> to vector<8x1xf32>
    %445 = vector.broadcast %444 : vector<8x1xf32> to vector<8x8xf32>
    %446 = arith.subf %442, %445 : vector<8x8xf32>
    %447 = math.exp %446 : vector<8x8xf32>
    %cst_209 = arith.constant dense<0.000000e+00> : vector<8xf32>
    %448 = vector.multi_reduction <add>, %447, %cst_209 [1] : vector<8x8xf32> to vector<8xf32>
    %449 = vector.shape_cast %448 : vector<8xf32> to vector<8x1xf32>
    %450 = vector.broadcast %449 : vector<8x1xf32> to vector<8x8xf32>
    %451 = arith.divf %447, %450 : vector<8x8xf32>
    %452 = arith.truncf %451 : vector<8x8xf32> to vector<8x8xbf16>
    %453 = arith.truncf %439 : vector<8x8xf32> to vector<8x8xbf16>
    %cst_210 = arith.constant dense<0.000000e+00> : vector<8x8xf32>
    %454 = tpu.matmul %452, %453, %cst_210 {dimension_numbers = #tpu.dot_dimension_numbers<[1], [0], [0], [1], [0, 0, 1, 1], [], []>} : vector<8x8xbf16>, vector<8x8xbf16>, vector<8x8xf32> -> vector<8x8xf32>
    %455 = tpu.concatenate %400, %418, %436, %454 in 1 : vector<8x8xf32>, vector<8x8xf32>, vector<8x8xf32>, vector<8x8xf32> -> vector<8x32xf32>
    %456 = arith.truncf %455 : vector<8x32xf32> to vector<8x32xbf16>
    %cst_211 = arith.constant dense<0.000000e+00> : vector<8x32xf32>
    %457 = tpu.matmul %456, %368, %cst_211 {dimension_numbers = #tpu.dot_dimension_numbers<[1], [0], [0], [1], [0, 0, 1, 1], [], []>} : vector<8x32xbf16>, vector<32x32xbf16>, vector<8x32xf32> -> vector<8x32xf32>
    %458 = vector.broadcast %370 : vector<1x32xf32> to vector<8x32xf32>
    %459 = arith.addf %457, %458 : vector<8x32xf32>
    %c0_212 = arith.constant 0 : index
    %c0_213 = arith.constant 0 : index
    %c0_214 = arith.constant 0 : index
    %460 = vector.load %arg28[%c0_212, %c0_213, %c0_214] : memref<2x1x32xf32, #tpu.memory_space<vmem>>, vector<1x1x32xf32>
    %461 = vector.shape_cast %460 : vector<1x1x32xf32> to vector<1x32xf32>
    %c0_215 = arith.constant 0 : index
    %c0_216 = arith.constant 0 : index
    %c0_217 = arith.constant 0 : index
    %462 = vector.load %arg29[%c0_215, %c0_216, %c0_217] : memref<2x1x32xf32, #tpu.memory_space<vmem>>, vector<1x1x32xf32>
    %463 = vector.shape_cast %462 : vector<1x1x32xf32> to vector<1x32xf32>
    %cst_218 = arith.constant dense<0.000000e+00> : vector<8xf32>
    %464 = vector.multi_reduction <add>, %459, %cst_218 [1] : vector<8x32xf32> to vector<8xf32>
    %465 = vector.shape_cast %464 : vector<8xf32> to vector<8x1xf32>
    %cst_219 = arith.constant 3.200000e+01 : f32
    %466 = vector.broadcast %cst_219 : f32 to vector<8x1xf32>
    %467 = arith.divf %465, %466 : vector<8x1xf32>
    %468 = vector.broadcast %467 : vector<8x1xf32> to vector<8x32xf32>
    %469 = arith.subf %459, %468 : vector<8x32xf32>
    %470 = arith.mulf %469, %469 : vector<8x32xf32>
    %cst_220 = arith.constant dense<0.000000e+00> : vector<8xf32>
    %471 = vector.multi_reduction <add>, %470, %cst_220 [1] : vector<8x32xf32> to vector<8xf32>
    %472 = vector.shape_cast %471 : vector<8xf32> to vector<8x1xf32>
    %cst_221 = arith.constant 3.200000e+01 : f32
    %473 = vector.broadcast %cst_221 : f32 to vector<8x1xf32>
    %474 = arith.divf %472, %473 : vector<8x1xf32>
    %cst_222 = arith.constant 9.99999974E-6 : f32
    %475 = vector.broadcast %cst_222 : f32 to vector<8x1xf32>
    %476 = arith.addf %474, %475 : vector<8x1xf32>
    %477 = math.rsqrt %476 : vector<8x1xf32>
    %478 = vector.broadcast %477 : vector<8x1xf32> to vector<8x32xf32>
    %479 = arith.mulf %469, %478 : vector<8x32xf32>
    %480 = vector.broadcast %461 : vector<1x32xf32> to vector<8x32xf32>
    %481 = arith.mulf %479, %480 : vector<8x32xf32>
    %482 = vector.broadcast %463 : vector<1x32xf32> to vector<8x32xf32>
    %483 = arith.addf %481, %482 : vector<8x32xf32>
    %c0_223 = arith.constant 0 : index
    %c0_224 = arith.constant 0 : index
    %c0_225 = arith.constant 0 : index
    %484 = vector.load %arg30[%c0_223, %c0_224, %c0_225] : memref<2x32x64xbf16, #tpu.memory_space<vmem>>, vector<1x32x64xbf16>
    %485 = vector.shape_cast %484 : vector<1x32x64xbf16> to vector<32x64xbf16>
    %c0_226 = arith.constant 0 : index
    %c0_227 = arith.constant 0 : index
    %c0_228 = arith.constant 0 : index
    %486 = vector.load %arg31[%c0_226, %c0_227, %c0_228] : memref<2x1x64xf32, #tpu.memory_space<vmem>>, vector<1x1x64xf32>
    %487 = vector.shape_cast %486 : vector<1x1x64xf32> to vector<1x64xf32>
    %c0_229 = arith.constant 0 : index
    %c0_230 = arith.constant 0 : index
    %c0_231 = arith.constant 0 : index
    %488 = vector.load %arg32[%c0_229, %c0_230, %c0_231] : memref<2x64x32xbf16, #tpu.memory_space<vmem>>, vector<1x64x32xbf16>
    %489 = vector.shape_cast %488 : vector<1x64x32xbf16> to vector<64x32xbf16>
    %c0_232 = arith.constant 0 : index
    %c0_233 = arith.constant 0 : index
    %c0_234 = arith.constant 0 : index
    %490 = vector.load %arg33[%c0_232, %c0_233, %c0_234] : memref<2x1x32xf32, #tpu.memory_space<vmem>>, vector<1x1x32xf32>
    %491 = vector.shape_cast %490 : vector<1x1x32xf32> to vector<1x32xf32>
    %492 = arith.truncf %483 : vector<8x32xf32> to vector<8x32xbf16>
    %cst_235 = arith.constant dense<0.000000e+00> : vector<8x64xf32>
    %493 = tpu.matmul %492, %485, %cst_235 {dimension_numbers = #tpu.dot_dimension_numbers<[1], [0], [0], [1], [0, 0, 1, 1], [], []>} : vector<8x32xbf16>, vector<32x64xbf16>, vector<8x64xf32> -> vector<8x64xf32>
    %494 = vector.broadcast %487 : vector<1x64xf32> to vector<8x64xf32>
    %495 = arith.addf %493, %494 : vector<8x64xf32>
    %cst_236 = arith.constant 0.000000e+00 : f32
    %496 = vector.broadcast %cst_236 : f32 to vector<8x64xf32>
    %497 = arith.maximumf %495, %496 : vector<8x64xf32>
    %498 = arith.truncf %497 : vector<8x64xf32> to vector<8x64xbf16>
    %cst_237 = arith.constant dense<0.000000e+00> : vector<8x32xf32>
    %499 = tpu.matmul %498, %489, %cst_237 {dimension_numbers = #tpu.dot_dimension_numbers<[1], [0], [0], [1], [0, 0, 1, 1], [], []>} : vector<8x64xbf16>, vector<64x32xbf16>, vector<8x32xf32> -> vector<8x32xf32>
    %500 = vector.broadcast %491 : vector<1x32xf32> to vector<8x32xf32>
    %501 = arith.addf %499, %500 : vector<8x32xf32>
    %502 = arith.addf %483, %501 : vector<8x32xf32>
    %c0_238 = arith.constant 0 : index
    %c0_239 = arith.constant 0 : index
    %c0_240 = arith.constant 0 : index
    %503 = vector.load %arg34[%c0_238, %c0_239, %c0_240] : memref<2x1x32xf32, #tpu.memory_space<vmem>>, vector<1x1x32xf32>
    %504 = vector.shape_cast %503 : vector<1x1x32xf32> to vector<1x32xf32>
    %c0_241 = arith.constant 0 : index
    %c0_242 = arith.constant 0 : index
    %c0_243 = arith.constant 0 : index
    %505 = vector.load %arg35[%c0_241, %c0_242, %c0_243] : memref<2x1x32xf32, #tpu.memory_space<vmem>>, vector<1x1x32xf32>
    %506 = vector.shape_cast %505 : vector<1x1x32xf32> to vector<1x32xf32>
    %cst_244 = arith.constant dense<0.000000e+00> : vector<8xf32>
    %507 = vector.multi_reduction <add>, %502, %cst_244 [1] : vector<8x32xf32> to vector<8xf32>
    %508 = vector.shape_cast %507 : vector<8xf32> to vector<8x1xf32>
    %cst_245 = arith.constant 3.200000e+01 : f32
    %509 = vector.broadcast %cst_245 : f32 to vector<8x1xf32>
    %510 = arith.divf %508, %509 : vector<8x1xf32>
    %511 = vector.broadcast %510 : vector<8x1xf32> to vector<8x32xf32>
    %512 = arith.subf %502, %511 : vector<8x32xf32>
    %513 = arith.mulf %512, %512 : vector<8x32xf32>
    %cst_246 = arith.constant dense<0.000000e+00> : vector<8xf32>
    %514 = vector.multi_reduction <add>, %513, %cst_246 [1] : vector<8x32xf32> to vector<8xf32>
    %515 = vector.shape_cast %514 : vector<8xf32> to vector<8x1xf32>
    %cst_247 = arith.constant 3.200000e+01 : f32
    %516 = vector.broadcast %cst_247 : f32 to vector<8x1xf32>
    %517 = arith.divf %515, %516 : vector<8x1xf32>
    %cst_248 = arith.constant 9.99999974E-6 : f32
    %518 = vector.broadcast %cst_248 : f32 to vector<8x1xf32>
    %519 = arith.addf %517, %518 : vector<8x1xf32>
    %520 = math.rsqrt %519 : vector<8x1xf32>
    %521 = vector.broadcast %520 : vector<8x1xf32> to vector<8x32xf32>
    %522 = arith.mulf %512, %521 : vector<8x32xf32>
    %523 = vector.broadcast %504 : vector<1x32xf32> to vector<8x32xf32>
    %524 = arith.mulf %522, %523 : vector<8x32xf32>
    %525 = vector.broadcast %506 : vector<1x32xf32> to vector<8x32xf32>
    %526 = arith.addf %524, %525 : vector<8x32xf32>
    %527 = arith.addf %526, %5 : vector<8x32xf32>
    %c1_249 = arith.constant 1 : index
    %c0_250 = arith.constant 0 : index
    %c0_251 = arith.constant 0 : index
    %528 = vector.load %arg20[%c1_249, %c0_250, %c0_251] : memref<2x32x32xbf16, #tpu.memory_space<vmem>>, vector<1x32x32xbf16>
    %529 = vector.shape_cast %528 : vector<1x32x32xbf16> to vector<32x32xbf16>
    %c1_252 = arith.constant 1 : index
    %c0_253 = arith.constant 0 : index
    %c0_254 = arith.constant 0 : index
    %530 = vector.load %arg21[%c1_252, %c0_253, %c0_254] : memref<2x1x32xf32, #tpu.memory_space<vmem>>, vector<1x1x32xf32>
    %531 = vector.shape_cast %530 : vector<1x1x32xf32> to vector<1x32xf32>
    %c1_255 = arith.constant 1 : index
    %c0_256 = arith.constant 0 : index
    %c0_257 = arith.constant 0 : index
    %532 = vector.load %arg22[%c1_255, %c0_256, %c0_257] : memref<2x32x32xbf16, #tpu.memory_space<vmem>>, vector<1x32x32xbf16>
    %533 = vector.shape_cast %532 : vector<1x32x32xbf16> to vector<32x32xbf16>
    %c1_258 = arith.constant 1 : index
    %c0_259 = arith.constant 0 : index
    %c0_260 = arith.constant 0 : index
    %534 = vector.load %arg23[%c1_258, %c0_259, %c0_260] : memref<2x1x32xf32, #tpu.memory_space<vmem>>, vector<1x1x32xf32>
    %535 = vector.shape_cast %534 : vector<1x1x32xf32> to vector<1x32xf32>
    %c1_261 = arith.constant 1 : index
    %c0_262 = arith.constant 0 : index
    %c0_263 = arith.constant 0 : index
    %536 = vector.load %arg24[%c1_261, %c0_262, %c0_263] : memref<2x32x32xbf16, #tpu.memory_space<vmem>>, vector<1x32x32xbf16>
    %537 = vector.shape_cast %536 : vector<1x32x32xbf16> to vector<32x32xbf16>
    %c1_264 = arith.constant 1 : index
    %c0_265 = arith.constant 0 : index
    %c0_266 = arith.constant 0 : index
    %538 = vector.load %arg25[%c1_264, %c0_265, %c0_266] : memref<2x1x32xf32, #tpu.memory_space<vmem>>, vector<1x1x32xf32>
    %539 = vector.shape_cast %538 : vector<1x1x32xf32> to vector<1x32xf32>
    %c1_267 = arith.constant 1 : index
    %c0_268 = arith.constant 0 : index
    %c0_269 = arith.constant 0 : index
    %540 = vector.load %arg26[%c1_267, %c0_268, %c0_269] : memref<2x32x32xbf16, #tpu.memory_space<vmem>>, vector<1x32x32xbf16>
    %541 = vector.shape_cast %540 : vector<1x32x32xbf16> to vector<32x32xbf16>
    %c1_270 = arith.constant 1 : index
    %c0_271 = arith.constant 0 : index
    %c0_272 = arith.constant 0 : index
    %542 = vector.load %arg27[%c1_270, %c0_271, %c0_272] : memref<2x1x32xf32, #tpu.memory_space<vmem>>, vector<1x1x32xf32>
    %543 = vector.shape_cast %542 : vector<1x1x32xf32> to vector<1x32xf32>
    %544 = arith.truncf %527 : vector<8x32xf32> to vector<8x32xbf16>
    %cst_273 = arith.constant dense<0.000000e+00> : vector<8x32xf32>
    %545 = tpu.matmul %544, %529, %cst_273 {dimension_numbers = #tpu.dot_dimension_numbers<[1], [0], [0], [1], [0, 0, 1, 1], [], []>} : vector<8x32xbf16>, vector<32x32xbf16>, vector<8x32xf32> -> vector<8x32xf32>
    %546 = vector.broadcast %531 : vector<1x32xf32> to vector<8x32xf32>
    %547 = arith.addf %545, %546 : vector<8x32xf32>
    %548 = arith.truncf %354 : vector<8x32xf32> to vector<8x32xbf16>
    %cst_274 = arith.constant dense<0.000000e+00> : vector<8x32xf32>
    %549 = tpu.matmul %548, %533, %cst_274 {dimension_numbers = #tpu.dot_dimension_numbers<[1], [0], [0], [1], [0, 0, 1, 1], [], []>} : vector<8x32xbf16>, vector<32x32xbf16>, vector<8x32xf32> -> vector<8x32xf32>
    %550 = vector.broadcast %535 : vector<1x32xf32> to vector<8x32xf32>
    %551 = arith.addf %549, %550 : vector<8x32xf32>
    %552 = arith.truncf %353 : vector<8x32xf32> to vector<8x32xbf16>
    %cst_275 = arith.constant dense<0.000000e+00> : vector<8x32xf32>
    %553 = tpu.matmul %552, %537, %cst_275 {dimension_numbers = #tpu.dot_dimension_numbers<[1], [0], [0], [1], [0, 0, 1, 1], [], []>} : vector<8x32xbf16>, vector<32x32xbf16>, vector<8x32xf32> -> vector<8x32xf32>
    %554 = vector.broadcast %539 : vector<1x32xf32> to vector<8x32xf32>
    %555 = arith.addf %553, %554 : vector<8x32xf32>
    %556 = vector.extract_strided_slice %547 {offsets = [0, 0], sizes = [8, 8], strides = [1, 1]} : vector<8x32xf32> to vector<8x8xf32>
    %557 = vector.extract_strided_slice %551 {offsets = [0, 0], sizes = [8, 8], strides = [1, 1]} : vector<8x32xf32> to vector<8x8xf32>
    %558 = vector.extract_strided_slice %555 {offsets = [0, 0], sizes = [8, 8], strides = [1, 1]} : vector<8x32xf32> to vector<8x8xf32>
    %559 = arith.truncf %556 : vector<8x8xf32> to vector<8x8xbf16>
    %560 = arith.truncf %557 : vector<8x8xf32> to vector<8x8xbf16>
    %cst_276 = arith.constant dense<0.000000e+00> : vector<8x8xf32>
    %561 = tpu.matmul %559, %560, %cst_276 {dimension_numbers = #tpu.dot_dimension_numbers<[1], [1], [0], [0], [0, 0, 1, 0], [], []>} : vector<8x8xbf16>, vector<8x8xbf16>, vector<8x8xf32> -> vector<8x8xf32>
    %cst_277 = arith.constant dense<0xFF800000> : vector<8xf32>
    %562 = vector.multi_reduction <maximumf>, %561, %cst_277 [1] : vector<8x8xf32> to vector<8xf32>
    %563 = vector.shape_cast %562 : vector<8xf32> to vector<8x1xf32>
    %564 = vector.broadcast %563 : vector<8x1xf32> to vector<8x8xf32>
    %565 = arith.subf %561, %564 : vector<8x8xf32>
    %566 = math.exp %565 : vector<8x8xf32>
    %cst_278 = arith.constant dense<0.000000e+00> : vector<8xf32>
    %567 = vector.multi_reduction <add>, %566, %cst_278 [1] : vector<8x8xf32> to vector<8xf32>
    %568 = vector.shape_cast %567 : vector<8xf32> to vector<8x1xf32>
    %569 = vector.broadcast %568 : vector<8x1xf32> to vector<8x8xf32>
    %570 = arith.divf %566, %569 : vector<8x8xf32>
    %571 = arith.truncf %570 : vector<8x8xf32> to vector<8x8xbf16>
    %572 = arith.truncf %558 : vector<8x8xf32> to vector<8x8xbf16>
    %cst_279 = arith.constant dense<0.000000e+00> : vector<8x8xf32>
    %573 = tpu.matmul %571, %572, %cst_279 {dimension_numbers = #tpu.dot_dimension_numbers<[1], [0], [0], [1], [0, 0, 1, 1], [], []>} : vector<8x8xbf16>, vector<8x8xbf16>, vector<8x8xf32> -> vector<8x8xf32>
    %574 = vector.extract_strided_slice %547 {offsets = [0, 8], sizes = [8, 8], strides = [1, 1]} : vector<8x32xf32> to vector<8x8xf32>
    %575 = vector.extract_strided_slice %551 {offsets = [0, 8], sizes = [8, 8], strides = [1, 1]} : vector<8x32xf32> to vector<8x8xf32>
    %576 = vector.extract_strided_slice %555 {offsets = [0, 8], sizes = [8, 8], strides = [1, 1]} : vector<8x32xf32> to vector<8x8xf32>
    %577 = arith.truncf %574 : vector<8x8xf32> to vector<8x8xbf16>
    %578 = arith.truncf %575 : vector<8x8xf32> to vector<8x8xbf16>
    %cst_280 = arith.constant dense<0.000000e+00> : vector<8x8xf32>
    %579 = tpu.matmul %577, %578, %cst_280 {dimension_numbers = #tpu.dot_dimension_numbers<[1], [1], [0], [0], [0, 0, 1, 0], [], []>} : vector<8x8xbf16>, vector<8x8xbf16>, vector<8x8xf32> -> vector<8x8xf32>
    %cst_281 = arith.constant dense<0xFF800000> : vector<8xf32>
    %580 = vector.multi_reduction <maximumf>, %579, %cst_281 [1] : vector<8x8xf32> to vector<8xf32>
    %581 = vector.shape_cast %580 : vector<8xf32> to vector<8x1xf32>
    %582 = vector.broadcast %581 : vector<8x1xf32> to vector<8x8xf32>
    %583 = arith.subf %579, %582 : vector<8x8xf32>
    %584 = math.exp %583 : vector<8x8xf32>
    %cst_282 = arith.constant dense<0.000000e+00> : vector<8xf32>
    %585 = vector.multi_reduction <add>, %584, %cst_282 [1] : vector<8x8xf32> to vector<8xf32>
    %586 = vector.shape_cast %585 : vector<8xf32> to vector<8x1xf32>
    %587 = vector.broadcast %586 : vector<8x1xf32> to vector<8x8xf32>
    %588 = arith.divf %584, %587 : vector<8x8xf32>
    %589 = arith.truncf %588 : vector<8x8xf32> to vector<8x8xbf16>
    %590 = arith.truncf %576 : vector<8x8xf32> to vector<8x8xbf16>
    %cst_283 = arith.constant dense<0.000000e+00> : vector<8x8xf32>
    %591 = tpu.matmul %589, %590, %cst_283 {dimension_numbers = #tpu.dot_dimension_numbers<[1], [0], [0], [1], [0, 0, 1, 1], [], []>} : vector<8x8xbf16>, vector<8x8xbf16>, vector<8x8xf32> -> vector<8x8xf32>
    %592 = vector.extract_strided_slice %547 {offsets = [0, 16], sizes = [8, 8], strides = [1, 1]} : vector<8x32xf32> to vector<8x8xf32>
    %593 = vector.extract_strided_slice %551 {offsets = [0, 16], sizes = [8, 8], strides = [1, 1]} : vector<8x32xf32> to vector<8x8xf32>
    %594 = vector.extract_strided_slice %555 {offsets = [0, 16], sizes = [8, 8], strides = [1, 1]} : vector<8x32xf32> to vector<8x8xf32>
    %595 = arith.truncf %592 : vector<8x8xf32> to vector<8x8xbf16>
    %596 = arith.truncf %593 : vector<8x8xf32> to vector<8x8xbf16>
    %cst_284 = arith.constant dense<0.000000e+00> : vector<8x8xf32>
    %597 = tpu.matmul %595, %596, %cst_284 {dimension_numbers = #tpu.dot_dimension_numbers<[1], [1], [0], [0], [0, 0, 1, 0], [], []>} : vector<8x8xbf16>, vector<8x8xbf16>, vector<8x8xf32> -> vector<8x8xf32>
    %cst_285 = arith.constant dense<0xFF800000> : vector<8xf32>
    %598 = vector.multi_reduction <maximumf>, %597, %cst_285 [1] : vector<8x8xf32> to vector<8xf32>
    %599 = vector.shape_cast %598 : vector<8xf32> to vector<8x1xf32>
    %600 = vector.broadcast %599 : vector<8x1xf32> to vector<8x8xf32>
    %601 = arith.subf %597, %600 : vector<8x8xf32>
    %602 = math.exp %601 : vector<8x8xf32>
    %cst_286 = arith.constant dense<0.000000e+00> : vector<8xf32>
    %603 = vector.multi_reduction <add>, %602, %cst_286 [1] : vector<8x8xf32> to vector<8xf32>
    %604 = vector.shape_cast %603 : vector<8xf32> to vector<8x1xf32>
    %605 = vector.broadcast %604 : vector<8x1xf32> to vector<8x8xf32>
    %606 = arith.divf %602, %605 : vector<8x8xf32>
    %607 = arith.truncf %606 : vector<8x8xf32> to vector<8x8xbf16>
    %608 = arith.truncf %594 : vector<8x8xf32> to vector<8x8xbf16>
    %cst_287 = arith.constant dense<0.000000e+00> : vector<8x8xf32>
    %609 = tpu.matmul %607, %608, %cst_287 {dimension_numbers = #tpu.dot_dimension_numbers<[1], [0], [0], [1], [0, 0, 1, 1], [], []>} : vector<8x8xbf16>, vector<8x8xbf16>, vector<8x8xf32> -> vector<8x8xf32>
    %610 = vector.extract_strided_slice %547 {offsets = [0, 24], sizes = [8, 8], strides = [1, 1]} : vector<8x32xf32> to vector<8x8xf32>
    %611 = vector.extract_strided_slice %551 {offsets = [0, 24], sizes = [8, 8], strides = [1, 1]} : vector<8x32xf32> to vector<8x8xf32>
    %612 = vector.extract_strided_slice %555 {offsets = [0, 24], sizes = [8, 8], strides = [1, 1]} : vector<8x32xf32> to vector<8x8xf32>
    %613 = arith.truncf %610 : vector<8x8xf32> to vector<8x8xbf16>
    %614 = arith.truncf %611 : vector<8x8xf32> to vector<8x8xbf16>
    %cst_288 = arith.constant dense<0.000000e+00> : vector<8x8xf32>
    %615 = tpu.matmul %613, %614, %cst_288 {dimension_numbers = #tpu.dot_dimension_numbers<[1], [1], [0], [0], [0, 0, 1, 0], [], []>} : vector<8x8xbf16>, vector<8x8xbf16>, vector<8x8xf32> -> vector<8x8xf32>
    %cst_289 = arith.constant dense<0xFF800000> : vector<8xf32>
    %616 = vector.multi_reduction <maximumf>, %615, %cst_289 [1] : vector<8x8xf32> to vector<8xf32>
    %617 = vector.shape_cast %616 : vector<8xf32> to vector<8x1xf32>
    %618 = vector.broadcast %617 : vector<8x1xf32> to vector<8x8xf32>
    %619 = arith.subf %615, %618 : vector<8x8xf32>
    %620 = math.exp %619 : vector<8x8xf32>
    %cst_290 = arith.constant dense<0.000000e+00> : vector<8xf32>
    %621 = vector.multi_reduction <add>, %620, %cst_290 [1] : vector<8x8xf32> to vector<8xf32>
    %622 = vector.shape_cast %621 : vector<8xf32> to vector<8x1xf32>
    %623 = vector.broadcast %622 : vector<8x1xf32> to vector<8x8xf32>
    %624 = arith.divf %620, %623 : vector<8x8xf32>
    %625 = arith.truncf %624 : vector<8x8xf32> to vector<8x8xbf16>
    %626 = arith.truncf %612 : vector<8x8xf32> to vector<8x8xbf16>
    %cst_291 = arith.constant dense<0.000000e+00> : vector<8x8xf32>
    %627 = tpu.matmul %625, %626, %cst_291 {dimension_numbers = #tpu.dot_dimension_numbers<[1], [0], [0], [1], [0, 0, 1, 1], [], []>} : vector<8x8xbf16>, vector<8x8xbf16>, vector<8x8xf32> -> vector<8x8xf32>
    %628 = tpu.concatenate %573, %591, %609, %627 in 1 : vector<8x8xf32>, vector<8x8xf32>, vector<8x8xf32>, vector<8x8xf32> -> vector<8x32xf32>
    %629 = arith.truncf %628 : vector<8x32xf32> to vector<8x32xbf16>
    %cst_292 = arith.constant dense<0.000000e+00> : vector<8x32xf32>
    %630 = tpu.matmul %629, %541, %cst_292 {dimension_numbers = #tpu.dot_dimension_numbers<[1], [0], [0], [1], [0, 0, 1, 1], [], []>} : vector<8x32xbf16>, vector<32x32xbf16>, vector<8x32xf32> -> vector<8x32xf32>
    %631 = vector.broadcast %543 : vector<1x32xf32> to vector<8x32xf32>
    %632 = arith.addf %630, %631 : vector<8x32xf32>
    %633 = arith.addf %526, %632 : vector<8x32xf32>
    %c1_293 = arith.constant 1 : index
    %c0_294 = arith.constant 0 : index
    %c0_295 = arith.constant 0 : index
    %634 = vector.load %arg28[%c1_293, %c0_294, %c0_295] : memref<2x1x32xf32, #tpu.memory_space<vmem>>, vector<1x1x32xf32>
    %635 = vector.shape_cast %634 : vector<1x1x32xf32> to vector<1x32xf32>
    %c1_296 = arith.constant 1 : index
    %c0_297 = arith.constant 0 : index
    %c0_298 = arith.constant 0 : index
    %636 = vector.load %arg29[%c1_296, %c0_297, %c0_298] : memref<2x1x32xf32, #tpu.memory_space<vmem>>, vector<1x1x32xf32>
    %637 = vector.shape_cast %636 : vector<1x1x32xf32> to vector<1x32xf32>
    %cst_299 = arith.constant dense<0.000000e+00> : vector<8xf32>
    %638 = vector.multi_reduction <add>, %633, %cst_299 [1] : vector<8x32xf32> to vector<8xf32>
    %639 = vector.shape_cast %638 : vector<8xf32> to vector<8x1xf32>
    %cst_300 = arith.constant 3.200000e+01 : f32
    %640 = vector.broadcast %cst_300 : f32 to vector<8x1xf32>
    %641 = arith.divf %639, %640 : vector<8x1xf32>
    %642 = vector.broadcast %641 : vector<8x1xf32> to vector<8x32xf32>
    %643 = arith.subf %633, %642 : vector<8x32xf32>
    %644 = arith.mulf %643, %643 : vector<8x32xf32>
    %cst_301 = arith.constant dense<0.000000e+00> : vector<8xf32>
    %645 = vector.multi_reduction <add>, %644, %cst_301 [1] : vector<8x32xf32> to vector<8xf32>
    %646 = vector.shape_cast %645 : vector<8xf32> to vector<8x1xf32>
    %cst_302 = arith.constant 3.200000e+01 : f32
    %647 = vector.broadcast %cst_302 : f32 to vector<8x1xf32>
    %648 = arith.divf %646, %647 : vector<8x1xf32>
    %cst_303 = arith.constant 9.99999974E-6 : f32
    %649 = vector.broadcast %cst_303 : f32 to vector<8x1xf32>
    %650 = arith.addf %648, %649 : vector<8x1xf32>
    %651 = math.rsqrt %650 : vector<8x1xf32>
    %652 = vector.broadcast %651 : vector<8x1xf32> to vector<8x32xf32>
    %653 = arith.mulf %643, %652 : vector<8x32xf32>
    %654 = vector.broadcast %635 : vector<1x32xf32> to vector<8x32xf32>
    %655 = arith.mulf %653, %654 : vector<8x32xf32>
    %656 = vector.broadcast %637 : vector<1x32xf32> to vector<8x32xf32>
    %657 = arith.addf %655, %656 : vector<8x32xf32>
    %c1_304 = arith.constant 1 : index
    %c0_305 = arith.constant 0 : index
    %c0_306 = arith.constant 0 : index
    %658 = vector.load %arg30[%c1_304, %c0_305, %c0_306] : memref<2x32x64xbf16, #tpu.memory_space<vmem>>, vector<1x32x64xbf16>
    %659 = vector.shape_cast %658 : vector<1x32x64xbf16> to vector<32x64xbf16>
    %c1_307 = arith.constant 1 : index
    %c0_308 = arith.constant 0 : index
    %c0_309 = arith.constant 0 : index
    %660 = vector.load %arg31[%c1_307, %c0_308, %c0_309] : memref<2x1x64xf32, #tpu.memory_space<vmem>>, vector<1x1x64xf32>
    %661 = vector.shape_cast %660 : vector<1x1x64xf32> to vector<1x64xf32>
    %c1_310 = arith.constant 1 : index
    %c0_311 = arith.constant 0 : index
    %c0_312 = arith.constant 0 : index
    %662 = vector.load %arg32[%c1_310, %c0_311, %c0_312] : memref<2x64x32xbf16, #tpu.memory_space<vmem>>, vector<1x64x32xbf16>
    %663 = vector.shape_cast %662 : vector<1x64x32xbf16> to vector<64x32xbf16>
    %c1_313 = arith.constant 1 : index
    %c0_314 = arith.constant 0 : index
    %c0_315 = arith.constant 0 : index
    %664 = vector.load %arg33[%c1_313, %c0_314, %c0_315] : memref<2x1x32xf32, #tpu.memory_space<vmem>>, vector<1x1x32xf32>
    %665 = vector.shape_cast %664 : vector<1x1x32xf32> to vector<1x32xf32>
    %666 = arith.truncf %657 : vector<8x32xf32> to vector<8x32xbf16>
    %cst_316 = arith.constant dense<0.000000e+00> : vector<8x64xf32>
    %667 = tpu.matmul %666, %659, %cst_316 {dimension_numbers = #tpu.dot_dimension_numbers<[1], [0], [0], [1], [0, 0, 1, 1], [], []>} : vector<8x32xbf16>, vector<32x64xbf16>, vector<8x64xf32> -> vector<8x64xf32>
    %668 = vector.broadcast %661 : vector<1x64xf32> to vector<8x64xf32>
    %669 = arith.addf %667, %668 : vector<8x64xf32>
    %cst_317 = arith.constant 0.000000e+00 : f32
    %670 = vector.broadcast %cst_317 : f32 to vector<8x64xf32>
    %671 = arith.maximumf %669, %670 : vector<8x64xf32>
    %672 = arith.truncf %671 : vector<8x64xf32> to vector<8x64xbf16>
    %cst_318 = arith.constant dense<0.000000e+00> : vector<8x32xf32>
    %673 = tpu.matmul %672, %663, %cst_318 {dimension_numbers = #tpu.dot_dimension_numbers<[1], [0], [0], [1], [0, 0, 1, 1], [], []>} : vector<8x64xbf16>, vector<64x32xbf16>, vector<8x32xf32> -> vector<8x32xf32>
    %674 = vector.broadcast %665 : vector<1x32xf32> to vector<8x32xf32>
    %675 = arith.addf %673, %674 : vector<8x32xf32>
    %676 = arith.addf %657, %675 : vector<8x32xf32>
    %c1_319 = arith.constant 1 : index
    %c0_320 = arith.constant 0 : index
    %c0_321 = arith.constant 0 : index
    %677 = vector.load %arg34[%c1_319, %c0_320, %c0_321] : memref<2x1x32xf32, #tpu.memory_space<vmem>>, vector<1x1x32xf32>
    %678 = vector.shape_cast %677 : vector<1x1x32xf32> to vector<1x32xf32>
    %c1_322 = arith.constant 1 : index
    %c0_323 = arith.constant 0 : index
    %c0_324 = arith.constant 0 : index
    %679 = vector.load %arg35[%c1_322, %c0_323, %c0_324] : memref<2x1x32xf32, #tpu.memory_space<vmem>>, vector<1x1x32xf32>
    %680 = vector.shape_cast %679 : vector<1x1x32xf32> to vector<1x32xf32>
    %cst_325 = arith.constant dense<0.000000e+00> : vector<8xf32>
    %681 = vector.multi_reduction <add>, %676, %cst_325 [1] : vector<8x32xf32> to vector<8xf32>
    %682 = vector.shape_cast %681 : vector<8xf32> to vector<8x1xf32>
    %cst_326 = arith.constant 3.200000e+01 : f32
    %683 = vector.broadcast %cst_326 : f32 to vector<8x1xf32>
    %684 = arith.divf %682, %683 : vector<8x1xf32>
    %685 = vector.broadcast %684 : vector<8x1xf32> to vector<8x32xf32>
    %686 = arith.subf %676, %685 : vector<8x32xf32>
    %687 = arith.mulf %686, %686 : vector<8x32xf32>
    %cst_327 = arith.constant dense<0.000000e+00> : vector<8xf32>
    %688 = vector.multi_reduction <add>, %687, %cst_327 [1] : vector<8x32xf32> to vector<8xf32>
    %689 = vector.shape_cast %688 : vector<8xf32> to vector<8x1xf32>
    %cst_328 = arith.constant 3.200000e+01 : f32
    %690 = vector.broadcast %cst_328 : f32 to vector<8x1xf32>
    %691 = arith.divf %689, %690 : vector<8x1xf32>
    %cst_329 = arith.constant 9.99999974E-6 : f32
    %692 = vector.broadcast %cst_329 : f32 to vector<8x1xf32>
    %693 = arith.addf %691, %692 : vector<8x1xf32>
    %694 = math.rsqrt %693 : vector<8x1xf32>
    %695 = vector.broadcast %694 : vector<8x1xf32> to vector<8x32xf32>
    %696 = arith.mulf %686, %695 : vector<8x32xf32>
    %697 = vector.broadcast %678 : vector<1x32xf32> to vector<8x32xf32>
    %698 = arith.mulf %696, %697 : vector<8x32xf32>
    %699 = vector.broadcast %680 : vector<1x32xf32> to vector<8x32xf32>
    %700 = arith.addf %698, %699 : vector<8x32xf32>
    %c0_330 = arith.constant 0 : index
    %c0_331 = arith.constant 0 : index
    %701 = vector.load %arg36[%c0_330, %c0_331] : memref<1x32xf32, #tpu.memory_space<vmem>>, vector<1x32xf32>
    %c0_332 = arith.constant 0 : index
    %c0_333 = arith.constant 0 : index
    %702 = vector.load %arg37[%c0_332, %c0_333] : memref<1x32xf32, #tpu.memory_space<vmem>>, vector<1x32xf32>
    %cst_334 = arith.constant dense<0.000000e+00> : vector<8xf32>
    %703 = vector.multi_reduction <add>, %700, %cst_334 [1] : vector<8x32xf32> to vector<8xf32>
    %704 = vector.shape_cast %703 : vector<8xf32> to vector<8x1xf32>
    %cst_335 = arith.constant 3.200000e+01 : f32
    %705 = vector.broadcast %cst_335 : f32 to vector<8x1xf32>
    %706 = arith.divf %704, %705 : vector<8x1xf32>
    %707 = vector.broadcast %706 : vector<8x1xf32> to vector<8x32xf32>
    %708 = arith.subf %700, %707 : vector<8x32xf32>
    %709 = arith.mulf %708, %708 : vector<8x32xf32>
    %cst_336 = arith.constant dense<0.000000e+00> : vector<8xf32>
    %710 = vector.multi_reduction <add>, %709, %cst_336 [1] : vector<8x32xf32> to vector<8xf32>
    %711 = vector.shape_cast %710 : vector<8xf32> to vector<8x1xf32>
    %cst_337 = arith.constant 3.200000e+01 : f32
    %712 = vector.broadcast %cst_337 : f32 to vector<8x1xf32>
    %713 = arith.divf %711, %712 : vector<8x1xf32>
    %cst_338 = arith.constant 9.99999974E-6 : f32
    %714 = vector.broadcast %cst_338 : f32 to vector<8x1xf32>
    %715 = arith.addf %713, %714 : vector<8x1xf32>
    %716 = math.rsqrt %715 : vector<8x1xf32>
    %717 = vector.broadcast %716 : vector<8x1xf32> to vector<8x32xf32>
    %718 = arith.mulf %708, %717 : vector<8x32xf32>
    %719 = vector.broadcast %701 : vector<1x32xf32> to vector<8x32xf32>
    %720 = arith.mulf %718, %719 : vector<8x32xf32>
    %721 = vector.broadcast %702 : vector<1x32xf32> to vector<8x32xf32>
    %722 = arith.addf %720, %721 : vector<8x32xf32>
    %c0_339 = arith.constant 0 : index
    %c0_340 = arith.constant 0 : index
    %c0_341 = arith.constant 0 : index
    %723 = vector.load %arg38[%c0_339, %c0_340, %c0_341] : memref<1x8x32xf32, #tpu.memory_space<vmem>>, vector<1x8x32xf32>
    %724 = vector.shape_cast %723 : vector<1x8x32xf32> to vector<8x32xf32>
    %725 = vector.shape_cast %722 : vector<8x32xf32> to vector<1x8x32xf32>
    tpu.vector_store %arg38[%c0_339, %c0_340, %c0_341], %725 {strides = array<i32>} : memref<1x8x32xf32, #tpu.memory_space<vmem>>, vector<1x8x32xf32>,
    %c0_342 = arith.constant 0 : index
    %c0_343 = arith.constant 0 : index
    %c0_344 = arith.constant 0 : index
    %726 = vector.load %arg39[%c0_342, %c0_343, %c0_344] : memref<1x8x32xf32, #tpu.memory_space<vmem>>, vector<1x8x32xf32>
    %727 = vector.shape_cast %726 : vector<1x8x32xf32> to vector<8x32xf32>
    %728 = vector.shape_cast %353 : vector<8x32xf32> to vector<1x8x32xf32>
    tpu.vector_store %arg39[%c0_342, %c0_343, %c0_344], %728 {strides = array<i32>} : memref<1x8x32xf32, #tpu.memory_space<vmem>>, vector<1x8x32xf32>,
    return
  }
  func.func @transform_0(%arg0: i32) -> (i32, i32, i32) {
    %c0_i32 = arith.constant 0 : i32
    %c0_i32_0 = arith.constant 0 : i32
    %c0_i32_1 = arith.constant 0 : i32
    return %arg0, %c0_i32, %c0_i32_0 : i32, i32, i32
  }
  func.func @transform_1(%arg0: i32) -> (i32, i32, i32) {
    %c0_i32 = arith.constant 0 : i32
    %c0_i32_0 = arith.constant 0 : i32
    %c0_i32_1 = arith.constant 0 : i32
    return %arg0, %c0_i32, %c0_i32_0 : i32, i32, i32
  }
  func.func @transform_2(%arg0: i32) -> (i32, i32, i32) {
    %c0_i32 = arith.constant 0 : i32
    %c0_i32_0 = arith.constant 0 : i32
    %c0_i32_1 = arith.constant 0 : i32
    return %arg0, %c0_i32, %c0_i32_0 : i32, i32, i32
  }
  func.func @transform_3(%arg0: i32) -> (i32, i32, i32) {
    %c0_i32 = arith.constant 0 : i32
    %c0_i32_0 = arith.constant 0 : i32
    %c0_i32_1 = arith.constant 0 : i32
    %c0_i32_2 = arith.constant 0 : i32
    return %c0_i32, %c0_i32_0, %c0_i32_1 : i32, i32, i32
  }
  func.func @transform_4(%arg0: i32) -> (i32, i32, i32) {
    %c0_i32 = arith.constant 0 : i32
    %c0_i32_0 = arith.constant 0 : i32
    %c0_i32_1 = arith.constant 0 : i32
    %c0_i32_2 = arith.constant 0 : i32
    return %c0_i32, %c0_i32_0, %c0_i32_1 : i32, i32, i32
  }
  func.func @transform_5(%arg0: i32) -> (i32, i32, i32) {
    %c0_i32 = arith.constant 0 : i32
    %c0_i32_0 = arith.constant 0 : i32
    %c0_i32_1 = arith.constant 0 : i32
    %c0_i32_2 = arith.constant 0 : i32
    return %c0_i32, %c0_i32_0, %c0_i32_1 : i32, i32, i32
  }
  func.func @transform_6(%arg0: i32) -> (i32, i32, i32) {
    %c0_i32 = arith.constant 0 : i32
    %c0_i32_0 = arith.constant 0 : i32
    %c0_i32_1 = arith.constant 0 : i32
    %c0_i32_2 = arith.constant 0 : i32
    return %c0_i32, %c0_i32_0, %c0_i32_1 : i32, i32, i32
  }
  func.func @transform_7(%arg0: i32) -> (i32, i32, i32) {
    %c0_i32 = arith.constant 0 : i32
    %c0_i32_0 = arith.constant 0 : i32
    %c0_i32_1 = arith.constant 0 : i32
    %c0_i32_2 = arith.constant 0 : i32
    return %c0_i32, %c0_i32_0, %c0_i32_1 : i32, i32, i32
  }
  func.func @transform_8(%arg0: i32) -> (i32, i32, i32) {
    %c0_i32 = arith.constant 0 : i32
    %c0_i32_0 = arith.constant 0 : i32
    %c0_i32_1 = arith.constant 0 : i32
    %c0_i32_2 = arith.constant 0 : i32
    return %c0_i32, %c0_i32_0, %c0_i32_1 : i32, i32, i32
  }
  func.func @transform_9(%arg0: i32) -> (i32, i32, i32) {
    %c0_i32 = arith.constant 0 : i32
    %c0_i32_0 = arith.constant 0 : i32
    %c0_i32_1 = arith.constant 0 : i32
    %c0_i32_2 = arith.constant 0 : i32
    return %c0_i32, %c0_i32_0, %c0_i32_1 : i32, i32, i32
  }
  func.func @transform_10(%arg0: i32) -> (i32, i32, i32) {
    %c0_i32 = arith.constant 0 : i32
    %c0_i32_0 = arith.constant 0 : i32
    %c0_i32_1 = arith.constant 0 : i32
    %c0_i32_2 = arith.constant 0 : i32
    return %c0_i32, %c0_i32_0, %c0_i32_1 : i32, i32, i32
  }
  func.func @transform_11(%arg0: i32) -> (i32, i32, i32) {
    %c0_i32 = arith.constant 0 : i32
    %c0_i32_0 = arith.constant 0 : i32
    %c0_i32_1 = arith.constant 0 : i32
    %c0_i32_2 = arith.constant 0 : i32
    return %c0_i32, %c0_i32_0, %c0_i32_1 : i32, i32, i32
  }
  func.func @transform_12(%arg0: i32) -> (i32, i32, i32) {
    %c0_i32 = arith.constant 0 : i32
    %c0_i32_0 = arith.constant 0 : i32
    %c0_i32_1 = arith.constant 0 : i32
    %c0_i32_2 = arith.constant 0 : i32
    return %c0_i32, %c0_i32_0, %c0_i32_1 : i32, i32, i32
  }
  func.func @transform_13(%arg0: i32) -> (i32, i32, i32) {
    %c0_i32 = arith.constant 0 : i32
    %c0_i32_0 = arith.constant 0 : i32
    %c0_i32_1 = arith.constant 0 : i32
    %c0_i32_2 = arith.constant 0 : i32
    return %c0_i32, %c0_i32_0, %c0_i32_1 : i32, i32, i32
  }
  func.func @transform_14(%arg0: i32) -> (i32, i32, i32) {
    %c0_i32 = arith.constant 0 : i32
    %c0_i32_0 = arith.constant 0 : i32
    %c0_i32_1 = arith.constant 0 : i32
    %c0_i32_2 = arith.constant 0 : i32
    return %c0_i32, %c0_i32_0, %c0_i32_1 : i32, i32, i32
  }
  func.func @transform_15(%arg0: i32) -> (i32, i32, i32) {
    %c0_i32 = arith.constant 0 : i32
    %c0_i32_0 = arith.constant 0 : i32
    %c0_i32_1 = arith.constant 0 : i32
    %c0_i32_2 = arith.constant 0 : i32
    return %c0_i32, %c0_i32_0, %c0_i32_1 : i32, i32, i32
  }
  func.func @transform_16(%arg0: i32) -> (i32, i32, i32) {
    %c0_i32 = arith.constant 0 : i32
    %c0_i32_0 = arith.constant 0 : i32
    %c0_i32_1 = arith.constant 0 : i32
    %c0_i32_2 = arith.constant 0 : i32
    return %c0_i32, %c0_i32_0, %c0_i32_1 : i32, i32, i32
  }
  func.func @transform_17(%arg0: i32) -> (i32, i32, i32) {
    %c0_i32 = arith.constant 0 : i32
    %c0_i32_0 = arith.constant 0 : i32
    %c0_i32_1 = arith.constant 0 : i32
    %c0_i32_2 = arith.constant 0 : i32
    return %c0_i32, %c0_i32_0, %c0_i32_1 : i32, i32, i32
  }
  func.func @transform_18(%arg0: i32) -> (i32, i32, i32) {
    %c0_i32 = arith.constant 0 : i32
    %c0_i32_0 = arith.constant 0 : i32
    %c0_i32_1 = arith.constant 0 : i32
    %c0_i32_2 = arith.constant 0 : i32
    return %c0_i32, %c0_i32_0, %c0_i32_1 : i32, i32, i32
  }
  func.func @transform_19(%arg0: i32) -> (i32, i32, i32) {
    %c0_i32 = arith.constant 0 : i32
    %c0_i32_0 = arith.constant 0 : i32
    %c0_i32_1 = arith.constant 0 : i32
    %c0_i32_2 = arith.constant 0 : i32
    return %c0_i32, %c0_i32_0, %c0_i32_1 : i32, i32, i32
  }
  func.func @transform_20(%arg0: i32) -> (i32, i32, i32) {
    %c0_i32 = arith.constant 0 : i32
    %c0_i32_0 = arith.constant 0 : i32
    %c0_i32_1 = arith.constant 0 : i32
    %c0_i32_2 = arith.constant 0 : i32
    return %c0_i32, %c0_i32_0, %c0_i32_1 : i32, i32, i32
  }
  func.func @transform_21(%arg0: i32) -> (i32, i32, i32) {
    %c0_i32 = arith.constant 0 : i32
    %c0_i32_0 = arith.constant 0 : i32
    %c0_i32_1 = arith.constant 0 : i32
    %c0_i32_2 = arith.constant 0 : i32
    return %c0_i32, %c0_i32_0, %c0_i32_1 : i32, i32, i32
  }
  func.func @transform_22(%arg0: i32) -> (i32, i32, i32) {
    %c0_i32 = arith.constant 0 : i32
    %c0_i32_0 = arith.constant 0 : i32
    %c0_i32_1 = arith.constant 0 : i32
    %c0_i32_2 = arith.constant 0 : i32
    return %c0_i32, %c0_i32_0, %c0_i32_1 : i32, i32, i32
  }
  func.func @transform_23(%arg0: i32) -> (i32, i32, i32) {
    %c0_i32 = arith.constant 0 : i32
    %c0_i32_0 = arith.constant 0 : i32
    %c0_i32_1 = arith.constant 0 : i32
    %c0_i32_2 = arith.constant 0 : i32
    return %c0_i32, %c0_i32_0, %c0_i32_1 : i32, i32, i32
  }
  func.func @transform_24(%arg0: i32) -> (i32, i32, i32) {
    %c0_i32 = arith.constant 0 : i32
    %c0_i32_0 = arith.constant 0 : i32
    %c0_i32_1 = arith.constant 0 : i32
    %c0_i32_2 = arith.constant 0 : i32
    return %c0_i32, %c0_i32_0, %c0_i32_1 : i32, i32, i32
  }
  func.func @transform_25(%arg0: i32) -> (i32, i32, i32) {
    %c0_i32 = arith.constant 0 : i32
    %c0_i32_0 = arith.constant 0 : i32
    %c0_i32_1 = arith.constant 0 : i32
    %c0_i32_2 = arith.constant 0 : i32
    return %c0_i32, %c0_i32_0, %c0_i32_1 : i32, i32, i32
  }
  func.func @transform_26(%arg0: i32) -> (i32, i32, i32) {
    %c0_i32 = arith.constant 0 : i32
    %c0_i32_0 = arith.constant 0 : i32
    %c0_i32_1 = arith.constant 0 : i32
    %c0_i32_2 = arith.constant 0 : i32
    return %c0_i32, %c0_i32_0, %c0_i32_1 : i32, i32, i32
  }
  func.func @transform_27(%arg0: i32) -> (i32, i32, i32) {
    %c0_i32 = arith.constant 0 : i32
    %c0_i32_0 = arith.constant 0 : i32
    %c0_i32_1 = arith.constant 0 : i32
    %c0_i32_2 = arith.constant 0 : i32
    return %c0_i32, %c0_i32_0, %c0_i32_1 : i32, i32, i32
  }
  func.func @transform_28(%arg0: i32) -> (i32, i32, i32) {
    %c0_i32 = arith.constant 0 : i32
    %c0_i32_0 = arith.constant 0 : i32
    %c0_i32_1 = arith.constant 0 : i32
    %c0_i32_2 = arith.constant 0 : i32
    return %c0_i32, %c0_i32_0, %c0_i32_1 : i32, i32, i32
  }
  func.func @transform_29(%arg0: i32) -> (i32, i32, i32) {
    %c0_i32 = arith.constant 0 : i32
    %c0_i32_0 = arith.constant 0 : i32
    %c0_i32_1 = arith.constant 0 : i32
    %c0_i32_2 = arith.constant 0 : i32
    return %c0_i32, %c0_i32_0, %c0_i32_1 : i32, i32, i32
  }
  func.func @transform_30(%arg0: i32) -> (i32, i32, i32) {
    %c0_i32 = arith.constant 0 : i32
    %c0_i32_0 = arith.constant 0 : i32
    %c0_i32_1 = arith.constant 0 : i32
    %c0_i32_2 = arith.constant 0 : i32
    return %c0_i32, %c0_i32_0, %c0_i32_1 : i32, i32, i32
  }
  func.func @transform_31(%arg0: i32) -> (i32, i32, i32) {
    %c0_i32 = arith.constant 0 : i32
    %c0_i32_0 = arith.constant 0 : i32
    %c0_i32_1 = arith.constant 0 : i32
    %c0_i32_2 = arith.constant 0 : i32
    return %c0_i32, %c0_i32_0, %c0_i32_1 : i32, i32, i32
  }
  func.func @transform_32(%arg0: i32) -> (i32, i32, i32) {
    %c0_i32 = arith.constant 0 : i32
    %c0_i32_0 = arith.constant 0 : i32
    %c0_i32_1 = arith.constant 0 : i32
    %c0_i32_2 = arith.constant 0 : i32
    return %c0_i32, %c0_i32_0, %c0_i32_1 : i32, i32, i32
  }
  func.func @transform_33(%arg0: i32) -> (i32, i32, i32) {
    %c0_i32 = arith.constant 0 : i32
    %c0_i32_0 = arith.constant 0 : i32
    %c0_i32_1 = arith.constant 0 : i32
    %c0_i32_2 = arith.constant 0 : i32
    return %c0_i32, %c0_i32_0, %c0_i32_1 : i32, i32, i32
  }
  func.func @transform_34(%arg0: i32) -> (i32, i32, i32) {
    %c0_i32 = arith.constant 0 : i32
    %c0_i32_0 = arith.constant 0 : i32
    %c0_i32_1 = arith.constant 0 : i32
    %c0_i32_2 = arith.constant 0 : i32
    return %c0_i32, %c0_i32_0, %c0_i32_1 : i32, i32, i32
  }
  func.func @transform_35(%arg0: i32) -> (i32, i32) {
    %c0_i32 = arith.constant 0 : i32
    %c0_i32_0 = arith.constant 0 : i32
    %c0_i32_1 = arith.constant 0 : i32
    return %c0_i32, %c0_i32_0 : i32, i32
  }
  func.func @transform_36(%arg0: i32) -> (i32, i32) {
    %c0_i32 = arith.constant 0 : i32
    %c0_i32_0 = arith.constant 0 : i32
    %c0_i32_1 = arith.constant 0 : i32
    return %c0_i32, %c0_i32_0 : i32, i32
  }
  func.func @transform_37(%arg0: i32) -> (i32, i32, i32) {
    %c0_i32 = arith.constant 0 : i32
    %c0_i32_0 = arith.constant 0 : i32
    %c0_i32_1 = arith.constant 0 : i32
    return %arg0, %c0_i32, %c0_i32_0 : i32, i32, i32
  }
  func.func @transform_38(%arg0: i32) -> (i32, i32, i32) {
    %c0_i32 = arith.constant 0 : i32
    %c0_i32_0 = arith.constant 0 : i32
    %c0_i32_1 = arith.constant 0 : i32
    return %arg0, %c0_i32, %c0_i32_0 : i32, i32, i32
  }
}

</mosaic_0001>

<llo_original>
// kernel: tpu_custom_call.1
$region0: #{tpu_custom_call.1}
  #allocation0 [shape = 'u32[]', space=smem, size = 0x4, offset = 0x4, fixed_abs, tag = 'smem constant byte address 0x4 - core index']
  #allocation1 [shape = 'u32[144,128]{1,0:T(1,128)}', space=vmem, size = 0x12000, scoped, tag = 'internal scratch']
  %s0 = inlined_call_operand.smem [shape: u32[39], index: -1, kind: input, shape index: {}]
  %s1 = sld [smem:[%s0]]
  %s2 = scalar_lea.smem %s0, 1
  %s3 = sld [smem:[%s2]]
  %s4 = scalar_lea.smem %s0, 2
  %s5 = sld [smem:[%s4]]
  %s6 = scalar_lea.smem %s0, 3
  %s7 = sld [smem:[%s6]]
  %s8 = scalar_lea.smem %s0, 4
  %s9 = sld [smem:[%s8]]
  %s10 = scalar_lea.smem %s0, 5
  %s11 = sld [smem:[%s10]]
  %s12 = scalar_lea.smem %s0, 6
  %s13 = sld [smem:[%s12]]
  %s14 = scalar_lea.smem %s0, 7
  %s15 = sld [smem:[%s14]]
  %s16 = scalar_lea.smem %s0, 8
  %s17 = sld [smem:[%s16]]
  %s18 = scalar_lea.smem %s0, 9
  %s19 = sld [smem:[%s18]]
  %s20 = scalar_lea.smem %s0, 10
  %s21 = sld [smem:[%s20]]
  %s22 = scalar_lea.smem %s0, 11
  %s23 = sld [smem:[%s22]]
  %s24 = scalar_lea.smem %s0, 12
  %s25 = sld [smem:[%s24]]
  %s26 = scalar_lea.smem %s0, 13
  %s27 = sld [smem:[%s26]]
  %s28 = scalar_lea.smem %s0, 14
  %s29 = sld [smem:[%s28]]
  %s30 = scalar_lea.smem %s0, 15
  %s31 = sld [smem:[%s30]]
  %s32 = scalar_lea.smem %s0, 16
  %s33 = sld [smem:[%s32]]
  %s34 = scalar_lea.smem %s0, 17
  %s35 = sld [smem:[%s34]]
  %s36 = scalar_lea.smem %s0, 18
  %s37 = sld [smem:[%s36]]
  %s38 = scalar_lea.smem %s0, 19
  %s39 = sld [smem:[%s38]]
  %s40 = scalar_lea.smem %s0, 20
  %s41 = sld [smem:[%s40]]
  %s42 = scalar_lea.smem %s0, 21
  %s43 = sld [smem:[%s42]]
  %s44 = scalar_lea.smem %s0, 22
  %s45 = sld [smem:[%s44]]
  %s46 = scalar_lea.smem %s0, 23
  %s47 = sld [smem:[%s46]]
  %s48 = scalar_lea.smem %s0, 24
  %s49 = sld [smem:[%s48]]
  %s50 = scalar_lea.smem %s0, 25
  %s51 = sld [smem:[%s50]]
  %s52 = scalar_lea.smem %s0, 26
  %s53 = sld [smem:[%s52]]
  %s54 = scalar_lea.smem %s0, 27
  %s55 = sld [smem:[%s54]]
  %s56 = scalar_lea.smem %s0, 28
  %s57 = sld [smem:[%s56]]
  %s58 = scalar_lea.smem %s0, 29
  %s59 = sld [smem:[%s58]]
  %s60 = scalar_lea.smem %s0, 30
  %s61 = sld [smem:[%s60]]
  %s62 = scalar_lea.smem %s0, 31
  %s63 = sld [smem:[%s62]]
  %s64 = scalar_lea.smem %s0, 32
  %s65 = sld [smem:[%s64]]
  %s66 = scalar_lea.smem %s0, 33
  %s67 = sld [smem:[%s66]]
  %s68 = scalar_lea.smem %s0, 34
  %s69 = sld [smem:[%s68]]
  %s70 = scalar_lea.smem %s0, 35
  %s71 = sld [smem:[%s70]]
  %s72 = scalar_lea.smem %s0, 36
  %s73 = sld [smem:[%s72]]
  %s74 = scalar_lea.smem %s0, 37
  %s75 = sld [smem:[%s74]]
  %s76 = scalar_lea.smem %s0, 38
  %s77 = sld [smem:[%s76]]
  %78 = xla_tuple %s75, %s77
  %s79 = sld [smem:[#allocation0]]
  $region265: #{tpu_custom_call.1} parent=0
    _
  %s81 = ssub.s32 1, %s79
  %s82 = scalar_select 0, %s81, %s79
  $region1: #{tpu_custom_call.1} parent=0
    #allocation2 [shape = 'u8[8192]{0}', space=vmem, size = 0x2000, scoped, tag = 'input window, operand 0']
    #allocation3 [shape = 's32[2]{0}', space=sflag, size = 0x8, scoped, tag = 'scoped memory for tpu_custom_call.1']
    #allocation4 [shape = 's32[2]{0}', space=sflag, size = 0x8, scoped, tag = 'scoped memory for tpu_custom_call.1']
    #allocation5 [shape = 'u8[8192]{0}', space=vmem, size = 0x2000, scoped, tag = 'input window, operand 1']
    #allocation6 [shape = 's32[2]{0}', space=sflag, size = 0x8, scoped, tag = 'scoped memory for tpu_custom_call.1']
    #allocation7 [shape = 'u8[8192]{0}', space=vmem, size = 0x2000, scoped, tag = 'input window, operand 2']
    #allocation8 [shape = 'u8[1024]{0}', space=vmem, size = 0x400, scoped, tag = 'input window, operand 4, single buffered']
    #allocation9 [shape = 's32[1]{0}', space=sflag, size = 0x4, scoped, tag = 'scoped memory for tpu_custom_call.1']
    #allocation10 [shape = 'u8[1024]{0}', space=vmem, size = 0x400, scoped, tag = 'input window, operand 6, single buffered']
    #allocation11 [shape = 'u8[1024]{0}', space=vmem, size = 0x400, scoped, tag = 'input window, operand 8, single buffered']
    #allocation12 [shape = 's32[1]{0}', space=sflag, size = 0x4, scoped, tag = 'scoped memory for tpu_custom_call.1']
    #allocation13 [shape = 'u8[1024]{0}', space=vmem, size = 0x400, scoped, tag = 'input window, operand 10, single buffered']
    #allocation14 [shape = 'u8[1024]{0}', space=vmem, size = 0x400, scoped, tag = 'input window, operand 11, single buffered']
    #allocation15 [shape = 's32[1]{0}', space=sflag, size = 0x4, scoped, tag = 'scoped memory for tpu_custom_call.1']
    #allocation16 [shape = 'u8[1024]{0}', space=vmem, size = 0x400, scoped, tag = 'input window, operand 12, single buffered']
    #allocation17 [shape = 'u8[1024]{0}', space=vmem, size = 0x400, scoped, tag = 'input window, operand 14, single buffered']
    #allocation18 [shape = 's32[1]{0}', space=sflag, size = 0x4, scoped, tag = 'scoped memory for tpu_custom_call.1']
    #allocation19 [shape = 'u8[1024]{0}', space=vmem, size = 0x400, scoped, tag = 'input window, operand 16, single buffered']
    #allocation20 [shape = 'u8[1024]{0}', space=vmem, size = 0x400, scoped, tag = 'input window, operand 17, single buffered']
    #allocation21 [shape = 's32[1]{0}', space=sflag, size = 0x4, scoped, tag = 'scoped memory for tpu_custom_call.1']
    #allocation22 [shape = 'u8[1024]{0}', space=vmem, size = 0x400, scoped, tag = 'input window, operand 20, single buffered']
    #allocation23 [shape = 'u8[16384]{0}', space=vmem, size = 0x4000, scoped, tag = 'input window, operand 21, single buffered']
    #allocation24 [shape = 's32[1]{0}', space=sflag, size = 0x4, scoped, tag = 'scoped memory for tpu_custom_call.1']
    #allocation25 [shape = 'u8[1024]{0}', space=vmem, size = 0x400, scoped, tag = 'input window, operand 22, single buffered']
    #allocation26 [shape = 'u8[16384]{0}', space=vmem, size = 0x4000, scoped, tag = 'input window, operand 23, single buffered']
    #allocation27 [shape = 's32[1]{0}', space=sflag, size = 0x4, scoped, tag = 'scoped memory for tpu_custom_call.1']
    #allocation28 [shape = 'u8[1024]{0}', space=vmem, size = 0x400, scoped, tag = 'input window, operand 24, single buffered']
    #allocation29 [shape = 'u8[16384]{0}', space=vmem, size = 0x4000, scoped, tag = 'input window, operand 25, single buffered']
    #allocation30 [shape = 's32[1]{0}', space=sflag, size = 0x4, scoped, tag = 'scoped memory for tpu_custom_call.1']
    #allocation31 [shape = 'u8[1024]{0}', space=vmem, size = 0x400, scoped, tag = 'input window, operand 26, single buffered']
    #allocation32 [shape = 'u8[8192]{0}', space=vmem, size = 0x2000, scoped, tag = 'output window, operand 0']
    #allocation33 [shape = 'u8[8192]{0}', space=vmem, size = 0x2000, scoped, tag = 'output window, operand 1']
    #allocation34 [shape = 's32[2]{0}', space=sflag, size = 0x8, scoped, tag = 'scoped memory for tpu_custom_call.1']
    %83 = vsyncpa [#allocation3], 0
    %s84 = scalar_lea.sflag [#allocation3], 1
    %85 = vsyncpa %s84, 0
    %86 = vsyncpa [#allocation6], 0
    %s87 = scalar_lea.sflag [#allocation6], 1
    %88 = vsyncpa %s87, 0
    %89 = vsyncpa [#allocation9], 0
    %90 = vsyncpa [#allocation12], 0
    %91 = vsyncpa [#allocation15], 0
    %92 = vsyncpa [#allocation18], 0
    %93 = vsyncpa [#allocation21], 0
    %94 = vsyncpa [#allocation24], 0
    %95 = vsyncpa [#allocation27], 0
    %96 = vsyncpa [#allocation30], 0
    %97 = vsyncpa [#allocation4], 0
    %s98 = scalar_lea.sflag [#allocation4], 1
    %99 = vsyncpa %s98, 0
    %100 = vsyncpa [#allocation34], 0
    %s101 = scalar_lea.sflag [#allocation34], 1
    %102 = vsyncpa %s101, 0
    loop: start=0, step=1, limit=4
    $region2: #{tpu_custom_call.1} parent=1 // loop_pre_header
      _
    $region3: #{tpu_custom_call.1} parent=1 // loop_header
      %s104 = sphi 0, %s108
      %p105 = scmp.ge.s32.totalorder %s104, 4
      %s114 = sphi 0, %s116
      %s117 = sphi 0, %s114
      %s118 = sphi 0, %s117
      %s134 = sphi 0, %s118
      %s140 = sphi 0, %s142
      %s143 = sphi 0, %s140
      %s144 = sphi 0, %s143
      %s160 = sphi 0, %s144
      %s166 = sphi 0, %s168
      %s169 = sphi 0, %s166
      %s170 = sphi 0, %s169
      %s186 = sphi 0, %s170
      %s190 = sphi 0, %s190
      %s192 = sphi 0, %s190
      %s193 = sphi 0, %s192
      %s207 = sphi 0, %s193
      %s211 = sphi 0, %s211
      %s213 = sphi 0, %s211
      %s214 = sphi 0, %s213
      %s228 = sphi 0, %s214
      %s232 = sphi 0, %s232
      %s234 = sphi 0, %s232
      %s235 = sphi 0, %s234
      %s249 = sphi 0, %s235
      %s253 = sphi 0, %s253
      %s255 = sphi 0, %s253
      %s256 = sphi 0, %s255
      %s270 = sphi 0, %s256
      %s274 = sphi 0, %s274
      %s276 = sphi 0, %s274
      %s277 = sphi 0, %s276
      %s291 = sphi 0, %s277
      %s295 = sphi 0, %s295
      %s297 = sphi 0, %s295
      %s298 = sphi 0, %s297
      %s312 = sphi 0, %s298
      %s316 = sphi 0, %s316
      %s318 = sphi 0, %s316
      %s319 = sphi 0, %s318
      %s333 = sphi 0, %s319
      %s337 = sphi 0, %s337
      %s339 = sphi 0, %s337
      %s340 = sphi 0, %s339
      %s354 = sphi 0, %s340
      %s358 = sphi 0, %s358
      %s360 = sphi 0, %s358
      %s361 = sphi 0, %s360
      %s375 = sphi 0, %s361
      %s379 = sphi 0, %s379
      %s381 = sphi 0, %s379
      %s382 = sphi 0, %s381
      %s396 = sphi 0, %s382
      %s400 = sphi 0, %s400
      %s402 = sphi 0, %s400
      %s403 = sphi 0, %s402
      %s417 = sphi 0, %s403
      %s421 = sphi 0, %s421
      %s423 = sphi 0, %s421
      %s424 = sphi 0, %s423
      %s438 = sphi 0, %s424
      %s442 = sphi 0, %s442
      %s444 = sphi 0, %s442
      %s445 = sphi 0, %s444
      %s459 = sphi 0, %s445
      %s463 = sphi 0, %s463
      %s465 = sphi 0, %s463
      %s466 = sphi 0, %s465
      %s480 = sphi 0, %s466
      %s484 = sphi 0, %s484
      %s486 = sphi 0, %s484
      %s487 = sphi 0, %s486
      %s501 = sphi 0, %s487
      %s505 = sphi 0, %s505
      %s507 = sphi 0, %s505
      %s508 = sphi 0, %s507
      %s522 = sphi 0, %s508
      %s526 = sphi 0, %s526
      %s528 = sphi 0, %s526
      %s529 = sphi 0, %s528
      %s543 = sphi 0, %s529
      %s547 = sphi 0, %s547
      %s549 = sphi 0, %s547
      %s550 = sphi 0, %s549
      %s564 = sphi 0, %s550
      %s568 = sphi 0, %s568
      %s570 = sphi 0, %s568
      %s571 = sphi 0, %s570
      %s585 = sphi 0, %s571
      %s589 = sphi 0, %s589
      %s591 = sphi 0, %s589
      %s592 = sphi 0, %s591
      %s606 = sphi 0, %s592
      %s610 = sphi 0, %s610
      %s612 = sphi 0, %s610
      %s613 = sphi 0, %s612
      %s627 = sphi 0, %s613
      %s631 = sphi 0, %s631
      %s633 = sphi 0, %s631
      %s634 = sphi 0, %s633
      %s648 = sphi 0, %s634
      %s652 = sphi 0, %s652
      %s654 = sphi 0, %s652
      %s655 = sphi 0, %s654
      %s669 = sphi 0, %s655
      %s673 = sphi 0, %s673
      %s675 = sphi 0, %s673
      %s676 = sphi 0, %s675
      %s690 = sphi 0, %s676
      %s694 = sphi 0, %s694
      %s696 = sphi 0, %s694
      %s697 = sphi 0, %s696
      %s711 = sphi 0, %s697
      %s715 = sphi 0, %s715
      %s717 = sphi 0, %s715
      %s718 = sphi 0, %s717
      %s732 = sphi 0, %s718
      %s736 = sphi 0, %s736
      %s738 = sphi 0, %s736
      %s739 = sphi 0, %s738
      %s753 = sphi 0, %s739
      %s757 = sphi 0, %s757
      %s759 = sphi 0, %s757
      %s760 = sphi 0, %s759
      %s774 = sphi 0, %s760
      %s778 = sphi 0, %s778
      %s780 = sphi 0, %s778
      %s781 = sphi 0, %s780
      %s795 = sphi 0, %s781
      %s799 = sphi 0, %s799
      %s801 = sphi 0, %s799
      %s802 = sphi 0, %s801
      %s816 = sphi 0, %s802
      %s820 = sphi 0, %s820
      %s822 = sphi 0, %s820
      %s823 = sphi 0, %s822
      %s837 = sphi 0, %s823
      %s841 = sphi 0, %s841
      %s843 = sphi 0, %s841
      %s844 = sphi 0, %s843
      %s858 = sphi 0, %s844
      %s862 = sphi 0, %s862
      %s864 = sphi 0, %s862
      %s865 = sphi 0, %s864
      %s879 = sphi 0, %s865
      %s883 = sphi 0, %s883
      %s885 = sphi 0, %s883
      %s886 = sphi 0, %s885
      %s900 = sphi 0, %s886
      %s906 = sphi 0, %s908
      %s909 = sphi 0, %s906
      %s910 = sphi 0, %s909
      %s926 = sphi 0, %s910
      %s932 = sphi 0, %s934
      %s935 = sphi 0, %s932
      %s936 = sphi 0, %s935
      %s952 = sphi 0, %s936
    $region4: #{tpu_custom_call.1} parent=1 // loop_header_branch
      %107 = sbr.rel (%p105) target = $region8
    $region5: #{tpu_custom_call.1} parent=1 // loop_body
      %s109 = ssub.s32 %s104, 1
      %s110 = ssub.s32 %s104, 2
      %s111 = sadd.s32 %s104, 1
      %s112 = ssub.s32 %s104, %s111
      %p113 = scmp.eq.s32.totalorder %s112, 0
      %s115 = sadd.s32 %s114, 1
      %s116 = scalar_select %p113, %s114, %s115
      %p119 = pneg %p113
      %p120 = scmp.eq.s32.totalorder %s104, 1
      %p121 = por %p119, %p120
      %p122 = scmp.ne.s32.totalorder %s114, %s117
      %p123 = scmp.eq.s32.totalorder %s104, 0
      %p124 = por %p122, %p123
      %p125 = scmp.ne.s32.totalorder %s114, %s117
      %p126 = scmp.eq.s32.totalorder %s109, 1
      %p127 = por %p125, %p126
      %p128 = scmp.ne.s32.totalorder %s117, %s118
      %p129 = scmp.eq.s32.totalorder %s109, 0
      %p130 = por %p128, %p129
      %p131 = scmp.ne.s32.totalorder %s117, %s118
      %p132 = scmp.eq.s32.totalorder %s110, 1
      %p133 = por %p131, %p132
      %p135 = scmp.ne.s32.totalorder %s118, %s134
      %p136 = scmp.eq.s32.totalorder %s110, 0
      %p137 = por %p135, %p136
      %s138 = ssub.s32 %s104, %s111
      %p139 = scmp.eq.s32.totalorder %s138, 0
      %s141 = sadd.s32 %s140, 1
      %s142 = scalar_select %p139, %s140, %s141
      %p145 = pneg %p139
      %p146 = scmp.eq.s32.totalorder %s104, 1
      %p147 = por %p145, %p146
      %p148 = scmp.ne.s32.totalorder %s140, %s143
      %p149 = scmp.eq.s32.totalorder %s104, 0
      %p150 = por %p148, %p149
      %p151 = scmp.ne.s32.totalorder %s140, %s143
      %p152 = scmp.eq.s32.totalorder %s109, 1
      %p153 = por %p151, %p152
      %p154 = scmp.ne.s32.totalorder %s143, %s144
      %p155 = scmp.eq.s32.totalorder %s109, 0
      %p156 = por %p154, %p155
      %p157 = scmp.ne.s32.totalorder %s143, %s144
      %p158 = scmp.eq.s32.totalorder %s110, 1
      %p159 = por %p157, %p158
      %p161 = scmp.ne.s32.totalorder %s144, %s160
      %p162 = scmp.eq.s32.totalorder %s110, 0
      %p163 = por %p161, %p162
      %s164 = ssub.s32 %s104, %s111
      %p165 = scmp.eq.s32.totalorder %s164, 0
      %s167 = sadd.s32 %s166, 1
      %s168 = scalar_select %p165, %s166, %s167
      %p171 = pneg %p165
      %p172 = scmp.eq.s32.totalorder %s104, 1
      %p173 = por %p171, %p172
      %p174 = scmp.ne.s32.totalorder %s166, %s169
      %p175 = scmp.eq.s32.totalorder %s104, 0
      %p176 = por %p174, %p175
      %p177 = scmp.ne.s32.totalorder %s166, %s169
      %p178 = scmp.eq.s32.totalorder %s109, 1
      %p179 = por %p177, %p178
      %p180 = scmp.ne.s32.totalorder %s169, %s170
      %p181 = scmp.eq.s32.totalorder %s109, 0
      %p182 = por %p180, %p181
      %p183 = scmp.ne.s32.totalorder %s169, %s170
      %p184 = scmp.eq.s32.totalorder %s110, 1
      %p185 = por %p183, %p184
      %p187 = scmp.ne.s32.totalorder %s170, %s186
      %p188 = scmp.eq.s32.totalorder %s110, 0
      %p189 = por %p187, %p188
      %s191 = sadd.s32 %s190, 1
      %p194 = scmp.eq.s32.totalorder %s104, 1
      %p195 = scmp.ne.s32.totalorder %s190, %s192
      %p196 = scmp.eq.s32.totalorder %s104, 0
      %p197 = por %p195, %p196
      %p198 = scmp.ne.s32.totalorder %s190, %s192
      %p199 = scmp.eq.s32.totalorder %s109, 1
      %p200 = por %p198, %p199
      %p201 = scmp.ne.s32.totalorder %s192, %s193
      %p202 = scmp.eq.s32.totalorder %s109, 0
      %p203 = por %p201, %p202
      %p204 = scmp.ne.s32.totalorder %s192, %s193
      %p205 = scmp.eq.s32.totalorder %s110, 1
      %p206 = por %p204, %p205
      %p208 = scmp.ne.s32.totalorder %s193, %s207
      %p209 = scmp.eq.s32.totalorder %s110, 0
      %p210 = por %p208, %p209
      %s212 = sadd.s32 %s211, 1
      %p215 = scmp.eq.s32.totalorder %s104, 1
      %p216 = scmp.ne.s32.totalorder %s211, %s213
      %p217 = scmp.eq.s32.totalorder %s104, 0
      %p218 = por %p216, %p217
      %p219 = scmp.ne.s32.totalorder %s211, %s213
      %p220 = scmp.eq.s32.totalorder %s109, 1
      %p221 = por %p219, %p220
      %p222 = scmp.ne.s32.totalorder %s213, %s214
      %p223 = scmp.eq.s32.totalorder %s109, 0
      %p224 = por %p222, %p223
      %p225 = scmp.ne.s32.totalorder %s213, %s214
      %p226 = scmp.eq.s32.totalorder %s110, 1
      %p227 = por %p225, %p226
      %p229 = scmp.ne.s32.totalorder %s214, %s228
      %p230 = scmp.eq.s32.totalorder %s110, 0
      %p231 = por %p229, %p230
      %s233 = sadd.s32 %s232, 1
      %p236 = scmp.eq.s32.totalorder %s104, 1
      %p237 = scmp.ne.s32.totalorder %s232, %s234
      %p238 = scmp.eq.s32.totalorder %s104, 0
      %p239 = por %p237, %p238
      %p240 = scmp.ne.s32.totalorder %s232, %s234
      %p241 = scmp.eq.s32.totalorder %s109, 1
      %p242 = por %p240, %p241
      %p243 = scmp.ne.s32.totalorder %s234, %s235
      %p244 = scmp.eq.s32.totalorder %s109, 0
      %p245 = por %p243, %p244
      %p246 = scmp.ne.s32.totalorder %s234, %s235
      %p247 = scmp.eq.s32.totalorder %s110, 1
      %p248 = por %p246, %p247
      %p250 = scmp.ne.s32.totalorder %s235, %s249
      %p251 = scmp.eq.s32.totalorder %s110, 0
      %p252 = por %p250, %p251
      %s254 = sadd.s32 %s253, 1
      %p257 = scmp.eq.s32.totalorder %s104, 1
      %p258 = scmp.ne.s32.totalorder %s253, %s255
      %p259 = scmp.eq.s32.totalorder %s104, 0
      %p260 = por %p258, %p259
      %p261 = scmp.ne.s32.totalorder %s253, %s255
      %p262 = scmp.eq.s32.totalorder %s109, 1
      %p263 = por %p261, %p262
      %p264 = scmp.ne.s32.totalorder %s255, %s256
      %p265 = scmp.eq.s32.totalorder %s109, 0
      %p266 = por %p264, %p265
      %p267 = scmp.ne.s32.totalorder %s255, %s256
      %p268 = scmp.eq.s32.totalorder %s110, 1
      %p269 = por %p267, %p268
      %p271 = scmp.ne.s32.totalorder %s256, %s270
      %p272 = scmp.eq.s32.totalorder %s110, 0
      %p273 = por %p271, %p272
      %s275 = sadd.s32 %s274, 1
      %p278 = scmp.eq.s32.totalorder %s104, 1
      %p279 = scmp.ne.s32.totalorder %s274, %s276
      %p280 = scmp.eq.s32.totalorder %s104, 0
      %p281 = por %p279, %p280
      %p282 = scmp.ne.s32.totalorder %s274, %s276
      %p283 = scmp.eq.s32.totalorder %s109, 1
      %p284 = por %p282, %p283
      %p285 = scmp.ne.s32.totalorder %s276, %s277
      %p286 = scmp.eq.s32.totalorder %s109, 0
      %p287 = por %p285, %p286
      %p288 = scmp.ne.s32.totalorder %s276, %s277
      %p289 = scmp.eq.s32.totalorder %s110, 1
      %p290 = por %p288, %p289
      %p292 = scmp.ne.s32.totalorder %s277, %s291
      %p293 = scmp.eq.s32.totalorder %s110, 0
      %p294 = por %p292, %p293
      %s296 = sadd.s32 %s295, 1
      %p299 = scmp.eq.s32.totalorder %s104, 1
      %p300 = scmp.ne.s32.totalorder %s295, %s297
      %p301 = scmp.eq.s32.totalorder %s104, 0
      %p302 = por %p300, %p301
      %p303 = scmp.ne.s32.totalorder %s295, %s297
      %p304 = scmp.eq.s32.totalorder %s109, 1
      %p305 = por %p303, %p304
      %p306 = scmp.ne.s32.totalorder %s297, %s298
      %p307 = scmp.eq.s32.totalorder %s109, 0
      %p308 = por %p306, %p307
      %p309 = scmp.ne.s32.totalorder %s297, %s298
      %p310 = scmp.eq.s32.totalorder %s110, 1
      %p311 = por %p309, %p310
      %p313 = scmp.ne.s32.totalorder %s298, %s312
      %p314 = scmp.eq.s32.totalorder %s110, 0
      %p315 = por %p313, %p314
      %s317 = sadd.s32 %s316, 1
      %p320 = scmp.eq.s32.totalorder %s104, 1
      %p321 = scmp.ne.s32.totalorder %s316, %s318
      %p322 = scmp.eq.s32.totalorder %s104, 0
      %p323 = por %p321, %p322
      %p324 = scmp.ne.s32.totalorder %s316, %s318
      %p325 = scmp.eq.s32.totalorder %s109, 1
      %p326 = por %p324, %p325
      %p327 = scmp.ne.s32.totalorder %s318, %s319
      %p328 = scmp.eq.s32.totalorder %s109, 0
      %p329 = por %p327, %p328
      %p330 = scmp.ne.s32.totalorder %s318, %s319
      %p331 = scmp.eq.s32.totalorder %s110, 1
      %p332 = por %p330, %p331
      %p334 = scmp.ne.s32.totalorder %s319, %s333
      %p335 = scmp.eq.s32.totalorder %s110, 0
      %p336 = por %p334, %p335
      %s338 = sadd.s32 %s337, 1
      %p341 = scmp.eq.s32.totalorder %s104, 1
      %p342 = scmp.ne.s32.totalorder %s337, %s339
      %p343 = scmp.eq.s32.totalorder %s104, 0
      %p344 = por %p342, %p343
      %p345 = scmp.ne.s32.totalorder %s337, %s339
      %p346 = scmp.eq.s32.totalorder %s109, 1
      %p347 = por %p345, %p346
      %p348 = scmp.ne.s32.totalorder %s339, %s340
      %p349 = scmp.eq.s32.totalorder %s109, 0
      %p350 = por %p348, %p349
      %p351 = scmp.ne.s32.totalorder %s339, %s340
      %p352 = scmp.eq.s32.totalorder %s110, 1
      %p353 = por %p351, %p352
      %p355 = scmp.ne.s32.totalorder %s340, %s354
      %p356 = scmp.eq.s32.totalorder %s110, 0
      %p357 = por %p355, %p356
      %s359 = sadd.s32 %s358, 1
      %p362 = scmp.eq.s32.totalorder %s104, 1
      %p363 = scmp.ne.s32.totalorder %s358, %s360
      %p364 = scmp.eq.s32.totalorder %s104, 0
      %p365 = por %p363, %p364
      %p366 = scmp.ne.s32.totalorder %s358, %s360
      %p367 = scmp.eq.s32.totalorder %s109, 1
      %p368 = por %p366, %p367
      %p369 = scmp.ne.s32.totalorder %s360, %s361
      %p370 = scmp.eq.s32.totalorder %s109, 0
      %p371 = por %p369, %p370
      %p372 = scmp.ne.s32.totalorder %s360, %s361
      %p373 = scmp.eq.s32.totalorder %s110, 1
      %p374 = por %p372, %p373
      %p376 = scmp.ne.s32.totalorder %s361, %s375
      %p377 = scmp.eq.s32.totalorder %s110, 0
      %p378 = por %p376, %p377
      %s380 = sadd.s32 %s379, 1
      %p383 = scmp.eq.s32.totalorder %s104, 1
      %p384 = scmp.ne.s32.totalorder %s379, %s381
      %p385 = scmp.eq.s32.totalorder %s104, 0
      %p386 = por %p384, %p385
      %p387 = scmp.ne.s32.totalorder %s379, %s381
      %p388 = scmp.eq.s32.totalorder %s109, 1
      %p389 = por %p387, %p388
      %p390 = scmp.ne.s32.totalorder %s381, %s382
      %p391 = scmp.eq.s32.totalorder %s109, 0
      %p392 = por %p390, %p391
      %p393 = scmp.ne.s32.totalorder %s381, %s382
      %p394 = scmp.eq.s32.totalorder %s110, 1
      %p395 = por %p393, %p394
      %p397 = scmp.ne.s32.totalorder %s382, %s396
      %p398 = scmp.eq.s32.totalorder %s110, 0
      %p399 = por %p397, %p398
      %s401 = sadd.s32 %s400, 1
      %p404 = scmp.eq.s32.totalorder %s104, 1
      %p405 = scmp.ne.s32.totalorder %s400, %s402
      %p406 = scmp.eq.s32.totalorder %s104, 0
      %p407 = por %p405, %p406
      %p408 = scmp.ne.s32.totalorder %s400, %s402
      %p409 = scmp.eq.s32.totalorder %s109, 1
      %p410 = por %p408, %p409
      %p411 = scmp.ne.s32.totalorder %s402, %s403
      %p412 = scmp.eq.s32.totalorder %s109, 0
      %p413 = por %p411, %p412
      %p414 = scmp.ne.s32.totalorder %s402, %s403
      %p415 = scmp.eq.s32.totalorder %s110, 1
      %p416 = por %p414, %p415
      %p418 = scmp.ne.s32.totalorder %s403, %s417
      %p419 = scmp.eq.s32.totalorder %s110, 0
      %p420 = por %p418, %p419
      %s422 = sadd.s32 %s421, 1
      %p425 = scmp.eq.s32.totalorder %s104, 1
      %p426 = scmp.ne.s32.totalorder %s421, %s423
      %p427 = scmp.eq.s32.totalorder %s104, 0
      %p428 = por %p426, %p427
      %p429 = scmp.ne.s32.totalorder %s421, %s423
      %p430 = scmp.eq.s32.totalorder %s109, 1
      %p431 = por %p429, %p430
      %p432 = scmp.ne.s32.totalorder %s423, %s424
      %p433 = scmp.eq.s32.totalorder %s109, 0
      %p434 = por %p432, %p433
      %p435 = scmp.ne.s32.totalorder %s423, %s424
      %p436 = scmp.eq.s32.totalorder %s110, 1
      %p437 = por %p435, %p436
      %p439 = scmp.ne.s32.totalorder %s424, %s438
      %p440 = scmp.eq.s32.totalorder %s110, 0
      %p441 = por %p439, %p440
      %s443 = sadd.s32 %s442, 1
      %p446 = scmp.eq.s32.totalorder %s104, 1
      %p447 = scmp.ne.s32.totalorder %s442, %s444
      %p448 = scmp.eq.s32.totalorder %s104, 0
      %p449 = por %p447, %p448
      %p450 = scmp.ne.s32.totalorder %s442, %s444
      %p451 = scmp.eq.s32.totalorder %s109, 1
      %p452 = por %p450, %p451
      %p453 = scmp.ne.s32.totalorder %s444, %s445
      %p454 = scmp.eq.s32.totalorder %s109, 0
      %p455 = por %p453, %p454
      %p456 = scmp.ne.s32.totalorder %s444, %s445
      %p457 = scmp.eq.s32.totalorder %s110, 1
      %p458 = por %p456, %p457
      %p460 = scmp.ne.s32.totalorder %s445, %s459
      %p461 = scmp.eq.s32.totalorder %s110, 0
      %p462 = por %p460, %p461
      %s464 = sadd.s32 %s463, 1
      %p467 = scmp.eq.s32.totalorder %s104, 1
      %p468 = scmp.ne.s32.totalorder %s463, %s465
      %p469 = scmp.eq.s32.totalorder %s104, 0
      %p470 = por %p468, %p469
      %p471 = scmp.ne.s32.totalorder %s463, %s465
      %p472 = scmp.eq.s32.totalorder %s109, 1
      %p473 = por %p471, %p472
      %p474 = scmp.ne.s32.totalorder %s465, %s466
      %p475 = scmp.eq.s32.totalorder %s109, 0
      %p476 = por %p474, %p475
      %p477 = scmp.ne.s32.totalorder %s465, %s466
      %p478 = scmp.eq.s32.totalorder %s110, 1
      %p479 = por %p477, %p478
      %p481 = scmp.ne.s32.totalorder %s466, %s480
      %p482 = scmp.eq.s32.totalorder %s110, 0
      %p483 = por %p481, %p482
      %s485 = sadd.s32 %s484, 1
      %p488 = scmp.eq.s32.totalorder %s104, 1
      %p489 = scmp.ne.s32.totalorder %s484, %s486
      %p490 = scmp.eq.s32.totalorder %s104, 0
      %p491 = por %p489, %p490
      %p492 = scmp.ne.s32.totalorder %s484, %s486
      %p493 = scmp.eq.s32.totalorder %s109, 1
      %p494 = por %p492, %p493
      %p495 = scmp.ne.s32.totalorder %s486, %s487
      %p496 = scmp.eq.s32.totalorder %s109, 0
      %p497 = por %p495, %p496
      %p498 = scmp.ne.s32.totalorder %s486, %s487
      %p499 = scmp.eq.s32.totalorder %s110, 1
      %p500 = por %p498, %p499
      %p502 = scmp.ne.s32.totalorder %s487, %s501
      %p503 = scmp.eq.s32.totalorder %s110, 0
      %p504 = por %p502, %p503
      %s506 = sadd.s32 %s505, 1
      %p509 = scmp.eq.s32.totalorder %s104, 1
      %p510 = scmp.ne.s32.totalorder %s505, %s507
      %p511 = scmp.eq.s32.totalorder %s104, 0
      %p512 = por %p510, %p511
      %p513 = scmp.ne.s32.totalorder %s505, %s507
      %p514 = scmp.eq.s32.totalorder %s109, 1
      %p515 = por %p513, %p514
      %p516 = scmp.ne.s32.totalorder %s507, %s508
      %p517 = scmp.eq.s32.totalorder %s109, 0
      %p518 = por %p516, %p517
      %p519 = scmp.ne.s32.totalorder %s507, %s508
      %p520 = scmp.eq.s32.totalorder %s110, 1
      %p521 = por %p519, %p520
      %p523 = scmp.ne.s32.totalorder %s508, %s522
      %p524 = scmp.eq.s32.totalorder %s110, 0
      %p525 = por %p523, %p524
      %s527 = sadd.s32 %s526, 1
      %p530 = scmp.eq.s32.totalorder %s104, 1
      %p531 = scmp.ne.s32.totalorder %s526, %s528
      %p532 = scmp.eq.s32.totalorder %s104, 0
      %p533 = por %p531, %p532
      %p534 = scmp.ne.s32.totalorder %s526, %s528
      %p535 = scmp.eq.s32.totalorder %s109, 1
      %p536 = por %p534, %p535
      %p537 = scmp.ne.s32.totalorder %s528, %s529
      %p538 = scmp.eq.s32.totalorder %s109, 0
      %p539 = por %p537, %p538
      %p540 = scmp.ne.s32.totalorder %s528, %s529
      %p541 = scmp.eq.s32.totalorder %s110, 1
      %p542 = por %p540, %p541
      %p544 = scmp.ne.s32.totalorder %s529, %s543
      %p545 = scmp.eq.s32.totalorder %s110, 0
      %p546 = por %p544, %p545
      %s548 = sadd.s32 %s547, 1
      %p551 = scmp.eq.s32.totalorder %s104, 1
      %p552 = scmp.ne.s32.totalorder %s547, %s549
      %p553 = scmp.eq.s32.totalorder %s104, 0
      %p554 = por %p552, %p553
      %p555 = scmp.ne.s32.totalorder %s547, %s549
      %p556 = scmp.eq.s32.totalorder %s109, 1
      %p557 = por %p555, %p556
      %p558 = scmp.ne.s32.totalorder %s549, %s550
      %p559 = scmp.eq.s32.totalorder %s109, 0
      %p560 = por %p558, %p559
      %p561 = scmp.ne.s32.totalorder %s549, %s550
      %p562 = scmp.eq.s32.totalorder %s110, 1
      %p563 = por %p561, %p562
      %p565 = scmp.ne.s32.totalorder %s550, %s564
      %p566 = scmp.eq.s32.totalorder %s110, 0
      %p567 = por %p565, %p566
      %s569 = sadd.s32 %s568, 1
      %p572 = scmp.eq.s32.totalorder %s104, 1
      %p573 = scmp.ne.s32.totalorder %s568, %s570
      %p574 = scmp.eq.s32.totalorder %s104, 0
      %p575 = por %p573, %p574
      %p576 = scmp.ne.s32.totalorder %s568, %s570
      %p577 = scmp.eq.s32.totalorder %s109, 1
      %p578 = por %p576, %p577
      %p579 = scmp.ne.s32.totalorder %s570, %s571
      %p580 = scmp.eq.s32.totalorder %s109, 0
      %p581 = por %p579, %p580
      %p582 = scmp.ne.s32.totalorder %s570, %s571
      %p583 = scmp.eq.s32.totalorder %s110, 1
      %p584 = por %p582, %p583
      %p586 = scmp.ne.s32.totalorder %s571, %s585
      %p587 = scmp.eq.s32.totalorder %s110, 0
      %p588 = por %p586, %p587
      %s590 = sadd.s32 %s589, 1
      %p593 = scmp.eq.s32.totalorder %s104, 1
      %p594 = scmp.ne.s32.totalorder %s589, %s591
      %p595 = scmp.eq.s32.totalorder %s104, 0
      %p596 = por %p594, %p595
      %p597 = scmp.ne.s32.totalorder %s589, %s591
      %p598 = scmp.eq.s32.totalorder %s109, 1
      %p599 = por %p597, %p598
      %p600 = scmp.ne.s32.totalorder %s591, %s592
      %p601 = scmp.eq.s32.totalorder %s109, 0
      %p602 = por %p600, %p601
      %p603 = scmp.ne.s32.totalorder %s591, %s592
      %p604 = scmp.eq.s32.totalorder %s110, 1
      %p605 = por %p603, %p604
      %p607 = scmp.ne.s32.totalorder %s592, %s606
      %p608 = scmp.eq.s32.totalorder %s110, 0
      %p609 = por %p607, %p608
      %s611 = sadd.s32 %s610, 1
      %p614 = scmp.eq.s32.totalorder %s104, 1
      %p615 = scmp.ne.s32.totalorder %s610, %s612
      %p616 = scmp.eq.s32.totalorder %s104, 0
      %p617 = por %p615, %p616
      %p618 = scmp.ne.s32.totalorder %s610, %s612
      %p619 = scmp.eq.s32.totalorder %s109, 1
      %p620 = por %p618, %p619
      %p621 = scmp.ne.s32.totalorder %s612, %s613
      %p622 = scmp.eq.s32.totalorder %s109, 0
      %p623 = por %p621, %p622
      %p624 = scmp.ne.s32.totalorder %s612, %s613
      %p625 = scmp.eq.s32.totalorder %s110, 1
      %p626 = por %p624, %p625
      %p628 = scmp.ne.s32.totalorder %s613, %s627
      %p629 = scmp.eq.s32.totalorder %s110, 0
      %p630 = por %p628, %p629
      %s632 = sadd.s32 %s631, 1
      %p635 = scmp.eq.s32.totalorder %s104, 1
      %p636 = scmp.ne.s32.totalorder %s631, %s633
      %p637 = scmp.eq.s32.totalorder %s104, 0
      %p638 = por %p636, %p637
      %p639 = scmp.ne.s32.totalorder %s631, %s633
      %p640 = scmp.eq.s32.totalorder %s109, 1
      %p641 = por %p639, %p640
      %p642 = scmp.ne.s32.totalorder %s633, %s634
      %p643 = scmp.eq.s32.totalorder %s109, 0
      %p644 = por %p642, %p643
      %p645 = scmp.ne.s32.totalorder %s633, %s634
      %p646 = scmp.eq.s32.totalorder %s110, 1
      %p647 = por %p645, %p646
      %p649 = scmp.ne.s32.totalorder %s634, %s648
      %p650 = scmp.eq.s32.totalorder %s110, 0
      %p651 = por %p649, %p650
      %s653 = sadd.s32 %s652, 1
      %p656 = scmp.eq.s32.totalorder %s104, 1
      %p657 = scmp.ne.s32.totalorder %s652, %s654
      %p658 = scmp.eq.s32.totalorder %s104, 0
      %p659 = por %p657, %p658
      %p660 = scmp.ne.s32.totalorder %s652, %s654
      %p661 = scmp.eq.s32.totalorder %s109, 1
      %p662 = por %p660, %p661
      %p663 = scmp.ne.s32.totalorder %s654, %s655
      %p664 = scmp.eq.s32.totalorder %s109, 0
      %p665 = por %p663, %p664
      %p666 = scmp.ne.s32.totalorder %s654, %s655
      %p667 = scmp.eq.s32.totalorder %s110, 1
      %p668 = por %p666, %p667
      %p670 = scmp.ne.s32.totalorder %s655, %s669
      %p671 = scmp.eq.s32.totalorder %s110, 0
      %p672 = por %p670, %p671
      %s674 = sadd.s32 %s673, 1
      %p677 = scmp.eq.s32.totalorder %s104, 1
      %p678 = scmp.ne.s32.totalorder %s673, %s675
      %p679 = scmp.eq.s32.totalorder %s104, 0
      %p680 = por %p678, %p679
      %p681 = scmp.ne.s32.totalorder %s673, %s675
      %p682 = scmp.eq.s32.totalorder %s109, 1
      %p683 = por %p681, %p682
      %p684 = scmp.ne.s32.totalorder %s675, %s676
      %p685 = scmp.eq.s32.totalorder %s109, 0
      %p686 = por %p684, %p685
      %p687 = scmp.ne.s32.totalorder %s675, %s676
      %p688 = scmp.eq.s32.totalorder %s110, 1
      %p689 = por %p687, %p688
      %p691 = scmp.ne.s32.totalorder %s676, %s690
      %p692 = scmp.eq.s32.totalorder %s110, 0
      %p693 = por %p691, %p692
      %s695 = sadd.s32 %s694, 1
      %p698 = scmp.eq.s32.totalorder %s104, 1
      %p699 = scmp.ne.s32.totalorder %s694, %s696
      %p700 = scmp.eq.s32.totalorder %s104, 0
      %p701 = por %p699, %p700
      %p702 = scmp.ne.s32.totalorder %s694, %s696
      %p703 = scmp.eq.s32.totalorder %s109, 1
      %p704 = por %p702, %p703
      %p705 = scmp.ne.s32.totalorder %s696, %s697
      %p706 = scmp.eq.s32.totalorder %s109, 0
      %p707 = por %p705, %p706
      %p708 = scmp.ne.s32.totalorder %s696, %s697
      %p709 = scmp.eq.s32.totalorder %s110, 1
      %p710 = por %p708, %p709
      %p712 = scmp.ne.s32.totalorder %s697, %s711
      %p713 = scmp.eq.s32.totalorder %s110, 0
      %p714 = por %p712, %p713
      %s716 = sadd.s32 %s715, 1
      %p719 = scmp.eq.s32.totalorder %s104, 1
      %p720 = scmp.ne.s32.totalorder %s715, %s717
      %p721 = scmp.eq.s32.totalorder %s104, 0
      %p722 = por %p720, %p721
      %p723 = scmp.ne.s32.totalorder %s715, %s717
      %p724 = scmp.eq.s32.totalorder %s109, 1
      %p725 = por %p723, %p724
      %p726 = scmp.ne.s32.totalorder %s717, %s718
      %p727 = scmp.eq.s32.totalorder %s109, 0
      %p728 = por %p726, %p727
      %p729 = scmp.ne.s32.totalorder %s717, %s718
      %p730 = scmp.eq.s32.totalorder %s110, 1
      %p731 = por %p729, %p730
      %p733 = scmp.ne.s32.totalorder %s718, %s732
      %p734 = scmp.eq.s32.totalorder %s110, 0
      %p735 = por %p733, %p734
      %s737 = sadd.s32 %s736, 1
      %p740 = scmp.eq.s32.totalorder %s104, 1
      %p741 = scmp.ne.s32.totalorder %s736, %s738
      %p742 = scmp.eq.s32.totalorder %s104, 0
      %p743 = por %p741, %p742
      %p744 = scmp.ne.s32.totalorder %s736, %s738
      %p745 = scmp.eq.s32.totalorder %s109, 1
      %p746 = por %p744, %p745
      %p747 = scmp.ne.s32.totalorder %s738, %s739
      %p748 = scmp.eq.s32.totalorder %s109, 0
      %p749 = por %p747, %p748
      %p750 = scmp.ne.s32.totalorder %s738, %s739
      %p751 = scmp.eq.s32.totalorder %s110, 1
      %p752 = por %p750, %p751
      %p754 = scmp.ne.s32.totalorder %s739, %s753
      %p755 = scmp.eq.s32.totalorder %s110, 0
      %p756 = por %p754, %p755
      %s758 = sadd.s32 %s757, 1
      %p761 = scmp.eq.s32.totalorder %s104, 1
      %p762 = scmp.ne.s32.totalorder %s757, %s759
      %p763 = scmp.eq.s32.totalorder %s104, 0
      %p764 = por %p762, %p763
      %p765 = scmp.ne.s32.totalorder %s757, %s759
      %p766 = scmp.eq.s32.totalorder %s109, 1
      %p767 = por %p765, %p766
      %p768 = scmp.ne.s32.totalorder %s759, %s760
      %p769 = scmp.eq.s32.totalorder %s109, 0
      %p770 = por %p768, %p769
      %p771 = scmp.ne.s32.totalorder %s759, %s760
      %p772 = scmp.eq.s32.totalorder %s110, 1
      %p773 = por %p771, %p772
      %p775 = scmp.ne.s32.totalorder %s760, %s774
      %p776 = scmp.eq.s32.totalorder %s110, 0
      %p777 = por %p775, %p776
      %s779 = sadd.s32 %s778, 1
      %p782 = scmp.eq.s32.totalorder %s104, 1
      %p783 = scmp.ne.s32.totalorder %s778, %s780
      %p784 = scmp.eq.s32.totalorder %s104, 0
      %p785 = por %p783, %p784
      %p786 = scmp.ne.s32.totalorder %s778, %s780
      %p787 = scmp.eq.s32.totalorder %s109, 1
      %p788 = por %p786, %p787
      %p789 = scmp.ne.s32.totalorder %s780, %s781
      %p790 = scmp.eq.s32.totalorder %s109, 0
      %p791 = por %p789, %p790
      %p792 = scmp.ne.s32.totalorder %s780, %s781
      %p793 = scmp.eq.s32.totalorder %s110, 1
      %p794 = por %p792, %p793
      %p796 = scmp.ne.s32.totalorder %s781, %s795
      %p797 = scmp.eq.s32.totalorder %s110, 0
      %p798 = por %p796, %p797
      %s800 = sadd.s32 %s799, 1
      %p803 = scmp.eq.s32.totalorder %s104, 1
      %p804 = scmp.ne.s32.totalorder %s799, %s801
      %p805 = scmp.eq.s32.totalorder %s104, 0
      %p806 = por %p804, %p805
      %p807 = scmp.ne.s32.totalorder %s799, %s801
      %p808 = scmp.eq.s32.totalorder %s109, 1
      %p809 = por %p807, %p808
      %p810 = scmp.ne.s32.totalorder %s801, %s802
      %p811 = scmp.eq.s32.totalorder %s109, 0
      %p812 = por %p810, %p811
      %p813 = scmp.ne.s32.totalorder %s801, %s802
      %p814 = scmp.eq.s32.totalorder %s110, 1
      %p815 = por %p813, %p814
      %p817 = scmp.ne.s32.totalorder %s802, %s816
      %p818 = scmp.eq.s32.totalorder %s110, 0
      %p819 = por %p817, %p818
      %s821 = sadd.s32 %s820, 1
      %p824 = scmp.eq.s32.totalorder %s104, 1
      %p825 = scmp.ne.s32.totalorder %s820, %s822
      %p826 = scmp.eq.s32.totalorder %s104, 0
      %p827 = por %p825, %p826
      %p828 = scmp.ne.s32.totalorder %s820, %s822
      %p829 = scmp.eq.s32.totalorder %s109, 1
      %p830 = por %p828, %p829
      %p831 = scmp.ne.s32.totalorder %s822, %s823
      %p832 = scmp.eq.s32.totalorder %s109, 0
      %p833 = por %p831, %p832
      %p834 = scmp.ne.s32.totalorder %s822, %s823
      %p835 = scmp.eq.s32.totalorder %s110, 1
      %p836 = por %p834, %p835
      %p838 = scmp.ne.s32.totalorder %s823, %s837
      %p839 = scmp.eq.s32.totalorder %s110, 0
      %p840 = por %p838, %p839
      %s842 = sadd.s32 %s841, 1
      %p845 = scmp.eq.s32.totalorder %s104, 1
      %p846 = scmp.ne.s32.totalorder %s841, %s843
      %p847 = scmp.eq.s32.totalorder %s104, 0
      %p848 = por %p846, %p847
      %p849 = scmp.ne.s32.totalorder %s841, %s843
      %p850 = scmp.eq.s32.totalorder %s109, 1
      %p851 = por %p849, %p850
      %p852 = scmp.ne.s32.totalorder %s843, %s844
      %p853 = scmp.eq.s32.totalorder %s109, 0
      %p854 = por %p852, %p853
      %p855 = scmp.ne.s32.totalorder %s843, %s844
      %p856 = scmp.eq.s32.totalorder %s110, 1
      %p857 = por %p855, %p856
      %p859 = scmp.ne.s32.totalorder %s844, %s858
      %p860 = scmp.eq.s32.totalorder %s110, 0
      %p861 = por %p859, %p860
      %s863 = sadd.s32 %s862, 1
      %p866 = scmp.eq.s32.totalorder %s104, 1
      %p867 = scmp.ne.s32.totalorder %s862, %s864
      %p868 = scmp.eq.s32.totalorder %s104, 0
      %p869 = por %p867, %p868
      %p870 = scmp.ne.s32.totalorder %s862, %s864
      %p871 = scmp.eq.s32.totalorder %s109, 1
      %p872 = por %p870, %p871
      %p873 = scmp.ne.s32.totalorder %s864, %s865
      %p874 = scmp.eq.s32.totalorder %s109, 0
      %p875 = por %p873, %p874
      %p876 = scmp.ne.s32.totalorder %s864, %s865
      %p877 = scmp.eq.s32.totalorder %s110, 1
      %p878 = por %p876, %p877
      %p880 = scmp.ne.s32.totalorder %s865, %s879
      %p881 = scmp.eq.s32.totalorder %s110, 0
      %p882 = por %p880, %p881
      %s884 = sadd.s32 %s883, 1
      %p887 = scmp.eq.s32.totalorder %s104, 1
      %p888 = scmp.ne.s32.totalorder %s883, %s885
      %p889 = scmp.eq.s32.totalorder %s104, 0
      %p890 = por %p888, %p889
      %p891 = scmp.ne.s32.totalorder %s883, %s885
      %p892 = scmp.eq.s32.totalorder %s109, 1
      %p893 = por %p891, %p892
      %p894 = scmp.ne.s32.totalorder %s885, %s886
      %p895 = scmp.eq.s32.totalorder %s109, 0
      %p896 = por %p894, %p895
      %p897 = scmp.ne.s32.totalorder %s885, %s886
      %p898 = scmp.eq.s32.totalorder %s110, 1
      %p899 = por %p897, %p898
      %p901 = scmp.ne.s32.totalorder %s886, %s900
      %p902 = scmp.eq.s32.totalorder %s110, 0
      %p903 = por %p901, %p902
      %s904 = ssub.s32 %s104, %s111
      %p905 = scmp.eq.s32.totalorder %s904, 0
      %s907 = sadd.s32 %s906, 1
      %s908 = scalar_select %p905, %s906, %s907
      %p911 = pneg %p905
      %p912 = scmp.eq.s32.totalorder %s104, 1
      %p913 = por %p911, %p912
      %p914 = scmp.ne.s32.totalorder %s906, %s909
      %p915 = scmp.eq.s32.totalorder %s104, 0
      %p916 = por %p914, %p915
      %p917 = scmp.ne.s32.totalorder %s906, %s909
      %p918 = scmp.eq.s32.totalorder %s109, 1
      %p919 = por %p917, %p918
      %p920 = scmp.ne.s32.totalorder %s909, %s910
      %p921 = scmp.eq.s32.totalorder %s109, 0
      %p922 = por %p920, %p921
      %p923 = scmp.ne.s32.totalorder %s909, %s910
      %p924 = scmp.eq.s32.totalorder %s110, 1
      %p925 = por %p923, %p924
      %p927 = scmp.ne.s32.totalorder %s910, %s926
      %p928 = scmp.eq.s32.totalorder %s110, 0
      %p929 = por %p927, %p928
      %s930 = ssub.s32 %s104, %s111
      %p931 = scmp.eq.s32.totalorder %s930, 0
      %s933 = sadd.s32 %s932, 1
      %s934 = scalar_select %p931, %s932, %s933
      %p937 = pneg %p931
      %p938 = scmp.eq.s32.totalorder %s104, 1
      %p939 = por %p937, %p938
      %p940 = scmp.ne.s32.totalorder %s932, %s935
      %p941 = scmp.eq.s32.totalorder %s104, 0
      %p942 = por %p940, %p941
      %p943 = scmp.ne.s32.totalorder %s932, %s935
      %p944 = scmp.eq.s32.totalorder %s109, 1
      %p945 = por %p943, %p944
      %p946 = scmp.ne.s32.totalorder %s935, %s936
      %p947 = scmp.eq.s32.totalorder %s109, 0
      %p948 = por %p946, %p947
      %p949 = scmp.ne.s32.totalorder %s935, %s936
      %p950 = scmp.eq.s32.totalorder %s110, 1
      %p951 = por %p949, %p950
      %p953 = scmp.ne.s32.totalorder %s936, %s952
      %p954 = scmp.eq.s32.totalorder %s110, 0
      %p955 = por %p953, %p954
      %p956 = scmp.le.s32.totalorder 1, %s104
      %p957 = scmp.lt.s32.totalorder %s104, 3
      %p958 = pnand %p956, %p957
      %p959 = pneg %p958
      // Predicated region
      $region9: #{tpu_custom_call.1} parent=5 // pred_check
        _
      $region10: #{tpu_custom_call.1} parent=5 // pred_check_branch
        %961 = sbr.rel (%p958) target = $region12
      $region11: #{tpu_custom_call.1} parent=5 // pred_region
        %s962 = ssub.s32 %s104, 1
        // Predicated region
        $region13: #{tpu_custom_call.1} parent=11 // pred_check
          %p963 = pneg %p203
        $region14: #{tpu_custom_call.1} parent=11 // pred_check_branch
          %965 = sbr.rel (%p963) target = $region16
        $region15: #{tpu_custom_call.1} parent=11 // pred_region
          _
        $region16: #{tpu_custom_call.1} parent=11 // pred_fallthru
          _
        // Predicated region
        $region17: #{tpu_custom_call.1} parent=11 // pred_check
          %p966 = pneg %p224
        $region18: #{tpu_custom_call.1} parent=11 // pred_check_branch
          %968 = sbr.rel (%p966) target = $region20
        $region19: #{tpu_custom_call.1} parent=11 // pred_region
          %s970 = ssub.s32 32, 32
          %971 = vsyncadd [#allocation9], %s970
          %s972 = sshll.u32 [#allocation8], 4
          %s973 = int_to_ptr.vmem [resolvable:$true] %s972
          %978 = dma.hbm_to_vmem [thread:$0]  %s9, 32, %s973, [#allocation9], 16, 16, 1
        $region20: #{tpu_custom_call.1} parent=11 // pred_fallthru
          _
        // Predicated region
        $region21: #{tpu_custom_call.1} parent=11 // pred_check
          %p979 = pneg %p245
        $region22: #{tpu_custom_call.1} parent=11 // pred_check_branch
          %981 = sbr.rel (%p979) target = $region24
        $region23: #{tpu_custom_call.1} parent=11 // pred_region
          _
        $region24: #{tpu_custom_call.1} parent=11 // pred_fallthru
          _
        // Predicated region
        $region25: #{tpu_custom_call.1} parent=11 // pred_check
          %p982 = pneg %p266
        $region26: #{tpu_custom_call.1} parent=11 // pred_check_branch
          %984 = sbr.rel (%p982) target = $region28
        $region27: #{tpu_custom_call.1} parent=11 // pred_region
          %s986 = ssub.s32 32, 32
          %987 = vsyncadd [#allocation9], %s986
          %s988 = sshll.u32 [#allocation10], 4
          %s989 = int_to_ptr.vmem [resolvable:$true] %s988
          %994 = dma.hbm_to_vmem [thread:$0]  %s13, 32, %s989, [#allocation9], 16, 16, 1
        $region28: #{tpu_custom_call.1} parent=11 // pred_fallthru
          _
        // Predicated region
        $region29: #{tpu_custom_call.1} parent=11 // pred_check
          %p995 = pneg %p287
        $region30: #{tpu_custom_call.1} parent=11 // pred_check_branch
          %997 = sbr.rel (%p995) target = $region32
        $region31: #{tpu_custom_call.1} parent=11 // pred_region
          _
        $region32: #{tpu_custom_call.1} parent=11 // pred_fallthru
          _
        // Predicated region
        $region33: #{tpu_custom_call.1} parent=11 // pred_check
          %p998 = pneg %p308
        $region34: #{tpu_custom_call.1} parent=11 // pred_check_branch
          %1000 = sbr.rel (%p998) target = $region36
        $region35: #{tpu_custom_call.1} parent=11 // pred_region
          %s1002 = ssub.s32 32, 32
          %1003 = vsyncadd [#allocation12], %s1002
          %s1004 = sshll.u32 [#allocation11], 4
          %s1005 = int_to_ptr.vmem [resolvable:$true] %s1004
          %1010 = dma.hbm_to_vmem [thread:$0]  %s17, 32, %s1005, [#allocation12], 16, 16, 1
        $region36: #{tpu_custom_call.1} parent=11 // pred_fallthru
          _
        // Predicated region
        $region37: #{tpu_custom_call.1} parent=11 // pred_check
          %p1011 = pneg %p329
        $region38: #{tpu_custom_call.1} parent=11 // pred_check_branch
          %1013 = sbr.rel (%p1011) target = $region40
        $region39: #{tpu_custom_call.1} parent=11 // pred_region
          _
        $region40: #{tpu_custom_call.1} parent=11 // pred_fallthru
          _
        // Predicated region
        $region41: #{tpu_custom_call.1} parent=11 // pred_check
          %p1014 = pneg %p350
        $region42: #{tpu_custom_call.1} parent=11 // pred_check_branch
          %1016 = sbr.rel (%p1014) target = $region44
        $region43: #{tpu_custom_call.1} parent=11 // pred_region
          %s1018 = ssub.s32 32, 32
          %1019 = vsyncadd [#allocation12], %s1018
          %s1020 = sshll.u32 [#allocation13], 4
          %s1021 = int_to_ptr.vmem [resolvable:$true] %s1020
          %1026 = dma.hbm_to_vmem [thread:$0]  %s21, 32, %s1021, [#allocation12], 16, 16, 1
        $region44: #{tpu_custom_call.1} parent=11 // pred_fallthru
          _
        // Predicated region
        $region45: #{tpu_custom_call.1} parent=11 // pred_check
          %p1027 = pneg %p371
        $region46: #{tpu_custom_call.1} parent=11 // pred_check_branch
          %1029 = sbr.rel (%p1027) target = $region48
        $region47: #{tpu_custom_call.1} parent=11 // pred_region
          %s1031 = ssub.s32 32, 32
          %1032 = vsyncadd [#allocation15], %s1031
          %s1033 = sshll.u32 [#allocation14], 4
          %s1034 = int_to_ptr.vmem [resolvable:$true] %s1033
          %1039 = dma.hbm_to_vmem [thread:$0]  %s23, 32, %s1034, [#allocation15], 16, 16, 1
        $region48: #{tpu_custom_call.1} parent=11 // pred_fallthru
          _
        // Predicated region
        $region49: #{tpu_custom_call.1} parent=11 // pred_check
          %p1040 = pneg %p392
        $region50: #{tpu_custom_call.1} parent=11 // pred_check_branch
          %1042 = sbr.rel (%p1040) target = $region52
        $region51: #{tpu_custom_call.1} parent=11 // pred_region
          %s1044 = ssub.s32 32, 32
          %1045 = vsyncadd [#allocation15], %s1044
          %s1046 = sshll.u32 [#allocation16], 4
          %s1047 = int_to_ptr.vmem [resolvable:$true] %s1046
          %1052 = dma.hbm_to_vmem [thread:$0]  %s25, 32, %s1047, [#allocation15], 16, 16, 1
        $region52: #{tpu_custom_call.1} parent=11 // pred_fallthru
          _
        // Predicated region
        $region53: #{tpu_custom_call.1} parent=11 // pred_check
          %p1053 = pneg %p413
        $region54: #{tpu_custom_call.1} parent=11 // pred_check_branch
          %1055 = sbr.rel (%p1053) target = $region56
        $region55: #{tpu_custom_call.1} parent=11 // pred_region
          _
        $region56: #{tpu_custom_call.1} parent=11 // pred_fallthru
          _
        // Predicated region
        $region57: #{tpu_custom_call.1} parent=11 // pred_check
          %p1056 = pneg %p434
        $region58: #{tpu_custom_call.1} parent=11 // pred_check_branch
          %1058 = sbr.rel (%p1056) target = $region60
        $region59: #{tpu_custom_call.1} parent=11 // pred_region
          %s1060 = ssub.s32 32, 32
          %1061 = vsyncadd [#allocation18], %s1060
          %s1062 = sshll.u32 [#allocation17], 4
          %s1063 = int_to_ptr.vmem [resolvable:$true] %s1062
          %1068 = dma.hbm_to_vmem [thread:$0]  %s29, 32, %s1063, [#allocation18], 16, 16, 1
        $region60: #{tpu_custom_call.1} parent=11 // pred_fallthru
          _
        // Predicated region
        $region61: #{tpu_custom_call.1} parent=11 // pred_check
          %p1069 = pneg %p455
        $region62: #{tpu_custom_call.1} parent=11 // pred_check_branch
          %1071 = sbr.rel (%p1069) target = $region64
        $region63: #{tpu_custom_call.1} parent=11 // pred_region
          _
        $region64: #{tpu_custom_call.1} parent=11 // pred_fallthru
          _
        // Predicated region
        $region65: #{tpu_custom_call.1} parent=11 // pred_check
          %p1072 = pneg %p476
        $region66: #{tpu_custom_call.1} parent=11 // pred_check_branch
          %1074 = sbr.rel (%p1072) target = $region68
        $region67: #{tpu_custom_call.1} parent=11 // pred_region
          %s1076 = ssub.s32 32, 32
          %1077 = vsyncadd [#allocation18], %s1076
          %s1078 = sshll.u32 [#allocation19], 4
          %s1079 = int_to_ptr.vmem [resolvable:$true] %s1078
          %1084 = dma.hbm_to_vmem [thread:$0]  %s33, 32, %s1079, [#allocation18], 16, 16, 1
        $region68: #{tpu_custom_call.1} parent=11 // pred_fallthru
          _
        // Predicated region
        $region69: #{tpu_custom_call.1} parent=11 // pred_check
          %p1085 = pneg %p497
        $region70: #{tpu_custom_call.1} parent=11 // pred_check_branch
          %1087 = sbr.rel (%p1085) target = $region72
        $region71: #{tpu_custom_call.1} parent=11 // pred_region
          %s1089 = ssub.s32 32, 32
          %1090 = vsyncadd [#allocation21], %s1089
          %s1091 = sshll.u32 [#allocation20], 4
          %s1092 = int_to_ptr.vmem [resolvable:$true] %s1091
          %1097 = dma.hbm_to_vmem [thread:$0]  %s35, 32, %s1092, [#allocation21], 16, 16, 1
        $region72: #{tpu_custom_call.1} parent=11 // pred_fallthru
          _
        // Predicated region
        $region73: #{tpu_custom_call.1} parent=11 // pred_check
          %p1098 = pneg %p518
        $region74: #{tpu_custom_call.1} parent=11 // pred_check_branch
          %1100 = sbr.rel (%p1098) target = $region76
        $region75: #{tpu_custom_call.1} parent=11 // pred_region
          _
        $region76: #{tpu_custom_call.1} parent=11 // pred_fallthru
          _
        // Predicated region
        $region77: #{tpu_custom_call.1} parent=11 // pred_check
          %p1101 = pneg %p539
        $region78: #{tpu_custom_call.1} parent=11 // pred_check_branch
          %1103 = sbr.rel (%p1101) target = $region80
        $region79: #{tpu_custom_call.1} parent=11 // pred_region
          _
        $region80: #{tpu_custom_call.1} parent=11 // pred_fallthru
          _
        // Predicated region
        $region81: #{tpu_custom_call.1} parent=11 // pred_check
          %p1104 = pneg %p560
        $region82: #{tpu_custom_call.1} parent=11 // pred_check_branch
          %1106 = sbr.rel (%p1104) target = $region84
        $region83: #{tpu_custom_call.1} parent=11 // pred_region
          %s1108 = ssub.s32 32, 32
          %1109 = vsyncadd [#allocation21], %s1108
          %s1110 = sshll.u32 [#allocation22], 4
          %s1111 = int_to_ptr.vmem [resolvable:$true] %s1110
          %1116 = dma.hbm_to_vmem [thread:$0]  %s41, 32, %s1111, [#allocation21], 16, 16, 1
        $region84: #{tpu_custom_call.1} parent=11 // pred_fallthru
          _
        // Predicated region
        $region85: #{tpu_custom_call.1} parent=11 // pred_check
          %p1117 = pneg %p581
        $region86: #{tpu_custom_call.1} parent=11 // pred_check_branch
          %1119 = sbr.rel (%p1117) target = $region88
        $region87: #{tpu_custom_call.1} parent=11 // pred_region
          %s1121 = ssub.s32 512, 512
          %1122 = vsyncadd [#allocation24], %s1121
          %s1123 = sshll.u32 [#allocation23], 4
          %s1124 = int_to_ptr.vmem [resolvable:$true] %s1123
          %1129 = dma.hbm_to_vmem [thread:$0]  %s43, 512, %s1124, [#allocation24], 64, 64, 4
        $region88: #{tpu_custom_call.1} parent=11 // pred_fallthru
          _
        // Predicated region
        $region89: #{tpu_custom_call.1} parent=11 // pred_check
          %p1130 = pneg %p602
        $region90: #{tpu_custom_call.1} parent=11 // pred_check_branch
          %1132 = sbr.rel (%p1130) target = $region92
        $region91: #{tpu_custom_call.1} parent=11 // pred_region
          %s1134 = ssub.s32 32, 32
          %1135 = vsyncadd [#allocation24], %s1134
          %s1136 = sshll.u32 [#allocation25], 4
          %s1137 = int_to_ptr.vmem [resolvable:$true] %s1136
          %1142 = dma.hbm_to_vmem [thread:$0]  %s45, 32, %s1137, [#allocation24], 16, 16, 1
        $region92: #{tpu_custom_call.1} parent=11 // pred_fallthru
          _
        // Predicated region
        $region93: #{tpu_custom_call.1} parent=11 // pred_check
          %p1143 = pneg %p623
        $region94: #{tpu_custom_call.1} parent=11 // pred_check_branch
          %1145 = sbr.rel (%p1143) target = $region96
        $region95: #{tpu_custom_call.1} parent=11 // pred_region
          %s1147 = ssub.s32 512, 512
          %1148 = vsyncadd [#allocation27], %s1147
          %s1149 = sshll.u32 [#allocation26], 4
          %s1150 = int_to_ptr.vmem [resolvable:$true] %s1149
          %1155 = dma.hbm_to_vmem [thread:$0]  %s47, 512, %s1150, [#allocation27], 64, 64, 4
        $region96: #{tpu_custom_call.1} parent=11 // pred_fallthru
          _
        // Predicated region
        $region97: #{tpu_custom_call.1} parent=11 // pred_check
          %p1156 = pneg %p644
        $region98: #{tpu_custom_call.1} parent=11 // pred_check_branch
          %1158 = sbr.rel (%p1156) target = $region100
        $region99: #{tpu_custom_call.1} parent=11 // pred_region
          %s1160 = ssub.s32 32, 32
          %1161 = vsyncadd [#allocation27], %s1160
          %s1162 = sshll.u32 [#allocation28], 4
          %s1163 = int_to_ptr.vmem [resolvable:$true] %s1162
          %1168 = dma.hbm_to_vmem [thread:$0]  %s49, 32, %s1163, [#allocation27], 16, 16, 1
        $region100: #{tpu_custom_call.1} parent=11 // pred_fallthru
          _
        // Predicated region
        $region101: #{tpu_custom_call.1} parent=11 // pred_check
          %p1169 = pneg %p665
        $region102: #{tpu_custom_call.1} parent=11 // pred_check_branch
          %1171 = sbr.rel (%p1169) target = $region104
        $region103: #{tpu_custom_call.1} parent=11 // pred_region
          %s1173 = ssub.s32 512, 512
          %1174 = vsyncadd [#allocation30], %s1173
          %s1175 = sshll.u32 [#allocation29], 4
          %s1176 = int_to_ptr.vmem [resolvable:$true] %s1175
          %1181 = dma.hbm_to_vmem [thread:$0]  %s51, 512, %s1176, [#allocation30], 64, 64, 4
        $region104: #{tpu_custom_call.1} parent=11 // pred_fallthru
          _
        // Predicated region
        $region105: #{tpu_custom_call.1} parent=11 // pred_check
          %p1182 = pneg %p686
        $region106: #{tpu_custom_call.1} parent=11 // pred_check_branch
          %1184 = sbr.rel (%p1182) target = $region108
        $region107: #{tpu_custom_call.1} parent=11 // pred_region
          %s1186 = ssub.s32 32, 32
          %1187 = vsyncadd [#allocation30], %s1186
          %s1188 = sshll.u32 [#allocation31], 4
          %s1189 = int_to_ptr.vmem [resolvable:$true] %s1188
          %1194 = dma.hbm_to_vmem [thread:$0]  %s53, 32, %s1189, [#allocation30], 16, 16, 1
        $region108: #{tpu_custom_call.1} parent=11 // pred_fallthru
          _
        // Predicated region
        $region109: #{tpu_custom_call.1} parent=11 // pred_check
          %p1195 = pneg %p707
        $region110: #{tpu_custom_call.1} parent=11 // pred_check_branch
          %1197 = sbr.rel (%p1195) target = $region112
        $region111: #{tpu_custom_call.1} parent=11 // pred_region
          _
        $region112: #{tpu_custom_call.1} parent=11 // pred_fallthru
          _
        // Predicated region
        $region113: #{tpu_custom_call.1} parent=11 // pred_check
          %p1198 = pneg %p728
        $region114: #{tpu_custom_call.1} parent=11 // pred_check_branch
          %1200 = sbr.rel (%p1198) target = $region116
        $region115: #{tpu_custom_call.1} parent=11 // pred_region
          _
        $region116: #{tpu_custom_call.1} parent=11 // pred_fallthru
          _
        // Predicated region
        $region117: #{tpu_custom_call.1} parent=11 // pred_check
          %p1201 = pneg %p749
        $region118: #{tpu_custom_call.1} parent=11 // pred_check_branch
          %1203 = sbr.rel (%p1201) target = $region120
        $region119: #{tpu_custom_call.1} parent=11 // pred_region
          _
        $region120: #{tpu_custom_call.1} parent=11 // pred_fallthru
          _
        // Predicated region
        $region121: #{tpu_custom_call.1} parent=11 // pred_check
          %p1204 = pneg %p770
        $region122: #{tpu_custom_call.1} parent=11 // pred_check_branch
          %1206 = sbr.rel (%p1204) target = $region124
        $region123: #{tpu_custom_call.1} parent=11 // pred_region
          _
        $region124: #{tpu_custom_call.1} parent=11 // pred_fallthru
          _
        // Predicated region
        $region125: #{tpu_custom_call.1} parent=11 // pred_check
          %p1207 = pneg %p791
        $region126: #{tpu_custom_call.1} parent=11 // pred_check_branch
          %1209 = sbr.rel (%p1207) target = $region128
        $region127: #{tpu_custom_call.1} parent=11 // pred_region
          _
        $region128: #{tpu_custom_call.1} parent=11 // pred_fallthru
          _
        // Predicated region
        $region129: #{tpu_custom_call.1} parent=11 // pred_check
          %p1210 = pneg %p812
        $region130: #{tpu_custom_call.1} parent=11 // pred_check_branch
          %1212 = sbr.rel (%p1210) target = $region132
        $region131: #{tpu_custom_call.1} parent=11 // pred_region
          _
        $region132: #{tpu_custom_call.1} parent=11 // pred_fallthru
          _
        // Predicated region
        $region133: #{tpu_custom_call.1} parent=11 // pred_check
          %p1213 = pneg %p833
        $region134: #{tpu_custom_call.1} parent=11 // pred_check_branch
          %1215 = sbr.rel (%p1213) target = $region136
        $region135: #{tpu_custom_call.1} parent=11 // pred_region
          _
        $region136: #{tpu_custom_call.1} parent=11 // pred_fallthru
          _
        // Predicated region
        $region137: #{tpu_custom_call.1} parent=11 // pred_check
          %p1216 = pneg %p854
        $region138: #{tpu_custom_call.1} parent=11 // pred_check_branch
          %1218 = sbr.rel (%p1216) target = $region140
        $region139: #{tpu_custom_call.1} parent=11 // pred_region
          _
        $region140: #{tpu_custom_call.1} parent=11 // pred_fallthru
          _
        // Predicated region
        $region141: #{tpu_custom_call.1} parent=11 // pred_check
          %p1219 = pneg %p875
        $region142: #{tpu_custom_call.1} parent=11 // pred_check_branch
          %1221 = sbr.rel (%p1219) target = $region144
        $region143: #{tpu_custom_call.1} parent=11 // pred_region
          _
        $region144: #{tpu_custom_call.1} parent=11 // pred_fallthru
          _
        // Predicated region
        $region145: #{tpu_custom_call.1} parent=11 // pred_check
          %p1222 = pneg %p896
        $region146: #{tpu_custom_call.1} parent=11 // pred_check_branch
          %1224 = sbr.rel (%p1222) target = $region148
        $region147: #{tpu_custom_call.1} parent=11 // pred_region
          _
        $region148: #{tpu_custom_call.1} parent=11 // pred_fallthru
          _
      $region12: #{tpu_custom_call.1} parent=5 // pred_fallthru
        _
      %p1225 = scmp.lt.s32.totalorder %s104, 2
      // Predicated region
      $region149: #{tpu_custom_call.1} parent=5 // pred_check
        %p1226 = pneg %p1225
      $region150: #{tpu_custom_call.1} parent=5 // pred_check_branch
        %1228 = sbr.rel (%p1226) target = $region152
      $region151: #{tpu_custom_call.1} parent=5 // pred_region
        // Predicated region
        $region153: #{tpu_custom_call.1} parent=151 // pred_check
          %p1229 = pneg %p124
        $region154: #{tpu_custom_call.1} parent=151 // pred_check_branch
          %1231 = sbr.rel (%p1229) target = $region156
        $region155: #{tpu_custom_call.1} parent=151 // pred_region
          %s1232 = sand.u32 %s114, 1
          %s1233 = scalar_lea.sflag [#allocation3], %s1232
          %s1234 = sand.u32 %s114, 1
          %s1235 = smul.addr %s1234, 8
          %s1236 = scalar_lea.vmem [#allocation2], %s1235
          %s1238 = ssub.s32 128, 128
          %1239 = vsyncadd %s1233, %s1238
          %s1240 = smul.addr %s104, 128
          %s1241 = scalar_lea.hbm %s1, %s1240
          %s1243 = sshll.u32 %s1236, 4
          %s1244 = int_to_ptr.vmem [resolvable:$true] %s1243
          %1246 = dma.hbm_to_vmem [thread:$0]  %s1241, 128, %s1244, %s1233
        $region156: #{tpu_custom_call.1} parent=151 // pred_fallthru
          _
        // Predicated region
        $region157: #{tpu_custom_call.1} parent=151 // pred_check
          %p1247 = pneg %p150
        $region158: #{tpu_custom_call.1} parent=151 // pred_check_branch
          %1249 = sbr.rel (%p1247) target = $region160
        $region159: #{tpu_custom_call.1} parent=151 // pred_region
          %s1250 = sand.u32 %s104, 1
          %s1251 = scalar_lea.sflag [#allocation6], %s1250
          %s1252 = sand.u32 %s140, 1
          %s1253 = smul.addr %s1252, 8
          %s1254 = scalar_lea.vmem [#allocation5], %s1253
          %s1256 = ssub.s32 128, 128
          %1257 = vsyncadd %s1251, %s1256
          %s1258 = smul.addr %s104, 128
          %s1259 = scalar_lea.hbm %s3, %s1258
          %s1261 = sshll.u32 %s1254, 4
          %s1262 = int_to_ptr.vmem [resolvable:$true] %s1261
          %1264 = dma.hbm_to_vmem [thread:$0]  %s1259, 128, %s1262, %s1251
        $region160: #{tpu_custom_call.1} parent=151 // pred_fallthru
          _
        // Predicated region
        $region161: #{tpu_custom_call.1} parent=151 // pred_check
          %p1265 = pneg %p176
        $region162: #{tpu_custom_call.1} parent=151 // pred_check_branch
          %1267 = sbr.rel (%p1265) target = $region164
        $region163: #{tpu_custom_call.1} parent=151 // pred_region
          %s1268 = sand.u32 %s104, 1
          %s1269 = scalar_lea.sflag [#allocation6], %s1268
          %s1270 = sand.u32 %s166, 1
          %s1271 = smul.addr %s1270, 8
          %s1272 = scalar_lea.vmem [#allocation7], %s1271
          %s1274 = ssub.s32 128, 128
          %1275 = vsyncadd %s1269, %s1274
          %s1276 = smul.addr %s104, 128
          %s1277 = scalar_lea.hbm %s5, %s1276
          %s1279 = sshll.u32 %s1272, 4
          %s1280 = int_to_ptr.vmem [resolvable:$true] %s1279
          %1282 = dma.hbm_to_vmem [thread:$0]  %s1277, 128, %s1280, %s1269
        $region164: #{tpu_custom_call.1} parent=151 // pred_fallthru
          _
      $region152: #{tpu_custom_call.1} parent=5 // pred_fallthru
        _
      %p1283 = scmp.le.s32.totalorder 1, %s104
      %p1284 = scmp.lt.s32.totalorder %s104, 3
      %p1285 = pnand %p1283, %p1284
      %p1286 = pneg %p1285
      // Predicated region
      $region165: #{tpu_custom_call.1} parent=5 // pred_check
        _
      $region166: #{tpu_custom_call.1} parent=5 // pred_check_branch
        %1288 = sbr.rel (%p1285) target = $region168
      $region167: #{tpu_custom_call.1} parent=5 // pred_region
        %s1289 = ssub.s32 %s104, 1
        %s1290 = sand.u32 %s117, 1
        %s1291 = scalar_lea.sflag [#allocation3], %s1290
        %s1292 = sand.u32 %s117, 1
        %s1293 = smul.addr %s1292, 8
        %s1294 = scalar_lea.vmem [#allocation2], %s1293
        // Predicated region
        $region169: #{tpu_custom_call.1} parent=167 // pred_check
          %p1295 = pneg %p130
        $region170: #{tpu_custom_call.1} parent=167 // pred_check_branch
          %1297 = sbr.rel (%p1295) target = $region172
        $region171: #{tpu_custom_call.1} parent=167 // pred_region
          %1298 = dma.done %s1291, 128
        $region172: #{tpu_custom_call.1} parent=167 // pred_fallthru
          _
        %s1299 = sand.u32 %s109, 1
        %s1300 = scalar_lea.sflag [#allocation6], %s1299
        %s1301 = sand.u32 %s143, 1
        %s1302 = smul.addr %s1301, 8
        %s1303 = scalar_lea.vmem [#allocation5], %s1302
        // Predicated region
        $region173: #{tpu_custom_call.1} parent=167 // pred_check
          %p1304 = pneg %p156
        $region174: #{tpu_custom_call.1} parent=167 // pred_check_branch
          %1306 = sbr.rel (%p1304) target = $region176
        $region175: #{tpu_custom_call.1} parent=167 // pred_region
          %1307 = dma.done %s1300, 128
        $region176: #{tpu_custom_call.1} parent=167 // pred_fallthru
          _
        %s1308 = sand.u32 %s109, 1
        %s1309 = scalar_lea.sflag [#allocation6], %s1308
        %s1310 = sand.u32 %s169, 1
        %s1311 = smul.addr %s1310, 8
        %s1312 = scalar_lea.vmem [#allocation7], %s1311
        // Predicated region
        $region177: #{tpu_custom_call.1} parent=167 // pred_check
          %p1313 = pneg %p182
        $region178: #{tpu_custom_call.1} parent=167 // pred_check_branch
          %1315 = sbr.rel (%p1313) target = $region180
        $region179: #{tpu_custom_call.1} parent=167 // pred_region
          %1316 = dma.done %s1309, 128
        $region180: #{tpu_custom_call.1} parent=167 // pred_fallthru
          _
        // Predicated region
        $region181: #{tpu_custom_call.1} parent=167 // pred_check
          %p1317 = pneg %p224
        $region182: #{tpu_custom_call.1} parent=167 // pred_check_branch
          %1319 = sbr.rel (%p1317) target = $region184
        $region183: #{tpu_custom_call.1} parent=167 // pred_region
          %1320 = dma.done [#allocation9], 32
        $region184: #{tpu_custom_call.1} parent=167 // pred_fallthru
          _
        // Predicated region
        $region185: #{tpu_custom_call.1} parent=167 // pred_check
          %p1321 = pneg %p266
        $region186: #{tpu_custom_call.1} parent=167 // pred_check_branch
          %1323 = sbr.rel (%p1321) target = $region188
        $region187: #{tpu_custom_call.1} parent=167 // pred_region
          %1324 = dma.done [#allocation9], 32
        $region188: #{tpu_custom_call.1} parent=167 // pred_fallthru
          _
        // Predicated region
        $region189: #{tpu_custom_call.1} parent=167 // pred_check
          %p1325 = pneg %p308
        $region190: #{tpu_custom_call.1} parent=167 // pred_check_branch
          %1327 = sbr.rel (%p1325) target = $region192
        $region191: #{tpu_custom_call.1} parent=167 // pred_region
          %1328 = dma.done [#allocation12], 32
        $region192: #{tpu_custom_call.1} parent=167 // pred_fallthru
          _
        // Predicated region
        $region193: #{tpu_custom_call.1} parent=167 // pred_check
          %p1329 = pneg %p350
        $region194: #{tpu_custom_call.1} parent=167 // pred_check_branch
          %1331 = sbr.rel (%p1329) target = $region196
        $region195: #{tpu_custom_call.1} parent=167 // pred_region
          %1332 = dma.done [#allocation12], 32
        $region196: #{tpu_custom_call.1} parent=167 // pred_fallthru
          _
        // Predicated region
        $region197: #{tpu_custom_call.1} parent=167 // pred_check
          %p1333 = pneg %p371
        $region198: #{tpu_custom_call.1} parent=167 // pred_check_branch
          %1335 = sbr.rel (%p1333) target = $region200
        $region199: #{tpu_custom_call.1} parent=167 // pred_region
          %1336 = dma.done [#allocation15], 32
        $region200: #{tpu_custom_call.1} parent=167 // pred_fallthru
          _
        // Predicated region
        $region201: #{tpu_custom_call.1} parent=167 // pred_check
          %p1337 = pneg %p392
        $region202: #{tpu_custom_call.1} parent=167 // pred_check_branch
          %1339 = sbr.rel (%p1337) target = $region204
        $region203: #{tpu_custom_call.1} parent=167 // pred_region
          %1340 = dma.done [#allocation15], 32
        $region204: #{tpu_custom_call.1} parent=167 // pred_fallthru
          _
        // Predicated region
        $region205: #{tpu_custom_call.1} parent=167 // pred_check
          %p1341 = pneg %p434
        $region206: #{tpu_custom_call.1} parent=167 // pred_check_branch
          %1343 = sbr.rel (%p1341) target = $region208
        $region207: #{tpu_custom_call.1} parent=167 // pred_region
          %1344 = dma.done [#allocation18], 32
        $region208: #{tpu_custom_call.1} parent=167 // pred_fallthru
          _
        // Predicated region
        $region209: #{tpu_custom_call.1} parent=167 // pred_check
          %p1345 = pneg %p476
        $region210: #{tpu_custom_call.1} parent=167 // pred_check_branch
          %1347 = sbr.rel (%p1345) target = $region212
        $region211: #{tpu_custom_call.1} parent=167 // pred_region
          %1348 = dma.done [#allocation18], 32
        $region212: #{tpu_custom_call.1} parent=167 // pred_fallthru
          _
        // Predicated region
        $region213: #{tpu_custom_call.1} parent=167 // pred_check
          %p1349 = pneg %p497
        $region214: #{tpu_custom_call.1} parent=167 // pred_check_branch
          %1351 = sbr.rel (%p1349) target = $region216
        $region215: #{tpu_custom_call.1} parent=167 // pred_region
          %1352 = dma.done [#allocation21], 32
        $region216: #{tpu_custom_call.1} parent=167 // pred_fallthru
          _
        // Predicated region
        $region217: #{tpu_custom_call.1} parent=167 // pred_check
          %p1353 = pneg %p560
        $region218: #{tpu_custom_call.1} parent=167 // pred_check_branch
          %1355 = sbr.rel (%p1353) target = $region220
        $region219: #{tpu_custom_call.1} parent=167 // pred_region
          %1356 = dma.done [#allocation21], 32
        $region220: #{tpu_custom_call.1} parent=167 // pred_fallthru
          _
        // Predicated region
        $region221: #{tpu_custom_call.1} parent=167 // pred_check
          %p1357 = pneg %p581
        $region222: #{tpu_custom_call.1} parent=167 // pred_check_branch
          %1359 = sbr.rel (%p1357) target = $region224
        $region223: #{tpu_custom_call.1} parent=167 // pred_region
          %1360 = dma.done [#allocation24], 512
        $region224: #{tpu_custom_call.1} parent=167 // pred_fallthru
          _
        // Predicated region
        $region225: #{tpu_custom_call.1} parent=167 // pred_check
          %p1361 = pneg %p602
        $region226: #{tpu_custom_call.1} parent=167 // pred_check_branch
          %1363 = sbr.rel (%p1361) target = $region228
        $region227: #{tpu_custom_call.1} parent=167 // pred_region
          %1364 = dma.done [#allocation24], 32
        $region228: #{tpu_custom_call.1} parent=167 // pred_fallthru
          _
        // Predicated region
        $region229: #{tpu_custom_call.1} parent=167 // pred_check
          %p1365 = pneg %p623
        $region230: #{tpu_custom_call.1} parent=167 // pred_check_branch
          %1367 = sbr.rel (%p1365) target = $region232
        $region231: #{tpu_custom_call.1} parent=167 // pred_region
          %1368 = dma.done [#allocation27], 512
        $region232: #{tpu_custom_call.1} parent=167 // pred_fallthru
          _
        // Predicated region
        $region233: #{tpu_custom_call.1} parent=167 // pred_check
          %p1369 = pneg %p644
        $region234: #{tpu_custom_call.1} parent=167 // pred_check_branch
          %1371 = sbr.rel (%p1369) target = $region236
        $region235: #{tpu_custom_call.1} parent=167 // pred_region
          %1372 = dma.done [#allocation27], 32
        $region236: #{tpu_custom_call.1} parent=167 // pred_fallthru
          _
        // Predicated region
        $region237: #{tpu_custom_call.1} parent=167 // pred_check
          %p1373 = pneg %p665
        $region238: #{tpu_custom_call.1} parent=167 // pred_check_branch
          %1375 = sbr.rel (%p1373) target = $region240
        $region239: #{tpu_custom_call.1} parent=167 // pred_region
          %1376 = dma.done [#allocation30], 512
        $region240: #{tpu_custom_call.1} parent=167 // pred_fallthru
          _
        // Predicated region
        $region241: #{tpu_custom_call.1} parent=167 // pred_check
          %p1377 = pneg %p686
        $region242: #{tpu_custom_call.1} parent=167 // pred_check_branch
          %1379 = sbr.rel (%p1377) target = $region244
        $region243: #{tpu_custom_call.1} parent=167 // pred_region
          %1380 = dma.done [#allocation30], 32
        $region244: #{tpu_custom_call.1} parent=167 // pred_fallthru
          _
        %s1381 = sand.u32 %s117, 1
        %s1382 = scalar_lea.sflag [#allocation3], %s1381
        %s1383 = sand.u32 %s117, 1
        %s1384 = smul.addr %s1383, 8
        %s1385 = scalar_lea.vmem [#allocation2], %s1384
        %p1386 = pneg %p130
        %p1387 = pneg %p127
        %s1388 = sand.u32 %s109, 1
        %s1389 = scalar_lea.sflag [#allocation6], %s1388
        %s1390 = sand.u32 %s143, 1
        %s1391 = smul.addr %s1390, 8
        %s1392 = scalar_lea.vmem [#allocation5], %s1391
        %p1393 = pneg %p156
        %p1394 = pneg %p153
        %s1395 = sand.u32 %s109, 1
        %s1396 = scalar_lea.sflag [#allocation6], %s1395
        %s1397 = sand.u32 %s169, 1
        %s1398 = smul.addr %s1397, 8
        %s1399 = scalar_lea.vmem [#allocation7], %s1398
        %p1400 = pneg %p182
        %p1401 = pneg %p179
        %p1402 = pneg %p203
        %p1403 = pneg %p200
        %p1404 = pneg %p224
        %p1405 = pneg %p221
        %p1406 = pneg %p245
        %p1407 = pneg %p242
        %p1408 = pneg %p266
        %p1409 = pneg %p263
        %p1410 = pneg %p287
        %p1411 = pneg %p284
        %p1412 = pneg %p308
        %p1413 = pneg %p305
        %p1414 = pneg %p329
        %p1415 = pneg %p326
        %p1416 = pneg %p350
        %p1417 = pneg %p347
        %p1418 = pneg %p371
        %p1419 = pneg %p368
        %p1420 = pneg %p392
        %p1421 = pneg %p389
        %p1422 = pneg %p413
        %p1423 = pneg %p410
        %p1424 = pneg %p434
        %p1425 = pneg %p431
        %p1426 = pneg %p455
        %p1427 = pneg %p452
        %p1428 = pneg %p476
        %p1429 = pneg %p473
        %p1430 = pneg %p497
        %p1431 = pneg %p494
        %p1432 = pneg %p518
        %p1433 = pneg %p515
        %p1434 = pneg %p539
        %p1435 = pneg %p536
        %p1436 = pneg %p560
        %p1437 = pneg %p557
        %p1438 = pneg %p581
        %p1439 = pneg %p578
        %p1440 = pneg %p602
        %p1441 = pneg %p599
        %p1442 = pneg %p623
        %p1443 = pneg %p620
        %p1444 = pneg %p644
        %p1445 = pneg %p641
        %p1446 = pneg %p665
        %p1447 = pneg %p662
        %p1448 = pneg %p686
        %p1449 = pneg %p683
        %p1450 = pneg %p707
        %p1451 = pneg %p704
        %p1452 = pneg %p728
        %p1453 = pneg %p725
        %p1454 = pneg %p749
        %p1455 = pneg %p746
        %p1456 = pneg %p770
        %p1457 = pneg %p767
        %p1458 = pneg %p791
        %p1459 = pneg %p788
        %p1460 = pneg %p812
        %p1461 = pneg %p809
        %p1462 = pneg %p833
        %p1463 = pneg %p830
        %p1464 = pneg %p854
        %p1465 = pneg %p851
        %p1466 = pneg %p875
        %p1467 = pneg %p872
        %p1468 = pneg %p896
        %p1469 = pneg %p893
        %p1470 = pneg %p922
        %p1471 = pneg %p919
        %s1472 = sand.u32 %s909, 1
        %s1473 = scalar_lea.sflag [#allocation4], %s1472
        %s1474 = sand.u32 %s909, 1
        %s1475 = smul.addr %s1474, 8
        %s1476 = scalar_lea.vmem [#allocation32], %s1475
        %p1477 = pneg %p948
        %p1478 = pneg %p945
        %s1479 = sand.u32 %s935, 1
        %s1480 = scalar_lea.sflag [#allocation34], %s1479
        %s1481 = sand.u32 %s935, 1
        %s1482 = smul.addr %s1481, 8
        %s1483 = scalar_lea.vmem [#allocation33], %s1482
        %v1485 = vld [vmem:[%s1294] sm:$0xff]
        %v1486 = vld [vmem:[%s1303] sm:$0xff]
        %v1487 = vld [vmem:[%s1312] sm:$0xff]
        %v1488 = vadd.f32 %v1485, %v1486
        %v1489 = vld [vmem:[%s7] sm:$0xf]
        %v1490 = vld [vmem:[%s7 + $0x4] sm:$0xf]
        %v1491 = vld [vmem:[%s7 + $0x8] sm:$0xf]
        %v1492 = vld [vmem:[%s7 + $0xc] sm:$0xf]
        %v1493 = vld [vmem:[#allocation8] sm:$0x1]
        %v1494 = vld [vmem:[%s11] sm:$0xf]
        %v1495 = vld [vmem:[%s11 + $0x4] sm:$0xf]
        %v1496 = vld [vmem:[%s11 + $0x8] sm:$0xf]
        %v1497 = vld [vmem:[%s11 + $0xc] sm:$0xf]
        %v1498 = vld [vmem:[#allocation10] sm:$0x1]
        %v1499 = vld [vmem:[%s15] sm:$0xf]
        %v1500 = vld [vmem:[%s15 + $0x4] sm:$0xf]
        %v1501 = vld [vmem:[%s15 + $0x8] sm:$0xf]
        %v1502 = vld [vmem:[%s15 + $0xc] sm:$0xf]
        %v1503 = vld [vmem:[#allocation11] sm:$0x1]
        %v1504 = vld [vmem:[%s19] sm:$0xf]
        %v1505 = vld [vmem:[%s19 + $0x4] sm:$0xf]
        %v1506 = vld [vmem:[%s19 + $0x8] sm:$0xf]
        %v1507 = vld [vmem:[%s19 + $0xc] sm:$0xf]
        %v1508 = vld [vmem:[#allocation13] sm:$0x1]
        %v1509 = vpack.c.bf16 %v1488, %v1488
        %v1511 = vlaneseq
        %v1512 = vshrl.u32 %v1511, 7
        %v1513 = vsub.s32 0, %v1512
        %v1514 = vrot.slane %v1493, %v1513
        %v1520 = vunpack.c.l.b16 %v1489
        %v1521 = vunpack.c.l.b16 %v1490
        %v1522 = vunpack.c.l.b16 %v1491
        %v1523 = vunpack.c.l.b16 %v1492
        %v1524 = vpack.c.b16 %v1521, %v1520
        %v1525 = vpack.c.b16 %v1523, %v1522
        %vm1528 = vcmask 261120
        %v1530 = vsel %vm1528, %v1509, 0
        %1532 = vmatprep.subr.bf16.mxu0 0
        %1533 = vmatpush1.bf16.msra.mxu0 %v1524
        %1534 = vmatprep.subr.bf16.mxu0 0
        %1535 = vmatpush1.bf16.msra.mxu0 %v1525
        %1536 = vmatprep.subr.bf16.mxu0 0
        %1537 = vmatpush1.bf16.msra.mxu0 0
        %1538 = vmatprep.subr.bf16.mxu0 0
        %1539 = vmatpush1.bf16.msra.mxu0 0
        %1540 = vmatprep.subr.bf16.mxu0 0
        %1541 = vmatpush1.bf16.msra.mxu0 0
        %1542 = vmatprep.subr.bf16.mxu0 0
        %1543 = vmatpush1.bf16.msra.mxu0 0
        %1544 = vmatprep.subr.bf16.mxu0 0
        %1545 = vmatpush1.bf16.msra.mxu0 0
        %1546 = vmatprep.subr.bf16.mxu0 0
        %1547 = vmatpush1.bf16.msra.mxu0 0
        %1548 = vmatprep.subr.bf16.mxu0 0
        %1549 = vmatpush1.bf16.msra.mxu0 0
        %1550 = vmatprep.subr.bf16.mxu0 0
        %1551 = vmatpush1.bf16.msra.mxu0 0
        %1552 = vmatprep.subr.bf16.mxu0 0
        %1553 = vmatpush1.bf16.msra.mxu0 0
        %1554 = vmatprep.subr.bf16.mxu0 0
        %1555 = vmatpush1.bf16.msra.mxu0 0
        %1556 = vmatprep.subr.bf16.mxu0 0
        %1557 = vmatpush1.bf16.msra.mxu0 0
        %1558 = vmatprep.subr.bf16.mxu0 0
        %1559 = vmatpush1.bf16.msra.mxu0 0
        %1560 = vmatprep.subr.bf16.mxu0 0
        %1561 = vmatpush1.bf16.msra.mxu0 0
        %1562 = vmatprep.subr.bf16.mxu0 0
        %1563 = vmatpush1.bf16.msra.mxu0 0
        %1564 = vmatprep.mubr.bf16.mxu0 0
        %1565 = vmatmul.mubr.bf16.gmra.mrb[0].mxu0 %v1530
        %v1566 = vpop.f32.mrb[0].mxu0
        %v1567 = vadd.f32 %v1514, %v1566
        %v1568 = vpop.f32.mrb[0].mxu0
        %v1569 = vpop.f32.mrb[0].mxu0
        %v1570 = vpop.f32.mrb[0].mxu0
        %1571 = vdwg.mxu0
        %v1573 = vlaneseq
        %v1574 = vshrl.u32 %v1573, 7
        %v1575 = vsub.s32 0, %v1574
        %v1576 = vrot.slane %v1498, %v1575
        %v1582 = vunpack.c.l.b16 %v1494
        %v1583 = vunpack.c.l.b16 %v1495
        %v1584 = vunpack.c.l.b16 %v1496
        %v1585 = vunpack.c.l.b16 %v1497
        %v1586 = vpack.c.b16 %v1583, %v1582
        %v1587 = vpack.c.b16 %v1585, %v1584
        %1590 = vmatprep.subr.bf16.mxu0 0
        %1591 = vmatpush1.bf16.msra.mxu0 %v1586
        %1592 = vmatprep.subr.bf16.mxu0 0
        %1593 = vmatpush1.bf16.msra.mxu0 %v1587
        %1594 = vmatprep.subr.bf16.mxu0 0
        %1595 = vmatpush1.bf16.msra.mxu0 0
        %1596 = vmatprep.subr.bf16.mxu0 0
        %1597 = vmatpush1.bf16.msra.mxu0 0
        %1598 = vmatprep.subr.bf16.mxu0 0
        %1599 = vmatpush1.bf16.msra.mxu0 0
        %1600 = vmatprep.subr.bf16.mxu0 0
        %1601 = vmatpush1.bf16.msra.mxu0 0
        %1602 = vmatprep.subr.bf16.mxu0 0
        %1603 = vmatpush1.bf16.msra.mxu0 0
        %1604 = vmatprep.subr.bf16.mxu0 0
        %1605 = vmatpush1.bf16.msra.mxu0 0
        %1606 = vmatprep.subr.bf16.mxu0 0
        %1607 = vmatpush1.bf16.msra.mxu0 0
        %1608 = vmatprep.subr.bf16.mxu0 0
        %1609 = vmatpush1.bf16.msra.mxu0 0
        %1610 = vmatprep.subr.bf16.mxu0 0
        %1611 = vmatpush1.bf16.msra.mxu0 0
        %1612 = vmatprep.subr.bf16.mxu0 0
        %1613 = vmatpush1.bf16.msra.mxu0 0
        %1614 = vmatprep.subr.bf16.mxu0 0
        %1615 = vmatpush1.bf16.msra.mxu0 0
        %1616 = vmatprep.subr.bf16.mxu0 0
        %1617 = vmatpush1.bf16.msra.mxu0 0
        %1618 = vmatprep.subr.bf16.mxu0 0
        %1619 = vmatpush1.bf16.msra.mxu0 0
        %1620 = vmatprep.subr.bf16.mxu0 0
        %1621 = vmatpush1.bf16.msra.mxu0 0
        %1622 = vmatprep.mubr.bf16.mxu0 0
        %1623 = vmatmul.mubr.bf16.gmra.mrb[0].mxu0 %v1530
        %v1624 = vpop.f32.mrb[0].mxu0
        %v1625 = vadd.f32 %v1576, %v1624
        %v1626 = vpop.f32.mrb[0].mxu0
        %v1627 = vpop.f32.mrb[0].mxu0
        %v1628 = vpop.f32.mrb[0].mxu0
        %1629 = vdwg.mxu0
        %v1630 = vpack.c.bf16 %v1485, %v1485
        %v1632 = vlaneseq
        %v1633 = vshrl.u32 %v1632, 7
        %v1634 = vsub.s32 0, %v1633
        %v1635 = vrot.slane %v1503, %v1634
        %v1641 = vunpack.c.l.b16 %v1499
        %v1642 = vunpack.c.l.b16 %v1500
        %v1643 = vunpack.c.l.b16 %v1501
        %v1644 = vunpack.c.l.b16 %v1502
        %v1645 = vpack.c.b16 %v1642, %v1641
        %v1646 = vpack.c.b16 %v1644, %v1643
        %v1650 = vsel %vm1528, %v1630, 0
        %1652 = vmatprep.subr.bf16.mxu0 0
        %1653 = vmatpush1.bf16.msra.mxu0 %v1645
        %1654 = vmatprep.subr.bf16.mxu0 0
        %1655 = vmatpush1.bf16.msra.mxu0 %v1646
        %1656 = vmatprep.subr.bf16.mxu0 0
        %1657 = vmatpush1.bf16.msra.mxu0 0
        %1658 = vmatprep.subr.bf16.mxu0 0
        %1659 = vmatpush1.bf16.msra.mxu0 0
        %1660 = vmatprep.subr.bf16.mxu0 0
        %1661 = vmatpush1.bf16.msra.mxu0 0
        %1662 = vmatprep.subr.bf16.mxu0 0
        %1663 = vmatpush1.bf16.msra.mxu0 0
        %1664 = vmatprep.subr.bf16.mxu0 0
        %1665 = vmatpush1.bf16.msra.mxu0 0
        %1666 = vmatprep.subr.bf16.mxu0 0
        %1667 = vmatpush1.bf16.msra.mxu0 0
        %1668 = vmatprep.subr.bf16.mxu0 0
        %1669 = vmatpush1.bf16.msra.mxu0 0
        %1670 = vmatprep.subr.bf16.mxu0 0
        %1671 = vmatpush1.bf16.msra.mxu0 0
        %1672 = vmatprep.subr.bf16.mxu0 0
        %1673 = vmatpush1.bf16.msra.mxu0 0
        %1674 = vmatprep.subr.bf16.mxu0 0
        %1675 = vmatpush1.bf16.msra.mxu0 0
        %1676 = vmatprep.subr.bf16.mxu0 0
        %1677 = vmatpush1.bf16.msra.mxu0 0
        %1678 = vmatprep.subr.bf16.mxu0 0
        %1679 = vmatpush1.bf16.msra.mxu0 0
        %1680 = vmatprep.subr.bf16.mxu0 0
        %1681 = vmatpush1.bf16.msra.mxu0 0
        %1682 = vmatprep.subr.bf16.mxu0 0
        %1683 = vmatpush1.bf16.msra.mxu0 0
        %1684 = vmatprep.mubr.bf16.mxu0 0
        %1685 = vmatmul.mubr.bf16.gmra.mrb[0].mxu0 %v1650
        %v1686 = vpop.f32.mrb[0].mxu0
        %v1687 = vadd.f32 %v1635, %v1686
        %v1688 = vpop.f32.mrb[0].mxu0
        %v1689 = vpop.f32.mrb[0].mxu0
        %v1690 = vpop.f32.mrb[0].mxu0
        %1691 = vdwg.mxu0
        %v1692 = vpack.c.bf16 %v1567, %v1567
        %v1693 = vpack.c.bf16 %v1625, %v1625
        %vm1694 = vcmask 64512
        %v1696 = vsel %vm1694, %v1692, 0
        %v1699 = vsel %vm1694, %v1693, 0
        %1701 = vmatprep.subr.bf16.mxu0 0
        %1702 = vmatpush1.bf16.xpose.msra.mxu0 %v1699
        %1703 = vmatprep.subr.bf16.mxu0 0
        %1704 = vmatpush1.bf16.xpose.msra.mxu0 0
        %1705 = vmatprep.subr.bf16.mxu0 0
        %1706 = vmatpush1.bf16.xpose.msra.mxu0 0
        %1707 = vmatprep.subr.bf16.mxu0 0
        %1708 = vmatpush1.bf16.xpose.msra.mxu0 0
        %1709 = vmatprep.subr.bf16.mxu0 0
        %1710 = vmatpush1.bf16.xpose.msra.mxu0 0
        %1711 = vmatprep.subr.bf16.mxu0 0
        %1712 = vmatpush1.bf16.xpose.msra.mxu0 0
        %1713 = vmatprep.subr.bf16.mxu0 0
        %1714 = vmatpush1.bf16.xpose.msra.mxu0 0
        %1715 = vmatprep.subr.bf16.mxu0 0
        %1716 = vmatpush1.bf16.xpose.msra.mxu0 0
        %1717 = vmatprep.subr.bf16.mxu0 0
        %1718 = vmatpush1.bf16.xpose.msra.mxu0 0
        %1719 = vmatprep.subr.bf16.mxu0 0
        %1720 = vmatpush1.bf16.xpose.msra.mxu0 0
        %1721 = vmatprep.subr.bf16.mxu0 0
        %1722 = vmatpush1.bf16.xpose.msra.mxu0 0
        %1723 = vmatprep.subr.bf16.mxu0 0
        %1724 = vmatpush1.bf16.xpose.msra.mxu0 0
        %1725 = vmatprep.subr.bf16.mxu0 0
        %1726 = vmatpush1.bf16.xpose.msra.mxu0 0
        %1727 = vmatprep.subr.bf16.mxu0 0
        %1728 = vmatpush1.bf16.xpose.msra.mxu0 0
        %1729 = vmatprep.subr.bf16.mxu0 0
        %1730 = vmatpush1.bf16.xpose.msra.mxu0 0
        %1731 = vmatprep.subr.bf16.mxu0 0
        %1732 = vmatpush1.bf16.xpose.msra.mxu0 0
        %1733 = vmatprep.mubr.bf16.mxu0 0
        %1734 = vmatmul.mubr.bf16.gmra.mrb[0].mxu0 %v1696
        %v1735 = vpop.f32.mrb[0].mxu0
        %v1736 = vadd.f32 0.0, %v1735
        %v1737 = vpop.f32.mrb[0].mxu0
        %v1738 = vpop.f32.mrb[0].mxu0
        %v1739 = vpop.f32.mrb[0].mxu0
        %1740 = vdwg.mxu0
        %v1741 = vsel %vm1694, %v1736, -inf
        %1742 = vmax.xlane.f32.xlu0 %v1741
        %v1743 = vpop.xlane.xlu0 %1742
        %v1744 = vsub.f32 %v1736, %v1743
        %v1745 = vmul.f32 %v1744, 1.442695
        %v1746 = vpow.pop %v1745
        %v1747 = vsel %vm1694, %v1746, 0.0
        %1748 = vadd.xlane.f32.xlu0 %v1747
        %v1749 = vpop.xlane.xlu0 %1748
        %v1750 = vrcp.pop %v1749
        %v1751 = vmul.f32 %v1746, %v1750
        %v1752 = vpack.c.bf16 %v1751, %v1751
        %v1753 = vpack.c.bf16 %v1687, %v1687
        %v1755 = vsel %vm1694, %v1752, 0
        %vm1757 = vcmask 1043456
        %v1759 = vsel %vm1757, %v1753, 0
        %1761 = vmatprep.subr.bf16.mxu0 0
        %1762 = vmatpush1.bf16.msra.mxu0 %v1759
        %1763 = vmatprep.subr.bf16.mxu0 0
        %1764 = vmatpush1.bf16.msra.mxu0 0
        %1765 = vmatprep.subr.bf16.mxu0 0
        %1766 = vmatpush1.bf16.msra.mxu0 0
        %1767 = vmatprep.subr.bf16.mxu0 0
        %1768 = vmatpush1.bf16.msra.mxu0 0
        %1769 = vmatprep.subr.bf16.mxu0 0
        %1770 = vmatpush1.bf16.msra.mxu0 0
        %1771 = vmatprep.subr.bf16.mxu0 0
        %1772 = vmatpush1.bf16.msra.mxu0 0
        %1773 = vmatprep.subr.bf16.mxu0 0
        %1774 = vmatpush1.bf16.msra.mxu0 0
        %1775 = vmatprep.subr.bf16.mxu0 0
        %1776 = vmatpush1.bf16.msra.mxu0 0
        %1777 = vmatprep.subr.bf16.mxu0 0
        %1778 = vmatpush1.bf16.msra.mxu0 0
        %1779 = vmatprep.subr.bf16.mxu0 0
        %1780 = vmatpush1.bf16.msra.mxu0 0
        %1781 = vmatprep.subr.bf16.mxu0 0
        %1782 = vmatpush1.bf16.msra.mxu0 0
        %1783 = vmatprep.subr.bf16.mxu0 0
        %1784 = vmatpush1.bf16.msra.mxu0 0
        %1785 = vmatprep.subr.bf16.mxu0 0
        %1786 = vmatpush1.bf16.msra.mxu0 0
        %1787 = vmatprep.subr.bf16.mxu0 0
        %1788 = vmatpush1.bf16.msra.mxu0 0
        %1789 = vmatprep.subr.bf16.mxu0 0
        %1790 = vmatpush1.bf16.msra.mxu0 0
        %1791 = vmatprep.subr.bf16.mxu0 0
        %1792 = vmatpush1.bf16.msra.mxu0 0
        %1793 = vmatprep.mubr.bf16.mxu0 0
        %1794 = vmatmul.mubr.bf16.gmra.mrb[0].mxu0 %v1755
        %v1795 = vpop.f32.mrb[0].mxu0
        %v1796 = vadd.f32 0.0, %v1795
        %v1797 = vpop.f32.mrb[0].mxu0
        %v1798 = vpop.f32.mrb[0].mxu0
        %v1799 = vpop.f32.mrb[0].mxu0
        %1800 = vdwg.mxu0
        %1802 = vrot.lane.b32.xlu0 %v1692, 120
        %v1803 = vpop.permute.xlu0 %1802
        %1805 = vrot.lane.b32.xlu0 %v1693, 120
        %v1806 = vpop.permute.xlu0 %1805
        %v1808 = vsel %vm1694, %v1803, 0
        %v1811 = vsel %vm1694, %v1806, 0
        %1813 = vmatprep.subr.bf16.mxu0 0
        %1814 = vmatpush1.bf16.xpose.msra.mxu0 %v1811
        %1815 = vmatprep.subr.bf16.mxu0 0
        %1816 = vmatpush1.bf16.xpose.msra.mxu0 0
        %1817 = vmatprep.subr.bf16.mxu0 0
        %1818 = vmatpush1.bf16.xpose.msra.mxu0 0
        %1819 = vmatprep.subr.bf16.mxu0 0
        %1820 = vmatpush1.bf16.xpose.msra.mxu0 0
        %1821 = vmatprep.subr.bf16.mxu0 0
        %1822 = vmatpush1.bf16.xpose.msra.mxu0 0
        %1823 = vmatprep.subr.bf16.mxu0 0
        %1824 = vmatpush1.bf16.xpose.msra.mxu0 0
        %1825 = vmatprep.subr.bf16.mxu0 0
        %1826 = vmatpush1.bf16.xpose.msra.mxu0 0
        %1827 = vmatprep.subr.bf16.mxu0 0
        %1828 = vmatpush1.bf16.xpose.msra.mxu0 0
        %1829 = vmatprep.subr.bf16.mxu0 0
        %1830 = vmatpush1.bf16.xpose.msra.mxu0 0
        %1831 = vmatprep.subr.bf16.mxu0 0
        %1832 = vmatpush1.bf16.xpose.msra.mxu0 0
        %1833 = vmatprep.subr.bf16.mxu0 0
        %1834 = vmatpush1.bf16.xpose.msra.mxu0 0
        %1835 = vmatprep.subr.bf16.mxu0 0
        %1836 = vmatpush1.bf16.xpose.msra.mxu0 0
        %1837 = vmatprep.subr.bf16.mxu0 0
        %1838 = vmatpush1.bf16.xpose.msra.mxu0 0
        %1839 = vmatprep.subr.bf16.mxu0 0
        %1840 = vmatpush1.bf16.xpose.msra.mxu0 0
        %1841 = vmatprep.subr.bf16.mxu0 0
        %1842 = vmatpush1.bf16.xpose.msra.mxu0 0
        %1843 = vmatprep.subr.bf16.mxu0 0
        %1844 = vmatpush1.bf16.xpose.msra.mxu0 0
        %1845 = vmatprep.mubr.bf16.mxu0 0
        %1846 = vmatmul.mubr.bf16.gmra.mrb[0].mxu0 %v1808
        %v1847 = vpop.f32.mrb[0].mxu0
        %v1848 = vadd.f32 0.0, %v1847
        %v1849 = vpop.f32.mrb[0].mxu0
        %v1850 = vpop.f32.mrb[0].mxu0
        %v1851 = vpop.f32.mrb[0].mxu0
        %1852 = vdwg.mxu0
        %v1853 = vsel %vm1694, %v1848, -inf
        %1854 = vmax.xlane.f32.xlu0 %v1853
        %v1855 = vpop.xlane.xlu0 %1854
        %v1856 = vsub.f32 %v1848, %v1855
        %v1857 = vmul.f32 %v1856, 1.442695
        %v1858 = vpow.pop %v1857
        %v1859 = vsel %vm1694, %v1858, 0.0
        %1860 = vadd.xlane.f32.xlu0 %v1859
        %v1861 = vpop.xlane.xlu0 %1860
        %v1862 = vrcp.pop %v1861
        %v1863 = vmul.f32 %v1858, %v1862
        %v1864 = vpack.c.bf16 %v1863, %v1863
        %1866 = vrot.lane.b32.xlu0 %v1753, 120
        %v1867 = vpop.permute.xlu0 %1866
        %v1869 = vsel %vm1694, %v1864, 0
        %v1872 = vsel %vm1757, %v1867, 0
        %1874 = vmatprep.subr.bf16.mxu0 0
        %1875 = vmatpush1.bf16.msra.mxu0 %v1872
        %1876 = vmatprep.subr.bf16.mxu0 0
        %1877 = vmatpush1.bf16.msra.mxu0 0
        %1878 = vmatprep.subr.bf16.mxu0 0
        %1879 = vmatpush1.bf16.msra.mxu0 0
        %1880 = vmatprep.subr.bf16.mxu0 0
        %1881 = vmatpush1.bf16.msra.mxu0 0
        %1882 = vmatprep.subr.bf16.mxu0 0
        %1883 = vmatpush1.bf16.msra.mxu0 0
        %1884 = vmatprep.subr.bf16.mxu0 0
        %1885 = vmatpush1.bf16.msra.mxu0 0
        %1886 = vmatprep.subr.bf16.mxu0 0
        %1887 = vmatpush1.bf16.msra.mxu0 0
        %1888 = vmatprep.subr.bf16.mxu0 0
        %1889 = vmatpush1.bf16.msra.mxu0 0
        %1890 = vmatprep.subr.bf16.mxu0 0
        %1891 = vmatpush1.bf16.msra.mxu0 0
        %1892 = vmatprep.subr.bf16.mxu0 0
        %1893 = vmatpush1.bf16.msra.mxu0 0
        %1894 = vmatprep.subr.bf16.mxu0 0
        %1895 = vmatpush1.bf16.msra.mxu0 0
        %1896 = vmatprep.subr.bf16.mxu0 0
        %1897 = vmatpush1.bf16.msra.mxu0 0
        %1898 = vmatprep.subr.bf16.mxu0 0
        %1899 = vmatpush1.bf16.msra.mxu0 0
        %1900 = vmatprep.subr.bf16.mxu0 0
        %1901 = vmatpush1.bf16.msra.mxu0 0
        %1902 = vmatprep.subr.bf16.mxu0 0
        %1903 = vmatpush1.bf16.msra.mxu0 0
        %1904 = vmatprep.subr.bf16.mxu0 0
        %1905 = vmatpush1.bf16.msra.mxu0 0
        %1906 = vmatprep.mubr.bf16.mxu0 0
        %1907 = vmatmul.mubr.bf16.gmra.mrb[0].mxu0 %v1869
        %v1908 = vpop.f32.mrb[0].mxu0
        %v1909 = vadd.f32 0.0, %v1908
        %v1910 = vpop.f32.mrb[0].mxu0
        %v1911 = vpop.f32.mrb[0].mxu0
        %v1912 = vpop.f32.mrb[0].mxu0
        %1913 = vdwg.mxu0
        %1914 = vrot.lane.b32.xlu0 %v1692, 112
        %v1915 = vpop.permute.xlu0 %1914
        %1916 = vrot.lane.b32.xlu0 %v1693, 112
        %v1917 = vpop.permute.xlu0 %1916
        %v1919 = vsel %vm1694, %v1915, 0
        %v1922 = vsel %vm1694, %v1917, 0
        %1924 = vmatprep.subr.bf16.mxu0 0
        %1925 = vmatpush1.bf16.xpose.msra.mxu0 %v1922
        %1926 = vmatprep.subr.bf16.mxu0 0
        %1927 = vmatpush1.bf16.xpose.msra.mxu0 0
        %1928 = vmatprep.subr.bf16.mxu0 0
        %1929 = vmatpush1.bf16.xpose.msra.mxu0 0
        %1930 = vmatprep.subr.bf16.mxu0 0
        %1931 = vmatpush1.bf16.xpose.msra.mxu0 0
        %1932 = vmatprep.subr.bf16.mxu0 0
        %1933 = vmatpush1.bf16.xpose.msra.mxu0 0
        %1934 = vmatprep.subr.bf16.mxu0 0
        %1935 = vmatpush1.bf16.xpose.msra.mxu0 0
        %1936 = vmatprep.subr.bf16.mxu0 0
        %1937 = vmatpush1.bf16.xpose.msra.mxu0 0
        %1938 = vmatprep.subr.bf16.mxu0 0
        %1939 = vmatpush1.bf16.xpose.msra.mxu0 0
        %1940 = vmatprep.subr.bf16.mxu0 0
        %1941 = vmatpush1.bf16.xpose.msra.mxu0 0
        %1942 = vmatprep.subr.bf16.mxu0 0
        %1943 = vmatpush1.bf16.xpose.msra.mxu0 0
        %1944 = vmatprep.subr.bf16.mxu0 0
        %1945 = vmatpush1.bf16.xpose.msra.mxu0 0
        %1946 = vmatprep.subr.bf16.mxu0 0
        %1947 = vmatpush1.bf16.xpose.msra.mxu0 0
        %1948 = vmatprep.subr.bf16.mxu0 0
        %1949 = vmatpush1.bf16.xpose.msra.mxu0 0
        %1950 = vmatprep.subr.bf16.mxu0 0
        %1951 = vmatpush1.bf16.xpose.msra.mxu0 0
        %1952 = vmatprep.subr.bf16.mxu0 0
        %1953 = vmatpush1.bf16.xpose.msra.mxu0 0
        %1954 = vmatprep.subr.bf16.mxu0 0
        %1955 = vmatpush1.bf16.xpose.msra.mxu0 0
        %1956 = vmatprep.mubr.bf16.mxu0 0
        %1957 = vmatmul.mubr.bf16.gmra.mrb[0].mxu0 %v1919
        %v1958 = vpop.f32.mrb[0].mxu0
        %v1959 = vadd.f32 0.0, %v1958
        %v1960 = vpop.f32.mrb[0].mxu0
        %v1961 = vpop.f32.mrb[0].mxu0
        %v1962 = vpop.f32.mrb[0].mxu0
        %1963 = vdwg.mxu0
        %v1964 = vsel %vm1694, %v1959, -inf
        %1965 = vmax.xlane.f32.xlu0 %v1964
        %v1966 = vpop.xlane.xlu0 %1965
        %v1967 = vsub.f32 %v1959, %v1966
        %v1968 = vmul.f32 %v1967, 1.442695
        %v1969 = vpow.pop %v1968
        %v1970 = vsel %vm1694, %v1969, 0.0
        %1971 = vadd.xlane.f32.xlu0 %v1970
        %v1972 = vpop.xlane.xlu0 %1971
        %v1973 = vrcp.pop %v1972
        %v1974 = vmul.f32 %v1969, %v1973
        %v1975 = vpack.c.bf16 %v1974, %v1974
        %1976 = vrot.lane.b32.xlu0 %v1753, 112
        %v1977 = vpop.permute.xlu0 %1976
        %v1979 = vsel %vm1694, %v1975, 0
        %v1982 = vsel %vm1757, %v1977, 0
        %1984 = vmatprep.subr.bf16.mxu0 0
        %1985 = vmatpush1.bf16.msra.mxu0 %v1982
        %1986 = vmatprep.subr.bf16.mxu0 0
        %1987 = vmatpush1.bf16.msra.mxu0 0
        %1988 = vmatprep.subr.bf16.mxu0 0
        %1989 = vmatpush1.bf16.msra.mxu0 0
        %1990 = vmatprep.subr.bf16.mxu0 0
        %1991 = vmatpush1.bf16.msra.mxu0 0
        %1992 = vmatprep.subr.bf16.mxu0 0
        %1993 = vmatpush1.bf16.msra.mxu0 0
        %1994 = vmatprep.subr.bf16.mxu0 0
        %1995 = vmatpush1.bf16.msra.mxu0 0
        %1996 = vmatprep.subr.bf16.mxu0 0
        %1997 = vmatpush1.bf16.msra.mxu0 0
        %1998 = vmatprep.subr.bf16.mxu0 0
        %1999 = vmatpush1.bf16.msra.mxu0 0
        %2000 = vmatprep.subr.bf16.mxu0 0
        %2001 = vmatpush1.bf16.msra.mxu0 0
        %2002 = vmatprep.subr.bf16.mxu0 0
        %2003 = vmatpush1.bf16.msra.mxu0 0
        %2004 = vmatprep.subr.bf16.mxu0 0
        %2005 = vmatpush1.bf16.msra.mxu0 0
        %2006 = vmatprep.subr.bf16.mxu0 0
        %2007 = vmatpush1.bf16.msra.mxu0 0
        %2008 = vmatprep.subr.bf16.mxu0 0
        %2009 = vmatpush1.bf16.msra.mxu0 0
        %2010 = vmatprep.subr.bf16.mxu0 0
        %2011 = vmatpush1.bf16.msra.mxu0 0
        %2012 = vmatprep.subr.bf16.mxu0 0
        %2013 = vmatpush1.bf16.msra.mxu0 0
        %2014 = vmatprep.subr.bf16.mxu0 0
        %2015 = vmatpush1.bf16.msra.mxu0 0
        %2016 = vmatprep.mubr.bf16.mxu0 0
        %2017 = vmatmul.mubr.bf16.gmra.mrb[0].mxu0 %v1979
        %v2018 = vpop.f32.mrb[0].mxu0
        %v2019 = vadd.f32 0.0, %v2018
        %v2020 = vpop.f32.mrb[0].mxu0
        %v2021 = vpop.f32.mrb[0].mxu0
        %v2022 = vpop.f32.mrb[0].mxu0
        %2023 = vdwg.mxu0
        %2024 = vrot.lane.b32.xlu0 %v1692, 104
        %v2025 = vpop.permute.xlu0 %2024
        %2026 = vrot.lane.b32.xlu0 %v1693, 104
        %v2027 = vpop.permute.xlu0 %2026
        %v2029 = vsel %vm1694, %v2025, 0
        %v2032 = vsel %vm1694, %v2027, 0
        %2034 = vmatprep.subr.bf16.mxu0 0
        %2035 = vmatpush1.bf16.xpose.msra.mxu0 %v2032
        %2036 = vmatprep.subr.bf16.mxu0 0
        %2037 = vmatpush1.bf16.xpose.msra.mxu0 0
        %2038 = vmatprep.subr.bf16.mxu0 0
        %2039 = vmatpush1.bf16.xpose.msra.mxu0 0
        %2040 = vmatprep.subr.bf16.mxu0 0
        %2041 = vmatpush1.bf16.xpose.msra.mxu0 0
        %2042 = vmatprep.subr.bf16.mxu0 0
        %2043 = vmatpush1.bf16.xpose.msra.mxu0 0
        %2044 = vmatprep.subr.bf16.mxu0 0
        %2045 = vmatpush1.bf16.xpose.msra.mxu0 0
        %2046 = vmatprep.subr.bf16.mxu0 0
        %2047 = vmatpush1.bf16.xpose.msra.mxu0 0
        %2048 = vmatprep.subr.bf16.mxu0 0
        %2049 = vmatpush1.bf16.xpose.msra.mxu0 0
        %2050 = vmatprep.subr.bf16.mxu0 0
        %2051 = vmatpush1.bf16.xpose.msra.mxu0 0
        %2052 = vmatprep.subr.bf16.mxu0 0
        %2053 = vmatpush1.bf16.xpose.msra.mxu0 0
        %2054 = vmatprep.subr.bf16.mxu0 0
        %2055 = vmatpush1.bf16.xpose.msra.mxu0 0
        %2056 = vmatprep.subr.bf16.mxu0 0
        %2057 = vmatpush1.bf16.xpose.msra.mxu0 0
        %2058 = vmatprep.subr.bf16.mxu0 0
        %2059 = vmatpush1.bf16.xpose.msra.mxu0 0
        %2060 = vmatprep.subr.bf16.mxu0 0
        %2061 = vmatpush1.bf16.xpose.msra.mxu0 0
        %2062 = vmatprep.subr.bf16.mxu0 0
        %2063 = vmatpush1.bf16.xpose.msra.mxu0 0
        %2064 = vmatprep.subr.bf16.mxu0 0
        %2065 = vmatpush1.bf16.xpose.msra.mxu0 0
        %2066 = vmatprep.mubr.bf16.mxu0 0
        %2067 = vmatmul.mubr.bf16.gmra.mrb[0].mxu0 %v2029
        %v2068 = vpop.f32.mrb[0].mxu0
        %v2069 = vadd.f32 0.0, %v2068
        %v2070 = vpop.f32.mrb[0].mxu0
        %v2071 = vpop.f32.mrb[0].mxu0
        %v2072 = vpop.f32.mrb[0].mxu0
        %2073 = vdwg.mxu0
        %v2074 = vsel %vm1694, %v2069, -inf
        %2075 = vmax.xlane.f32.xlu0 %v2074
        %v2076 = vpop.xlane.xlu0 %2075
        %v2077 = vsub.f32 %v2069, %v2076
        %v2078 = vmul.f32 %v2077, 1.442695
        %v2079 = vpow.pop %v2078
        %v2080 = vsel %vm1694, %v2079, 0.0
        %2081 = vadd.xlane.f32.xlu0 %v2080
        %v2082 = vpop.xlane.xlu0 %2081
        %v2083 = vrcp.pop %v2082
        %v2084 = vmul.f32 %v2079, %v2083
        %v2085 = vpack.c.bf16 %v2084, %v2084
        %2086 = vrot.lane.b32.xlu0 %v1753, 104
        %v2087 = vpop.permute.xlu0 %2086
        %v2089 = vsel %vm1694, %v2085, 0
        %v2092 = vsel %vm1757, %v2087, 0
        %2094 = vmatprep.subr.bf16.mxu0 0
        %2095 = vmatpush1.bf16.msra.mxu0 %v2092
        %2096 = vmatprep.subr.bf16.mxu0 0
        %2097 = vmatpush1.bf16.msra.mxu0 0
        %2098 = vmatprep.subr.bf16.mxu0 0
        %2099 = vmatpush1.bf16.msra.mxu0 0
        %2100 = vmatprep.subr.bf16.mxu0 0
        %2101 = vmatpush1.bf16.msra.mxu0 0
        %2102 = vmatprep.subr.bf16.mxu0 0
        %2103 = vmatpush1.bf16.msra.mxu0 0
        %2104 = vmatprep.subr.bf16.mxu0 0
        %2105 = vmatpush1.bf16.msra.mxu0 0
        %2106 = vmatprep.subr.bf16.mxu0 0
        %2107 = vmatpush1.bf16.msra.mxu0 0
        %2108 = vmatprep.subr.bf16.mxu0 0
        %2109 = vmatpush1.bf16.msra.mxu0 0
        %2110 = vmatprep.subr.bf16.mxu0 0
        %2111 = vmatpush1.bf16.msra.mxu0 0
        %2112 = vmatprep.subr.bf16.mxu0 0
        %2113 = vmatpush1.bf16.msra.mxu0 0
        %2114 = vmatprep.subr.bf16.mxu0 0
        %2115 = vmatpush1.bf16.msra.mxu0 0
        %2116 = vmatprep.subr.bf16.mxu0 0
        %2117 = vmatpush1.bf16.msra.mxu0 0
        %2118 = vmatprep.subr.bf16.mxu0 0
        %2119 = vmatpush1.bf16.msra.mxu0 0
        %2120 = vmatprep.subr.bf16.mxu0 0
        %2121 = vmatpush1.bf16.msra.mxu0 0
        %2122 = vmatprep.subr.bf16.mxu0 0
        %2123 = vmatpush1.bf16.msra.mxu0 0
        %2124 = vmatprep.subr.bf16.mxu0 0
        %2125 = vmatpush1.bf16.msra.mxu0 0
        %2126 = vmatprep.mubr.bf16.mxu0 0
        %2127 = vmatmul.mubr.bf16.gmra.mrb[0].mxu0 %v2089
        %v2128 = vpop.f32.mrb[0].mxu0
        %v2129 = vadd.f32 0.0, %v2128
        %v2130 = vpop.f32.mrb[0].mxu0
        %v2131 = vpop.f32.mrb[0].mxu0
        %v2132 = vpop.f32.mrb[0].mxu0
        %2133 = vdwg.mxu0
        %2135 = vrot.lane.b32.xlu0 %v1909, 8
        %v2136 = vpop.permute.xlu0 %2135
        %2139 = vrot.lane.b32.xlu0 %v2019, 16
        %v2140 = vpop.permute.xlu0 %2139
        %2143 = vrot.lane.b32.xlu0 %v2129, 24
        %v2144 = vpop.permute.xlu0 %2143
        %v2146 = vsel %vm1694, %v1796, %v2136
        %vm2147 = vcmask 130048
        %v2148 = vsel %vm2147, %v2146, %v2140
        %vm2149 = vcmask 195584
        %v2150 = vsel %vm2149, %v2148, %v2144
        %v2151 = vpack.c.bf16 %v2150, %v2150
        %v2153 = vlaneseq
        %v2154 = vshrl.u32 %v2153, 7
        %v2155 = vsub.s32 0, %v2154
        %v2156 = vrot.slane %v1508, %v2155
        %v2162 = vunpack.c.l.b16 %v1504
        %v2163 = vunpack.c.l.b16 %v1505
        %v2164 = vunpack.c.l.b16 %v1506
        %v2165 = vunpack.c.l.b16 %v1507
        %v2166 = vpack.c.b16 %v2163, %v2162
        %v2167 = vpack.c.b16 %v2165, %v2164
        %v2171 = vsel %vm1528, %v2151, 0
        %2173 = vmatprep.subr.bf16.mxu0 0
        %2174 = vmatpush1.bf16.msra.mxu0 %v2166
        %2175 = vmatprep.subr.bf16.mxu0 0
        %2176 = vmatpush1.bf16.msra.mxu0 %v2167
        %2177 = vmatprep.subr.bf16.mxu0 0
        %2178 = vmatpush1.bf16.msra.mxu0 0
        %2179 = vmatprep.subr.bf16.mxu0 0
        %2180 = vmatpush1.bf16.msra.mxu0 0
        %2181 = vmatprep.subr.bf16.mxu0 0
        %2182 = vmatpush1.bf16.msra.mxu0 0
        %2183 = vmatprep.subr.bf16.mxu0 0
        %2184 = vmatpush1.bf16.msra.mxu0 0
        %2185 = vmatprep.subr.bf16.mxu0 0
        %2186 = vmatpush1.bf16.msra.mxu0 0
        %2187 = vmatprep.subr.bf16.mxu0 0
        %2188 = vmatpush1.bf16.msra.mxu0 0
        %2189 = vmatprep.subr.bf16.mxu0 0
        %2190 = vmatpush1.bf16.msra.mxu0 0
        %2191 = vmatprep.subr.bf16.mxu0 0
        %2192 = vmatpush1.bf16.msra.mxu0 0
        %2193 = vmatprep.subr.bf16.mxu0 0
        %2194 = vmatpush1.bf16.msra.mxu0 0
        %2195 = vmatprep.subr.bf16.mxu0 0
        %2196 = vmatpush1.bf16.msra.mxu0 0
        %2197 = vmatprep.subr.bf16.mxu0 0
        %2198 = vmatpush1.bf16.msra.mxu0 0
        %2199 = vmatprep.subr.bf16.mxu0 0
        %2200 = vmatpush1.bf16.msra.mxu0 0
        %2201 = vmatprep.subr.bf16.mxu0 0
        %2202 = vmatpush1.bf16.msra.mxu0 0
        %2203 = vmatprep.subr.bf16.mxu0 0
        %2204 = vmatpush1.bf16.msra.mxu0 0
        %2205 = vmatprep.mubr.bf16.mxu0 0
        %2206 = vmatmul.mubr.bf16.gmra.mrb[0].mxu0 %v2171
        %v2207 = vpop.f32.mrb[0].mxu0
        %v2208 = vadd.f32 %v2156, %v2207
        %v2209 = vpop.f32.mrb[0].mxu0
        %v2210 = vpop.f32.mrb[0].mxu0
        %v2211 = vpop.f32.mrb[0].mxu0
        %2212 = vdwg.mxu0
        %v2213 = vadd.f32 %v1485, %v2208
        %v2214 = vld [vmem:[#allocation14] sm:$0x1]
        %v2215 = vld [vmem:[#allocation16] sm:$0x1]
        %v2216 = vsel %vm1528, %v2213, 0.0
        %2217 = vadd.xlane.f32.xlu0 %v2216
        %v2218 = vpop.xlane.xlu0 %2217
        %v2219 = vrcp.pop 32.0
        %v2220 = vmul.f32 %v2218, %v2219
        %v2221 = vsub.f32 %v2213, %v2220
        %v2222 = vmul.f32 %v2221, %v2221
        %v2223 = vsel %vm1528, %v2222, 0.0
        %2224 = vadd.xlane.f32.xlu0 %v2223
        %v2225 = vpop.xlane.xlu0 %2224
        %v2226 = vmul.f32 %v2225, %v2219
        %v2227 = vadd.f32 %v2226, 1e-05
        %v2228 = vrsqrt.pop %v2227
        %v2229 = vmul.f32 %v2221, %v2228
        %v2231 = vlaneseq
        %v2232 = vshrl.u32 %v2231, 7
        %v2233 = vsub.s32 0, %v2232
        %v2234 = vrot.slane %v2214, %v2233
        %v2236 = vmul.f32 %v2229, %v2234
        %v2238 = vlaneseq
        %v2239 = vshrl.u32 %v2238, 7
        %v2240 = vsub.s32 0, %v2239
        %v2241 = vrot.slane %v2215, %v2240
        %v2243 = vadd.f32 %v2236, %v2241
        %v2244 = vld [vmem:[%s27] sm:$0xf]
        %v2245 = vld [vmem:[%s27 + $0x4] sm:$0xf]
        %v2246 = vld [vmem:[%s27 + $0x8] sm:$0xf]
        %v2247 = vld [vmem:[%s27 + $0xc] sm:$0xf]
        %v2248 = vld [vmem:[#allocation17] sm:$0x1]
        %v2249 = vld [vmem:[%s31] sm:$0xf]
        %v2250 = vld [vmem:[%s31 + $0x4] sm:$0xf]
        %v2251 = vld [vmem:[%s31 + $0x8] sm:$0xf]
        %v2252 = vld [vmem:[%s31 + $0xc] sm:$0xf]
        %v2253 = vld [vmem:[%s31 + $0x10] sm:$0xf]
        %v2254 = vld [vmem:[%s31 + $0x14] sm:$0xf]
        %v2255 = vld [vmem:[%s31 + $0x18] sm:$0xf]
        %v2256 = vld [vmem:[%s31 + $0x1c] sm:$0xf]
        %v2257 = vld [vmem:[#allocation19] sm:$0x1]
        %v2258 = vpack.c.bf16 %v2243, %v2243
        %v2260 = vlaneseq
        %v2261 = vshrl.u32 %v2260, 7
        %v2262 = vsub.s32 0, %v2261
        %v2263 = vrot.slane %v2248, %v2262
        %v2269 = vunpack.c.l.b16 %v2244
        %v2270 = vunpack.c.l.b16 %v2245
        %v2271 = vunpack.c.l.b16 %v2246
        %v2272 = vunpack.c.l.b16 %v2247
        %v2273 = vpack.c.b16 %v2270, %v2269
        %v2274 = vpack.c.b16 %v2272, %v2271
        %v2278 = vsel %vm1528, %v2258, 0
        %2280 = vmatprep.subr.bf16.mxu0 0
        %2281 = vmatpush1.bf16.msra.mxu0 %v2273
        %2282 = vmatprep.subr.bf16.mxu0 0
        %2283 = vmatpush1.bf16.msra.mxu0 %v2274
        %2284 = vmatprep.subr.bf16.mxu0 0
        %2285 = vmatpush1.bf16.msra.mxu0 0
        %2286 = vmatprep.subr.bf16.mxu0 0
        %2287 = vmatpush1.bf16.msra.mxu0 0
        %2288 = vmatprep.subr.bf16.mxu0 0
        %2289 = vmatpush1.bf16.msra.mxu0 0
        %2290 = vmatprep.subr.bf16.mxu0 0
        %2291 = vmatpush1.bf16.msra.mxu0 0
        %2292 = vmatprep.subr.bf16.mxu0 0
        %2293 = vmatpush1.bf16.msra.mxu0 0
        %2294 = vmatprep.subr.bf16.mxu0 0
        %2295 = vmatpush1.bf16.msra.mxu0 0
        %2296 = vmatprep.subr.bf16.mxu0 0
        %2297 = vmatpush1.bf16.msra.mxu0 0
        %2298 = vmatprep.subr.bf16.mxu0 0
        %2299 = vmatpush1.bf16.msra.mxu0 0
        %2300 = vmatprep.subr.bf16.mxu0 0
        %2301 = vmatpush1.bf16.msra.mxu0 0
        %2302 = vmatprep.subr.bf16.mxu0 0
        %2303 = vmatpush1.bf16.msra.mxu0 0
        %2304 = vmatprep.subr.bf16.mxu0 0
        %2305 = vmatpush1.bf16.msra.mxu0 0
        %2306 = vmatprep.subr.bf16.mxu0 0
        %2307 = vmatpush1.bf16.msra.mxu0 0
        %2308 = vmatprep.subr.bf16.mxu0 0
        %2309 = vmatpush1.bf16.msra.mxu0 0
        %2310 = vmatprep.subr.bf16.mxu0 0
        %2311 = vmatpush1.bf16.msra.mxu0 0
        %2312 = vmatprep.mubr.bf16.mxu0 0
        %2313 = vmatmul.mubr.bf16.gmra.mrb[0].mxu0 %v2278
        %v2314 = vpop.f32.mrb[0].mxu0
        %v2315 = vadd.f32 %v2263, %v2314
        %v2316 = vpop.f32.mrb[0].mxu0
        %v2317 = vpop.f32.mrb[0].mxu0
        %v2318 = vpop.f32.mrb[0].mxu0
        %2319 = vdwg.mxu0
        %v2320 = vmax.f32 %v2315, 0.0
        %v2321 = vpack.c.bf16 %v2320, %v2320
        %v2323 = vlaneseq
        %v2324 = vshrl.u32 %v2323, 7
        %v2325 = vsub.s32 0, %v2324
        %v2326 = vrot.slane %v2257, %v2325
        %v2336 = vunpack.c.l.b16 %v2249
        %v2337 = vunpack.c.l.b16 %v2250
        %v2338 = vunpack.c.l.b16 %v2251
        %v2339 = vunpack.c.l.b16 %v2252
        %v2340 = vunpack.c.l.b16 %v2253
        %v2341 = vunpack.c.l.b16 %v2254
        %v2342 = vunpack.c.l.b16 %v2255
        %v2343 = vunpack.c.l.b16 %v2256
        %v2344 = vpack.c.b16 %v2337, %v2336
        %v2345 = vpack.c.b16 %v2339, %v2338
        %v2346 = vpack.c.b16 %v2341, %v2340
        %v2347 = vpack.c.b16 %v2343, %v2342
        %vm2352 = vcmask 523264
        %v2354 = vsel %vm2352, %v2321, 0
        %2356 = vmatprep.subr.bf16.mxu0 0
        %2357 = vmatpush1.bf16.msra.mxu0 %v2344
        %2358 = vmatprep.subr.bf16.mxu0 0
        %2359 = vmatpush1.bf16.msra.mxu0 %v2345
        %2360 = vmatprep.subr.bf16.mxu0 0
        %2361 = vmatpush1.bf16.msra.mxu0 %v2346
        %2362 = vmatprep.subr.bf16.mxu0 0
        %2363 = vmatpush1.bf16.msra.mxu0 %v2347
        %2364 = vmatprep.subr.bf16.mxu0 0
        %2365 = vmatpush1.bf16.msra.mxu0 0
        %2366 = vmatprep.subr.bf16.mxu0 0
        %2367 = vmatpush1.bf16.msra.mxu0 0
        %2368 = vmatprep.subr.bf16.mxu0 0
        %2369 = vmatpush1.bf16.msra.mxu0 0
        %2370 = vmatprep.subr.bf16.mxu0 0
        %2371 = vmatpush1.bf16.msra.mxu0 0
        %2372 = vmatprep.subr.bf16.mxu0 0
        %2373 = vmatpush1.bf16.msra.mxu0 0
        %2374 = vmatprep.subr.bf16.mxu0 0
        %2375 = vmatpush1.bf16.msra.mxu0 0
        %2376 = vmatprep.subr.bf16.mxu0 0
        %2377 = vmatpush1.bf16.msra.mxu0 0
        %2378 = vmatprep.subr.bf16.mxu0 0
        %2379 = vmatpush1.bf16.msra.mxu0 0
        %2380 = vmatprep.subr.bf16.mxu0 0
        %2381 = vmatpush1.bf16.msra.mxu0 0
        %2382 = vmatprep.subr.bf16.mxu0 0
        %2383 = vmatpush1.bf16.msra.mxu0 0
        %2384 = vmatprep.subr.bf16.mxu0 0
        %2385 = vmatpush1.bf16.msra.mxu0 0
        %2386 = vmatprep.subr.bf16.mxu0 0
        %2387 = vmatpush1.bf16.msra.mxu0 0
        %2388 = vmatprep.mubr.bf16.mxu0 0
        %2389 = vmatmul.mubr.bf16.gmra.mrb[0].mxu0 %v2354
        %v2390 = vpop.f32.mrb[0].mxu0
        %v2391 = vadd.f32 %v2326, %v2390
        %v2392 = vpop.f32.mrb[0].mxu0
        %v2393 = vpop.f32.mrb[0].mxu0
        %v2394 = vpop.f32.mrb[0].mxu0
        %2395 = vdwg.mxu0
        %v2396 = vadd.f32 %v2243, %v2391
        %v2397 = vld [vmem:[#allocation20] sm:$0x1]
        %v2398 = vld [vmem:[%s37] sm:$0x1]
        %v2399 = vsel %vm1528, %v2396, 0.0
        %2400 = vadd.xlane.f32.xlu0 %v2399
        %v2401 = vpop.xlane.xlu0 %2400
        %v2402 = vmul.f32 %v2401, %v2219
        %v2403 = vsub.f32 %v2396, %v2402
        %v2404 = vmul.f32 %v2403, %v2403
        %v2405 = vsel %vm1528, %v2404, 0.0
        %2406 = vadd.xlane.f32.xlu0 %v2405
        %v2407 = vpop.xlane.xlu0 %2406
        %v2408 = vmul.f32 %v2407, %v2219
        %v2409 = vadd.f32 %v2408, 1e-05
        %v2410 = vrsqrt.pop %v2409
        %v2411 = vmul.f32 %v2403, %v2410
        %v2413 = vlaneseq
        %v2414 = vshrl.u32 %v2413, 7
        %v2415 = vsub.s32 0, %v2414
        %v2416 = vrot.slane %v2397, %v2415
        %v2418 = vmul.f32 %v2411, %v2416
        %v2420 = vlaneseq
        %v2421 = vshrl.u32 %v2420, 7
        %v2422 = vsub.s32 0, %v2421
        %v2423 = vrot.slane %v2398, %v2422
        %v2425 = vadd.f32 %v2418, %v2423
        %v2426 = vadd.f32 %v2425, %v1486
        %s2427 = scalar_lea.vmem %s7, 16
        %v2428 = vld [vmem:[%s2427] sm:$0xf]
        %v2429 = vld [vmem:[%s2427 + $0x4] sm:$0xf]
        %v2430 = vld [vmem:[%s2427 + $0x8] sm:$0xf]
        %v2431 = vld [vmem:[%s2427 + $0xc] sm:$0xf]
        %s2432 = scalar_lea.vmem [#allocation8], 1
        %v2433 = vld [vmem:[%s2432] sm:$0x1]
        %s2434 = scalar_lea.vmem %s11, 16
        %v2435 = vld [vmem:[%s2434] sm:$0xf]
        %v2436 = vld [vmem:[%s2434 + $0x4] sm:$0xf]
        %v2437 = vld [vmem:[%s2434 + $0x8] sm:$0xf]
        %v2438 = vld [vmem:[%s2434 + $0xc] sm:$0xf]
        %s2439 = scalar_lea.vmem [#allocation10], 1
        %v2440 = vld [vmem:[%s2439] sm:$0x1]
        %s2441 = scalar_lea.vmem %s15, 16
        %v2442 = vld [vmem:[%s2441] sm:$0xf]
        %v2443 = vld [vmem:[%s2441 + $0x4] sm:$0xf]
        %v2444 = vld [vmem:[%s2441 + $0x8] sm:$0xf]
        %v2445 = vld [vmem:[%s2441 + $0xc] sm:$0xf]
        %s2446 = scalar_lea.vmem [#allocation11], 1
        %v2447 = vld [vmem:[%s2446] sm:$0x1]
        %s2448 = scalar_lea.vmem %s19, 16
        %v2449 = vld [vmem:[%s2448] sm:$0xf]
        %v2450 = vld [vmem:[%s2448 + $0x4] sm:$0xf]
        %v2451 = vld [vmem:[%s2448 + $0x8] sm:$0xf]
        %v2452 = vld [vmem:[%s2448 + $0xc] sm:$0xf]
        %s2453 = scalar_lea.vmem [#allocation13], 1
        %v2454 = vld [vmem:[%s2453] sm:$0x1]
        %v2455 = vpack.c.bf16 %v2426, %v2426
        %v2457 = vlaneseq
        %v2458 = vshrl.u32 %v2457, 7
        %v2459 = vsub.s32 0, %v2458
        %v2460 = vrot.slane %v2433, %v2459
        %v2466 = vunpack.c.l.b16 %v2428
        %v2467 = vunpack.c.l.b16 %v2429
        %v2468 = vunpack.c.l.b16 %v2430
        %v2469 = vunpack.c.l.b16 %v2431
        %v2470 = vpack.c.b16 %v2467, %v2466
        %v2471 = vpack.c.b16 %v2469, %v2468
        %v2475 = vsel %vm1528, %v2455, 0
        %2477 = vmatprep.subr.bf16.mxu0 0
        %2478 = vmatpush1.bf16.msra.mxu0 %v2470
        %2479 = vmatprep.subr.bf16.mxu0 0
        %2480 = vmatpush1.bf16.msra.mxu0 %v2471
        %2481 = vmatprep.subr.bf16.mxu0 0
        %2482 = vmatpush1.bf16.msra.mxu0 0
        %2483 = vmatprep.subr.bf16.mxu0 0
        %2484 = vmatpush1.bf16.msra.mxu0 0
        %2485 = vmatprep.subr.bf16.mxu0 0
        %2486 = vmatpush1.bf16.msra.mxu0 0
        %2487 = vmatprep.subr.bf16.mxu0 0
        %2488 = vmatpush1.bf16.msra.mxu0 0
        %2489 = vmatprep.subr.bf16.mxu0 0
        %2490 = vmatpush1.bf16.msra.mxu0 0
        %2491 = vmatprep.subr.bf16.mxu0 0
        %2492 = vmatpush1.bf16.msra.mxu0 0
        %2493 = vmatprep.subr.bf16.mxu0 0
        %2494 = vmatpush1.bf16.msra.mxu0 0
        %2495 = vmatprep.subr.bf16.mxu0 0
        %2496 = vmatpush1.bf16.msra.mxu0 0
        %2497 = vmatprep.subr.bf16.mxu0 0
        %2498 = vmatpush1.bf16.msra.mxu0 0
        %2499 = vmatprep.subr.bf16.mxu0 0
        %2500 = vmatpush1.bf16.msra.mxu0 0
        %2501 = vmatprep.subr.bf16.mxu0 0
        %2502 = vmatpush1.bf16.msra.mxu0 0
        %2503 = vmatprep.subr.bf16.mxu0 0
        %2504 = vmatpush1.bf16.msra.mxu0 0
        %2505 = vmatprep.subr.bf16.mxu0 0
        %2506 = vmatpush1.bf16.msra.mxu0 0
        %2507 = vmatprep.subr.bf16.mxu0 0
        %2508 = vmatpush1.bf16.msra.mxu0 0
        %2509 = vmatprep.mubr.bf16.mxu0 0
        %2510 = vmatmul.mubr.bf16.gmra.mrb[0].mxu0 %v2475
        %v2511 = vpop.f32.mrb[0].mxu0
        %v2512 = vadd.f32 %v2460, %v2511
        %v2513 = vpop.f32.mrb[0].mxu0
        %v2514 = vpop.f32.mrb[0].mxu0
        %v2515 = vpop.f32.mrb[0].mxu0
        %2516 = vdwg.mxu0
        %v2518 = vlaneseq
        %v2519 = vshrl.u32 %v2518, 7
        %v2520 = vsub.s32 0, %v2519
        %v2521 = vrot.slane %v2440, %v2520
        %v2527 = vunpack.c.l.b16 %v2435
        %v2528 = vunpack.c.l.b16 %v2436
        %v2529 = vunpack.c.l.b16 %v2437
        %v2530 = vunpack.c.l.b16 %v2438
        %v2531 = vpack.c.b16 %v2528, %v2527
        %v2532 = vpack.c.b16 %v2530, %v2529
        %2535 = vmatprep.subr.bf16.mxu0 0
        %2536 = vmatpush1.bf16.msra.mxu0 %v2531
        %2537 = vmatprep.subr.bf16.mxu0 0
        %2538 = vmatpush1.bf16.msra.mxu0 %v2532
        %2539 = vmatprep.subr.bf16.mxu0 0
        %2540 = vmatpush1.bf16.msra.mxu0 0
        %2541 = vmatprep.subr.bf16.mxu0 0
        %2542 = vmatpush1.bf16.msra.mxu0 0
        %2543 = vmatprep.subr.bf16.mxu0 0
        %2544 = vmatpush1.bf16.msra.mxu0 0
        %2545 = vmatprep.subr.bf16.mxu0 0
        %2546 = vmatpush1.bf16.msra.mxu0 0
        %2547 = vmatprep.subr.bf16.mxu0 0
        %2548 = vmatpush1.bf16.msra.mxu0 0
        %2549 = vmatprep.subr.bf16.mxu0 0
        %2550 = vmatpush1.bf16.msra.mxu0 0
        %2551 = vmatprep.subr.bf16.mxu0 0
        %2552 = vmatpush1.bf16.msra.mxu0 0
        %2553 = vmatprep.subr.bf16.mxu0 0
        %2554 = vmatpush1.bf16.msra.mxu0 0
        %2555 = vmatprep.subr.bf16.mxu0 0
        %2556 = vmatpush1.bf16.msra.mxu0 0
        %2557 = vmatprep.subr.bf16.mxu0 0
        %2558 = vmatpush1.bf16.msra.mxu0 0
        %2559 = vmatprep.subr.bf16.mxu0 0
        %2560 = vmatpush1.bf16.msra.mxu0 0
        %2561 = vmatprep.subr.bf16.mxu0 0
        %2562 = vmatpush1.bf16.msra.mxu0 0
        %2563 = vmatprep.subr.bf16.mxu0 0
        %2564 = vmatpush1.bf16.msra.mxu0 0
        %2565 = vmatprep.subr.bf16.mxu0 0
        %2566 = vmatpush1.bf16.msra.mxu0 0
        %2567 = vmatprep.mubr.bf16.mxu0 0
        %2568 = vmatmul.mubr.bf16.gmra.mrb[0].mxu0 %v2475
        %v2569 = vpop.f32.mrb[0].mxu0
        %v2570 = vadd.f32 %v2521, %v2569
        %v2571 = vpop.f32.mrb[0].mxu0
        %v2572 = vpop.f32.mrb[0].mxu0
        %v2573 = vpop.f32.mrb[0].mxu0
        %2574 = vdwg.mxu0
        %v2575 = vpack.c.bf16 %v2425, %v2425
        %v2577 = vlaneseq
        %v2578 = vshrl.u32 %v2577, 7
        %v2579 = vsub.s32 0, %v2578
        %v2580 = vrot.slane %v2447, %v2579
        %v2586 = vunpack.c.l.b16 %v2442
        %v2587 = vunpack.c.l.b16 %v2443
        %v2588 = vunpack.c.l.b16 %v2444
        %v2589 = vunpack.c.l.b16 %v2445
        %v2590 = vpack.c.b16 %v2587, %v2586
        %v2591 = vpack.c.b16 %v2589, %v2588
        %v2595 = vsel %vm1528, %v2575, 0
        %2597 = vmatprep.subr.bf16.mxu0 0
        %2598 = vmatpush1.bf16.msra.mxu0 %v2590
        %2599 = vmatprep.subr.bf16.mxu0 0
        %2600 = vmatpush1.bf16.msra.mxu0 %v2591
        %2601 = vmatprep.subr.bf16.mxu0 0
        %2602 = vmatpush1.bf16.msra.mxu0 0
        %2603 = vmatprep.subr.bf16.mxu0 0
        %2604 = vmatpush1.bf16.msra.mxu0 0
        %2605 = vmatprep.subr.bf16.mxu0 0
        %2606 = vmatpush1.bf16.msra.mxu0 0
        %2607 = vmatprep.subr.bf16.mxu0 0
        %2608 = vmatpush1.bf16.msra.mxu0 0
        %2609 = vmatprep.subr.bf16.mxu0 0
        %2610 = vmatpush1.bf16.msra.mxu0 0
        %2611 = vmatprep.subr.bf16.mxu0 0
        %2612 = vmatpush1.bf16.msra.mxu0 0
        %2613 = vmatprep.subr.bf16.mxu0 0
        %2614 = vmatpush1.bf16.msra.mxu0 0
        %2615 = vmatprep.subr.bf16.mxu0 0
        %2616 = vmatpush1.bf16.msra.mxu0 0
        %2617 = vmatprep.subr.bf16.mxu0 0
        %2618 = vmatpush1.bf16.msra.mxu0 0
        %2619 = vmatprep.subr.bf16.mxu0 0
        %2620 = vmatpush1.bf16.msra.mxu0 0
        %2621 = vmatprep.subr.bf16.mxu0 0
        %2622 = vmatpush1.bf16.msra.mxu0 0
        %2623 = vmatprep.subr.bf16.mxu0 0
        %2624 = vmatpush1.bf16.msra.mxu0 0
        %2625 = vmatprep.subr.bf16.mxu0 0
        %2626 = vmatpush1.bf16.msra.mxu0 0
        %2627 = vmatprep.subr.bf16.mxu0 0
        %2628 = vmatpush1.bf16.msra.mxu0 0
        %2629 = vmatprep.mubr.bf16.mxu0 0
        %2630 = vmatmul.mubr.bf16.gmra.mrb[0].mxu0 %v2595
        %v2631 = vpop.f32.mrb[0].mxu0
        %v2632 = vadd.f32 %v2580, %v2631
        %v2633 = vpop.f32.mrb[0].mxu0
        %v2634 = vpop.f32.mrb[0].mxu0
        %v2635 = vpop.f32.mrb[0].mxu0
        %2636 = vdwg.mxu0
        %v2637 = vpack.c.bf16 %v2512, %v2512
        %v2638 = vpack.c.bf16 %v2570, %v2570
        %v2640 = vsel %vm1694, %v2637, 0
        %v2643 = vsel %vm1694, %v2638, 0
        %2645 = vmatprep.subr.bf16.mxu0 0
        %2646 = vmatpush1.bf16.xpose.msra.mxu0 %v2643
        %2647 = vmatprep.subr.bf16.mxu0 0
        %2648 = vmatpush1.bf16.xpose.msra.mxu0 0
        %2649 = vmatprep.subr.bf16.mxu0 0
        %2650 = vmatpush1.bf16.xpose.msra.mxu0 0
        %2651 = vmatprep.subr.bf16.mxu0 0
        %2652 = vmatpush1.bf16.xpose.msra.mxu0 0
        %2653 = vmatprep.subr.bf16.mxu0 0
        %2654 = vmatpush1.bf16.xpose.msra.mxu0 0
        %2655 = vmatprep.subr.bf16.mxu0 0
        %2656 = vmatpush1.bf16.xpose.msra.mxu0 0
        %2657 = vmatprep.subr.bf16.mxu0 0
        %2658 = vmatpush1.bf16.xpose.msra.mxu0 0
        %2659 = vmatprep.subr.bf16.mxu0 0
        %2660 = vmatpush1.bf16.xpose.msra.mxu0 0
        %2661 = vmatprep.subr.bf16.mxu0 0
        %2662 = vmatpush1.bf16.xpose.msra.mxu0 0
        %2663 = vmatprep.subr.bf16.mxu0 0
        %2664 = vmatpush1.bf16.xpose.msra.mxu0 0
        %2665 = vmatprep.subr.bf16.mxu0 0
        %2666 = vmatpush1.bf16.xpose.msra.mxu0 0
        %2667 = vmatprep.subr.bf16.mxu0 0
        %2668 = vmatpush1.bf16.xpose.msra.mxu0 0
        %2669 = vmatprep.subr.bf16.mxu0 0
        %2670 = vmatpush1.bf16.xpose.msra.mxu0 0
        %2671 = vmatprep.subr.bf16.mxu0 0
        %2672 = vmatpush1.bf16.xpose.msra.mxu0 0
        %2673 = vmatprep.subr.bf16.mxu0 0
        %2674 = vmatpush1.bf16.xpose.msra.mxu0 0
        %2675 = vmatprep.subr.bf16.mxu0 0
        %2676 = vmatpush1.bf16.xpose.msra.mxu0 0
        %2677 = vmatprep.mubr.bf16.mxu0 0
        %2678 = vmatmul.mubr.bf16.gmra.mrb[0].mxu0 %v2640
        %v2679 = vpop.f32.mrb[0].mxu0
        %v2680 = vadd.f32 0.0, %v2679
        %v2681 = vpop.f32.mrb[0].mxu0
        %v2682 = vpop.f32.mrb[0].mxu0
        %v2683 = vpop.f32.mrb[0].mxu0
        %2684 = vdwg.mxu0
        %v2685 = vsel %vm1694, %v2680, -inf
        %2686 = vmax.xlane.f32.xlu0 %v2685
        %v2687 = vpop.xlane.xlu0 %2686
        %v2688 = vsub.f32 %v2680, %v2687
        %v2689 = vmul.f32 %v2688, 1.442695
        %v2690 = vpow.pop %v2689
        %v2691 = vsel %vm1694, %v2690, 0.0
        %2692 = vadd.xlane.f32.xlu0 %v2691
        %v2693 = vpop.xlane.xlu0 %2692
        %v2694 = vrcp.pop %v2693
        %v2695 = vmul.f32 %v2690, %v2694
        %v2696 = vpack.c.bf16 %v2695, %v2695
        %v2697 = vpack.c.bf16 %v2632, %v2632
        %v2699 = vsel %vm1694, %v2696, 0
        %v2702 = vsel %vm1757, %v2697, 0
        %2704 = vmatprep.subr.bf16.mxu0 0
        %2705 = vmatpush1.bf16.msra.mxu0 %v2702
        %2706 = vmatprep.subr.bf16.mxu0 0
        %2707 = vmatpush1.bf16.msra.mxu0 0
        %2708 = vmatprep.subr.bf16.mxu0 0
        %2709 = vmatpush1.bf16.msra.mxu0 0
        %2710 = vmatprep.subr.bf16.mxu0 0
        %2711 = vmatpush1.bf16.msra.mxu0 0
        %2712 = vmatprep.subr.bf16.mxu0 0
        %2713 = vmatpush1.bf16.msra.mxu0 0
        %2714 = vmatprep.subr.bf16.mxu0 0
        %2715 = vmatpush1.bf16.msra.mxu0 0
        %2716 = vmatprep.subr.bf16.mxu0 0
        %2717 = vmatpush1.bf16.msra.mxu0 0
        %2718 = vmatprep.subr.bf16.mxu0 0
        %2719 = vmatpush1.bf16.msra.mxu0 0
        %2720 = vmatprep.subr.bf16.mxu0 0
        %2721 = vmatpush1.bf16.msra.mxu0 0
        %2722 = vmatprep.subr.bf16.mxu0 0
        %2723 = vmatpush1.bf16.msra.mxu0 0
        %2724 = vmatprep.subr.bf16.mxu0 0
        %2725 = vmatpush1.bf16.msra.mxu0 0
        %2726 = vmatprep.subr.bf16.mxu0 0
        %2727 = vmatpush1.bf16.msra.mxu0 0
        %2728 = vmatprep.subr.bf16.mxu0 0
        %2729 = vmatpush1.bf16.msra.mxu0 0
        %2730 = vmatprep.subr.bf16.mxu0 0
        %2731 = vmatpush1.bf16.msra.mxu0 0
        %2732 = vmatprep.subr.bf16.mxu0 0
        %2733 = vmatpush1.bf16.msra.mxu0 0
        %2734 = vmatprep.subr.bf16.mxu0 0
        %2735 = vmatpush1.bf16.msra.mxu0 0
        %2736 = vmatprep.mubr.bf16.mxu0 0
        %2737 = vmatmul.mubr.bf16.gmra.mrb[0].mxu0 %v2699
        %v2738 = vpop.f32.mrb[0].mxu0
        %v2739 = vadd.f32 0.0, %v2738
        %v2740 = vpop.f32.mrb[0].mxu0
        %v2741 = vpop.f32.mrb[0].mxu0
        %v2742 = vpop.f32.mrb[0].mxu0
        %2743 = vdwg.mxu0
        %2745 = vrot.lane.b32.xlu0 %v2637, 120
        %v2746 = vpop.permute.xlu0 %2745
        %2748 = vrot.lane.b32.xlu0 %v2638, 120
        %v2749 = vpop.permute.xlu0 %2748
        %v2751 = vsel %vm1694, %v2746, 0
        %v2754 = vsel %vm1694, %v2749, 0
        %2756 = vmatprep.subr.bf16.mxu0 0
        %2757 = vmatpush1.bf16.xpose.msra.mxu0 %v2754
        %2758 = vmatprep.subr.bf16.mxu0 0
        %2759 = vmatpush1.bf16.xpose.msra.mxu0 0
        %2760 = vmatprep.subr.bf16.mxu0 0
        %2761 = vmatpush1.bf16.xpose.msra.mxu0 0
        %2762 = vmatprep.subr.bf16.mxu0 0
        %2763 = vmatpush1.bf16.xpose.msra.mxu0 0
        %2764 = vmatprep.subr.bf16.mxu0 0
        %2765 = vmatpush1.bf16.xpose.msra.mxu0 0
        %2766 = vmatprep.subr.bf16.mxu0 0
        %2767 = vmatpush1.bf16.xpose.msra.mxu0 0
        %2768 = vmatprep.subr.bf16.mxu0 0
        %2769 = vmatpush1.bf16.xpose.msra.mxu0 0
        %2770 = vmatprep.subr.bf16.mxu0 0
        %2771 = vmatpush1.bf16.xpose.msra.mxu0 0
        %2772 = vmatprep.subr.bf16.mxu0 0
        %2773 = vmatpush1.bf16.xpose.msra.mxu0 0
        %2774 = vmatprep.subr.bf16.mxu0 0
        %2775 = vmatpush1.bf16.xpose.msra.mxu0 0
        %2776 = vmatprep.subr.bf16.mxu0 0
        %2777 = vmatpush1.bf16.xpose.msra.mxu0 0
        %2778 = vmatprep.subr.bf16.mxu0 0
        %2779 = vmatpush1.bf16.xpose.msra.mxu0 0
        %2780 = vmatprep.subr.bf16.mxu0 0
        %2781 = vmatpush1.bf16.xpose.msra.mxu0 0
        %2782 = vmatprep.subr.bf16.mxu0 0
        %2783 = vmatpush1.bf16.xpose.msra.mxu0 0
        %2784 = vmatprep.subr.bf16.mxu0 0
        %2785 = vmatpush1.bf16.xpose.msra.mxu0 0
        %2786 = vmatprep.subr.bf16.mxu0 0
        %2787 = vmatpush1.bf16.xpose.msra.mxu0 0
        %2788 = vmatprep.mubr.bf16.mxu0 0
        %2789 = vmatmul.mubr.bf16.gmra.mrb[0].mxu0 %v2751
        %v2790 = vpop.f32.mrb[0].mxu0
        %v2791 = vadd.f32 0.0, %v2790
        %v2792 = vpop.f32.mrb[0].mxu0
        %v2793 = vpop.f32.mrb[0].mxu0
        %v2794 = vpop.f32.mrb[0].mxu0
        %2795 = vdwg.mxu0
        %v2796 = vsel %vm1694, %v2791, -inf
        %2797 = vmax.xlane.f32.xlu0 %v2796
        %v2798 = vpop.xlane.xlu0 %2797
        %v2799 = vsub.f32 %v2791, %v2798
        %v2800 = vmul.f32 %v2799, 1.442695
        %v2801 = vpow.pop %v2800
        %v2802 = vsel %vm1694, %v2801, 0.0
        %2803 = vadd.xlane.f32.xlu0 %v2802
        %v2804 = vpop.xlane.xlu0 %2803
        %v2805 = vrcp.pop %v2804
        %v2806 = vmul.f32 %v2801, %v2805
        %v2807 = vpack.c.bf16 %v2806, %v2806
        %2809 = vrot.lane.b32.xlu0 %v2697, 120
        %v2810 = vpop.permute.xlu0 %2809
        %v2812 = vsel %vm1694, %v2807, 0
        %v2815 = vsel %vm1757, %v2810, 0
        %2817 = vmatprep.subr.bf16.mxu0 0
        %2818 = vmatpush1.bf16.msra.mxu0 %v2815
        %2819 = vmatprep.subr.bf16.mxu0 0
        %2820 = vmatpush1.bf16.msra.mxu0 0
        %2821 = vmatprep.subr.bf16.mxu0 0
        %2822 = vmatpush1.bf16.msra.mxu0 0
        %2823 = vmatprep.subr.bf16.mxu0 0
        %2824 = vmatpush1.bf16.msra.mxu0 0
        %2825 = vmatprep.subr.bf16.mxu0 0
        %2826 = vmatpush1.bf16.msra.mxu0 0
        %2827 = vmatprep.subr.bf16.mxu0 0
        %2828 = vmatpush1.bf16.msra.mxu0 0
        %2829 = vmatprep.subr.bf16.mxu0 0
        %2830 = vmatpush1.bf16.msra.mxu0 0
        %2831 = vmatprep.subr.bf16.mxu0 0
        %2832 = vmatpush1.bf16.msra.mxu0 0
        %2833 = vmatprep.subr.bf16.mxu0 0
        %2834 = vmatpush1.bf16.msra.mxu0 0
        %2835 = vmatprep.subr.bf16.mxu0 0
        %2836 = vmatpush1.bf16.msra.mxu0 0
        %2837 = vmatprep.subr.bf16.mxu0 0
        %2838 = vmatpush1.bf16.msra.mxu0 0
        %2839 = vmatprep.subr.bf16.mxu0 0
        %2840 = vmatpush1.bf16.msra.mxu0 0
        %2841 = vmatprep.subr.bf16.mxu0 0
        %2842 = vmatpush1.bf16.msra.mxu0 0
        %2843 = vmatprep.subr.bf16.mxu0 0
        %2844 = vmatpush1.bf16.msra.mxu0 0
        %2845 = vmatprep.subr.bf16.mxu0 0
        %2846 = vmatpush1.bf16.msra.mxu0 0
        %2847 = vmatprep.subr.bf16.mxu0 0
        %2848 = vmatpush1.bf16.msra.mxu0 0
        %2849 = vmatprep.mubr.bf16.mxu0 0
        %2850 = vmatmul.mubr.bf16.gmra.mrb[0].mxu0 %v2812
        %v2851 = vpop.f32.mrb[0].mxu0
        %v2852 = vadd.f32 0.0, %v2851
        %v2853 = vpop.f32.mrb[0].mxu0
        %v2854 = vpop.f32.mrb[0].mxu0
        %v2855 = vpop.f32.mrb[0].mxu0
        %2856 = vdwg.mxu0
        %2857 = vrot.lane.b32.xlu0 %v2637, 112
        %v2858 = vpop.permute.xlu0 %2857
        %2859 = vrot.lane.b32.xlu0 %v2638, 112
        %v2860 = vpop.permute.xlu0 %2859
        %v2862 = vsel %vm1694, %v2858, 0
        %v2865 = vsel %vm1694, %v2860, 0
        %2867 = vmatprep.subr.bf16.mxu0 0
        %2868 = vmatpush1.bf16.xpose.msra.mxu0 %v2865
        %2869 = vmatprep.subr.bf16.mxu0 0
        %2870 = vmatpush1.bf16.xpose.msra.mxu0 0
        %2871 = vmatprep.subr.bf16.mxu0 0
        %2872 = vmatpush1.bf16.xpose.msra.mxu0 0
        %2873 = vmatprep.subr.bf16.mxu0 0
        %2874 = vmatpush1.bf16.xpose.msra.mxu0 0
        %2875 = vmatprep.subr.bf16.mxu0 0
        %2876 = vmatpush1.bf16.xpose.msra.mxu0 0
        %2877 = vmatprep.subr.bf16.mxu0 0
        %2878 = vmatpush1.bf16.xpose.msra.mxu0 0
        %2879 = vmatprep.subr.bf16.mxu0 0
        %2880 = vmatpush1.bf16.xpose.msra.mxu0 0
        %2881 = vmatprep.subr.bf16.mxu0 0
        %2882 = vmatpush1.bf16.xpose.msra.mxu0 0
        %2883 = vmatprep.subr.bf16.mxu0 0
        %2884 = vmatpush1.bf16.xpose.msra.mxu0 0
        %2885 = vmatprep.subr.bf16.mxu0 0
        %2886 = vmatpush1.bf16.xpose.msra.mxu0 0
        %2887 = vmatprep.subr.bf16.mxu0 0
        %2888 = vmatpush1.bf16.xpose.msra.mxu0 0
        %2889 = vmatprep.subr.bf16.mxu0 0
        %2890 = vmatpush1.bf16.xpose.msra.mxu0 0
        %2891 = vmatprep.subr.bf16.mxu0 0
        %2892 = vmatpush1.bf16.xpose.msra.mxu0 0
        %2893 = vmatprep.subr.bf16.mxu0 0
        %2894 = vmatpush1.bf16.xpose.msra.mxu0 0
        %2895 = vmatprep.subr.bf16.mxu0 0
        %2896 = vmatpush1.bf16.xpose.msra.mxu0 0
        %2897 = vmatprep.subr.bf16.mxu0 0
        %2898 = vmatpush1.bf16.xpose.msra.mxu0 0
        %2899 = vmatprep.mubr.bf16.mxu0 0
        %2900 = vmatmul.mubr.bf16.gmra.mrb[0].mxu0 %v2862
        %v2901 = vpop.f32.mrb[0].mxu0
        %v2902 = vadd.f32 0.0, %v2901
        %v2903 = vpop.f32.mrb[0].mxu0
        %v2904 = vpop.f32.mrb[0].mxu0
        %v2905 = vpop.f32.mrb[0].mxu0
        %2906 = vdwg.mxu0
        %v2907 = vsel %vm1694, %v2902, -inf
        %2908 = vmax.xlane.f32.xlu0 %v2907
        %v2909 = vpop.xlane.xlu0 %2908
        %v2910 = vsub.f32 %v2902, %v2909
        %v2911 = vmul.f32 %v2910, 1.442695
        %v2912 = vpow.pop %v2911
        %v2913 = vsel %vm1694, %v2912, 0.0
        %2914 = vadd.xlane.f32.xlu0 %v2913
        %v2915 = vpop.xlane.xlu0 %2914
        %v2916 = vrcp.pop %v2915
        %v2917 = vmul.f32 %v2912, %v2916
        %v2918 = vpack.c.bf16 %v2917, %v2917
        %2919 = vrot.lane.b32.xlu0 %v2697, 112
        %v2920 = vpop.permute.xlu0 %2919
        %v2922 = vsel %vm1694, %v2918, 0
        %v2925 = vsel %vm1757, %v2920, 0
        %2927 = vmatprep.subr.bf16.mxu0 0
        %2928 = vmatpush1.bf16.msra.mxu0 %v2925
        %2929 = vmatprep.subr.bf16.mxu0 0
        %2930 = vmatpush1.bf16.msra.mxu0 0
        %2931 = vmatprep.subr.bf16.mxu0 0
        %2932 = vmatpush1.bf16.msra.mxu0 0
        %2933 = vmatprep.subr.bf16.mxu0 0
        %2934 = vmatpush1.bf16.msra.mxu0 0
        %2935 = vmatprep.subr.bf16.mxu0 0
        %2936 = vmatpush1.bf16.msra.mxu0 0
        %2937 = vmatprep.subr.bf16.mxu0 0
        %2938 = vmatpush1.bf16.msra.mxu0 0
        %2939 = vmatprep.subr.bf16.mxu0 0
        %2940 = vmatpush1.bf16.msra.mxu0 0
        %2941 = vmatprep.subr.bf16.mxu0 0
        %2942 = vmatpush1.bf16.msra.mxu0 0
        %2943 = vmatprep.subr.bf16.mxu0 0
        %2944 = vmatpush1.bf16.msra.mxu0 0
        %2945 = vmatprep.subr.bf16.mxu0 0
        %2946 = vmatpush1.bf16.msra.mxu0 0
        %2947 = vmatprep.subr.bf16.mxu0 0
        %2948 = vmatpush1.bf16.msra.mxu0 0
        %2949 = vmatprep.subr.bf16.mxu0 0
        %2950 = vmatpush1.bf16.msra.mxu0 0
        %2951 = vmatprep.subr.bf16.mxu0 0
        %2952 = vmatpush1.bf16.msra.mxu0 0
        %2953 = vmatprep.subr.bf16.mxu0 0
        %2954 = vmatpush1.bf16.msra.mxu0 0
        %2955 = vmatprep.subr.bf16.mxu0 0
        %2956 = vmatpush1.bf16.msra.mxu0 0
        %2957 = vmatprep.subr.bf16.mxu0 0
        %2958 = vmatpush1.bf16.msra.mxu0 0
        %2959 = vmatprep.mubr.bf16.mxu0 0
        %2960 = vmatmul.mubr.bf16.gmra.mrb[0].mxu0 %v2922
        %v2961 = vpop.f32.mrb[0].mxu0
        %v2962 = vadd.f32 0.0, %v2961
        %v2963 = vpop.f32.mrb[0].mxu0
        %v2964 = vpop.f32.mrb[0].mxu0
        %v2965 = vpop.f32.mrb[0].mxu0
        %2966 = vdwg.mxu0
        %2967 = vrot.lane.b32.xlu0 %v2637, 104
        %v2968 = vpop.permute.xlu0 %2967
        %2969 = vrot.lane.b32.xlu0 %v2638, 104
        %v2970 = vpop.permute.xlu0 %2969
        %v2972 = vsel %vm1694, %v2968, 0
        %v2975 = vsel %vm1694, %v2970, 0
        %2977 = vmatprep.subr.bf16.mxu0 0
        %2978 = vmatpush1.bf16.xpose.msra.mxu0 %v2975
        %2979 = vmatprep.subr.bf16.mxu0 0
        %2980 = vmatpush1.bf16.xpose.msra.mxu0 0
        %2981 = vmatprep.subr.bf16.mxu0 0
        %2982 = vmatpush1.bf16.xpose.msra.mxu0 0
        %2983 = vmatprep.subr.bf16.mxu0 0
        %2984 = vmatpush1.bf16.xpose.msra.mxu0 0
        %2985 = vmatprep.subr.bf16.mxu0 0
        %2986 = vmatpush1.bf16.xpose.msra.mxu0 0
        %2987 = vmatprep.subr.bf16.mxu0 0
        %2988 = vmatpush1.bf16.xpose.msra.mxu0 0
        %2989 = vmatprep.subr.bf16.mxu0 0
        %2990 = vmatpush1.bf16.xpose.msra.mxu0 0
        %2991 = vmatprep.subr.bf16.mxu0 0
        %2992 = vmatpush1.bf16.xpose.msra.mxu0 0
        %2993 = vmatprep.subr.bf16.mxu0 0
        %2994 = vmatpush1.bf16.xpose.msra.mxu0 0
        %2995 = vmatprep.subr.bf16.mxu0 0
        %2996 = vmatpush1.bf16.xpose.msra.mxu0 0
        %2997 = vmatprep.subr.bf16.mxu0 0
        %2998 = vmatpush1.bf16.xpose.msra.mxu0 0
        %2999 = vmatprep.subr.bf16.mxu0 0
        %3000 = vmatpush1.bf16.xpose.msra.mxu0 0
        %3001 = vmatprep.subr.bf16.mxu0 0
        %3002 = vmatpush1.bf16.xpose.msra.mxu0 0
        %3003 = vmatprep.subr.bf16.mxu0 0
        %3004 = vmatpush1.bf16.xpose.msra.mxu0 0
        %3005 = vmatprep.subr.bf16.mxu0 0
        %3006 = vmatpush1.bf16.xpose.msra.mxu0 0
        %3007 = vmatprep.subr.bf16.mxu0 0
        %3008 = vmatpush1.bf16.xpose.msra.mxu0 0
        %3009 = vmatprep.mubr.bf16.mxu0 0
        %3010 = vmatmul.mubr.bf16.gmra.mrb[0].mxu0 %v2972
        %v3011 = vpop.f32.mrb[0].mxu0
        %v3012 = vadd.f32 0.0, %v3011
        %v3013 = vpop.f32.mrb[0].mxu0
        %v3014 = vpop.f32.mrb[0].mxu0
        %v3015 = vpop.f32.mrb[0].mxu0
        %3016 = vdwg.mxu0
        %v3017 = vsel %vm1694, %v3012, -inf
        %3018 = vmax.xlane.f32.xlu0 %v3017
        %v3019 = vpop.xlane.xlu0 %3018
        %v3020 = vsub.f32 %v3012, %v3019
        %v3021 = vmul.f32 %v3020, 1.442695
        %v3022 = vpow.pop %v3021
        %v3023 = vsel %vm1694, %v3022, 0.0
        %3024 = vadd.xlane.f32.xlu0 %v3023
        %v3025 = vpop.xlane.xlu0 %3024
        %v3026 = vrcp.pop %v3025
        %v3027 = vmul.f32 %v3022, %v3026
        %v3028 = vpack.c.bf16 %v3027, %v3027
        %3029 = vrot.lane.b32.xlu0 %v2697, 104
        %v3030 = vpop.permute.xlu0 %3029
        %v3032 = vsel %vm1694, %v3028, 0
        %v3035 = vsel %vm1757, %v3030, 0
        %3037 = vmatprep.subr.bf16.mxu0 0
        %3038 = vmatpush1.bf16.msra.mxu0 %v3035
        %3039 = vmatprep.subr.bf16.mxu0 0
        %3040 = vmatpush1.bf16.msra.mxu0 0
        %3041 = vmatprep.subr.bf16.mxu0 0
        %3042 = vmatpush1.bf16.msra.mxu0 0
        %3043 = vmatprep.subr.bf16.mxu0 0
        %3044 = vmatpush1.bf16.msra.mxu0 0
        %3045 = vmatprep.subr.bf16.mxu0 0
        %3046 = vmatpush1.bf16.msra.mxu0 0
        %3047 = vmatprep.subr.bf16.mxu0 0
        %3048 = vmatpush1.bf16.msra.mxu0 0
        %3049 = vmatprep.subr.bf16.mxu0 0
        %3050 = vmatpush1.bf16.msra.mxu0 0
        %3051 = vmatprep.subr.bf16.mxu0 0
        %3052 = vmatpush1.bf16.msra.mxu0 0
        %3053 = vmatprep.subr.bf16.mxu0 0
        %3054 = vmatpush1.bf16.msra.mxu0 0
        %3055 = vmatprep.subr.bf16.mxu0 0
        %3056 = vmatpush1.bf16.msra.mxu0 0
        %3057 = vmatprep.subr.bf16.mxu0 0
        %3058 = vmatpush1.bf16.msra.mxu0 0
        %3059 = vmatprep.subr.bf16.mxu0 0
        %3060 = vmatpush1.bf16.msra.mxu0 0
        %3061 = vmatprep.subr.bf16.mxu0 0
        %3062 = vmatpush1.bf16.msra.mxu0 0
        %3063 = vmatprep.subr.bf16.mxu0 0
        %3064 = vmatpush1.bf16.msra.mxu0 0
        %3065 = vmatprep.subr.bf16.mxu0 0
        %3066 = vmatpush1.bf16.msra.mxu0 0
        %3067 = vmatprep.subr.bf16.mxu0 0
        %3068 = vmatpush1.bf16.msra.mxu0 0
        %3069 = vmatprep.mubr.bf16.mxu0 0
        %3070 = vmatmul.mubr.bf16.gmra.mrb[0].mxu0 %v3032
        %v3071 = vpop.f32.mrb[0].mxu0
        %v3072 = vadd.f32 0.0, %v3071
        %v3073 = vpop.f32.mrb[0].mxu0
        %v3074 = vpop.f32.mrb[0].mxu0
        %v3075 = vpop.f32.mrb[0].mxu0
        %3076 = vdwg.mxu0
        %3078 = vrot.lane.b32.xlu0 %v2852, 8
        %v3079 = vpop.permute.xlu0 %3078
        %3082 = vrot.lane.b32.xlu0 %v2962, 16
        %v3083 = vpop.permute.xlu0 %3082
        %3086 = vrot.lane.b32.xlu0 %v3072, 24
        %v3087 = vpop.permute.xlu0 %3086
        %v3089 = vsel %vm1694, %v2739, %v3079
        %v3090 = vsel %vm2147, %v3089, %v3083
        %v3091 = vsel %vm2149, %v3090, %v3087
        %v3092 = vpack.c.bf16 %v3091, %v3091
        %v3094 = vlaneseq
        %v3095 = vshrl.u32 %v3094, 7
        %v3096 = vsub.s32 0, %v3095
        %v3097 = vrot.slane %v2454, %v3096
        %v3103 = vunpack.c.l.b16 %v2449
        %v3104 = vunpack.c.l.b16 %v2450
        %v3105 = vunpack.c.l.b16 %v2451
        %v3106 = vunpack.c.l.b16 %v2452
        %v3107 = vpack.c.b16 %v3104, %v3103
        %v3108 = vpack.c.b16 %v3106, %v3105
        %v3112 = vsel %vm1528, %v3092, 0
        %3114 = vmatprep.subr.bf16.mxu0 0
        %3115 = vmatpush1.bf16.msra.mxu0 %v3107
        %3116 = vmatprep.subr.bf16.mxu0 0
        %3117 = vmatpush1.bf16.msra.mxu0 %v3108
        %3118 = vmatprep.subr.bf16.mxu0 0
        %3119 = vmatpush1.bf16.msra.mxu0 0
        %3120 = vmatprep.subr.bf16.mxu0 0
        %3121 = vmatpush1.bf16.msra.mxu0 0
        %3122 = vmatprep.subr.bf16.mxu0 0
        %3123 = vmatpush1.bf16.msra.mxu0 0
        %3124 = vmatprep.subr.bf16.mxu0 0
        %3125 = vmatpush1.bf16.msra.mxu0 0
        %3126 = vmatprep.subr.bf16.mxu0 0
        %3127 = vmatpush1.bf16.msra.mxu0 0
        %3128 = vmatprep.subr.bf16.mxu0 0
        %3129 = vmatpush1.bf16.msra.mxu0 0
        %3130 = vmatprep.subr.bf16.mxu0 0
        %3131 = vmatpush1.bf16.msra.mxu0 0
        %3132 = vmatprep.subr.bf16.mxu0 0
        %3133 = vmatpush1.bf16.msra.mxu0 0
        %3134 = vmatprep.subr.bf16.mxu0 0
        %3135 = vmatpush1.bf16.msra.mxu0 0
        %3136 = vmatprep.subr.bf16.mxu0 0
        %3137 = vmatpush1.bf16.msra.mxu0 0
        %3138 = vmatprep.subr.bf16.mxu0 0
        %3139 = vmatpush1.bf16.msra.mxu0 0
        %3140 = vmatprep.subr.bf16.mxu0 0
        %3141 = vmatpush1.bf16.msra.mxu0 0
        %3142 = vmatprep.subr.bf16.mxu0 0
        %3143 = vmatpush1.bf16.msra.mxu0 0
        %3144 = vmatprep.subr.bf16.mxu0 0
        %3145 = vmatpush1.bf16.msra.mxu0 0
        %3146 = vmatprep.mubr.bf16.mxu0 0
        %3147 = vmatmul.mubr.bf16.gmra.mrb[0].mxu0 %v3112
        %v3148 = vpop.f32.mrb[0].mxu0
        %v3149 = vadd.f32 %v3097, %v3148
        %v3150 = vpop.f32.mrb[0].mxu0
        %v3151 = vpop.f32.mrb[0].mxu0
        %v3152 = vpop.f32.mrb[0].mxu0
        %3153 = vdwg.mxu0
        %v3154 = vadd.f32 %v2425, %v3149
        %s3155 = scalar_lea.vmem [#allocation14], 1
        %v3156 = vld [vmem:[%s3155] sm:$0x1]
        %s3157 = scalar_lea.vmem [#allocation16], 1
        %v3158 = vld [vmem:[%s3157] sm:$0x1]
        %v3159 = vsel %vm1528, %v3154, 0.0
        %3160 = vadd.xlane.f32.xlu0 %v3159
        %v3161 = vpop.xlane.xlu0 %3160
        %v3162 = vmul.f32 %v3161, %v2219
        %v3163 = vsub.f32 %v3154, %v3162
        %v3164 = vmul.f32 %v3163, %v3163
        %v3165 = vsel %vm1528, %v3164, 0.0
        %3166 = vadd.xlane.f32.xlu0 %v3165
        %v3167 = vpop.xlane.xlu0 %3166
        %v3168 = vmul.f32 %v3167, %v2219
        %v3169 = vadd.f32 %v3168, 1e-05
        %v3170 = vrsqrt.pop %v3169
        %v3171 = vmul.f32 %v3163, %v3170
        %v3173 = vlaneseq
        %v3174 = vshrl.u32 %v3173, 7
        %v3175 = vsub.s32 0, %v3174
        %v3176 = vrot.slane %v3156, %v3175
        %v3178 = vmul.f32 %v3171, %v3176
        %v3180 = vlaneseq
        %v3181 = vshrl.u32 %v3180, 7
        %v3182 = vsub.s32 0, %v3181
        %v3183 = vrot.slane %v3158, %v3182
        %v3185 = vadd.f32 %v3178, %v3183
        %s3186 = scalar_lea.vmem %s27, 16
        %v3187 = vld [vmem:[%s3186] sm:$0xf]
        %v3188 = vld [vmem:[%s3186 + $0x4] sm:$0xf]
        %v3189 = vld [vmem:[%s3186 + $0x8] sm:$0xf]
        %v3190 = vld [vmem:[%s3186 + $0xc] sm:$0xf]
        %s3191 = scalar_lea.vmem [#allocation17], 1
        %v3192 = vld [vmem:[%s3191] sm:$0x1]
        %s3193 = scalar_lea.vmem %s31, 32
        %v3194 = vld [vmem:[%s3193] sm:$0xf]
        %v3195 = vld [vmem:[%s3193 + $0x4] sm:$0xf]
        %v3196 = vld [vmem:[%s3193 + $0x8] sm:$0xf]
        %v3197 = vld [vmem:[%s3193 + $0xc] sm:$0xf]
        %v3198 = vld [vmem:[%s3193 + $0x10] sm:$0xf]
        %v3199 = vld [vmem:[%s3193 + $0x14] sm:$0xf]
        %v3200 = vld [vmem:[%s3193 + $0x18] sm:$0xf]
        %v3201 = vld [vmem:[%s3193 + $0x1c] sm:$0xf]
        %s3202 = scalar_lea.vmem [#allocation19], 1
        %v3203 = vld [vmem:[%s3202] sm:$0x1]
        %v3204 = vpack.c.bf16 %v3185, %v3185
        %v3206 = vlaneseq
        %v3207 = vshrl.u32 %v3206, 7
        %v3208 = vsub.s32 0, %v3207
        %v3209 = vrot.slane %v3192, %v3208
        %v3215 = vunpack.c.l.b16 %v3187
        %v3216 = vunpack.c.l.b16 %v3188
        %v3217 = vunpack.c.l.b16 %v3189
        %v3218 = vunpack.c.l.b16 %v3190
        %v3219 = vpack.c.b16 %v3216, %v3215
        %v3220 = vpack.c.b16 %v3218, %v3217
        %v3224 = vsel %vm1528, %v3204, 0
        %3226 = vmatprep.subr.bf16.mxu0 0
        %3227 = vmatpush1.bf16.msra.mxu0 %v3219
        %3228 = vmatprep.subr.bf16.mxu0 0
        %3229 = vmatpush1.bf16.msra.mxu0 %v3220
        %3230 = vmatprep.subr.bf16.mxu0 0
        %3231 = vmatpush1.bf16.msra.mxu0 0
        %3232 = vmatprep.subr.bf16.mxu0 0
        %3233 = vmatpush1.bf16.msra.mxu0 0
        %3234 = vmatprep.subr.bf16.mxu0 0
        %3235 = vmatpush1.bf16.msra.mxu0 0
        %3236 = vmatprep.subr.bf16.mxu0 0
        %3237 = vmatpush1.bf16.msra.mxu0 0
        %3238 = vmatprep.subr.bf16.mxu0 0
        %3239 = vmatpush1.bf16.msra.mxu0 0
        %3240 = vmatprep.subr.bf16.mxu0 0
        %3241 = vmatpush1.bf16.msra.mxu0 0
        %3242 = vmatprep.subr.bf16.mxu0 0
        %3243 = vmatpush1.bf16.msra.mxu0 0
        %3244 = vmatprep.subr.bf16.mxu0 0
        %3245 = vmatpush1.bf16.msra.mxu0 0
        %3246 = vmatprep.subr.bf16.mxu0 0
        %3247 = vmatpush1.bf16.msra.mxu0 0
        %3248 = vmatprep.subr.bf16.mxu0 0
        %3249 = vmatpush1.bf16.msra.mxu0 0
        %3250 = vmatprep.subr.bf16.mxu0 0
        %3251 = vmatpush1.bf16.msra.mxu0 0
        %3252 = vmatprep.subr.bf16.mxu0 0
        %3253 = vmatpush1.bf16.msra.mxu0 0
        %3254 = vmatprep.subr.bf16.mxu0 0
        %3255 = vmatpush1.bf16.msra.mxu0 0
        %3256 = vmatprep.subr.bf16.mxu0 0
        %3257 = vmatpush1.bf16.msra.mxu0 0
        %3258 = vmatprep.mubr.bf16.mxu0 0
        %3259 = vmatmul.mubr.bf16.gmra.mrb[0].mxu0 %v3224
        %v3260 = vpop.f32.mrb[0].mxu0
        %v3261 = vadd.f32 %v3209, %v3260
        %v3262 = vpop.f32.mrb[0].mxu0
        %v3263 = vpop.f32.mrb[0].mxu0
        %v3264 = vpop.f32.mrb[0].mxu0
        %3265 = vdwg.mxu0
        %v3266 = vmax.f32 %v3261, 0.0
        %v3267 = vpack.c.bf16 %v3266, %v3266
        %v3269 = vlaneseq
        %v3270 = vshrl.u32 %v3269, 7
        %v3271 = vsub.s32 0, %v3270
        %v3272 = vrot.slane %v3203, %v3271
        %v3282 = vunpack.c.l.b16 %v3194
        %v3283 = vunpack.c.l.b16 %v3195
        %v3284 = vunpack.c.l.b16 %v3196
        %v3285 = vunpack.c.l.b16 %v3197
        %v3286 = vunpack.c.l.b16 %v3198
        %v3287 = vunpack.c.l.b16 %v3199
        %v3288 = vunpack.c.l.b16 %v3200
        %v3289 = vunpack.c.l.b16 %v3201
        %v3290 = vpack.c.b16 %v3283, %v3282
        %v3291 = vpack.c.b16 %v3285, %v3284
        %v3292 = vpack.c.b16 %v3287, %v3286
        %v3293 = vpack.c.b16 %v3289, %v3288
        %v3299 = vsel %vm2352, %v3267, 0
        %3301 = vmatprep.subr.bf16.mxu0 0
        %3302 = vmatpush1.bf16.msra.mxu0 %v3290
        %3303 = vmatprep.subr.bf16.mxu0 0
        %3304 = vmatpush1.bf16.msra.mxu0 %v3291
        %3305 = vmatprep.subr.bf16.mxu0 0
        %3306 = vmatpush1.bf16.msra.mxu0 %v3292
        %3307 = vmatprep.subr.bf16.mxu0 0
        %3308 = vmatpush1.bf16.msra.mxu0 %v3293
        %3309 = vmatprep.subr.bf16.mxu0 0
        %3310 = vmatpush1.bf16.msra.mxu0 0
        %3311 = vmatprep.subr.bf16.mxu0 0
        %3312 = vmatpush1.bf16.msra.mxu0 0
        %3313 = vmatprep.subr.bf16.mxu0 0
        %3314 = vmatpush1.bf16.msra.mxu0 0
        %3315 = vmatprep.subr.bf16.mxu0 0
        %3316 = vmatpush1.bf16.msra.mxu0 0
        %3317 = vmatprep.subr.bf16.mxu0 0
        %3318 = vmatpush1.bf16.msra.mxu0 0
        %3319 = vmatprep.subr.bf16.mxu0 0
        %3320 = vmatpush1.bf16.msra.mxu0 0
        %3321 = vmatprep.subr.bf16.mxu0 0
        %3322 = vmatpush1.bf16.msra.mxu0 0
        %3323 = vmatprep.subr.bf16.mxu0 0
        %3324 = vmatpush1.bf16.msra.mxu0 0
        %3325 = vmatprep.subr.bf16.mxu0 0
        %3326 = vmatpush1.bf16.msra.mxu0 0
        %3327 = vmatprep.subr.bf16.mxu0 0
        %3328 = vmatpush1.bf16.msra.mxu0 0
        %3329 = vmatprep.subr.bf16.mxu0 0
        %3330 = vmatpush1.bf16.msra.mxu0 0
        %3331 = vmatprep.subr.bf16.mxu0 0
        %3332 = vmatpush1.bf16.msra.mxu0 0
        %3333 = vmatprep.mubr.bf16.mxu0 0
        %3334 = vmatmul.mubr.bf16.gmra.mrb[0].mxu0 %v3299
        %v3335 = vpop.f32.mrb[0].mxu0
        %v3336 = vadd.f32 %v3272, %v3335
        %v3337 = vpop.f32.mrb[0].mxu0
        %v3338 = vpop.f32.mrb[0].mxu0
        %v3339 = vpop.f32.mrb[0].mxu0
        %3340 = vdwg.mxu0
        %v3341 = vadd.f32 %v3185, %v3336
        %s3342 = scalar_lea.vmem [#allocation20], 1
        %v3343 = vld [vmem:[%s3342] sm:$0x1]
        %s3344 = scalar_lea.vmem %s37, 1
        %v3345 = vld [vmem:[%s3344] sm:$0x1]
        %v3346 = vsel %vm1528, %v3341, 0.0
        %3347 = vadd.xlane.f32.xlu0 %v3346
        %v3348 = vpop.xlane.xlu0 %3347
        %v3349 = vmul.f32 %v3348, %v2219
        %v3350 = vsub.f32 %v3341, %v3349
        %v3351 = vmul.f32 %v3350, %v3350
        %v3352 = vsel %vm1528, %v3351, 0.0
        %3353 = vadd.xlane.f32.xlu0 %v3352
        %v3354 = vpop.xlane.xlu0 %3353
        %v3355 = vmul.f32 %v3354, %v2219
        %v3356 = vadd.f32 %v3355, 1e-05
        %v3357 = vrsqrt.pop %v3356
        %v3358 = vmul.f32 %v3350, %v3357
        %v3360 = vlaneseq
        %v3361 = vshrl.u32 %v3360, 7
        %v3362 = vsub.s32 0, %v3361
        %v3363 = vrot.slane %v3343, %v3362
        %v3365 = vmul.f32 %v3358, %v3363
        %v3367 = vlaneseq
        %v3368 = vshrl.u32 %v3367, 7
        %v3369 = vsub.s32 0, %v3368
        %v3370 = vrot.slane %v3345, %v3369
        %v3372 = vadd.f32 %v3365, %v3370
        %v3373 = vadd.f32 %v3372, %v1486
        %v3374 = vld [vmem:[%s39] sm:$0xf]
        %v3375 = vld [vmem:[%s39 + $0x4] sm:$0xf]
        %v3376 = vld [vmem:[%s39 + $0x8] sm:$0xf]
        %v3377 = vld [vmem:[%s39 + $0xc] sm:$0xf]
        %v3378 = vld [vmem:[#allocation22] sm:$0x1]
        %v3379 = vld [vmem:[#allocation23] sm:$0xf]
        %v3380 = vld [vmem:[#allocation23 + $0x4] sm:$0xf]
        %v3381 = vld [vmem:[#allocation23 + $0x8] sm:$0xf]
        %v3382 = vld [vmem:[#allocation23 + $0xc] sm:$0xf]
        %v3383 = vld [vmem:[#allocation25] sm:$0x1]
        %v3384 = vld [vmem:[#allocation26] sm:$0xf]
        %v3385 = vld [vmem:[#allocation26 + $0x4] sm:$0xf]
        %v3386 = vld [vmem:[#allocation26 + $0x8] sm:$0xf]
        %v3387 = vld [vmem:[#allocation26 + $0xc] sm:$0xf]
        %v3388 = vld [vmem:[#allocation28] sm:$0x1]
        %v3389 = vld [vmem:[#allocation29] sm:$0xf]
        %v3390 = vld [vmem:[#allocation29 + $0x4] sm:$0xf]
        %v3391 = vld [vmem:[#allocation29 + $0x8] sm:$0xf]
        %v3392 = vld [vmem:[#allocation29 + $0xc] sm:$0xf]
        %v3393 = vld [vmem:[#allocation31] sm:$0x1]
        %v3394 = vpack.c.bf16 %v1487, %v1487
        %v3396 = vlaneseq
        %v3397 = vshrl.u32 %v3396, 7
        %v3398 = vsub.s32 0, %v3397
        %v3399 = vrot.slane %v3378, %v3398
        %v3405 = vunpack.c.l.b16 %v3374
        %v3406 = vunpack.c.l.b16 %v3375
        %v3407 = vunpack.c.l.b16 %v3376
        %v3408 = vunpack.c.l.b16 %v3377
        %v3409 = vpack.c.b16 %v3406, %v3405
        %v3410 = vpack.c.b16 %v3408, %v3407
        %v3414 = vsel %vm1528, %v3394, 0
        %3416 = vmatprep.subr.bf16.mxu0 0
        %3417 = vmatpush1.bf16.msra.mxu0 %v3409
        %3418 = vmatprep.subr.bf16.mxu0 0
        %3419 = vmatpush1.bf16.msra.mxu0 %v3410
        %3420 = vmatprep.subr.bf16.mxu0 0
        %3421 = vmatpush1.bf16.msra.mxu0 0
        %3422 = vmatprep.subr.bf16.mxu0 0
        %3423 = vmatpush1.bf16.msra.mxu0 0
        %3424 = vmatprep.subr.bf16.mxu0 0
        %3425 = vmatpush1.bf16.msra.mxu0 0
        %3426 = vmatprep.subr.bf16.mxu0 0
        %3427 = vmatpush1.bf16.msra.mxu0 0
        %3428 = vmatprep.subr.bf16.mxu0 0
        %3429 = vmatpush1.bf16.msra.mxu0 0
        %3430 = vmatprep.subr.bf16.mxu0 0
        %3431 = vmatpush1.bf16.msra.mxu0 0
        %3432 = vmatprep.subr.bf16.mxu0 0
        %3433 = vmatpush1.bf16.msra.mxu0 0
        %3434 = vmatprep.subr.bf16.mxu0 0
        %3435 = vmatpush1.bf16.msra.mxu0 0
        %3436 = vmatprep.subr.bf16.mxu0 0
        %3437 = vmatpush1.bf16.msra.mxu0 0
        %3438 = vmatprep.subr.bf16.mxu0 0
        %3439 = vmatpush1.bf16.msra.mxu0 0
        %3440 = vmatprep.subr.bf16.mxu0 0
        %3441 = vmatpush1.bf16.msra.mxu0 0
        %3442 = vmatprep.subr.bf16.mxu0 0
        %3443 = vmatpush1.bf16.msra.mxu0 0
        %3444 = vmatprep.subr.bf16.mxu0 0
        %3445 = vmatpush1.bf16.msra.mxu0 0
        %3446 = vmatprep.subr.bf16.mxu0 0
        %3447 = vmatpush1.bf16.msra.mxu0 0
        %3448 = vmatprep.mubr.bf16.mxu0 0
        %3449 = vmatmul.mubr.bf16.gmra.mrb[0].mxu0 %v3414
        %v3450 = vpop.f32.mrb[0].mxu0
        %v3451 = vadd.f32 %v3399, %v3450
        %v3452 = vpop.f32.mrb[0].mxu0
        %v3453 = vpop.f32.mrb[0].mxu0
        %v3454 = vpop.f32.mrb[0].mxu0
        %3455 = vdwg.mxu0
        %v3456 = vpack.c.bf16 %v3373, %v3373
        %v3458 = vlaneseq
        %v3459 = vshrl.u32 %v3458, 7
        %v3460 = vsub.s32 0, %v3459
        %v3461 = vrot.slane %v3383, %v3460
        %v3467 = vunpack.c.l.b16 %v3379
        %v3468 = vunpack.c.l.b16 %v3380
        %v3469 = vunpack.c.l.b16 %v3381
        %v3470 = vunpack.c.l.b16 %v3382
        %v3471 = vpack.c.b16 %v3468, %v3467
        %v3472 = vpack.c.b16 %v3470, %v3469
        %v3476 = vsel %vm1528, %v3456, 0
        %3478 = vmatprep.subr.bf16.mxu0 0
        %3479 = vmatpush1.bf16.msra.mxu0 %v3471
        %3480 = vmatprep.subr.bf16.mxu0 0
        %3481 = vmatpush1.bf16.msra.mxu0 %v3472
        %3482 = vmatprep.subr.bf16.mxu0 0
        %3483 = vmatpush1.bf16.msra.mxu0 0
        %3484 = vmatprep.subr.bf16.mxu0 0
        %3485 = vmatpush1.bf16.msra.mxu0 0
        %3486 = vmatprep.subr.bf16.mxu0 0
        %3487 = vmatpush1.bf16.msra.mxu0 0
        %3488 = vmatprep.subr.bf16.mxu0 0
        %3489 = vmatpush1.bf16.msra.mxu0 0
        %3490 = vmatprep.subr.bf16.mxu0 0
        %3491 = vmatpush1.bf16.msra.mxu0 0
        %3492 = vmatprep.subr.bf16.mxu0 0
        %3493 = vmatpush1.bf16.msra.mxu0 0
        %3494 = vmatprep.subr.bf16.mxu0 0
        %3495 = vmatpush1.bf16.msra.mxu0 0
        %3496 = vmatprep.subr.bf16.mxu0 0
        %3497 = vmatpush1.bf16.msra.mxu0 0
        %3498 = vmatprep.subr.bf16.mxu0 0
        %3499 = vmatpush1.bf16.msra.mxu0 0
        %3500 = vmatprep.subr.bf16.mxu0 0
        %3501 = vmatpush1.bf16.msra.mxu0 0
        %3502 = vmatprep.subr.bf16.mxu0 0
        %3503 = vmatpush1.bf16.msra.mxu0 0
        %3504 = vmatprep.subr.bf16.mxu0 0
        %3505 = vmatpush1.bf16.msra.mxu0 0
        %3506 = vmatprep.subr.bf16.mxu0 0
        %3507 = vmatpush1.bf16.msra.mxu0 0
        %3508 = vmatprep.subr.bf16.mxu0 0
        %3509 = vmatpush1.bf16.msra.mxu0 0
        %3510 = vmatprep.mubr.bf16.mxu0 0
        %3511 = vmatmul.mubr.bf16.gmra.mrb[0].mxu0 %v3476
        %v3512 = vpop.f32.mrb[0].mxu0
        %v3513 = vadd.f32 %v3461, %v3512
        %v3514 = vpop.f32.mrb[0].mxu0
        %v3515 = vpop.f32.mrb[0].mxu0
        %v3516 = vpop.f32.mrb[0].mxu0
        %3517 = vdwg.mxu0
        %v3518 = vpack.c.bf16 %v3372, %v3372
        %v3520 = vlaneseq
        %v3521 = vshrl.u32 %v3520, 7
        %v3522 = vsub.s32 0, %v3521
        %v3523 = vrot.slane %v3388, %v3522
        %v3529 = vunpack.c.l.b16 %v3384
        %v3530 = vunpack.c.l.b16 %v3385
        %v3531 = vunpack.c.l.b16 %v3386
        %v3532 = vunpack.c.l.b16 %v3387
        %v3533 = vpack.c.b16 %v3530, %v3529
        %v3534 = vpack.c.b16 %v3532, %v3531
        %v3538 = vsel %vm1528, %v3518, 0
        %3540 = vmatprep.subr.bf16.mxu0 0
        %3541 = vmatpush1.bf16.msra.mxu0 %v3533
        %3542 = vmatprep.subr.bf16.mxu0 0
        %3543 = vmatpush1.bf16.msra.mxu0 %v3534
        %3544 = vmatprep.subr.bf16.mxu0 0
        %3545 = vmatpush1.bf16.msra.mxu0 0
        %3546 = vmatprep.subr.bf16.mxu0 0
        %3547 = vmatpush1.bf16.msra.mxu0 0
        %3548 = vmatprep.subr.bf16.mxu0 0
        %3549 = vmatpush1.bf16.msra.mxu0 0
        %3550 = vmatprep.subr.bf16.mxu0 0
        %3551 = vmatpush1.bf16.msra.mxu0 0
        %3552 = vmatprep.subr.bf16.mxu0 0
        %3553 = vmatpush1.bf16.msra.mxu0 0
        %3554 = vmatprep.subr.bf16.mxu0 0
        %3555 = vmatpush1.bf16.msra.mxu0 0
        %3556 = vmatprep.subr.bf16.mxu0 0
        %3557 = vmatpush1.bf16.msra.mxu0 0
        %3558 = vmatprep.subr.bf16.mxu0 0
        %3559 = vmatpush1.bf16.msra.mxu0 0
        %3560 = vmatprep.subr.bf16.mxu0 0
        %3561 = vmatpush1.bf16.msra.mxu0 0
        %3562 = vmatprep.subr.bf16.mxu0 0
        %3563 = vmatpush1.bf16.msra.mxu0 0
        %3564 = vmatprep.subr.bf16.mxu0 0
        %3565 = vmatpush1.bf16.msra.mxu0 0
        %3566 = vmatprep.subr.bf16.mxu0 0
        %3567 = vmatpush1.bf16.msra.mxu0 0
        %3568 = vmatprep.subr.bf16.mxu0 0
        %3569 = vmatpush1.bf16.msra.mxu0 0
        %3570 = vmatprep.subr.bf16.mxu0 0
        %3571 = vmatpush1.bf16.msra.mxu0 0
        %3572 = vmatprep.mubr.bf16.mxu0 0
        %3573 = vmatmul.mubr.bf16.gmra.mrb[0].mxu0 %v3538
        %v3574 = vpop.f32.mrb[0].mxu0
        %v3575 = vadd.f32 %v3523, %v3574
        %v3576 = vpop.f32.mrb[0].mxu0
        %v3577 = vpop.f32.mrb[0].mxu0
        %v3578 = vpop.f32.mrb[0].mxu0
        %3579 = vdwg.mxu0
        %v3580 = vpack.c.bf16 %v3451, %v3451
        %v3581 = vpack.c.bf16 %v3513, %v3513
        %v3583 = vsel %vm1694, %v3580, 0
        %v3586 = vsel %vm1694, %v3581, 0
        %3588 = vmatprep.subr.bf16.mxu0 0
        %3589 = vmatpush1.bf16.xpose.msra.mxu0 %v3586
        %3590 = vmatprep.subr.bf16.mxu0 0
        %3591 = vmatpush1.bf16.xpose.msra.mxu0 0
        %3592 = vmatprep.subr.bf16.mxu0 0
        %3593 = vmatpush1.bf16.xpose.msra.mxu0 0
        %3594 = vmatprep.subr.bf16.mxu0 0
        %3595 = vmatpush1.bf16.xpose.msra.mxu0 0
        %3596 = vmatprep.subr.bf16.mxu0 0
        %3597 = vmatpush1.bf16.xpose.msra.mxu0 0
        %3598 = vmatprep.subr.bf16.mxu0 0
        %3599 = vmatpush1.bf16.xpose.msra.mxu0 0
        %3600 = vmatprep.subr.bf16.mxu0 0
        %3601 = vmatpush1.bf16.xpose.msra.mxu0 0
        %3602 = vmatprep.subr.bf16.mxu0 0
        %3603 = vmatpush1.bf16.xpose.msra.mxu0 0
        %3604 = vmatprep.subr.bf16.mxu0 0
        %3605 = vmatpush1.bf16.xpose.msra.mxu0 0
        %3606 = vmatprep.subr.bf16.mxu0 0
        %3607 = vmatpush1.bf16.xpose.msra.mxu0 0
        %3608 = vmatprep.subr.bf16.mxu0 0
        %3609 = vmatpush1.bf16.xpose.msra.mxu0 0
        %3610 = vmatprep.subr.bf16.mxu0 0
        %3611 = vmatpush1.bf16.xpose.msra.mxu0 0
        %3612 = vmatprep.subr.bf16.mxu0 0
        %3613 = vmatpush1.bf16.xpose.msra.mxu0 0
        %3614 = vmatprep.subr.bf16.mxu0 0
        %3615 = vmatpush1.bf16.xpose.msra.mxu0 0
        %3616 = vmatprep.subr.bf16.mxu0 0
        %3617 = vmatpush1.bf16.xpose.msra.mxu0 0
        %3618 = vmatprep.subr.bf16.mxu0 0
        %3619 = vmatpush1.bf16.xpose.msra.mxu0 0
        %3620 = vmatprep.mubr.bf16.mxu0 0
        %3621 = vmatmul.mubr.bf16.gmra.mrb[0].mxu0 %v3583
        %v3622 = vpop.f32.mrb[0].mxu0
        %v3623 = vadd.f32 0.0, %v3622
        %v3624 = vpop.f32.mrb[0].mxu0
        %v3625 = vpop.f32.mrb[0].mxu0
        %v3626 = vpop.f32.mrb[0].mxu0
        %3627 = vdwg.mxu0
        %v3628 = vsel %vm1694, %v3623, -inf
        %3629 = vmax.xlane.f32.xlu0 %v3628
        %v3630 = vpop.xlane.xlu0 %3629
        %v3631 = vsub.f32 %v3623, %v3630
        %v3632 = vmul.f32 %v3631, 1.442695
        %v3633 = vpow.pop %v3632
        %v3634 = vsel %vm1694, %v3633, 0.0
        %3635 = vadd.xlane.f32.xlu0 %v3634
        %v3636 = vpop.xlane.xlu0 %3635
        %v3637 = vrcp.pop %v3636
        %v3638 = vmul.f32 %v3633, %v3637
        %v3639 = vpack.c.bf16 %v3638, %v3638
        %v3640 = vpack.c.bf16 %v3575, %v3575
        %v3642 = vsel %vm1694, %v3639, 0
        %v3645 = vsel %vm1757, %v3640, 0
        %3647 = vmatprep.subr.bf16.mxu0 0
        %3648 = vmatpush1.bf16.msra.mxu0 %v3645
        %3649 = vmatprep.subr.bf16.mxu0 0
        %3650 = vmatpush1.bf16.msra.mxu0 0
        %3651 = vmatprep.subr.bf16.mxu0 0
        %3652 = vmatpush1.bf16.msra.mxu0 0
        %3653 = vmatprep.subr.bf16.mxu0 0
        %3654 = vmatpush1.bf16.msra.mxu0 0
        %3655 = vmatprep.subr.bf16.mxu0 0
        %3656 = vmatpush1.bf16.msra.mxu0 0
        %3657 = vmatprep.subr.bf16.mxu0 0
        %3658 = vmatpush1.bf16.msra.mxu0 0
        %3659 = vmatprep.subr.bf16.mxu0 0
        %3660 = vmatpush1.bf16.msra.mxu0 0
        %3661 = vmatprep.subr.bf16.mxu0 0
        %3662 = vmatpush1.bf16.msra.mxu0 0
        %3663 = vmatprep.subr.bf16.mxu0 0
        %3664 = vmatpush1.bf16.msra.mxu0 0
        %3665 = vmatprep.subr.bf16.mxu0 0
        %3666 = vmatpush1.bf16.msra.mxu0 0
        %3667 = vmatprep.subr.bf16.mxu0 0
        %3668 = vmatpush1.bf16.msra.mxu0 0
        %3669 = vmatprep.subr.bf16.mxu0 0
        %3670 = vmatpush1.bf16.msra.mxu0 0
        %3671 = vmatprep.subr.bf16.mxu0 0
        %3672 = vmatpush1.bf16.msra.mxu0 0
        %3673 = vmatprep.subr.bf16.mxu0 0
        %3674 = vmatpush1.bf16.msra.mxu0 0
        %3675 = vmatprep.subr.bf16.mxu0 0
        %3676 = vmatpush1.bf16.msra.mxu0 0
        %3677 = vmatprep.subr.bf16.mxu0 0
        %3678 = vmatpush1.bf16.msra.mxu0 0
        %3679 = vmatprep.mubr.bf16.mxu0 0
        %3680 = vmatmul.mubr.bf16.gmra.mrb[0].mxu0 %v3642
        %v3681 = vpop.f32.mrb[0].mxu0
        %v3682 = vadd.f32 0.0, %v3681
        %v3683 = vpop.f32.mrb[0].mxu0
        %v3684 = vpop.f32.mrb[0].mxu0
        %v3685 = vpop.f32.mrb[0].mxu0
        %3686 = vdwg.mxu0
        %3688 = vrot.lane.b32.xlu0 %v3580, 120
        %v3689 = vpop.permute.xlu0 %3688
        %3691 = vrot.lane.b32.xlu0 %v3581, 120
        %v3692 = vpop.permute.xlu0 %3691
        %v3694 = vsel %vm1694, %v3689, 0
        %v3697 = vsel %vm1694, %v3692, 0
        %3699 = vmatprep.subr.bf16.mxu0 0
        %3700 = vmatpush1.bf16.xpose.msra.mxu0 %v3697
        %3701 = vmatprep.subr.bf16.mxu0 0
        %3702 = vmatpush1.bf16.xpose.msra.mxu0 0
        %3703 = vmatprep.subr.bf16.mxu0 0
        %3704 = vmatpush1.bf16.xpose.msra.mxu0 0
        %3705 = vmatprep.subr.bf16.mxu0 0
        %3706 = vmatpush1.bf16.xpose.msra.mxu0 0
        %3707 = vmatprep.subr.bf16.mxu0 0
        %3708 = vmatpush1.bf16.xpose.msra.mxu0 0
        %3709 = vmatprep.subr.bf16.mxu0 0
        %3710 = vmatpush1.bf16.xpose.msra.mxu0 0
        %3711 = vmatprep.subr.bf16.mxu0 0
        %3712 = vmatpush1.bf16.xpose.msra.mxu0 0
        %3713 = vmatprep.subr.bf16.mxu0 0
        %3714 = vmatpush1.bf16.xpose.msra.mxu0 0
        %3715 = vmatprep.subr.bf16.mxu0 0
        %3716 = vmatpush1.bf16.xpose.msra.mxu0 0
        %3717 = vmatprep.subr.bf16.mxu0 0
        %3718 = vmatpush1.bf16.xpose.msra.mxu0 0
        %3719 = vmatprep.subr.bf16.mxu0 0
        %3720 = vmatpush1.bf16.xpose.msra.mxu0 0
        %3721 = vmatprep.subr.bf16.mxu0 0
        %3722 = vmatpush1.bf16.xpose.msra.mxu0 0
        %3723 = vmatprep.subr.bf16.mxu0 0
        %3724 = vmatpush1.bf16.xpose.msra.mxu0 0
        %3725 = vmatprep.subr.bf16.mxu0 0
        %3726 = vmatpush1.bf16.xpose.msra.mxu0 0
        %3727 = vmatprep.subr.bf16.mxu0 0
        %3728 = vmatpush1.bf16.xpose.msra.mxu0 0
        %3729 = vmatprep.subr.bf16.mxu0 0
        %3730 = vmatpush1.bf16.xpose.msra.mxu0 0
        %3731 = vmatprep.mubr.bf16.mxu0 0
        %3732 = vmatmul.mubr.bf16.gmra.mrb[0].mxu0 %v3694
        %v3733 = vpop.f32.mrb[0].mxu0
        %v3734 = vadd.f32 0.0, %v3733
        %v3735 = vpop.f32.mrb[0].mxu0
        %v3736 = vpop.f32.mrb[0].mxu0
        %v3737 = vpop.f32.mrb[0].mxu0
        %3738 = vdwg.mxu0
        %v3739 = vsel %vm1694, %v3734, -inf
        %3740 = vmax.xlane.f32.xlu0 %v3739
        %v3741 = vpop.xlane.xlu0 %3740
        %v3742 = vsub.f32 %v3734, %v3741
        %v3743 = vmul.f32 %v3742, 1.442695
        %v3744 = vpow.pop %v3743
        %v3745 = vsel %vm1694, %v3744, 0.0
        %3746 = vadd.xlane.f32.xlu0 %v3745
        %v3747 = vpop.xlane.xlu0 %3746
        %v3748 = vrcp.pop %v3747
        %v3749 = vmul.f32 %v3744, %v3748
        %v3750 = vpack.c.bf16 %v3749, %v3749
        %3752 = vrot.lane.b32.xlu0 %v3640, 120
        %v3753 = vpop.permute.xlu0 %3752
        %v3755 = vsel %vm1694, %v3750, 0
        %v3758 = vsel %vm1757, %v3753, 0
        %3760 = vmatprep.subr.bf16.mxu0 0
        %3761 = vmatpush1.bf16.msra.mxu0 %v3758
        %3762 = vmatprep.subr.bf16.mxu0 0
        %3763 = vmatpush1.bf16.msra.mxu0 0
        %3764 = vmatprep.subr.bf16.mxu0 0
        %3765 = vmatpush1.bf16.msra.mxu0 0
        %3766 = vmatprep.subr.bf16.mxu0 0
        %3767 = vmatpush1.bf16.msra.mxu0 0
        %3768 = vmatprep.subr.bf16.mxu0 0
        %3769 = vmatpush1.bf16.msra.mxu0 0
        %3770 = vmatprep.subr.bf16.mxu0 0
        %3771 = vmatpush1.bf16.msra.mxu0 0
        %3772 = vmatprep.subr.bf16.mxu0 0
        %3773 = vmatpush1.bf16.msra.mxu0 0
        %3774 = vmatprep.subr.bf16.mxu0 0
        %3775 = vmatpush1.bf16.msra.mxu0 0
        %3776 = vmatprep.subr.bf16.mxu0 0
        %3777 = vmatpush1.bf16.msra.mxu0 0
        %3778 = vmatprep.subr.bf16.mxu0 0
        %3779 = vmatpush1.bf16.msra.mxu0 0
        %3780 = vmatprep.subr.bf16.mxu0 0
        %3781 = vmatpush1.bf16.msra.mxu0 0
        %3782 = vmatprep.subr.bf16.mxu0 0
        %3783 = vmatpush1.bf16.msra.mxu0 0
        %3784 = vmatprep.subr.bf16.mxu0 0
        %3785 = vmatpush1.bf16.msra.mxu0 0
        %3786 = vmatprep.subr.bf16.mxu0 0
        %3787 = vmatpush1.bf16.msra.mxu0 0
        %3788 = vmatprep.subr.bf16.mxu0 0
        %3789 = vmatpush1.bf16.msra.mxu0 0
        %3790 = vmatprep.subr.bf16.mxu0 0
        %3791 = vmatpush1.bf16.msra.mxu0 0
        %3792 = vmatprep.mubr.bf16.mxu0 0
        %3793 = vmatmul.mubr.bf16.gmra.mrb[0].mxu0 %v3755
        %v3794 = vpop.f32.mrb[0].mxu0
        %v3795 = vadd.f32 0.0, %v3794
        %v3796 = vpop.f32.mrb[0].mxu0
        %v3797 = vpop.f32.mrb[0].mxu0
        %v3798 = vpop.f32.mrb[0].mxu0
        %3799 = vdwg.mxu0
        %3800 = vrot.lane.b32.xlu0 %v3580, 112
        %v3801 = vpop.permute.xlu0 %3800
        %3802 = vrot.lane.b32.xlu0 %v3581, 112
        %v3803 = vpop.permute.xlu0 %3802
        %v3805 = vsel %vm1694, %v3801, 0
        %v3808 = vsel %vm1694, %v3803, 0
        %3810 = vmatprep.subr.bf16.mxu0 0
        %3811 = vmatpush1.bf16.xpose.msra.mxu0 %v3808
        %3812 = vmatprep.subr.bf16.mxu0 0
        %3813 = vmatpush1.bf16.xpose.msra.mxu0 0
        %3814 = vmatprep.subr.bf16.mxu0 0
        %3815 = vmatpush1.bf16.xpose.msra.mxu0 0
        %3816 = vmatprep.subr.bf16.mxu0 0
        %3817 = vmatpush1.bf16.xpose.msra.mxu0 0
        %3818 = vmatprep.subr.bf16.mxu0 0
        %3819 = vmatpush1.bf16.xpose.msra.mxu0 0
        %3820 = vmatprep.subr.bf16.mxu0 0
        %3821 = vmatpush1.bf16.xpose.msra.mxu0 0
        %3822 = vmatprep.subr.bf16.mxu0 0
        %3823 = vmatpush1.bf16.xpose.msra.mxu0 0
        %3824 = vmatprep.subr.bf16.mxu0 0
        %3825 = vmatpush1.bf16.xpose.msra.mxu0 0
        %3826 = vmatprep.subr.bf16.mxu0 0
        %3827 = vmatpush1.bf16.xpose.msra.mxu0 0
        %3828 = vmatprep.subr.bf16.mxu0 0
        %3829 = vmatpush1.bf16.xpose.msra.mxu0 0
        %3830 = vmatprep.subr.bf16.mxu0 0
        %3831 = vmatpush1.bf16.xpose.msra.mxu0 0
        %3832 = vmatprep.subr.bf16.mxu0 0
        %3833 = vmatpush1.bf16.xpose.msra.mxu0 0
        %3834 = vmatprep.subr.bf16.mxu0 0
        %3835 = vmatpush1.bf16.xpose.msra.mxu0 0
        %3836 = vmatprep.subr.bf16.mxu0 0
        %3837 = vmatpush1.bf16.xpose.msra.mxu0 0
        %3838 = vmatprep.subr.bf16.mxu0 0
        %3839 = vmatpush1.bf16.xpose.msra.mxu0 0
        %3840 = vmatprep.subr.bf16.mxu0 0
        %3841 = vmatpush1.bf16.xpose.msra.mxu0 0
        %3842 = vmatprep.mubr.bf16.mxu0 0
        %3843 = vmatmul.mubr.bf16.gmra.mrb[0].mxu0 %v3805
        %v3844 = vpop.f32.mrb[0].mxu0
        %v3845 = vadd.f32 0.0, %v3844
        %v3846 = vpop.f32.mrb[0].mxu0
        %v3847 = vpop.f32.mrb[0].mxu0
        %v3848 = vpop.f32.mrb[0].mxu0
        %3849 = vdwg.mxu0
        %v3850 = vsel %vm1694, %v3845, -inf
        %3851 = vmax.xlane.f32.xlu0 %v3850
        %v3852 = vpop.xlane.xlu0 %3851
        %v3853 = vsub.f32 %v3845, %v3852
        %v3854 = vmul.f32 %v3853, 1.442695
        %v3855 = vpow.pop %v3854
        %v3856 = vsel %vm1694, %v3855, 0.0
        %3857 = vadd.xlane.f32.xlu0 %v3856
        %v3858 = vpop.xlane.xlu0 %3857
        %v3859 = vrcp.pop %v3858
        %v3860 = vmul.f32 %v3855, %v3859
        %v3861 = vpack.c.bf16 %v3860, %v3860
        %3862 = vrot.lane.b32.xlu0 %v3640, 112
        %v3863 = vpop.permute.xlu0 %3862
        %v3865 = vsel %vm1694, %v3861, 0
        %v3868 = vsel %vm1757, %v3863, 0
        %3870 = vmatprep.subr.bf16.mxu0 0
        %3871 = vmatpush1.bf16.msra.mxu0 %v3868
        %3872 = vmatprep.subr.bf16.mxu0 0
        %3873 = vmatpush1.bf16.msra.mxu0 0
        %3874 = vmatprep.subr.bf16.mxu0 0
        %3875 = vmatpush1.bf16.msra.mxu0 0
        %3876 = vmatprep.subr.bf16.mxu0 0
        %3877 = vmatpush1.bf16.msra.mxu0 0
        %3878 = vmatprep.subr.bf16.mxu0 0
        %3879 = vmatpush1.bf16.msra.mxu0 0
        %3880 = vmatprep.subr.bf16.mxu0 0
        %3881 = vmatpush1.bf16.msra.mxu0 0
        %3882 = vmatprep.subr.bf16.mxu0 0
        %3883 = vmatpush1.bf16.msra.mxu0 0
        %3884 = vmatprep.subr.bf16.mxu0 0
        %3885 = vmatpush1.bf16.msra.mxu0 0
        %3886 = vmatprep.subr.bf16.mxu0 0
        %3887 = vmatpush1.bf16.msra.mxu0 0
        %3888 = vmatprep.subr.bf16.mxu0 0
        %3889 = vmatpush1.bf16.msra.mxu0 0
        %3890 = vmatprep.subr.bf16.mxu0 0
        %3891 = vmatpush1.bf16.msra.mxu0 0
        %3892 = vmatprep.subr.bf16.mxu0 0
        %3893 = vmatpush1.bf16.msra.mxu0 0
        %3894 = vmatprep.subr.bf16.mxu0 0
        %3895 = vmatpush1.bf16.msra.mxu0 0
        %3896 = vmatprep.subr.bf16.mxu0 0
        %3897 = vmatpush1.bf16.msra.mxu0 0
        %3898 = vmatprep.subr.bf16.mxu0 0
        %3899 = vmatpush1.bf16.msra.mxu0 0
        %3900 = vmatprep.subr.bf16.mxu0 0
        %3901 = vmatpush1.bf16.msra.mxu0 0
        %3902 = vmatprep.mubr.bf16.mxu0 0
        %3903 = vmatmul.mubr.bf16.gmra.mrb[0].mxu0 %v3865
        %v3904 = vpop.f32.mrb[0].mxu0
        %v3905 = vadd.f32 0.0, %v3904
        %v3906 = vpop.f32.mrb[0].mxu0
        %v3907 = vpop.f32.mrb[0].mxu0
        %v3908 = vpop.f32.mrb[0].mxu0
        %3909 = vdwg.mxu0
        %3910 = vrot.lane.b32.xlu0 %v3580, 104
        %v3911 = vpop.permute.xlu0 %3910
        %3912 = vrot.lane.b32.xlu0 %v3581, 104
        %v3913 = vpop.permute.xlu0 %3912
        %v3915 = vsel %vm1694, %v3911, 0
        %v3918 = vsel %vm1694, %v3913, 0
        %3920 = vmatprep.subr.bf16.mxu0 0
        %3921 = vmatpush1.bf16.xpose.msra.mxu0 %v3918
        %3922 = vmatprep.subr.bf16.mxu0 0
        %3923 = vmatpush1.bf16.xpose.msra.mxu0 0
        %3924 = vmatprep.subr.bf16.mxu0 0
        %3925 = vmatpush1.bf16.xpose.msra.mxu0 0
        %3926 = vmatprep.subr.bf16.mxu0 0
        %3927 = vmatpush1.bf16.xpose.msra.mxu0 0
        %3928 = vmatprep.subr.bf16.mxu0 0
        %3929 = vmatpush1.bf16.xpose.msra.mxu0 0
        %3930 = vmatprep.subr.bf16.mxu0 0
        %3931 = vmatpush1.bf16.xpose.msra.mxu0 0
        %3932 = vmatprep.subr.bf16.mxu0 0
        %3933 = vmatpush1.bf16.xpose.msra.mxu0 0
        %3934 = vmatprep.subr.bf16.mxu0 0
        %3935 = vmatpush1.bf16.xpose.msra.mxu0 0
        %3936 = vmatprep.subr.bf16.mxu0 0
        %3937 = vmatpush1.bf16.xpose.msra.mxu0 0
        %3938 = vmatprep.subr.bf16.mxu0 0
        %3939 = vmatpush1.bf16.xpose.msra.mxu0 0
        %3940 = vmatprep.subr.bf16.mxu0 0
        %3941 = vmatpush1.bf16.xpose.msra.mxu0 0
        %3942 = vmatprep.subr.bf16.mxu0 0
        %3943 = vmatpush1.bf16.xpose.msra.mxu0 0
        %3944 = vmatprep.subr.bf16.mxu0 0
        %3945 = vmatpush1.bf16.xpose.msra.mxu0 0
        %3946 = vmatprep.subr.bf16.mxu0 0
        %3947 = vmatpush1.bf16.xpose.msra.mxu0 0
        %3948 = vmatprep.subr.bf16.mxu0 0
        %3949 = vmatpush1.bf16.xpose.msra.mxu0 0
        %3950 = vmatprep.subr.bf16.mxu0 0
        %3951 = vmatpush1.bf16.xpose.msra.mxu0 0
        %3952 = vmatprep.mubr.bf16.mxu0 0
        %3953 = vmatmul.mubr.bf16.gmra.mrb[0].mxu0 %v3915
        %v3954 = vpop.f32.mrb[0].mxu0
        %v3955 = vadd.f32 0.0, %v3954
        %v3956 = vpop.f32.mrb[0].mxu0
        %v3957 = vpop.f32.mrb[0].mxu0
        %v3958 = vpop.f32.mrb[0].mxu0
        %3959 = vdwg.mxu0
        %v3960 = vsel %vm1694, %v3955, -inf
        %3961 = vmax.xlane.f32.xlu0 %v3960
        %v3962 = vpop.xlane.xlu0 %3961
        %v3963 = vsub.f32 %v3955, %v3962
        %v3964 = vmul.f32 %v3963, 1.442695
        %v3965 = vpow.pop %v3964
        %v3966 = vsel %vm1694, %v3965, 0.0
        %3967 = vadd.xlane.f32.xlu0 %v3966
        %v3968 = vpop.xlane.xlu0 %3967
        %v3969 = vrcp.pop %v3968
        %v3970 = vmul.f32 %v3965, %v3969
        %v3971 = vpack.c.bf16 %v3970, %v3970
        %3972 = vrot.lane.b32.xlu0 %v3640, 104
        %v3973 = vpop.permute.xlu0 %3972
        %v3975 = vsel %vm1694, %v3971, 0
        %v3978 = vsel %vm1757, %v3973, 0
        %3980 = vmatprep.subr.bf16.mxu0 0
        %3981 = vmatpush1.bf16.msra.mxu0 %v3978
        %3982 = vmatprep.subr.bf16.mxu0 0
        %3983 = vmatpush1.bf16.msra.mxu0 0
        %3984 = vmatprep.subr.bf16.mxu0 0
        %3985 = vmatpush1.bf16.msra.mxu0 0
        %3986 = vmatprep.subr.bf16.mxu0 0
        %3987 = vmatpush1.bf16.msra.mxu0 0
        %3988 = vmatprep.subr.bf16.mxu0 0
        %3989 = vmatpush1.bf16.msra.mxu0 0
        %3990 = vmatprep.subr.bf16.mxu0 0
        %3991 = vmatpush1.bf16.msra.mxu0 0
        %3992 = vmatprep.subr.bf16.mxu0 0
        %3993 = vmatpush1.bf16.msra.mxu0 0
        %3994 = vmatprep.subr.bf16.mxu0 0
        %3995 = vmatpush1.bf16.msra.mxu0 0
        %3996 = vmatprep.subr.bf16.mxu0 0
        %3997 = vmatpush1.bf16.msra.mxu0 0
        %3998 = vmatprep.subr.bf16.mxu0 0
        %3999 = vmatpush1.bf16.msra.mxu0 0
        %4000 = vmatprep.subr.bf16.mxu0 0
        %4001 = vmatpush1.bf16.msra.mxu0 0
        %4002 = vmatprep.subr.bf16.mxu0 0
        %4003 = vmatpush1.bf16.msra.mxu0 0
        %4004 = vmatprep.subr.bf16.mxu0 0
        %4005 = vmatpush1.bf16.msra.mxu0 0
        %4006 = vmatprep.subr.bf16.mxu0 0
        %4007 = vmatpush1.bf16.msra.mxu0 0
        %4008 = vmatprep.subr.bf16.mxu0 0
        %4009 = vmatpush1.bf16.msra.mxu0 0
        %4010 = vmatprep.subr.bf16.mxu0 0
        %4011 = vmatpush1.bf16.msra.mxu0 0
        %4012 = vmatprep.mubr.bf16.mxu0 0
        %4013 = vmatmul.mubr.bf16.gmra.mrb[0].mxu0 %v3975
        %v4014 = vpop.f32.mrb[0].mxu0
        %v4015 = vadd.f32 0.0, %v4014
        %v4016 = vpop.f32.mrb[0].mxu0
        %v4017 = vpop.f32.mrb[0].mxu0
        %v4018 = vpop.f32.mrb[0].mxu0
        %4019 = vdwg.mxu0
        %4021 = vrot.lane.b32.xlu0 %v3795, 8
        %v4022 = vpop.permute.xlu0 %4021
        %4025 = vrot.lane.b32.xlu0 %v3905, 16
        %v4026 = vpop.permute.xlu0 %4025
        %4029 = vrot.lane.b32.xlu0 %v4015, 24
        %v4030 = vpop.permute.xlu0 %4029
        %v4032 = vsel %vm1694, %v3682, %v4022
        %v4033 = vsel %vm2147, %v4032, %v4026
        %v4034 = vsel %vm2149, %v4033, %v4030
        %v4035 = vpack.c.bf16 %v4034, %v4034
        %v4037 = vlaneseq
        %v4038 = vshrl.u32 %v4037, 7
        %v4039 = vsub.s32 0, %v4038
        %v4040 = vrot.slane %v3393, %v4039
        %v4046 = vunpack.c.l.b16 %v3389
        %v4047 = vunpack.c.l.b16 %v3390
        %v4048 = vunpack.c.l.b16 %v3391
        %v4049 = vunpack.c.l.b16 %v3392
        %v4050 = vpack.c.b16 %v4047, %v4046
        %v4051 = vpack.c.b16 %v4049, %v4048
        %v4055 = vsel %vm1528, %v4035, 0
        %4057 = vmatprep.subr.bf16.mxu0 0
        %4058 = vmatpush1.bf16.msra.mxu0 %v4050
        %4059 = vmatprep.subr.bf16.mxu0 0
        %4060 = vmatpush1.bf16.msra.mxu0 %v4051
        %4061 = vmatprep.subr.bf16.mxu0 0
        %4062 = vmatpush1.bf16.msra.mxu0 0
        %4063 = vmatprep.subr.bf16.mxu0 0
        %4064 = vmatpush1.bf16.msra.mxu0 0
        %4065 = vmatprep.subr.bf16.mxu0 0
        %4066 = vmatpush1.bf16.msra.mxu0 0
        %4067 = vmatprep.subr.bf16.mxu0 0
        %4068 = vmatpush1.bf16.msra.mxu0 0
        %4069 = vmatprep.subr.bf16.mxu0 0
        %4070 = vmatpush1.bf16.msra.mxu0 0
        %4071 = vmatprep.subr.bf16.mxu0 0
        %4072 = vmatpush1.bf16.msra.mxu0 0
        %4073 = vmatprep.subr.bf16.mxu0 0
        %4074 = vmatpush1.bf16.msra.mxu0 0
        %4075 = vmatprep.subr.bf16.mxu0 0
        %4076 = vmatpush1.bf16.msra.mxu0 0
        %4077 = vmatprep.subr.bf16.mxu0 0
        %4078 = vmatpush1.bf16.msra.mxu0 0
        %4079 = vmatprep.subr.bf16.mxu0 0
        %4080 = vmatpush1.bf16.msra.mxu0 0
        %4081 = vmatprep.subr.bf16.mxu0 0
        %4082 = vmatpush1.bf16.msra.mxu0 0
        %4083 = vmatprep.subr.bf16.mxu0 0
        %4084 = vmatpush1.bf16.msra.mxu0 0
        %4085 = vmatprep.subr.bf16.mxu0 0
        %4086 = vmatpush1.bf16.msra.mxu0 0
        %4087 = vmatprep.subr.bf16.mxu0 0
        %4088 = vmatpush1.bf16.msra.mxu0 0
        %4089 = vmatprep.mubr.bf16.mxu0 0
        %4090 = vmatmul.mubr.bf16.gmra.mrb[0].mxu0 %v4055
        %v4091 = vpop.f32.mrb[0].mxu0
        %v4092 = vadd.f32 %v4040, %v4091
        %v4093 = vpop.f32.mrb[0].mxu0
        %v4094 = vpop.f32.mrb[0].mxu0
        %v4095 = vpop.f32.mrb[0].mxu0
        %4096 = vdwg.mxu0
        %v4097 = vld [vmem:[%s55] sm:$0x1]
        %v4098 = vld [vmem:[%s57] sm:$0x1]
        %v4099 = vsel %vm1528, %v4092, 0.0
        %4100 = vadd.xlane.f32.xlu0 %v4099
        %v4101 = vpop.xlane.xlu0 %4100
        %v4102 = vmul.f32 %v4101, %v2219
        %v4103 = vsub.f32 %v4092, %v4102
        %v4104 = vmul.f32 %v4103, %v4103
        %v4105 = vsel %vm1528, %v4104, 0.0
        %4106 = vadd.xlane.f32.xlu0 %v4105
        %v4107 = vpop.xlane.xlu0 %4106
        %v4108 = vmul.f32 %v4107, %v2219
        %v4109 = vadd.f32 %v4108, 1e-05
        %v4110 = vrsqrt.pop %v4109
        %v4111 = vmul.f32 %v4103, %v4110
        %v4113 = vlaneseq
        %v4114 = vshrl.u32 %v4113, 7
        %v4115 = vsub.s32 0, %v4114
        %v4116 = vrot.slane %v4097, %v4115
        %v4118 = vmul.f32 %v4111, %v4116
        %v4120 = vlaneseq
        %v4121 = vshrl.u32 %v4120, 7
        %v4122 = vsub.s32 0, %v4121
        %v4123 = vrot.slane %v4098, %v4122
        %v4125 = vadd.f32 %v4118, %v4123
        %v4126 = vld [vmem:[%s59] sm:$0xf]
        %v4127 = vld [vmem:[%s59 + $0x4] sm:$0xf]
        %v4128 = vld [vmem:[%s59 + $0x8] sm:$0xf]
        %v4129 = vld [vmem:[%s59 + $0xc] sm:$0xf]
        %v4130 = vld [vmem:[%s61] sm:$0x1]
        %v4131 = vld [vmem:[%s63] sm:$0xf]
        %v4132 = vld [vmem:[%s63 + $0x4] sm:$0xf]
        %v4133 = vld [vmem:[%s63 + $0x8] sm:$0xf]
        %v4134 = vld [vmem:[%s63 + $0xc] sm:$0xf]
        %v4135 = vld [vmem:[%s63 + $0x10] sm:$0xf]
        %v4136 = vld [vmem:[%s63 + $0x14] sm:$0xf]
        %v4137 = vld [vmem:[%s63 + $0x18] sm:$0xf]
        %v4138 = vld [vmem:[%s63 + $0x1c] sm:$0xf]
        %v4139 = vld [vmem:[%s65] sm:$0x1]
        %v4140 = vpack.c.bf16 %v4125, %v4125
        %v4142 = vlaneseq
        %v4143 = vshrl.u32 %v4142, 7
        %v4144 = vsub.s32 0, %v4143
        %v4145 = vrot.slane %v4130, %v4144
        %v4151 = vunpack.c.l.b16 %v4126
        %v4152 = vunpack.c.l.b16 %v4127
        %v4153 = vunpack.c.l.b16 %v4128
        %v4154 = vunpack.c.l.b16 %v4129
        %v4155 = vpack.c.b16 %v4152, %v4151
        %v4156 = vpack.c.b16 %v4154, %v4153
        %v4160 = vsel %vm1528, %v4140, 0
        %4162 = vmatprep.subr.bf16.mxu0 0
        %4163 = vmatpush1.bf16.msra.mxu0 %v4155
        %4164 = vmatprep.subr.bf16.mxu0 0
        %4165 = vmatpush1.bf16.msra.mxu0 %v4156
        %4166 = vmatprep.subr.bf16.mxu0 0
        %4167 = vmatpush1.bf16.msra.mxu0 0
        %4168 = vmatprep.subr.bf16.mxu0 0
        %4169 = vmatpush1.bf16.msra.mxu0 0
        %4170 = vmatprep.subr.bf16.mxu0 0
        %4171 = vmatpush1.bf16.msra.mxu0 0
        %4172 = vmatprep.subr.bf16.mxu0 0
        %4173 = vmatpush1.bf16.msra.mxu0 0
        %4174 = vmatprep.subr.bf16.mxu0 0
        %4175 = vmatpush1.bf16.msra.mxu0 0
        %4176 = vmatprep.subr.bf16.mxu0 0
        %4177 = vmatpush1.bf16.msra.mxu0 0
        %4178 = vmatprep.subr.bf16.mxu0 0
        %4179 = vmatpush1.bf16.msra.mxu0 0
        %4180 = vmatprep.subr.bf16.mxu0 0
        %4181 = vmatpush1.bf16.msra.mxu0 0
        %4182 = vmatprep.subr.bf16.mxu0 0
        %4183 = vmatpush1.bf16.msra.mxu0 0
        %4184 = vmatprep.subr.bf16.mxu0 0
        %4185 = vmatpush1.bf16.msra.mxu0 0
        %4186 = vmatprep.subr.bf16.mxu0 0
        %4187 = vmatpush1.bf16.msra.mxu0 0
        %4188 = vmatprep.subr.bf16.mxu0 0
        %4189 = vmatpush1.bf16.msra.mxu0 0
        %4190 = vmatprep.subr.bf16.mxu0 0
        %4191 = vmatpush1.bf16.msra.mxu0 0
        %4192 = vmatprep.subr.bf16.mxu0 0
        %4193 = vmatpush1.bf16.msra.mxu0 0
        %4194 = vmatprep.mubr.bf16.mxu0 0
        %4195 = vmatmul.mubr.bf16.gmra.mrb[0].mxu0 %v4160
        %v4196 = vpop.f32.mrb[0].mxu0
        %v4197 = vadd.f32 %v4145, %v4196
        %v4198 = vpop.f32.mrb[0].mxu0
        %v4199 = vpop.f32.mrb[0].mxu0
        %v4200 = vpop.f32.mrb[0].mxu0
        %4201 = vdwg.mxu0
        %v4202 = vmax.f32 %v4197, 0.0
        %v4203 = vpack.c.bf16 %v4202, %v4202
        %v4205 = vlaneseq
        %v4206 = vshrl.u32 %v4205, 7
        %v4207 = vsub.s32 0, %v4206
        %v4208 = vrot.slane %v4139, %v4207
        %v4218 = vunpack.c.l.b16 %v4131
        %v4219 = vunpack.c.l.b16 %v4132
        %v4220 = vunpack.c.l.b16 %v4133
        %v4221 = vunpack.c.l.b16 %v4134
        %v4222 = vunpack.c.l.b16 %v4135
        %v4223 = vunpack.c.l.b16 %v4136
        %v4224 = vunpack.c.l.b16 %v4137
        %v4225 = vunpack.c.l.b16 %v4138
        %v4226 = vpack.c.b16 %v4219, %v4218
        %v4227 = vpack.c.b16 %v4221, %v4220
        %v4228 = vpack.c.b16 %v4223, %v4222
        %v4229 = vpack.c.b16 %v4225, %v4224
        %v4235 = vsel %vm2352, %v4203, 0
        %4237 = vmatprep.subr.bf16.mxu0 0
        %4238 = vmatpush1.bf16.msra.mxu0 %v4226
        %4239 = vmatprep.subr.bf16.mxu0 0
        %4240 = vmatpush1.bf16.msra.mxu0 %v4227
        %4241 = vmatprep.subr.bf16.mxu0 0
        %4242 = vmatpush1.bf16.msra.mxu0 %v4228
        %4243 = vmatprep.subr.bf16.mxu0 0
        %4244 = vmatpush1.bf16.msra.mxu0 %v4229
        %4245 = vmatprep.subr.bf16.mxu0 0
        %4246 = vmatpush1.bf16.msra.mxu0 0
        %4247 = vmatprep.subr.bf16.mxu0 0
        %4248 = vmatpush1.bf16.msra.mxu0 0
        %4249 = vmatprep.subr.bf16.mxu0 0
        %4250 = vmatpush1.bf16.msra.mxu0 0
        %4251 = vmatprep.subr.bf16.mxu0 0
        %4252 = vmatpush1.bf16.msra.mxu0 0
        %4253 = vmatprep.subr.bf16.mxu0 0
        %4254 = vmatpush1.bf16.msra.mxu0 0
        %4255 = vmatprep.subr.bf16.mxu0 0
        %4256 = vmatpush1.bf16.msra.mxu0 0
        %4257 = vmatprep.subr.bf16.mxu0 0
        %4258 = vmatpush1.bf16.msra.mxu0 0
        %4259 = vmatprep.subr.bf16.mxu0 0
        %4260 = vmatpush1.bf16.msra.mxu0 0
        %4261 = vmatprep.subr.bf16.mxu0 0
        %4262 = vmatpush1.bf16.msra.mxu0 0
        %4263 = vmatprep.subr.bf16.mxu0 0
        %4264 = vmatpush1.bf16.msra.mxu0 0
        %4265 = vmatprep.subr.bf16.mxu0 0
        %4266 = vmatpush1.bf16.msra.mxu0 0
        %4267 = vmatprep.subr.bf16.mxu0 0
        %4268 = vmatpush1.bf16.msra.mxu0 0
        %4269 = vmatprep.mubr.bf16.mxu0 0
        %4270 = vmatmul.mubr.bf16.gmra.mrb[0].mxu0 %v4235
        %v4271 = vpop.f32.mrb[0].mxu0
        %v4272 = vadd.f32 %v4208, %v4271
        %v4273 = vpop.f32.mrb[0].mxu0
        %v4274 = vpop.f32.mrb[0].mxu0
        %v4275 = vpop.f32.mrb[0].mxu0
        %4276 = vdwg.mxu0
        %v4277 = vadd.f32 %v4125, %v4272
        %v4278 = vld [vmem:[%s67] sm:$0x1]
        %v4279 = vld [vmem:[%s69] sm:$0x1]
        %v4280 = vsel %vm1528, %v4277, 0.0
        %4281 = vadd.xlane.f32.xlu0 %v4280
        %v4282 = vpop.xlane.xlu0 %4281
        %v4283 = vmul.f32 %v4282, %v2219
        %v4284 = vsub.f32 %v4277, %v4283
        %v4285 = vmul.f32 %v4284, %v4284
        %v4286 = vsel %vm1528, %v4285, 0.0
        %4287 = vadd.xlane.f32.xlu0 %v4286
        %v4288 = vpop.xlane.xlu0 %4287
        %v4289 = vmul.f32 %v4288, %v2219
        %v4290 = vadd.f32 %v4289, 1e-05
        %v4291 = vrsqrt.pop %v4290
        %v4292 = vmul.f32 %v4284, %v4291
        %v4294 = vlaneseq
        %v4295 = vshrl.u32 %v4294, 7
        %v4296 = vsub.s32 0, %v4295
        %v4297 = vrot.slane %v4278, %v4296
        %v4299 = vmul.f32 %v4292, %v4297
        %v4301 = vlaneseq
        %v4302 = vshrl.u32 %v4301, 7
        %v4303 = vsub.s32 0, %v4302
        %v4304 = vrot.slane %v4279, %v4303
        %v4306 = vadd.f32 %v4299, %v4304
        %v4307 = vadd.f32 %v4306, %v1487
        %s4308 = scalar_lea.vmem %s39, 16
        %v4309 = vld [vmem:[%s4308] sm:$0xf]
        %v4310 = vld [vmem:[%s4308 + $0x4] sm:$0xf]
        %v4311 = vld [vmem:[%s4308 + $0x8] sm:$0xf]
        %v4312 = vld [vmem:[%s4308 + $0xc] sm:$0xf]
        %s4313 = scalar_lea.vmem [#allocation22], 1
        %v4314 = vld [vmem:[%s4313] sm:$0x1]
        %s4315 = scalar_lea.vmem [#allocation23], 16
        %v4316 = vld [vmem:[%s4315] sm:$0xf]
        %v4317 = vld [vmem:[%s4315 + $0x4] sm:$0xf]
        %v4318 = vld [vmem:[%s4315 + $0x8] sm:$0xf]
        %v4319 = vld [vmem:[%s4315 + $0xc] sm:$0xf]
        %s4320 = scalar_lea.vmem [#allocation25], 1
        %v4321 = vld [vmem:[%s4320] sm:$0x1]
        %s4322 = scalar_lea.vmem [#allocation26], 16
        %v4323 = vld [vmem:[%s4322] sm:$0xf]
        %v4324 = vld [vmem:[%s4322 + $0x4] sm:$0xf]
        %v4325 = vld [vmem:[%s4322 + $0x8] sm:$0xf]
        %v4326 = vld [vmem:[%s4322 + $0xc] sm:$0xf]
        %s4327 = scalar_lea.vmem [#allocation28], 1
        %v4328 = vld [vmem:[%s4327] sm:$0x1]
        %s4329 = scalar_lea.vmem [#allocation29], 16
        %v4330 = vld [vmem:[%s4329] sm:$0xf]
        %v4331 = vld [vmem:[%s4329 + $0x4] sm:$0xf]
        %v4332 = vld [vmem:[%s4329 + $0x8] sm:$0xf]
        %v4333 = vld [vmem:[%s4329 + $0xc] sm:$0xf]
        %s4334 = scalar_lea.vmem [#allocation31], 1
        %v4335 = vld [vmem:[%s4334] sm:$0x1]
        %v4336 = vpack.c.bf16 %v4307, %v4307
        %v4338 = vlaneseq
        %v4339 = vshrl.u32 %v4338, 7
        %v4340 = vsub.s32 0, %v4339
        %v4341 = vrot.slane %v4314, %v4340
        %v4347 = vunpack.c.l.b16 %v4309
        %v4348 = vunpack.c.l.b16 %v4310
        %v4349 = vunpack.c.l.b16 %v4311
        %v4350 = vunpack.c.l.b16 %v4312
        %v4351 = vpack.c.b16 %v4348, %v4347
        %v4352 = vpack.c.b16 %v4350, %v4349
        %v4356 = vsel %vm1528, %v4336, 0
        %4358 = vmatprep.subr.bf16.mxu0 0
        %4359 = vmatpush1.bf16.msra.mxu0 %v4351
        %4360 = vmatprep.subr.bf16.mxu0 0
        %4361 = vmatpush1.bf16.msra.mxu0 %v4352
        %4362 = vmatprep.subr.bf16.mxu0 0
        %4363 = vmatpush1.bf16.msra.mxu0 0
        %4364 = vmatprep.subr.bf16.mxu0 0
        %4365 = vmatpush1.bf16.msra.mxu0 0
        %4366 = vmatprep.subr.bf16.mxu0 0
        %4367 = vmatpush1.bf16.msra.mxu0 0
        %4368 = vmatprep.subr.bf16.mxu0 0
        %4369 = vmatpush1.bf16.msra.mxu0 0
        %4370 = vmatprep.subr.bf16.mxu0 0
        %4371 = vmatpush1.bf16.msra.mxu0 0
        %4372 = vmatprep.subr.bf16.mxu0 0
        %4373 = vmatpush1.bf16.msra.mxu0 0
        %4374 = vmatprep.subr.bf16.mxu0 0
        %4375 = vmatpush1.bf16.msra.mxu0 0
        %4376 = vmatprep.subr.bf16.mxu0 0
        %4377 = vmatpush1.bf16.msra.mxu0 0
        %4378 = vmatprep.subr.bf16.mxu0 0
        %4379 = vmatpush1.bf16.msra.mxu0 0
        %4380 = vmatprep.subr.bf16.mxu0 0
        %4381 = vmatpush1.bf16.msra.mxu0 0
        %4382 = vmatprep.subr.bf16.mxu0 0
        %4383 = vmatpush1.bf16.msra.mxu0 0
        %4384 = vmatprep.subr.bf16.mxu0 0
        %4385 = vmatpush1.bf16.msra.mxu0 0
        %4386 = vmatprep.subr.bf16.mxu0 0
        %4387 = vmatpush1.bf16.msra.mxu0 0
        %4388 = vmatprep.subr.bf16.mxu0 0
        %4389 = vmatpush1.bf16.msra.mxu0 0
        %4390 = vmatprep.mubr.bf16.mxu0 0
        %4391 = vmatmul.mubr.bf16.gmra.mrb[0].mxu0 %v4356
        %v4392 = vpop.f32.mrb[0].mxu0
        %v4393 = vadd.f32 %v4341, %v4392
        %v4394 = vpop.f32.mrb[0].mxu0
        %v4395 = vpop.f32.mrb[0].mxu0
        %v4396 = vpop.f32.mrb[0].mxu0
        %4397 = vdwg.mxu0
        %v4399 = vlaneseq
        %v4400 = vshrl.u32 %v4399, 7
        %v4401 = vsub.s32 0, %v4400
        %v4402 = vrot.slane %v4321, %v4401
        %v4408 = vunpack.c.l.b16 %v4316
        %v4409 = vunpack.c.l.b16 %v4317
        %v4410 = vunpack.c.l.b16 %v4318
        %v4411 = vunpack.c.l.b16 %v4319
        %v4412 = vpack.c.b16 %v4409, %v4408
        %v4413 = vpack.c.b16 %v4411, %v4410
        %4416 = vmatprep.subr.bf16.mxu0 0
        %4417 = vmatpush1.bf16.msra.mxu0 %v4412
        %4418 = vmatprep.subr.bf16.mxu0 0
        %4419 = vmatpush1.bf16.msra.mxu0 %v4413
        %4420 = vmatprep.subr.bf16.mxu0 0
        %4421 = vmatpush1.bf16.msra.mxu0 0
        %4422 = vmatprep.subr.bf16.mxu0 0
        %4423 = vmatpush1.bf16.msra.mxu0 0
        %4424 = vmatprep.subr.bf16.mxu0 0
        %4425 = vmatpush1.bf16.msra.mxu0 0
        %4426 = vmatprep.subr.bf16.mxu0 0
        %4427 = vmatpush1.bf16.msra.mxu0 0
        %4428 = vmatprep.subr.bf16.mxu0 0
        %4429 = vmatpush1.bf16.msra.mxu0 0
        %4430 = vmatprep.subr.bf16.mxu0 0
        %4431 = vmatpush1.bf16.msra.mxu0 0
        %4432 = vmatprep.subr.bf16.mxu0 0
        %4433 = vmatpush1.bf16.msra.mxu0 0
        %4434 = vmatprep.subr.bf16.mxu0 0
        %4435 = vmatpush1.bf16.msra.mxu0 0
        %4436 = vmatprep.subr.bf16.mxu0 0
        %4437 = vmatpush1.bf16.msra.mxu0 0
        %4438 = vmatprep.subr.bf16.mxu0 0
        %4439 = vmatpush1.bf16.msra.mxu0 0
        %4440 = vmatprep.subr.bf16.mxu0 0
        %4441 = vmatpush1.bf16.msra.mxu0 0
        %4442 = vmatprep.subr.bf16.mxu0 0
        %4443 = vmatpush1.bf16.msra.mxu0 0
        %4444 = vmatprep.subr.bf16.mxu0 0
        %4445 = vmatpush1.bf16.msra.mxu0 0
        %4446 = vmatprep.subr.bf16.mxu0 0
        %4447 = vmatpush1.bf16.msra.mxu0 0
        %4448 = vmatprep.mubr.bf16.mxu0 0
        %4449 = vmatmul.mubr.bf16.gmra.mrb[0].mxu0 %v3476
        %v4450 = vpop.f32.mrb[0].mxu0
        %v4451 = vadd.f32 %v4402, %v4450
        %v4452 = vpop.f32.mrb[0].mxu0
        %v4453 = vpop.f32.mrb[0].mxu0
        %v4454 = vpop.f32.mrb[0].mxu0
        %4455 = vdwg.mxu0
        %v4457 = vlaneseq
        %v4458 = vshrl.u32 %v4457, 7
        %v4459 = vsub.s32 0, %v4458
        %v4460 = vrot.slane %v4328, %v4459
        %v4466 = vunpack.c.l.b16 %v4323
        %v4467 = vunpack.c.l.b16 %v4324
        %v4468 = vunpack.c.l.b16 %v4325
        %v4469 = vunpack.c.l.b16 %v4326
        %v4470 = vpack.c.b16 %v4467, %v4466
        %v4471 = vpack.c.b16 %v4469, %v4468
        %4474 = vmatprep.subr.bf16.mxu0 0
        %4475 = vmatpush1.bf16.msra.mxu0 %v4470
        %4476 = vmatprep.subr.bf16.mxu0 0
        %4477 = vmatpush1.bf16.msra.mxu0 %v4471
        %4478 = vmatprep.subr.bf16.mxu0 0
        %4479 = vmatpush1.bf16.msra.mxu0 0
        %4480 = vmatprep.subr.bf16.mxu0 0
        %4481 = vmatpush1.bf16.msra.mxu0 0
        %4482 = vmatprep.subr.bf16.mxu0 0
        %4483 = vmatpush1.bf16.msra.mxu0 0
        %4484 = vmatprep.subr.bf16.mxu0 0
        %4485 = vmatpush1.bf16.msra.mxu0 0
        %4486 = vmatprep.subr.bf16.mxu0 0
        %4487 = vmatpush1.bf16.msra.mxu0 0
        %4488 = vmatprep.subr.bf16.mxu0 0
        %4489 = vmatpush1.bf16.msra.mxu0 0
        %4490 = vmatprep.subr.bf16.mxu0 0
        %4491 = vmatpush1.bf16.msra.mxu0 0
        %4492 = vmatprep.subr.bf16.mxu0 0
        %4493 = vmatpush1.bf16.msra.mxu0 0
        %4494 = vmatprep.subr.bf16.mxu0 0
        %4495 = vmatpush1.bf16.msra.mxu0 0
        %4496 = vmatprep.subr.bf16.mxu0 0
        %4497 = vmatpush1.bf16.msra.mxu0 0
        %4498 = vmatprep.subr.bf16.mxu0 0
        %4499 = vmatpush1.bf16.msra.mxu0 0
        %4500 = vmatprep.subr.bf16.mxu0 0
        %4501 = vmatpush1.bf16.msra.mxu0 0
        %4502 = vmatprep.subr.bf16.mxu0 0
        %4503 = vmatpush1.bf16.msra.mxu0 0
        %4504 = vmatprep.subr.bf16.mxu0 0
        %4505 = vmatpush1.bf16.msra.mxu0 0
        %4506 = vmatprep.mubr.bf16.mxu0 0
        %4507 = vmatmul.mubr.bf16.gmra.mrb[0].mxu0 %v3538
        %v4508 = vpop.f32.mrb[0].mxu0
        %v4509 = vadd.f32 %v4460, %v4508
        %v4510 = vpop.f32.mrb[0].mxu0
        %v4511 = vpop.f32.mrb[0].mxu0
        %v4512 = vpop.f32.mrb[0].mxu0
        %4513 = vdwg.mxu0
        %v4514 = vpack.c.bf16 %v4393, %v4393
        %v4515 = vpack.c.bf16 %v4451, %v4451
        %v4517 = vsel %vm1694, %v4514, 0
        %v4520 = vsel %vm1694, %v4515, 0
        %4522 = vmatprep.subr.bf16.mxu0 0
        %4523 = vmatpush1.bf16.xpose.msra.mxu0 %v4520
        %4524 = vmatprep.subr.bf16.mxu0 0
        %4525 = vmatpush1.bf16.xpose.msra.mxu0 0
        %4526 = vmatprep.subr.bf16.mxu0 0
        %4527 = vmatpush1.bf16.xpose.msra.mxu0 0
        %4528 = vmatprep.subr.bf16.mxu0 0
        %4529 = vmatpush1.bf16.xpose.msra.mxu0 0
        %4530 = vmatprep.subr.bf16.mxu0 0
        %4531 = vmatpush1.bf16.xpose.msra.mxu0 0
        %4532 = vmatprep.subr.bf16.mxu0 0
        %4533 = vmatpush1.bf16.xpose.msra.mxu0 0
        %4534 = vmatprep.subr.bf16.mxu0 0
        %4535 = vmatpush1.bf16.xpose.msra.mxu0 0
        %4536 = vmatprep.subr.bf16.mxu0 0
        %4537 = vmatpush1.bf16.xpose.msra.mxu0 0
        %4538 = vmatprep.subr.bf16.mxu0 0
        %4539 = vmatpush1.bf16.xpose.msra.mxu0 0
        %4540 = vmatprep.subr.bf16.mxu0 0
        %4541 = vmatpush1.bf16.xpose.msra.mxu0 0
        %4542 = vmatprep.subr.bf16.mxu0 0
        %4543 = vmatpush1.bf16.xpose.msra.mxu0 0
        %4544 = vmatprep.subr.bf16.mxu0 0
        %4545 = vmatpush1.bf16.xpose.msra.mxu0 0
        %4546 = vmatprep.subr.bf16.mxu0 0
        %4547 = vmatpush1.bf16.xpose.msra.mxu0 0
        %4548 = vmatprep.subr.bf16.mxu0 0
        %4549 = vmatpush1.bf16.xpose.msra.mxu0 0
        %4550 = vmatprep.subr.bf16.mxu0 0
        %4551 = vmatpush1.bf16.xpose.msra.mxu0 0
        %4552 = vmatprep.subr.bf16.mxu0 0
        %4553 = vmatpush1.bf16.xpose.msra.mxu0 0
        %4554 = vmatprep.mubr.bf16.mxu0 0
        %4555 = vmatmul.mubr.bf16.gmra.mrb[0].mxu0 %v4517
        %v4556 = vpop.f32.mrb[0].mxu0
        %v4557 = vadd.f32 0.0, %v4556
        %v4558 = vpop.f32.mrb[0].mxu0
        %v4559 = vpop.f32.mrb[0].mxu0
        %v4560 = vpop.f32.mrb[0].mxu0
        %4561 = vdwg.mxu0
        %v4562 = vsel %vm1694, %v4557, -inf
        %4563 = vmax.xlane.f32.xlu0 %v4562
        %v4564 = vpop.xlane.xlu0 %4563
        %v4565 = vsub.f32 %v4557, %v4564
        %v4566 = vmul.f32 %v4565, 1.442695
        %v4567 = vpow.pop %v4566
        %v4568 = vsel %vm1694, %v4567, 0.0
        %4569 = vadd.xlane.f32.xlu0 %v4568
        %v4570 = vpop.xlane.xlu0 %4569
        %v4571 = vrcp.pop %v4570
        %v4572 = vmul.f32 %v4567, %v4571
        %v4573 = vpack.c.bf16 %v4572, %v4572
        %v4574 = vpack.c.bf16 %v4509, %v4509
        %v4576 = vsel %vm1694, %v4573, 0
        %v4579 = vsel %vm1757, %v4574, 0
        %4581 = vmatprep.subr.bf16.mxu0 0
        %4582 = vmatpush1.bf16.msra.mxu0 %v4579
        %4583 = vmatprep.subr.bf16.mxu0 0
        %4584 = vmatpush1.bf16.msra.mxu0 0
        %4585 = vmatprep.subr.bf16.mxu0 0
        %4586 = vmatpush1.bf16.msra.mxu0 0
        %4587 = vmatprep.subr.bf16.mxu0 0
        %4588 = vmatpush1.bf16.msra.mxu0 0
        %4589 = vmatprep.subr.bf16.mxu0 0
        %4590 = vmatpush1.bf16.msra.mxu0 0
        %4591 = vmatprep.subr.bf16.mxu0 0
        %4592 = vmatpush1.bf16.msra.mxu0 0
        %4593 = vmatprep.subr.bf16.mxu0 0
        %4594 = vmatpush1.bf16.msra.mxu0 0
        %4595 = vmatprep.subr.bf16.mxu0 0
        %4596 = vmatpush1.bf16.msra.mxu0 0
        %4597 = vmatprep.subr.bf16.mxu0 0
        %4598 = vmatpush1.bf16.msra.mxu0 0
        %4599 = vmatprep.subr.bf16.mxu0 0
        %4600 = vmatpush1.bf16.msra.mxu0 0
        %4601 = vmatprep.subr.bf16.mxu0 0
        %4602 = vmatpush1.bf16.msra.mxu0 0
        %4603 = vmatprep.subr.bf16.mxu0 0
        %4604 = vmatpush1.bf16.msra.mxu0 0
        %4605 = vmatprep.subr.bf16.mxu0 0
        %4606 = vmatpush1.bf16.msra.mxu0 0
        %4607 = vmatprep.subr.bf16.mxu0 0
        %4608 = vmatpush1.bf16.msra.mxu0 0
        %4609 = vmatprep.subr.bf16.mxu0 0
        %4610 = vmatpush1.bf16.msra.mxu0 0
        %4611 = vmatprep.subr.bf16.mxu0 0
        %4612 = vmatpush1.bf16.msra.mxu0 0
        %4613 = vmatprep.mubr.bf16.mxu0 0
        %4614 = vmatmul.mubr.bf16.gmra.mrb[0].mxu0 %v4576
        %v4615 = vpop.f32.mrb[0].mxu0
        %v4616 = vadd.f32 0.0, %v4615
        %v4617 = vpop.f32.mrb[0].mxu0
        %v4618 = vpop.f32.mrb[0].mxu0
        %v4619 = vpop.f32.mrb[0].mxu0
        %4620 = vdwg.mxu0
        %4622 = vrot.lane.b32.xlu0 %v4514, 120
        %v4623 = vpop.permute.xlu0 %4622
        %4625 = vrot.lane.b32.xlu0 %v4515, 120
        %v4626 = vpop.permute.xlu0 %4625
        %v4628 = vsel %vm1694, %v4623, 0
        %v4631 = vsel %vm1694, %v4626, 0
        %4633 = vmatprep.subr.bf16.mxu0 0
        %4634 = vmatpush1.bf16.xpose.msra.mxu0 %v4631
        %4635 = vmatprep.subr.bf16.mxu0 0
        %4636 = vmatpush1.bf16.xpose.msra.mxu0 0
        %4637 = vmatprep.subr.bf16.mxu0 0
        %4638 = vmatpush1.bf16.xpose.msra.mxu0 0
        %4639 = vmatprep.subr.bf16.mxu0 0
        %4640 = vmatpush1.bf16.xpose.msra.mxu0 0
        %4641 = vmatprep.subr.bf16.mxu0 0
        %4642 = vmatpush1.bf16.xpose.msra.mxu0 0
        %4643 = vmatprep.subr.bf16.mxu0 0
        %4644 = vmatpush1.bf16.xpose.msra.mxu0 0
        %4645 = vmatprep.subr.bf16.mxu0 0
        %4646 = vmatpush1.bf16.xpose.msra.mxu0 0
        %4647 = vmatprep.subr.bf16.mxu0 0
        %4648 = vmatpush1.bf16.xpose.msra.mxu0 0
        %4649 = vmatprep.subr.bf16.mxu0 0
        %4650 = vmatpush1.bf16.xpose.msra.mxu0 0
        %4651 = vmatprep.subr.bf16.mxu0 0
        %4652 = vmatpush1.bf16.xpose.msra.mxu0 0
        %4653 = vmatprep.subr.bf16.mxu0 0
        %4654 = vmatpush1.bf16.xpose.msra.mxu0 0
        %4655 = vmatprep.subr.bf16.mxu0 0
        %4656 = vmatpush1.bf16.xpose.msra.mxu0 0
        %4657 = vmatprep.subr.bf16.mxu0 0
        %4658 = vmatpush1.bf16.xpose.msra.mxu0 0
        %4659 = vmatprep.subr.bf16.mxu0 0
        %4660 = vmatpush1.bf16.xpose.msra.mxu0 0
        %4661 = vmatprep.subr.bf16.mxu0 0
        %4662 = vmatpush1.bf16.xpose.msra.mxu0 0
        %4663 = vmatprep.subr.bf16.mxu0 0
        %4664 = vmatpush1.bf16.xpose.msra.mxu0 0
        %4665 = vmatprep.mubr.bf16.mxu0 0
        %4666 = vmatmul.mubr.bf16.gmra.mrb[0].mxu0 %v4628
        %v4667 = vpop.f32.mrb[0].mxu0
        %v4668 = vadd.f32 0.0, %v4667
        %v4669 = vpop.f32.mrb[0].mxu0
        %v4670 = vpop.f32.mrb[0].mxu0
        %v4671 = vpop.f32.mrb[0].mxu0
        %4672 = vdwg.mxu0
        %v4673 = vsel %vm1694, %v4668, -inf
        %4674 = vmax.xlane.f32.xlu0 %v4673
        %v4675 = vpop.xlane.xlu0 %4674
        %v4676 = vsub.f32 %v4668, %v4675
        %v4677 = vmul.f32 %v4676, 1.442695
        %v4678 = vpow.pop %v4677
        %v4679 = vsel %vm1694, %v4678, 0.0
        %4680 = vadd.xlane.f32.xlu0 %v4679
        %v4681 = vpop.xlane.xlu0 %4680
        %v4682 = vrcp.pop %v4681
        %v4683 = vmul.f32 %v4678, %v4682
        %v4684 = vpack.c.bf16 %v4683, %v4683
        %4686 = vrot.lane.b32.xlu0 %v4574, 120
        %v4687 = vpop.permute.xlu0 %4686
        %v4689 = vsel %vm1694, %v4684, 0
        %v4692 = vsel %vm1757, %v4687, 0
        %4694 = vmatprep.subr.bf16.mxu0 0
        %4695 = vmatpush1.bf16.msra.mxu0 %v4692
        %4696 = vmatprep.subr.bf16.mxu0 0
        %4697 = vmatpush1.bf16.msra.mxu0 0
        %4698 = vmatprep.subr.bf16.mxu0 0
        %4699 = vmatpush1.bf16.msra.mxu0 0
        %4700 = vmatprep.subr.bf16.mxu0 0
        %4701 = vmatpush1.bf16.msra.mxu0 0
        %4702 = vmatprep.subr.bf16.mxu0 0
        %4703 = vmatpush1.bf16.msra.mxu0 0
        %4704 = vmatprep.subr.bf16.mxu0 0
        %4705 = vmatpush1.bf16.msra.mxu0 0
        %4706 = vmatprep.subr.bf16.mxu0 0
        %4707 = vmatpush1.bf16.msra.mxu0 0
        %4708 = vmatprep.subr.bf16.mxu0 0
        %4709 = vmatpush1.bf16.msra.mxu0 0
        %4710 = vmatprep.subr.bf16.mxu0 0
        %4711 = vmatpush1.bf16.msra.mxu0 0
        %4712 = vmatprep.subr.bf16.mxu0 0
        %4713 = vmatpush1.bf16.msra.mxu0 0
        %4714 = vmatprep.subr.bf16.mxu0 0
        %4715 = vmatpush1.bf16.msra.mxu0 0
        %4716 = vmatprep.subr.bf16.mxu0 0
        %4717 = vmatpush1.bf16.msra.mxu0 0
        %4718 = vmatprep.subr.bf16.mxu0 0
        %4719 = vmatpush1.bf16.msra.mxu0 0
        %4720 = vmatprep.subr.bf16.mxu0 0
        %4721 = vmatpush1.bf16.msra.mxu0 0
        %4722 = vmatprep.subr.bf16.mxu0 0
        %4723 = vmatpush1.bf16.msra.mxu0 0
        %4724 = vmatprep.subr.bf16.mxu0 0
        %4725 = vmatpush1.bf16.msra.mxu0 0
        %4726 = vmatprep.mubr.bf16.mxu0 0
        %4727 = vmatmul.mubr.bf16.gmra.mrb[0].mxu0 %v4689
        %v4728 = vpop.f32.mrb[0].mxu0
        %v4729 = vadd.f32 0.0, %v4728
        %v4730 = vpop.f32.mrb[0].mxu0
        %v4731 = vpop.f32.mrb[0].mxu0
        %v4732 = vpop.f32.mrb[0].mxu0
        %4733 = vdwg.mxu0
        %4734 = vrot.lane.b32.xlu0 %v4514, 112
        %v4735 = vpop.permute.xlu0 %4734
        %4736 = vrot.lane.b32.xlu0 %v4515, 112
        %v4737 = vpop.permute.xlu0 %4736
        %v4739 = vsel %vm1694, %v4735, 0
        %v4742 = vsel %vm1694, %v4737, 0
        %4744 = vmatprep.subr.bf16.mxu0 0
        %4745 = vmatpush1.bf16.xpose.msra.mxu0 %v4742
        %4746 = vmatprep.subr.bf16.mxu0 0
        %4747 = vmatpush1.bf16.xpose.msra.mxu0 0
        %4748 = vmatprep.subr.bf16.mxu0 0
        %4749 = vmatpush1.bf16.xpose.msra.mxu0 0
        %4750 = vmatprep.subr.bf16.mxu0 0
        %4751 = vmatpush1.bf16.xpose.msra.mxu0 0
        %4752 = vmatprep.subr.bf16.mxu0 0
        %4753 = vmatpush1.bf16.xpose.msra.mxu0 0
        %4754 = vmatprep.subr.bf16.mxu0 0
        %4755 = vmatpush1.bf16.xpose.msra.mxu0 0
        %4756 = vmatprep.subr.bf16.mxu0 0
        %4757 = vmatpush1.bf16.xpose.msra.mxu0 0
        %4758 = vmatprep.subr.bf16.mxu0 0
        %4759 = vmatpush1.bf16.xpose.msra.mxu0 0
        %4760 = vmatprep.subr.bf16.mxu0 0
        %4761 = vmatpush1.bf16.xpose.msra.mxu0 0
        %4762 = vmatprep.subr.bf16.mxu0 0
        %4763 = vmatpush1.bf16.xpose.msra.mxu0 0
        %4764 = vmatprep.subr.bf16.mxu0 0
        %4765 = vmatpush1.bf16.xpose.msra.mxu0 0
        %4766 = vmatprep.subr.bf16.mxu0 0
        %4767 = vmatpush1.bf16.xpose.msra.mxu0 0
        %4768 = vmatprep.subr.bf16.mxu0 0
        %4769 = vmatpush1.bf16.xpose.msra.mxu0 0
        %4770 = vmatprep.subr.bf16.mxu0 0
        %4771 = vmatpush1.bf16.xpose.msra.mxu0 0
        %4772 = vmatprep.subr.bf16.mxu0 0
        %4773 = vmatpush1.bf16.xpose.msra.mxu0 0
        %4774 = vmatprep.subr.bf16.mxu0 0
        %4775 = vmatpush1.bf16.xpose.msra.mxu0 0
        %4776 = vmatprep.mubr.bf16.mxu0 0
        %4777 = vmatmul.mubr.bf16.gmra.mrb[0].mxu0 %v4739
        %v4778 = vpop.f32.mrb[0].mxu0
        %v4779 = vadd.f32 0.0, %v4778
        %v4780 = vpop.f32.mrb[0].mxu0
        %v4781 = vpop.f32.mrb[0].mxu0
        %v4782 = vpop.f32.mrb[0].mxu0
        %4783 = vdwg.mxu0
        %v4784 = vsel %vm1694, %v4779, -inf
        %4785 = vmax.xlane.f32.xlu0 %v4784
        %v4786 = vpop.xlane.xlu0 %4785
        %v4787 = vsub.f32 %v4779, %v4786
        %v4788 = vmul.f32 %v4787, 1.442695
        %v4789 = vpow.pop %v4788
        %v4790 = vsel %vm1694, %v4789, 0.0
        %4791 = vadd.xlane.f32.xlu0 %v4790
        %v4792 = vpop.xlane.xlu0 %4791
        %v4793 = vrcp.pop %v4792
        %v4794 = vmul.f32 %v4789, %v4793
        %v4795 = vpack.c.bf16 %v4794, %v4794
        %4796 = vrot.lane.b32.xlu0 %v4574, 112
        %v4797 = vpop.permute.xlu0 %4796
        %v4799 = vsel %vm1694, %v4795, 0
        %v4802 = vsel %vm1757, %v4797, 0
        %4804 = vmatprep.subr.bf16.mxu0 0
        %4805 = vmatpush1.bf16.msra.mxu0 %v4802
        %4806 = vmatprep.subr.bf16.mxu0 0
        %4807 = vmatpush1.bf16.msra.mxu0 0
        %4808 = vmatprep.subr.bf16.mxu0 0
        %4809 = vmatpush1.bf16.msra.mxu0 0
        %4810 = vmatprep.subr.bf16.mxu0 0
        %4811 = vmatpush1.bf16.msra.mxu0 0
        %4812 = vmatprep.subr.bf16.mxu0 0
        %4813 = vmatpush1.bf16.msra.mxu0 0
        %4814 = vmatprep.subr.bf16.mxu0 0
        %4815 = vmatpush1.bf16.msra.mxu0 0
        %4816 = vmatprep.subr.bf16.mxu0 0
        %4817 = vmatpush1.bf16.msra.mxu0 0
        %4818 = vmatprep.subr.bf16.mxu0 0
        %4819 = vmatpush1.bf16.msra.mxu0 0
        %4820 = vmatprep.subr.bf16.mxu0 0
        %4821 = vmatpush1.bf16.msra.mxu0 0
        %4822 = vmatprep.subr.bf16.mxu0 0
        %4823 = vmatpush1.bf16.msra.mxu0 0
        %4824 = vmatprep.subr.bf16.mxu0 0
        %4825 = vmatpush1.bf16.msra.mxu0 0
        %4826 = vmatprep.subr.bf16.mxu0 0
        %4827 = vmatpush1.bf16.msra.mxu0 0
        %4828 = vmatprep.subr.bf16.mxu0 0
        %4829 = vmatpush1.bf16.msra.mxu0 0
        %4830 = vmatprep.subr.bf16.mxu0 0
        %4831 = vmatpush1.bf16.msra.mxu0 0
        %4832 = vmatprep.subr.bf16.mxu0 0
        %4833 = vmatpush1.bf16.msra.mxu0 0
        %4834 = vmatprep.subr.bf16.mxu0 0
        %4835 = vmatpush1.bf16.msra.mxu0 0
        %4836 = vmatprep.mubr.bf16.mxu0 0
        %4837 = vmatmul.mubr.bf16.gmra.mrb[0].mxu0 %v4799
        %v4838 = vpop.f32.mrb[0].mxu0
        %v4839 = vadd.f32 0.0, %v4838
        %v4840 = vpop.f32.mrb[0].mxu0
        %v4841 = vpop.f32.mrb[0].mxu0
        %v4842 = vpop.f32.mrb[0].mxu0
        %4843 = vdwg.mxu0
        %4844 = vrot.lane.b32.xlu0 %v4514, 104
        %v4845 = vpop.permute.xlu0 %4844
        %4846 = vrot.lane.b32.xlu0 %v4515, 104
        %v4847 = vpop.permute.xlu0 %4846
        %v4849 = vsel %vm1694, %v4845, 0
        %v4852 = vsel %vm1694, %v4847, 0
        %4854 = vmatprep.subr.bf16.mxu0 0
        %4855 = vmatpush1.bf16.xpose.msra.mxu0 %v4852
        %4856 = vmatprep.subr.bf16.mxu0 0
        %4857 = vmatpush1.bf16.xpose.msra.mxu0 0
        %4858 = vmatprep.subr.bf16.mxu0 0
        %4859 = vmatpush1.bf16.xpose.msra.mxu0 0
        %4860 = vmatprep.subr.bf16.mxu0 0
        %4861 = vmatpush1.bf16.xpose.msra.mxu0 0
        %4862 = vmatprep.subr.bf16.mxu0 0
        %4863 = vmatpush1.bf16.xpose.msra.mxu0 0
        %4864 = vmatprep.subr.bf16.mxu0 0
        %4865 = vmatpush1.bf16.xpose.msra.mxu0 0
        %4866 = vmatprep.subr.bf16.mxu0 0
        %4867 = vmatpush1.bf16.xpose.msra.mxu0 0
        %4868 = vmatprep.subr.bf16.mxu0 0
        %4869 = vmatpush1.bf16.xpose.msra.mxu0 0
        %4870 = vmatprep.subr.bf16.mxu0 0
        %4871 = vmatpush1.bf16.xpose.msra.mxu0 0
        %4872 = vmatprep.subr.bf16.mxu0 0
        %4873 = vmatpush1.bf16.xpose.msra.mxu0 0
        %4874 = vmatprep.subr.bf16.mxu0 0
        %4875 = vmatpush1.bf16.xpose.msra.mxu0 0
        %4876 = vmatprep.subr.bf16.mxu0 0
        %4877 = vmatpush1.bf16.xpose.msra.mxu0 0
        %4878 = vmatprep.subr.bf16.mxu0 0
        %4879 = vmatpush1.bf16.xpose.msra.mxu0 0
        %4880 = vmatprep.subr.bf16.mxu0 0
        %4881 = vmatpush1.bf16.xpose.msra.mxu0 0
        %4882 = vmatprep.subr.bf16.mxu0 0
        %4883 = vmatpush1.bf16.xpose.msra.mxu0 0
        %4884 = vmatprep.subr.bf16.mxu0 0
        %4885 = vmatpush1.bf16.xpose.msra.mxu0 0
        %4886 = vmatprep.mubr.bf16.mxu0 0
        %4887 = vmatmul.mubr.bf16.gmra.mrb[0].mxu0 %v4849
        %v4888 = vpop.f32.mrb[0].mxu0
        %v4889 = vadd.f32 0.0, %v4888
        %v4890 = vpop.f32.mrb[0].mxu0
        %v4891 = vpop.f32.mrb[0].mxu0
        %v4892 = vpop.f32.mrb[0].mxu0
        %4893 = vdwg.mxu0
        %v4894 = vsel %vm1694, %v4889, -inf
        %4895 = vmax.xlane.f32.xlu0 %v4894
        %v4896 = vpop.xlane.xlu0 %4895
        %v4897 = vsub.f32 %v4889, %v4896
        %v4898 = vmul.f32 %v4897, 1.442695
        %v4899 = vpow.pop %v4898
        %v4900 = vsel %vm1694, %v4899, 0.0
        %4901 = vadd.xlane.f32.xlu0 %v4900
        %v4902 = vpop.xlane.xlu0 %4901
        %v4903 = vrcp.pop %v4902
        %v4904 = vmul.f32 %v4899, %v4903
        %v4905 = vpack.c.bf16 %v4904, %v4904
        %4906 = vrot.lane.b32.xlu0 %v4574, 104
        %v4907 = vpop.permute.xlu0 %4906
        %v4909 = vsel %vm1694, %v4905, 0
        %v4912 = vsel %vm1757, %v4907, 0
        %4914 = vmatprep.subr.bf16.mxu0 0
        %4915 = vmatpush1.bf16.msra.mxu0 %v4912
        %4916 = vmatprep.subr.bf16.mxu0 0
        %4917 = vmatpush1.bf16.msra.mxu0 0
        %4918 = vmatprep.subr.bf16.mxu0 0
        %4919 = vmatpush1.bf16.msra.mxu0 0
        %4920 = vmatprep.subr.bf16.mxu0 0
        %4921 = vmatpush1.bf16.msra.mxu0 0
        %4922 = vmatprep.subr.bf16.mxu0 0
        %4923 = vmatpush1.bf16.msra.mxu0 0
        %4924 = vmatprep.subr.bf16.mxu0 0
        %4925 = vmatpush1.bf16.msra.mxu0 0
        %4926 = vmatprep.subr.bf16.mxu0 0
        %4927 = vmatpush1.bf16.msra.mxu0 0
        %4928 = vmatprep.subr.bf16.mxu0 0
        %4929 = vmatpush1.bf16.msra.mxu0 0
        %4930 = vmatprep.subr.bf16.mxu0 0
        %4931 = vmatpush1.bf16.msra.mxu0 0
        %4932 = vmatprep.subr.bf16.mxu0 0
        %4933 = vmatpush1.bf16.msra.mxu0 0
        %4934 = vmatprep.subr.bf16.mxu0 0
        %4935 = vmatpush1.bf16.msra.mxu0 0
        %4936 = vmatprep.subr.bf16.mxu0 0
        %4937 = vmatpush1.bf16.msra.mxu0 0
        %4938 = vmatprep.subr.bf16.mxu0 0
        %4939 = vmatpush1.bf16.msra.mxu0 0
        %4940 = vmatprep.subr.bf16.mxu0 0
        %4941 = vmatpush1.bf16.msra.mxu0 0
        %4942 = vmatprep.subr.bf16.mxu0 0
        %4943 = vmatpush1.bf16.msra.mxu0 0
        %4944 = vmatprep.subr.bf16.mxu0 0
        %4945 = vmatpush1.bf16.msra.mxu0 0
        %4946 = vmatprep.mubr.bf16.mxu0 0
        %4947 = vmatmul.mubr.bf16.gmra.mrb[0].mxu0 %v4909
        %v4948 = vpop.f32.mrb[0].mxu0
        %v4949 = vadd.f32 0.0, %v4948
        %v4950 = vpop.f32.mrb[0].mxu0
        %v4951 = vpop.f32.mrb[0].mxu0
        %v4952 = vpop.f32.mrb[0].mxu0
        %4953 = vdwg.mxu0
        %4955 = vrot.lane.b32.xlu0 %v4729, 8
        %v4956 = vpop.permute.xlu0 %4955
        %4959 = vrot.lane.b32.xlu0 %v4839, 16
        %v4960 = vpop.permute.xlu0 %4959
        %4963 = vrot.lane.b32.xlu0 %v4949, 24
        %v4964 = vpop.permute.xlu0 %4963
        %v4966 = vsel %vm1694, %v4616, %v4956
        %v4967 = vsel %vm2147, %v4966, %v4960
        %v4968 = vsel %vm2149, %v4967, %v4964
        %v4969 = vpack.c.bf16 %v4968, %v4968
        %v4971 = vlaneseq
        %v4972 = vshrl.u32 %v4971, 7
        %v4973 = vsub.s32 0, %v4972
        %v4974 = vrot.slane %v4335, %v4973
        %v4980 = vunpack.c.l.b16 %v4330
        %v4981 = vunpack.c.l.b16 %v4331
        %v4982 = vunpack.c.l.b16 %v4332
        %v4983 = vunpack.c.l.b16 %v4333
        %v4984 = vpack.c.b16 %v4981, %v4980
        %v4985 = vpack.c.b16 %v4983, %v4982
        %v4989 = vsel %vm1528, %v4969, 0
        %4991 = vmatprep.subr.bf16.mxu0 0
        %4992 = vmatpush1.bf16.msra.mxu0 %v4984
        %4993 = vmatprep.subr.bf16.mxu0 0
        %4994 = vmatpush1.bf16.msra.mxu0 %v4985
        %4995 = vmatprep.subr.bf16.mxu0 0
        %4996 = vmatpush1.bf16.msra.mxu0 0
        %4997 = vmatprep.subr.bf16.mxu0 0
        %4998 = vmatpush1.bf16.msra.mxu0 0
        %4999 = vmatprep.subr.bf16.mxu0 0
        %5000 = vmatpush1.bf16.msra.mxu0 0
        %5001 = vmatprep.subr.bf16.mxu0 0
        %5002 = vmatpush1.bf16.msra.mxu0 0
        %5003 = vmatprep.subr.bf16.mxu0 0
        %5004 = vmatpush1.bf16.msra.mxu0 0
        %5005 = vmatprep.subr.bf16.mxu0 0
        %5006 = vmatpush1.bf16.msra.mxu0 0
        %5007 = vmatprep.subr.bf16.mxu0 0
        %5008 = vmatpush1.bf16.msra.mxu0 0
        %5009 = vmatprep.subr.bf16.mxu0 0
        %5010 = vmatpush1.bf16.msra.mxu0 0
        %5011 = vmatprep.subr.bf16.mxu0 0
        %5012 = vmatpush1.bf16.msra.mxu0 0
        %5013 = vmatprep.subr.bf16.mxu0 0
        %5014 = vmatpush1.bf16.msra.mxu0 0
        %5015 = vmatprep.subr.bf16.mxu0 0
        %5016 = vmatpush1.bf16.msra.mxu0 0
        %5017 = vmatprep.subr.bf16.mxu0 0
        %5018 = vmatpush1.bf16.msra.mxu0 0
        %5019 = vmatprep.subr.bf16.mxu0 0
        %5020 = vmatpush1.bf16.msra.mxu0 0
        %5021 = vmatprep.subr.bf16.mxu0 0
        %5022 = vmatpush1.bf16.msra.mxu0 0
        %5023 = vmatprep.mubr.bf16.mxu0 0
        %5024 = vmatmul.mubr.bf16.gmra.mrb[0].mxu0 %v4989
        %v5025 = vpop.f32.mrb[0].mxu0
        %v5026 = vadd.f32 %v4974, %v5025
        %v5027 = vpop.f32.mrb[0].mxu0
        %v5028 = vpop.f32.mrb[0].mxu0
        %v5029 = vpop.f32.mrb[0].mxu0
        %5030 = vdwg.mxu0
        %v5031 = vadd.f32 %v4306, %v5026
        %s5032 = scalar_lea.vmem %s55, 1
        %v5033 = vld [vmem:[%s5032] sm:$0x1]
        %s5034 = scalar_lea.vmem %s57, 1
        %v5035 = vld [vmem:[%s5034] sm:$0x1]
        %v5036 = vsel %vm1528, %v5031, 0.0
        %5037 = vadd.xlane.f32.xlu0 %v5036
        %v5038 = vpop.xlane.xlu0 %5037
        %v5039 = vmul.f32 %v5038, %v2219
        %v5040 = vsub.f32 %v5031, %v5039
        %v5041 = vmul.f32 %v5040, %v5040
        %v5042 = vsel %vm1528, %v5041, 0.0
        %5043 = vadd.xlane.f32.xlu0 %v5042
        %v5044 = vpop.xlane.xlu0 %5043
        %v5045 = vmul.f32 %v5044, %v2219
        %v5046 = vadd.f32 %v5045, 1e-05
        %v5047 = vrsqrt.pop %v5046
        %v5048 = vmul.f32 %v5040, %v5047
        %v5050 = vlaneseq
        %v5051 = vshrl.u32 %v5050, 7
        %v5052 = vsub.s32 0, %v5051
        %v5053 = vrot.slane %v5033, %v5052
        %v5055 = vmul.f32 %v5048, %v5053
        %v5057 = vlaneseq
        %v5058 = vshrl.u32 %v5057, 7
        %v5059 = vsub.s32 0, %v5058
        %v5060 = vrot.slane %v5035, %v5059
        %v5062 = vadd.f32 %v5055, %v5060
        %s5063 = scalar_lea.vmem %s59, 16
        %v5064 = vld [vmem:[%s5063] sm:$0xf]
        %v5065 = vld [vmem:[%s5063 + $0x4] sm:$0xf]
        %v5066 = vld [vmem:[%s5063 + $0x8] sm:$0xf]
        %v5067 = vld [vmem:[%s5063 + $0xc] sm:$0xf]
        %s5068 = scalar_lea.vmem %s61, 1
        %v5069 = vld [vmem:[%s5068] sm:$0x1]
        %s5070 = scalar_lea.vmem %s63, 32
        %v5071 = vld [vmem:[%s5070] sm:$0xf]
        %v5072 = vld [vmem:[%s5070 + $0x4] sm:$0xf]
        %v5073 = vld [vmem:[%s5070 + $0x8] sm:$0xf]
        %v5074 = vld [vmem:[%s5070 + $0xc] sm:$0xf]
        %v5075 = vld [vmem:[%s5070 + $0x10] sm:$0xf]
        %v5076 = vld [vmem:[%s5070 + $0x14] sm:$0xf]
        %v5077 = vld [vmem:[%s5070 + $0x18] sm:$0xf]
        %v5078 = vld [vmem:[%s5070 + $0x1c] sm:$0xf]
        %s5079 = scalar_lea.vmem %s65, 1
        %v5080 = vld [vmem:[%s5079] sm:$0x1]
        %v5081 = vpack.c.bf16 %v5062, %v5062
        %v5083 = vlaneseq
        %v5084 = vshrl.u32 %v5083, 7
        %v5085 = vsub.s32 0, %v5084
        %v5086 = vrot.slane %v5069, %v5085
        %v5092 = vunpack.c.l.b16 %v5064
        %v5093 = vunpack.c.l.b16 %v5065
        %v5094 = vunpack.c.l.b16 %v5066
        %v5095 = vunpack.c.l.b16 %v5067
        %v5096 = vpack.c.b16 %v5093, %v5092
        %v5097 = vpack.c.b16 %v5095, %v5094
        %v5101 = vsel %vm1528, %v5081, 0
        %5103 = vmatprep.subr.bf16.mxu0 0
        %5104 = vmatpush1.bf16.msra.mxu0 %v5096
        %5105 = vmatprep.subr.bf16.mxu0 0
        %5106 = vmatpush1.bf16.msra.mxu0 %v5097
        %5107 = vmatprep.subr.bf16.mxu0 0
        %5108 = vmatpush1.bf16.msra.mxu0 0
        %5109 = vmatprep.subr.bf16.mxu0 0
        %5110 = vmatpush1.bf16.msra.mxu0 0
        %5111 = vmatprep.subr.bf16.mxu0 0
        %5112 = vmatpush1.bf16.msra.mxu0 0
        %5113 = vmatprep.subr.bf16.mxu0 0
        %5114 = vmatpush1.bf16.msra.mxu0 0
        %5115 = vmatprep.subr.bf16.mxu0 0
        %5116 = vmatpush1.bf16.msra.mxu0 0
        %5117 = vmatprep.subr.bf16.mxu0 0
        %5118 = vmatpush1.bf16.msra.mxu0 0
        %5119 = vmatprep.subr.bf16.mxu0 0
        %5120 = vmatpush1.bf16.msra.mxu0 0
        %5121 = vmatprep.subr.bf16.mxu0 0
        %5122 = vmatpush1.bf16.msra.mxu0 0
        %5123 = vmatprep.subr.bf16.mxu0 0
        %5124 = vmatpush1.bf16.msra.mxu0 0
        %5125 = vmatprep.subr.bf16.mxu0 0
        %5126 = vmatpush1.bf16.msra.mxu0 0
        %5127 = vmatprep.subr.bf16.mxu0 0
        %5128 = vmatpush1.bf16.msra.mxu0 0
        %5129 = vmatprep.subr.bf16.mxu0 0
        %5130 = vmatpush1.bf16.msra.mxu0 0
        %5131 = vmatprep.subr.bf16.mxu0 0
        %5132 = vmatpush1.bf16.msra.mxu0 0
        %5133 = vmatprep.subr.bf16.mxu0 0
        %5134 = vmatpush1.bf16.msra.mxu0 0
        %5135 = vmatprep.mubr.bf16.mxu0 0
        %5136 = vmatmul.mubr.bf16.gmra.mrb[0].mxu0 %v5101
        %v5137 = vpop.f32.mrb[0].mxu0
        %v5138 = vadd.f32 %v5086, %v5137
        %v5139 = vpop.f32.mrb[0].mxu0
        %v5140 = vpop.f32.mrb[0].mxu0
        %v5141 = vpop.f32.mrb[0].mxu0
        %5142 = vdwg.mxu0
        %v5143 = vmax.f32 %v5138, 0.0
        %v5144 = vpack.c.bf16 %v5143, %v5143
        %v5146 = vlaneseq
        %v5147 = vshrl.u32 %v5146, 7
        %v5148 = vsub.s32 0, %v5147
        %v5149 = vrot.slane %v5080, %v5148
        %v5159 = vunpack.c.l.b16 %v5071
        %v5160 = vunpack.c.l.b16 %v5072
        %v5161 = vunpack.c.l.b16 %v5073
        %v5162 = vunpack.c.l.b16 %v5074
        %v5163 = vunpack.c.l.b16 %v5075
        %v5164 = vunpack.c.l.b16 %v5076
        %v5165 = vunpack.c.l.b16 %v5077
        %v5166 = vunpack.c.l.b16 %v5078
        %v5167 = vpack.c.b16 %v5160, %v5159
        %v5168 = vpack.c.b16 %v5162, %v5161
        %v5169 = vpack.c.b16 %v5164, %v5163
        %v5170 = vpack.c.b16 %v5166, %v5165
        %v5176 = vsel %vm2352, %v5144, 0
        %5178 = vmatprep.subr.bf16.mxu0 0
        %5179 = vmatpush1.bf16.msra.mxu0 %v5167
        %5180 = vmatprep.subr.bf16.mxu0 0
        %5181 = vmatpush1.bf16.msra.mxu0 %v5168
        %5182 = vmatprep.subr.bf16.mxu0 0
        %5183 = vmatpush1.bf16.msra.mxu0 %v5169
        %5184 = vmatprep.subr.bf16.mxu0 0
        %5185 = vmatpush1.bf16.msra.mxu0 %v5170
        %5186 = vmatprep.subr.bf16.mxu0 0
        %5187 = vmatpush1.bf16.msra.mxu0 0
        %5188 = vmatprep.subr.bf16.mxu0 0
        %5189 = vmatpush1.bf16.msra.mxu0 0
        %5190 = vmatprep.subr.bf16.mxu0 0
        %5191 = vmatpush1.bf16.msra.mxu0 0
        %5192 = vmatprep.subr.bf16.mxu0 0
        %5193 = vmatpush1.bf16.msra.mxu0 0
        %5194 = vmatprep.subr.bf16.mxu0 0
        %5195 = vmatpush1.bf16.msra.mxu0 0
        %5196 = vmatprep.subr.bf16.mxu0 0
        %5197 = vmatpush1.bf16.msra.mxu0 0
        %5198 = vmatprep.subr.bf16.mxu0 0
        %5199 = vmatpush1.bf16.msra.mxu0 0
        %5200 = vmatprep.subr.bf16.mxu0 0
        %5201 = vmatpush1.bf16.msra.mxu0 0
        %5202 = vmatprep.subr.bf16.mxu0 0
        %5203 = vmatpush1.bf16.msra.mxu0 0
        %5204 = vmatprep.subr.bf16.mxu0 0
        %5205 = vmatpush1.bf16.msra.mxu0 0
        %5206 = vmatprep.subr.bf16.mxu0 0
        %5207 = vmatpush1.bf16.msra.mxu0 0
        %5208 = vmatprep.subr.bf16.mxu0 0
        %5209 = vmatpush1.bf16.msra.mxu0 0
        %5210 = vmatprep.mubr.bf16.mxu0 0
        %5211 = vmatmul.mubr.bf16.gmra.mrb[0].mxu0 %v5176
        %v5212 = vpop.f32.mrb[0].mxu0
        %v5213 = vadd.f32 %v5149, %v5212
        %v5214 = vpop.f32.mrb[0].mxu0
        %v5215 = vpop.f32.mrb[0].mxu0
        %v5216 = vpop.f32.mrb[0].mxu0
        %5217 = vdwg.mxu0
        %v5218 = vadd.f32 %v5062, %v5213
        %s5219 = scalar_lea.vmem %s67, 1
        %v5220 = vld [vmem:[%s5219] sm:$0x1]
        %s5221 = scalar_lea.vmem %s69, 1
        %v5222 = vld [vmem:[%s5221] sm:$0x1]
        %v5223 = vsel %vm1528, %v5218, 0.0
        %5224 = vadd.xlane.f32.xlu0 %v5223
        %v5225 = vpop.xlane.xlu0 %5224
        %v5226 = vmul.f32 %v5225, %v2219
        %v5227 = vsub.f32 %v5218, %v5226
        %v5228 = vmul.f32 %v5227, %v5227
        %v5229 = vsel %vm1528, %v5228, 0.0
        %5230 = vadd.xlane.f32.xlu0 %v5229
        %v5231 = vpop.xlane.xlu0 %5230
        %v5232 = vmul.f32 %v5231, %v2219
        %v5233 = vadd.f32 %v5232, 1e-05
        %v5234 = vrsqrt.pop %v5233
        %v5235 = vmul.f32 %v5227, %v5234
        %v5237 = vlaneseq
        %v5238 = vshrl.u32 %v5237, 7
        %v5239 = vsub.s32 0, %v5238
        %v5240 = vrot.slane %v5220, %v5239
        %v5242 = vmul.f32 %v5235, %v5240
        %v5244 = vlaneseq
        %v5245 = vshrl.u32 %v5244, 7
        %v5246 = vsub.s32 0, %v5245
        %v5247 = vrot.slane %v5222, %v5246
        %v5249 = vadd.f32 %v5242, %v5247
        %v5250 = vld [vmem:[%s71] sm:$0x1]
        %v5251 = vld [vmem:[%s73] sm:$0x1]
        %v5252 = vsel %vm1528, %v5249, 0.0
        %5253 = vadd.xlane.f32.xlu0 %v5252
        %v5254 = vpop.xlane.xlu0 %5253
        %v5255 = vmul.f32 %v5254, %v2219
        %v5256 = vsub.f32 %v5249, %v5255
        %v5257 = vmul.f32 %v5256, %v5256
        %v5258 = vsel %vm1528, %v5257, 0.0
        %5259 = vadd.xlane.f32.xlu0 %v5258
        %v5260 = vpop.xlane.xlu0 %5259
        %v5261 = vmul.f32 %v5260, %v2219
        %v5262 = vadd.f32 %v5261, 1e-05
        %v5263 = vrsqrt.pop %v5262
        %v5264 = vmul.f32 %v5256, %v5263
        %v5266 = vlaneseq
        %v5267 = vshrl.u32 %v5266, 7
        %v5268 = vsub.s32 0, %v5267
        %v5269 = vrot.slane %v5250, %v5268
        %v5271 = vmul.f32 %v5264, %v5269
        %v5273 = vlaneseq
        %v5274 = vshrl.u32 %v5273, 7
        %v5275 = vsub.s32 0, %v5274
        %v5276 = vrot.slane %v5251, %v5275
        %v5278 = vadd.f32 %v5271, %v5276
        %5279 = vst.msk [vmem:[%s1476] sm:$0xff] %vm1528, %v5278
        %5280 = vst.msk [vmem:[%s1483] sm:$0xff] %vm1528, %v3372
        %s5281 = sand.u32 %s909, 1
        %s5282 = scalar_lea.sflag [#allocation4], %s5281
        %s5283 = sand.u32 %s909, 1
        %s5284 = smul.addr %s5283, 8
        %s5285 = scalar_lea.vmem [#allocation32], %s5284
        %s5286 = sand.u32 %s935, 1
        %s5287 = scalar_lea.sflag [#allocation34], %s5286
        %s5288 = sand.u32 %s935, 1
        %s5289 = smul.addr %s5288, 8
        %s5290 = scalar_lea.vmem [#allocation33], %s5289
        // Predicated region
        $region245: #{tpu_custom_call.1} parent=167 // pred_check
          %p5291 = pneg %p919
        $region246: #{tpu_custom_call.1} parent=167 // pred_check_branch
          %5293 = sbr.rel (%p5291) target = $region248
        $region247: #{tpu_custom_call.1} parent=167 // pred_region
          %s5295 = ssub.s32 128, 128
          %5296 = vsyncadd %s5282, %s5295
          %s5297 = smul.addr %s109, 128
          %s5298 = scalar_lea.hbm %s75, %s5297
          %s5300 = sshll.u32 %s5285, 4
          %s5301 = int_to_ptr.vmem [resolvable:$true] %s5300
          %5303 = dma.vmem_to_hbm [thread:$0]  %s5301, 128, %s5298, %s5282
        $region248: #{tpu_custom_call.1} parent=167 // pred_fallthru
          _
        // Predicated region
        $region249: #{tpu_custom_call.1} parent=167 // pred_check
          %p5304 = pneg %p945
        $region250: #{tpu_custom_call.1} parent=167 // pred_check_branch
          %5306 = sbr.rel (%p5304) target = $region252
        $region251: #{tpu_custom_call.1} parent=167 // pred_region
          %s5308 = ssub.s32 128, 128
          %5309 = vsyncadd %s5287, %s5308
          %s5310 = smul.addr %s109, 128
          %s5311 = scalar_lea.hbm %s77, %s5310
          %s5313 = sshll.u32 %s5290, 4
          %s5314 = int_to_ptr.vmem [resolvable:$true] %s5313
          %5316 = dma.vmem_to_hbm [thread:$0]  %s5314, 128, %s5311, %s5287
        $region252: #{tpu_custom_call.1} parent=167 // pred_fallthru
          _
      $region168: #{tpu_custom_call.1} parent=5 // pred_fallthru
        _
      %p5317 = scmp.le.s32.totalorder 2, %s104
      // Predicated region
      $region253: #{tpu_custom_call.1} parent=5 // pred_check
        %p5318 = pneg %p5317
      $region254: #{tpu_custom_call.1} parent=5 // pred_check_branch
        %5320 = sbr.rel (%p5318) target = $region256
      $region255: #{tpu_custom_call.1} parent=5 // pred_region
        %s5321 = ssub.s32 %s104, 2
        // Predicated region
        $region257: #{tpu_custom_call.1} parent=255 // pred_check
          %p5322 = pneg %p925
        $region258: #{tpu_custom_call.1} parent=255 // pred_check_branch
          %5324 = sbr.rel (%p5322) target = $region260
        $region259: #{tpu_custom_call.1} parent=255 // pred_region
          %s5325 = sand.u32 %s910, 1
          %s5326 = scalar_lea.sflag [#allocation4], %s5325
          %s5327 = sand.u32 %s910, 1
          %s5328 = smul.addr %s5327, 8
          %s5329 = scalar_lea.vmem [#allocation32], %s5328
          %5330 = dma.done %s5326, 128
        $region260: #{tpu_custom_call.1} parent=255 // pred_fallthru
          _
        // Predicated region
        $region261: #{tpu_custom_call.1} parent=255 // pred_check
          %p5331 = pneg %p951
        $region262: #{tpu_custom_call.1} parent=255 // pred_check_branch
          %5333 = sbr.rel (%p5331) target = $region264
        $region263: #{tpu_custom_call.1} parent=255 // pred_region
          %s5334 = sand.u32 %s936, 1
          %s5335 = scalar_lea.sflag [#allocation34], %s5334
          %s5336 = sand.u32 %s936, 1
          %s5337 = smul.addr %s5336, 8
          %s5338 = scalar_lea.vmem [#allocation33], %s5337
          %5339 = dma.done %s5335, 128
        $region264: #{tpu_custom_call.1} parent=255 // pred_fallthru
          _
      $region256: #{tpu_custom_call.1} parent=5 // pred_fallthru
        _
    $region6: #{tpu_custom_call.1} parent=1 // loop_footer
      %s108 = sadd.s32 1, %s104
    $region7: #{tpu_custom_call.1} parent=1 // loop_footer_branch
      %103 = sbr.rel target = $region3
    $region8: #{tpu_custom_call.1} parent=1 // loop_exit
      _
    %5340 = vsyncpa [#allocation3], 1
    %s5341 = scalar_lea.sflag [#allocation3], 1
    %5342 = vsyncpa %s5341, 1
    %5343 = vsyncpa [#allocation6], 1
    %s5344 = scalar_lea.sflag [#allocation6], 1
    %5345 = vsyncpa %s5344, 1
    %5346 = vsyncpa [#allocation9], 1
    %5347 = vsyncpa [#allocation12], 1
    %5348 = vsyncpa [#allocation15], 1
    %5349 = vsyncpa [#allocation18], 1
    %5350 = vsyncpa [#allocation21], 1
    %5351 = vsyncpa [#allocation24], 1
    %5352 = vsyncpa [#allocation27], 1
    %5353 = vsyncpa [#allocation30], 1
    %5354 = vsyncpa [#allocation4], 1
    %s5355 = scalar_lea.sflag [#allocation4], 1
    %5356 = vsyncpa %s5355, 1
    %5357 = vsyncpa [#allocation34], 1
    %s5358 = scalar_lea.sflag [#allocation34], 1
    %5359 = vsyncpa %s5358, 1

</llo_original>
